<compile_context>
chip_gen: v7x
topology: tpu7x:2x2x1
jax: 0.10.0
libtpu: 0.0.40
codegen_flags: <defaults>
</compile_context>

<pallas_src>
import functools

import jax
import jax.numpy as jnp
from jax.experimental import pallas as pl
from jax.experimental.pallas import tpu as pltpu

LANE = 128          # channel padding granularity (vreg lane width)
IN_CH_PAD = 8       # pad RGB input channels 3 -> 8 (sublane-friendly K for embed)


# ----------------------------------------------------------------------------
# Small helpers
# ----------------------------------------------------------------------------
def _round_up(x, m):
    return ((x + m - 1) // m) * m


def _pad_ch(c):
    return _round_up(c, LANE)


def _pick_m_tile(m):
    """Largest multiple-of-8 divisor of m, capped at 256, keeping >=2 grid steps."""
    if m % 8 != 0 or m < 16:
        return m
    cap = min(256, m // 2)
    best, t = 8, 8
    while t <= cap:
        if m % t == 0:
            best = t
        t += 8
    return best


def _pick_n_tile(n):
    if n % 256 == 0:
        return 256
    if n % 128 == 0:
        return 128
    return n


def _pick_k_tile(k, cap=2048):
    if k % 128 != 0:
        return k
    best, t = 128, 128
    while t <= min(k, cap):
        if k % t == 0:
            best = t
        t += 128
    return best


# ----------------------------------------------------------------------------
# Pallas kernels
# ----------------------------------------------------------------------------
def _matmul_bn_kernel(*refs, relu, has_res):
    """acc += A@W (bf16 in, f32 acc); epilogue: + bias (+ residual), ReLU, store."""
    if has_res:
        a_ref, w_ref, b_ref, r_ref, o_ref, acc_ref = refs
    else:
        a_ref, w_ref, b_ref, o_ref, acc_ref = refs
        r_ref = None

    @pl.when(pl.program_id(2) == 0)
    def _init():
        acc_ref[...] = jnp.zeros_like(acc_ref)

    acc_ref[...] += jnp.dot(a_ref[...], w_ref[...],
                            preferred_element_type=jnp.float32)

    @pl.when(pl.program_id(2) == pl.num_programs(2) - 1)
    def _epilogue():
        acc = acc_ref[...] + b_ref[...]
        if has_res:
            acc = acc + r_ref[...].astype(jnp.float32)
        if relu:
            acc = jnp.maximum(acc, 0.0)
        o_ref[...] = acc.astype(o_ref.dtype)


def _gap_fc_kernel(x_ref, w_ref, b_ref, o_ref, lhs_ref):
    """Fused global-average-pool + Linear.

    x: [N, H*W, C] bf16 ; w: [C, NCLS_PAD] f32 ; b: [1, NCLS_PAD] f32.
    Pooled rows are staged into an (8-aligned, C) f32 scratch so the MXU sees a
    sublane-aligned LHS; extra rows are zero and sliced off by the caller.
    """
    n = x_ref.shape[0]
    lhs_ref[...] = jnp.zeros_like(lhs_ref)
    lhs_ref[0:n, :] = jnp.mean(x_ref[...].astype(jnp.float32), axis=1)
    o_ref[...] = jnp.dot(lhs_ref[...], w_ref[...],
                         preferred_element_type=jnp.float32) + b_ref[...]


# ----------------------------------------------------------------------------
# Kernel wrappers
# ----------------------------------------------------------------------------
def fused_matmul(a, w, bias, residual=None, relu=False, out_dtype=jnp.bfloat16):
    """a: [M, K] bf16, w: [K, N] bf16 (BN scale folded), bias: [1, N] f32,
    residual: [M, N] bf16 or None.  M/N/K tiled with an f32 VMEM accumulator."""
    a = a.astype(jnp.bfloat16)
    w = w.astype(jnp.bfloat16)
    M, K = a.shape
    K2, Nc = w.shape
    assert K == K2

    tm = _pick_m_tile(M)
    tn = _pick_n_tile(Nc)
    tk = _pick_k_tile(K)
    grid = (M // tm, Nc // tn, K // tk)

    has_res = residual is not None
    inputs = [a, w, bias.astype(jnp.float32)]
    in_specs = [
        pl.BlockSpec((tm, tk), lambda i, j, k: (i, k)),
        pl.BlockSpec((tk, tn), lambda i, j, k: (k, j)),
        pl.BlockSpec((1, tn), lambda i, j, k: (0, j)),
    ]
    if has_res:
        inputs.append(residual.astype(jnp.bfloat16))
        in_specs.append(pl.BlockSpec((tm, tn), lambda i, j, k: (i, j)))

    kernel = functools.partial(_matmul_bn_kernel, relu=relu, has_res=has_res)
    return pl.pallas_call(
        kernel,
        out_shape=jax.ShapeDtypeStruct((M, Nc), out_dtype),
        grid=grid,
        in_specs=in_specs,
        out_specs=pl.BlockSpec((tm, tn), lambda i, j, k: (i, j)),
        scratch_shapes=[pltpu.VMEM((tm, tn), jnp.float32)],
        compiler_params=pltpu.CompilerParams(
            dimension_semantics=("parallel", "parallel", "arbitrary"),
            vmem_limit_bytes=32 * 1024 * 1024,
        ),
    )(*inputs)


def gap_fc(x, w, b, num_classes):
    """x: [N, H, W, C_pad] bf16 -> logits [N, num_classes] f32 (pool + FC fused)."""
    N, H, W, C = x.shape
    HW = H * W
    xr = x.reshape(N, HW, C)
    nclsp = w.shape[1]
    m_pad = _round_up(max(N, 8), 8)
    out = pl.pallas_call(
        _gap_fc_kernel,
        out_shape=jax.ShapeDtypeStruct((m_pad, nclsp), jnp.float32),
        grid=(1,),
        in_specs=[pl.BlockSpec((N, HW, C), lambda i: (0, 0, 0)),
                  pl.BlockSpec((C, nclsp), lambda i: (0, 0)),
                  pl.BlockSpec((1, nclsp), lambda i: (0, 0))],
        out_specs=pl.BlockSpec((m_pad, nclsp), lambda i: (0, 0)),
        scratch_shapes=[pltpu.VMEM((m_pad, C), jnp.float32)],
    )(xr, w, b)
    return out[:N, :num_classes]


# ----------------------------------------------------------------------------
# Conv glue (im2col in bf16; matmul + BN + residual + ReLU in Pallas)
# ----------------------------------------------------------------------------
def _im2col_3x3(x, stride):
    """x: [N, H, W, C] bf16, pad=1, kernel=3 -> ([N*Ho*Wo, 9*C] bf16, (N,Ho,Wo))."""
    N, H, W, C = x.shape
    Ho = (H + 2 - 3) // stride + 1
    Wo = (W + 2 - 3) // stride + 1
    xp = jnp.pad(x, ((0, 0), (1, 1), (1, 1), (0, 0)))
    cols = [xp[:, kh:kh + stride * Ho:stride, kw:kw + stride * Wo:stride, :]
            for kh in range(3) for kw in range(3)]           # feature order (kh,kw,cin)
    patches = jnp.concatenate(cols, axis=-1)
    return patches.reshape(N * Ho * Wo, 9 * C), (N, Ho, Wo)


def conv_bn(x, w_mat, bias, ksize, stride=1, relu=True, residual=None):
    """x: [N,H,W,Cin_pad] bf16; w_mat: [K, Cout_pad] bf16 (scale folded); bias: [1,Cout_pad] f32."""
    if ksize == 3:
        a, (N, Ho, Wo) = _im2col_3x3(x, stride)
    else:
        xs = x[:, ::stride, ::stride, :] if stride > 1 else x
        N, Ho, Wo, C = xs.shape
        a = xs.reshape(N * Ho * Wo, C)
    cout = w_mat.shape[1]
    res = residual.reshape(N * Ho * Wo, cout) if residual is not None else None
    out = fused_matmul(a, w_mat, bias, residual=res, relu=relu)
    return out.reshape(N, Ho, Wo, cout)


# ----------------------------------------------------------------------------
# Parameter construction (mirrors the PyTorch __init__ shapes / init)
# ----------------------------------------------------------------------------
def _kaiming_conv(key, cout, cin, kh, kw):
    fan_out = cout * kh * kw
    std = (2.0 / fan_out) ** 0.5
    return std * jax.random.normal(key, (cout, cin, kh, kw), dtype=jnp.float32)


def _fold_bn(c, eps=1e-5):
    gamma = jnp.ones((c,), jnp.float32)
    beta = jnp.zeros((c,), jnp.float32)
    mean = jnp.zeros((c,), jnp.float32)
    var = jnp.ones((c,), jnp.float32)
    scale = gamma / jnp.sqrt(var + eps)
    bias = beta - mean * scale
    return scale, bias


def _prep_conv(w, bn, cin_pad, cout_pad):
    """PyTorch weight [Cout,Cin,KH,KW] -> matmul weight [(kh,kw,cin_pad), cout_pad]
    (bf16, BN scale folded) and bias [1, cout_pad] (f32)."""
    cout, cin, KH, KW = w.shape
    scale, bias = bn
    wt = jnp.transpose(w, (2, 3, 1, 0)) * scale.reshape(1, 1, 1, cout)
    wt = jnp.pad(wt, ((0, 0), (0, 0), (0, cin_pad - cin), (0, cout_pad - cout)))
    wm = wt.reshape(KH * KW * cin_pad, cout_pad).astype(jnp.bfloat16)
    bm = jnp.pad(bias, (0, cout_pad - cout)).reshape(1, cout_pad).astype(jnp.float32)
    return wm, bm


def _build_basic_block(key, inplanes, planes, stride):
    k1, k2, k3 = jax.random.split(key, 3)
    cin_p, cpl_p = _pad_ch(inplanes), _pad_ch(planes)
    p = dict(type="basic", stride=stride)
    p["conv1"] = _prep_conv(_kaiming_conv(k1, planes, inplanes, 3, 3),
                            _fold_bn(planes), cin_p, cpl_p)
    p["conv2"] = _prep_conv(_kaiming_conv(k2, planes, planes, 3, 3),
                            _fold_bn(planes), cpl_p, cpl_p)
    if stride != 1 or inplanes != planes:
        wd, bd = _prep_conv(_kaiming_conv(k3, planes, inplanes, 1, 1),
                            _fold_bn(planes), cin_p, cpl_p)
        p["downsample"] = dict(w=wd, b=bd, stride=stride)
    else:
        p["downsample"] = None
    return p, planes


def _build_bottleneck_block(key, inplanes, planes, stride):
    k1, k2, k3, k4 = jax.random.split(key, 4)
    expansion = 4
    cin_p, cpl_p, cout_p = _pad_ch(inplanes), _pad_ch(planes), _pad_ch(planes * expansion)
    p = dict(type="bottleneck", stride=stride)
    p["conv1"] = _prep_conv(_kaiming_conv(k1, planes, inplanes, 1, 1),
                            _fold_bn(planes), cin_p, cpl_p)
    p["conv2"] = _prep_conv(_kaiming_conv(k2, planes, planes, 3, 3),
                            _fold_bn(planes), cpl_p, cpl_p)
    p["conv3"] = _prep_conv(_kaiming_conv(k3, planes * expansion, planes, 1, 1),
                            _fold_bn(planes * expansion), cpl_p, cout_p)
    if stride != 1 or inplanes != planes * expansion:
        wd, bd = _prep_conv(_kaiming_conv(k4, planes * expansion, inplanes, 1, 1),
                            _fold_bn(planes * expansion), cin_p, cout_p)
        p["downsample"] = dict(w=wd, b=bd, stride=stride)
    else:
        p["downsample"] = None
    return p, planes * expansion


def build_resnet_params(key, block, layers, num_classes, large_input, width):
    assert not large_input, "only the small-input embed path is implemented"
    n_blocks = sum(d for d, _, _ in layers)
    keys = jax.random.split(key, n_blocks + 3)
    ki = iter(keys)

    inplanes = width
    wm, bm = _prep_conv(_kaiming_conv(next(ki), inplanes, 3, 3, 3),
                        _fold_bn(inplanes), IN_CH_PAD, _pad_ch(inplanes))
    params = {"embed": dict(w=wm, b=bm)}

    blocks = []
    for depth, stride, multiplier in layers:
        planes = width * multiplier
        for b in range(depth):
            s = stride if b == 0 else 1
            if block == "basic":
                p, inplanes = _build_basic_block(next(ki), inplanes, planes, s)
            else:
                p, inplanes = _build_bottleneck_block(next(ki), inplanes, planes, s)
            blocks.append(p)
    params["blocks"] = blocks

    c_p, ncls_p = _pad_ch(inplanes), _pad_ch(num_classes)
    bound = 1.0 / (inplanes ** 0.5)
    kfw, kfb = next(ki), next(ki)
    fw = jax.random.uniform(kfw, (num_classes, inplanes), jnp.float32, -bound, bound)
    fb = jax.random.uniform(kfb, (num_classes,), jnp.float32, -bound, bound)
    wfc = jnp.zeros((c_p, ncls_p), jnp.float32).at[:inplanes, :num_classes].set(fw.T)
    bfc = jnp.zeros((1, ncls_p), jnp.float32).at[0, :num_classes].set(fb)
    params["fc"] = dict(w=wfc, b=bfc)
    params["num_classes"] = num_classes
    return params


# ----------------------------------------------------------------------------
# Forward pass
# ----------------------------------------------------------------------------
def _basic_block_forward(x, p):
    identity = x
    if p["downsample"] is not None:
        ds = p["downsample"]
        identity = conv_bn(x, ds["w"], ds["b"], ksize=1, stride=ds["stride"], relu=False)
    w1, b1 = p["conv1"]
    w2, b2 = p["conv2"]
    out = conv_bn(x, w1, b1, ksize=3, stride=p["stride"], relu=True)
    out = conv_bn(out, w2, b2, ksize=3, stride=1, relu=True, residual=identity)
    return out


def _bottleneck_forward(x, p):
    identity = x
    if p["downsample"] is not None:
        ds = p["downsample"]
        identity = conv_bn(x, ds["w"], ds["b"], ksize=1, stride=ds["stride"], relu=False)
    w1, b1 = p["conv1"]
    w2, b2 = p["conv2"]
    w3, b3 = p["conv3"]
    out = conv_bn(x, w1, b1, ksize=1, stride=1, relu=True)
    out = conv_bn(out, w2, b2, ksize=3, stride=p["stride"], relu=True)
    out = conv_bn(out, w3, b3, ksize=1, stride=1, relu=True, residual=identity)
    return out


def resnet_forward(params, x_nchw):
    # x_nchw: [N, 3, H, W] (PyTorch convention); internally NHWC bf16, channels padded.
    x = jnp.transpose(x_nchw, (0, 2, 3, 1)).astype(jnp.bfloat16)
    x = jnp.pad(x, ((0, 0), (0, 0), (0, 0), (0, IN_CH_PAD - x.shape[-1])))

    e = params["embed"]
    x = conv_bn(x, e["w"], e["b"], ksize=3, stride=1, relu=True)

    for p in params["blocks"]:
        x = _basic_block_forward(x, p) if p["type"] == "basic" else _bottleneck_forward(x, p)

    fc = params["fc"]
    return gap_fc(x, fc["w"], fc["b"], params["num_classes"])   # [N, num_classes]


# ----------------------------------------------------------------------------
# Main
# ----------------------------------------------------------------------------
if __name__ == "__main__":
    key = jax.random.PRNGKey(0)
    k_x, k_p = jax.random.split(key)

    # Small ResNet: BasicBlock, layers=[(depth, stride, multiplier)], width=8.
    layers = [(2, 1, 1), (2, 2, 2)]
    num_classes = 10
    width = 8

    params = build_resnet_params(k_p, block="basic", layers=layers,
                                 num_classes=num_classes, large_input=False, width=width)

    x = jax.random.normal(k_x, (2, 3, 16, 16), dtype=jnp.float32)  # NCHW input
    fwd = jax.jit(functools.partial(resnet_forward, params))
    out = jax.block_until_ready(fwd(x))

    assert out.shape == (2, num_classes)
    assert bool(jnp.all(jnp.isfinite(out)))
    print("KERNEL_OK")
</pallas_src>

<mosaic_0001>
module attributes {stable_mosaic.version = 11 : i64} {
  func.func @_matmul_bn_kernel(%arg0: i32, %arg1: i32, %arg2: i32, %arg3: memref<256x72xbf16, #tpu.memory_space<vmem>>, %arg4: memref<72x128xbf16, #tpu.memory_space<vmem>>, %arg5: memref<1x128xf32, #tpu.memory_space<vmem>>, %arg6: memref<256x128xbf16, #tpu.memory_space<vmem>>, %arg7: memref<256x128xf32, #tpu.memory_space<vmem>>) attributes {dimension_semantics = [#tpu.dimension_semantics<parallel>, #tpu.dimension_semantics<parallel>, #tpu.dimension_semantics<arbitrary>], iteration_bounds = array<i64: 2, 1, 1>, scalar_prefetch = 0 : i64, scratch_operands = 1 : i64, tpu.core_type = #tpu.core_type<tc>, window_params = [{transform_indices = @transform_0, window_bounds = array<i64: 256, 72>}, {transform_indices = @transform_1, window_bounds = array<i64: 72, 128>}, {transform_indices = @transform_2, window_bounds = array<i64: 1, 128>}, {transform_indices = @transform_3, window_bounds = array<i64: 256, 128>}]} {
    %c0_i32 = arith.constant 0 : i32
    %0 = arith.cmpi eq, %arg2, %c0_i32 : i32
    %1 = arith.extui %0 : i1 to i32
    %c0_i32_0 = arith.constant 0 : i32
    %2 = arith.cmpi ne, %1, %c0_i32_0 : i32
    scf.if %2 {
      %cst_10 = arith.constant 0.000000e+00 : f32
      %12 = vector.broadcast %cst_10 : f32 to vector<256x128xf32>
      %c0_11 = arith.constant 0 : index
      %c0_12 = arith.constant 0 : index
      %13 = vector.load %arg7[%c0_11, %c0_12] : memref<256x128xf32, #tpu.memory_space<vmem>>, vector<256x128xf32>
      tpu.vector_store %arg7[%c0_11, %c0_12], %12 {strides = array<i32>} : memref<256x128xf32, #tpu.memory_space<vmem>>, vector<256x128xf32>,
    } else {
    }
    %c0 = arith.constant 0 : index
    %c0_1 = arith.constant 0 : index
    %3 = vector.load %arg7[%c0, %c0_1] : memref<256x128xf32, #tpu.memory_space<vmem>>, vector<256x128xf32>
    %c0_2 = arith.constant 0 : index
    %c0_3 = arith.constant 0 : index
    %4 = vector.load %arg3[%c0_2, %c0_3] : memref<256x72xbf16, #tpu.memory_space<vmem>>, vector<256x72xbf16>
    %c0_4 = arith.constant 0 : index
    %c0_5 = arith.constant 0 : index
    %5 = vector.load %arg4[%c0_4, %c0_5] : memref<72x128xbf16, #tpu.memory_space<vmem>>, vector<72x128xbf16>
    %cst = arith.constant dense<0.000000e+00> : vector<256x128xf32>
    %6 = tpu.matmul %4, %5, %cst {dimension_numbers = #tpu.dot_dimension_numbers<[1], [0], [0], [1], [0, 0, 1, 1], [], []>} : vector<256x72xbf16>, vector<72x128xbf16>, vector<256x128xf32> -> vector<256x128xf32>
    %7 = arith.addf %3, %6 : vector<256x128xf32>
    %c0_6 = arith.constant 0 : index
    %c0_7 = arith.constant 0 : index
    %8 = vector.load %arg7[%c0_6, %c0_7] : memref<256x128xf32, #tpu.memory_space<vmem>>, vector<256x128xf32>
    tpu.vector_store %arg7[%c0_6, %c0_7], %7 {strides = array<i32>} : memref<256x128xf32, #tpu.memory_space<vmem>>, vector<256x128xf32>,
    %c0_i32_8 = arith.constant 0 : i32
    %9 = arith.cmpi eq, %arg2, %c0_i32_8 : i32
    %10 = arith.extui %9 : i1 to i32
    %c0_i32_9 = arith.constant 0 : i32
    %11 = arith.cmpi ne, %10, %c0_i32_9 : i32
    scf.if %11 {
      %c0_10 = arith.constant 0 : index
      %c0_11 = arith.constant 0 : index
      %12 = vector.load %arg7[%c0_10, %c0_11] : memref<256x128xf32, #tpu.memory_space<vmem>>, vector<256x128xf32>
      %c0_12 = arith.constant 0 : index
      %c0_13 = arith.constant 0 : index
      %13 = vector.load %arg5[%c0_12, %c0_13] : memref<1x128xf32, #tpu.memory_space<vmem>>, vector<1x128xf32>
      %14 = vector.broadcast %13 : vector<1x128xf32> to vector<256x128xf32>
      %15 = arith.addf %12, %14 : vector<256x128xf32>
      %cst_14 = arith.constant 0.000000e+00 : f32
      %16 = vector.broadcast %cst_14 : f32 to vector<256x128xf32>
      %17 = arith.maximumf %15, %16 : vector<256x128xf32>
      %18 = arith.truncf %17 : vector<256x128xf32> to vector<256x128xbf16>
      %c0_15 = arith.constant 0 : index
      %c0_16 = arith.constant 0 : index
      %19 = vector.load %arg6[%c0_15, %c0_16] : memref<256x128xbf16, #tpu.memory_space<vmem>>, vector<256x128xbf16>
      tpu.vector_store %arg6[%c0_15, %c0_16], %18 {strides = array<i32>} : memref<256x128xbf16, #tpu.memory_space<vmem>>, vector<256x128xbf16>,
    } else {
    }
    return
  }
  func.func @transform_0(%arg0: i32, %arg1: i32, %arg2: i32) -> (i32, i32) {
    %c0_i32 = arith.constant 0 : i32
    return %arg0, %arg2 : i32, i32
  }
  func.func @transform_1(%arg0: i32, %arg1: i32, %arg2: i32) -> (i32, i32) {
    %c0_i32 = arith.constant 0 : i32
    return %arg2, %arg1 : i32, i32
  }
  func.func @transform_2(%arg0: i32, %arg1: i32, %arg2: i32) -> (i32, i32) {
    %c0_i32 = arith.constant 0 : i32
    %c0_i32_0 = arith.constant 0 : i32
    return %c0_i32, %arg1 : i32, i32
  }
  func.func @transform_3(%arg0: i32, %arg1: i32, %arg2: i32) -> (i32, i32) {
    %c0_i32 = arith.constant 0 : i32
    return %arg0, %arg1 : i32, i32
  }
}

module attributes {stable_mosaic.version = 11 : i64} {
  func.func @_matmul_bn_kernel(%arg0: i32, %arg1: i32, %arg2: i32, %arg3: memref<256x1152xbf16, #tpu.memory_space<vmem>>, %arg4: memref<1152x128xbf16, #tpu.memory_space<vmem>>, %arg5: memref<1x128xf32, #tpu.memory_space<vmem>>, %arg6: memref<256x128xbf16, #tpu.memory_space<vmem>>, %arg7: memref<256x128xf32, #tpu.memory_space<vmem>>) attributes {dimension_semantics = [#tpu.dimension_semantics<parallel>, #tpu.dimension_semantics<parallel>, #tpu.dimension_semantics<arbitrary>], iteration_bounds = array<i64: 2, 1, 1>, scalar_prefetch = 0 : i64, scratch_operands = 1 : i64, tpu.core_type = #tpu.core_type<tc>, window_params = [{transform_indices = @transform_0, window_bounds = array<i64: 256, 1152>}, {transform_indices = @transform_1, window_bounds = array<i64: 1152, 128>}, {transform_indices = @transform_2, window_bounds = array<i64: 1, 128>}, {transform_indices = @transform_3, window_bounds = array<i64: 256, 128>}]} {
    %c0_i32 = arith.constant 0 : i32
    %0 = arith.cmpi eq, %arg2, %c0_i32 : i32
    %1 = arith.extui %0 : i1 to i32
    %c0_i32_0 = arith.constant 0 : i32
    %2 = arith.cmpi ne, %1, %c0_i32_0 : i32
    scf.if %2 {
      %cst_10 = arith.constant 0.000000e+00 : f32
      %12 = vector.broadcast %cst_10 : f32 to vector<256x128xf32>
      %c0_11 = arith.constant 0 : index
      %c0_12 = arith.constant 0 : index
      %13 = vector.load %arg7[%c0_11, %c0_12] : memref<256x128xf32, #tpu.memory_space<vmem>>, vector<256x128xf32>
      tpu.vector_store %arg7[%c0_11, %c0_12], %12 {strides = array<i32>} : memref<256x128xf32, #tpu.memory_space<vmem>>, vector<256x128xf32>,
    } else {
    }
    %c0 = arith.constant 0 : index
    %c0_1 = arith.constant 0 : index
    %3 = vector.load %arg7[%c0, %c0_1] : memref<256x128xf32, #tpu.memory_space<vmem>>, vector<256x128xf32>
    %c0_2 = arith.constant 0 : index
    %c0_3 = arith.constant 0 : index
    %4 = vector.load %arg3[%c0_2, %c0_3] : memref<256x1152xbf16, #tpu.memory_space<vmem>>, vector<256x1152xbf16>
    %c0_4 = arith.constant 0 : index
    %c0_5 = arith.constant 0 : index
    %5 = vector.load %arg4[%c0_4, %c0_5] : memref<1152x128xbf16, #tpu.memory_space<vmem>>, vector<1152x128xbf16>
    %cst = arith.constant dense<0.000000e+00> : vector<256x128xf32>
    %6 = tpu.matmul %4, %5, %cst {dimension_numbers = #tpu.dot_dimension_numbers<[1], [0], [0], [1], [0, 0, 1, 1], [], []>} : vector<256x1152xbf16>, vector<1152x128xbf16>, vector<256x128xf32> -> vector<256x128xf32>
    %7 = arith.addf %3, %6 : vector<256x128xf32>
    %c0_6 = arith.constant 0 : index
    %c0_7 = arith.constant 0 : index
    %8 = vector.load %arg7[%c0_6, %c0_7] : memref<256x128xf32, #tpu.memory_space<vmem>>, vector<256x128xf32>
    tpu.vector_store %arg7[%c0_6, %c0_7], %7 {strides = array<i32>} : memref<256x128xf32, #tpu.memory_space<vmem>>, vector<256x128xf32>,
    %c0_i32_8 = arith.constant 0 : i32
    %9 = arith.cmpi eq, %arg2, %c0_i32_8 : i32
    %10 = arith.extui %9 : i1 to i32
    %c0_i32_9 = arith.constant 0 : i32
    %11 = arith.cmpi ne, %10, %c0_i32_9 : i32
    scf.if %11 {
      %c0_10 = arith.constant 0 : index
      %c0_11 = arith.constant 0 : index
      %12 = vector.load %arg7[%c0_10, %c0_11] : memref<256x128xf32, #tpu.memory_space<vmem>>, vector<256x128xf32>
      %c0_12 = arith.constant 0 : index
      %c0_13 = arith.constant 0 : index
      %13 = vector.load %arg5[%c0_12, %c0_13] : memref<1x128xf32, #tpu.memory_space<vmem>>, vector<1x128xf32>
      %14 = vector.broadcast %13 : vector<1x128xf32> to vector<256x128xf32>
      %15 = arith.addf %12, %14 : vector<256x128xf32>
      %cst_14 = arith.constant 0.000000e+00 : f32
      %16 = vector.broadcast %cst_14 : f32 to vector<256x128xf32>
      %17 = arith.maximumf %15, %16 : vector<256x128xf32>
      %18 = arith.truncf %17 : vector<256x128xf32> to vector<256x128xbf16>
      %c0_15 = arith.constant 0 : index
      %c0_16 = arith.constant 0 : index
      %19 = vector.load %arg6[%c0_15, %c0_16] : memref<256x128xbf16, #tpu.memory_space<vmem>>, vector<256x128xbf16>
      tpu.vector_store %arg6[%c0_15, %c0_16], %18 {strides = array<i32>} : memref<256x128xbf16, #tpu.memory_space<vmem>>, vector<256x128xbf16>,
    } else {
    }
    return
  }
  func.func @transform_0(%arg0: i32, %arg1: i32, %arg2: i32) -> (i32, i32) {
    %c0_i32 = arith.constant 0 : i32
    return %arg0, %arg2 : i32, i32
  }
  func.func @transform_1(%arg0: i32, %arg1: i32, %arg2: i32) -> (i32, i32) {
    %c0_i32 = arith.constant 0 : i32
    return %arg2, %arg1 : i32, i32
  }
  func.func @transform_2(%arg0: i32, %arg1: i32, %arg2: i32) -> (i32, i32) {
    %c0_i32 = arith.constant 0 : i32
    %c0_i32_0 = arith.constant 0 : i32
    return %c0_i32, %arg1 : i32, i32
  }
  func.func @transform_3(%arg0: i32, %arg1: i32, %arg2: i32) -> (i32, i32) {
    %c0_i32 = arith.constant 0 : i32
    return %arg0, %arg1 : i32, i32
  }
}

module attributes {stable_mosaic.version = 11 : i64} {
  func.func @_matmul_bn_kernel(%arg0: i32, %arg1: i32, %arg2: i32, %arg3: memref<256x1152xbf16, #tpu.memory_space<vmem>>, %arg4: memref<1152x128xbf16, #tpu.memory_space<vmem>>, %arg5: memref<1x128xf32, #tpu.memory_space<vmem>>, %arg6: memref<256x128xbf16, #tpu.memory_space<vmem>>, %arg7: memref<256x128xbf16, #tpu.memory_space<vmem>>, %arg8: memref<256x128xf32, #tpu.memory_space<vmem>>) attributes {dimension_semantics = [#tpu.dimension_semantics<parallel>, #tpu.dimension_semantics<parallel>, #tpu.dimension_semantics<arbitrary>], iteration_bounds = array<i64: 2, 1, 1>, scalar_prefetch = 0 : i64, scratch_operands = 1 : i64, tpu.core_type = #tpu.core_type<tc>, window_params = [{transform_indices = @transform_0, window_bounds = array<i64: 256, 1152>}, {transform_indices = @transform_1, window_bounds = array<i64: 1152, 128>}, {transform_indices = @transform_2, window_bounds = array<i64: 1, 128>}, {transform_indices = @transform_3, window_bounds = array<i64: 256, 128>}, {transform_indices = @transform_4, window_bounds = array<i64: 256, 128>}]} {
    %c0_i32 = arith.constant 0 : i32
    %0 = arith.cmpi eq, %arg2, %c0_i32 : i32
    %1 = arith.extui %0 : i1 to i32
    %c0_i32_0 = arith.constant 0 : i32
    %2 = arith.cmpi ne, %1, %c0_i32_0 : i32
    scf.if %2 {
      %cst_10 = arith.constant 0.000000e+00 : f32
      %12 = vector.broadcast %cst_10 : f32 to vector<256x128xf32>
      %c0_11 = arith.constant 0 : index
      %c0_12 = arith.constant 0 : index
      %13 = vector.load %arg8[%c0_11, %c0_12] : memref<256x128xf32, #tpu.memory_space<vmem>>, vector<256x128xf32>
      tpu.vector_store %arg8[%c0_11, %c0_12], %12 {strides = array<i32>} : memref<256x128xf32, #tpu.memory_space<vmem>>, vector<256x128xf32>,
    } else {
    }
    %c0 = arith.constant 0 : index
    %c0_1 = arith.constant 0 : index
    %3 = vector.load %arg8[%c0, %c0_1] : memref<256x128xf32, #tpu.memory_space<vmem>>, vector<256x128xf32>
    %c0_2 = arith.constant 0 : index
    %c0_3 = arith.constant 0 : index
    %4 = vector.load %arg3[%c0_2, %c0_3] : memref<256x1152xbf16, #tpu.memory_space<vmem>>, vector<256x1152xbf16>
    %c0_4 = arith.constant 0 : index
    %c0_5 = arith.constant 0 : index
    %5 = vector.load %arg4[%c0_4, %c0_5] : memref<1152x128xbf16, #tpu.memory_space<vmem>>, vector<1152x128xbf16>
    %cst = arith.constant dense<0.000000e+00> : vector<256x128xf32>
    %6 = tpu.matmul %4, %5, %cst {dimension_numbers = #tpu.dot_dimension_numbers<[1], [0], [0], [1], [0, 0, 1, 1], [], []>} : vector<256x1152xbf16>, vector<1152x128xbf16>, vector<256x128xf32> -> vector<256x128xf32>
    %7 = arith.addf %3, %6 : vector<256x128xf32>
    %c0_6 = arith.constant 0 : index
    %c0_7 = arith.constant 0 : index
    %8 = vector.load %arg8[%c0_6, %c0_7] : memref<256x128xf32, #tpu.memory_space<vmem>>, vector<256x128xf32>
    tpu.vector_store %arg8[%c0_6, %c0_7], %7 {strides = array<i32>} : memref<256x128xf32, #tpu.memory_space<vmem>>, vector<256x128xf32>,
    %c0_i32_8 = arith.constant 0 : i32
    %9 = arith.cmpi eq, %arg2, %c0_i32_8 : i32
    %10 = arith.extui %9 : i1 to i32
    %c0_i32_9 = arith.constant 0 : i32
    %11 = arith.cmpi ne, %10, %c0_i32_9 : i32
    scf.if %11 {
      %c0_10 = arith.constant 0 : index
      %c0_11 = arith.constant 0 : index
      %12 = vector.load %arg8[%c0_10, %c0_11] : memref<256x128xf32, #tpu.memory_space<vmem>>, vector<256x128xf32>
      %c0_12 = arith.constant 0 : index
      %c0_13 = arith.constant 0 : index
      %13 = vector.load %arg5[%c0_12, %c0_13] : memref<1x128xf32, #tpu.memory_space<vmem>>, vector<1x128xf32>
      %14 = vector.broadcast %13 : vector<1x128xf32> to vector<256x128xf32>
      %15 = arith.addf %12, %14 : vector<256x128xf32>
      %c0_14 = arith.constant 0 : index
      %c0_15 = arith.constant 0 : index
      %16 = vector.load %arg6[%c0_14, %c0_15] : memref<256x128xbf16, #tpu.memory_space<vmem>>, vector<256x128xbf16>
      %17 = arith.extf %16 : vector<256x128xbf16> to vector<256x128xf32>
      %18 = arith.addf %15, %17 : vector<256x128xf32>
      %cst_16 = arith.constant 0.000000e+00 : f32
      %19 = vector.broadcast %cst_16 : f32 to vector<256x128xf32>
      %20 = arith.maximumf %18, %19 : vector<256x128xf32>
      %21 = arith.truncf %20 : vector<256x128xf32> to vector<256x128xbf16>
      %c0_17 = arith.constant 0 : index
      %c0_18 = arith.constant 0 : index
      %22 = vector.load %arg7[%c0_17, %c0_18] : memref<256x128xbf16, #tpu.memory_space<vmem>>, vector<256x128xbf16>
      tpu.vector_store %arg7[%c0_17, %c0_18], %21 {strides = array<i32>} : memref<256x128xbf16, #tpu.memory_space<vmem>>, vector<256x128xbf16>,
    } else {
    }
    return
  }
  func.func @transform_0(%arg0: i32, %arg1: i32, %arg2: i32) -> (i32, i32) {
    %c0_i32 = arith.constant 0 : i32
    return %arg0, %arg2 : i32, i32
  }
  func.func @transform_1(%arg0: i32, %arg1: i32, %arg2: i32) -> (i32, i32) {
    %c0_i32 = arith.constant 0 : i32
    return %arg2, %arg1 : i32, i32
  }
  func.func @transform_2(%arg0: i32, %arg1: i32, %arg2: i32) -> (i32, i32) {
    %c0_i32 = arith.constant 0 : i32
    %c0_i32_0 = arith.constant 0 : i32
    return %c0_i32, %arg1 : i32, i32
  }
  func.func @transform_3(%arg0: i32, %arg1: i32, %arg2: i32) -> (i32, i32) {
    %c0_i32 = arith.constant 0 : i32
    return %arg0, %arg1 : i32, i32
  }
  func.func @transform_4(%arg0: i32, %arg1: i32, %arg2: i32) -> (i32, i32) {
    %c0_i32 = arith.constant 0 : i32
    return %arg0, %arg1 : i32, i32
  }
}

module attributes {stable_mosaic.version = 11 : i64} {
  func.func @_matmul_bn_kernel(%arg0: i32, %arg1: i32, %arg2: i32, %arg3: memref<64x128xbf16, #tpu.memory_space<vmem>>, %arg4: memref<128x128xbf16, #tpu.memory_space<vmem>>, %arg5: memref<1x128xf32, #tpu.memory_space<vmem>>, %arg6: memref<64x128xbf16, #tpu.memory_space<vmem>>, %arg7: memref<64x128xf32, #tpu.memory_space<vmem>>) attributes {dimension_semantics = [#tpu.dimension_semantics<parallel>, #tpu.dimension_semantics<parallel>, #tpu.dimension_semantics<arbitrary>], iteration_bounds = array<i64: 2, 1, 1>, scalar_prefetch = 0 : i64, scratch_operands = 1 : i64, tpu.core_type = #tpu.core_type<tc>, window_params = [{transform_indices = @transform_0, window_bounds = array<i64: 64, 128>}, {transform_indices = @transform_1, window_bounds = array<i64: 128, 128>}, {transform_indices = @transform_2, window_bounds = array<i64: 1, 128>}, {transform_indices = @transform_3, window_bounds = array<i64: 64, 128>}]} {
    %c0_i32 = arith.constant 0 : i32
    %0 = arith.cmpi eq, %arg2, %c0_i32 : i32
    %1 = arith.extui %0 : i1 to i32
    %c0_i32_0 = arith.constant 0 : i32
    %2 = arith.cmpi ne, %1, %c0_i32_0 : i32
    scf.if %2 {
      %cst_10 = arith.constant 0.000000e+00 : f32
      %12 = vector.broadcast %cst_10 : f32 to vector<64x128xf32>
      %c0_11 = arith.constant 0 : index
      %c0_12 = arith.constant 0 : index
      %13 = vector.load %arg7[%c0_11, %c0_12] : memref<64x128xf32, #tpu.memory_space<vmem>>, vector<64x128xf32>
      tpu.vector_store %arg7[%c0_11, %c0_12], %12 {strides = array<i32>} : memref<64x128xf32, #tpu.memory_space<vmem>>, vector<64x128xf32>,
    } else {
    }
    %c0 = arith.constant 0 : index
    %c0_1 = arith.constant 0 : index
    %3 = vector.load %arg7[%c0, %c0_1] : memref<64x128xf32, #tpu.memory_space<vmem>>, vector<64x128xf32>
    %c0_2 = arith.constant 0 : index
    %c0_3 = arith.constant 0 : index
    %4 = vector.load %arg3[%c0_2, %c0_3] : memref<64x128xbf16, #tpu.memory_space<vmem>>, vector<64x128xbf16>
    %c0_4 = arith.constant 0 : index
    %c0_5 = arith.constant 0 : index
    %5 = vector.load %arg4[%c0_4, %c0_5] : memref<128x128xbf16, #tpu.memory_space<vmem>>, vector<128x128xbf16>
    %cst = arith.constant dense<0.000000e+00> : vector<64x128xf32>
    %6 = tpu.matmul %4, %5, %cst {dimension_numbers = #tpu.dot_dimension_numbers<[1], [0], [0], [1], [0, 0, 1, 1], [], []>} : vector<64x128xbf16>, vector<128x128xbf16>, vector<64x128xf32> -> vector<64x128xf32>
    %7 = arith.addf %3, %6 : vector<64x128xf32>
    %c0_6 = arith.constant 0 : index
    %c0_7 = arith.constant 0 : index
    %8 = vector.load %arg7[%c0_6, %c0_7] : memref<64x128xf32, #tpu.memory_space<vmem>>, vector<64x128xf32>
    tpu.vector_store %arg7[%c0_6, %c0_7], %7 {strides = array<i32>} : memref<64x128xf32, #tpu.memory_space<vmem>>, vector<64x128xf32>,
    %c0_i32_8 = arith.constant 0 : i32
    %9 = arith.cmpi eq, %arg2, %c0_i32_8 : i32
    %10 = arith.extui %9 : i1 to i32
    %c0_i32_9 = arith.constant 0 : i32
    %11 = arith.cmpi ne, %10, %c0_i32_9 : i32
    scf.if %11 {
      %c0_10 = arith.constant 0 : index
      %c0_11 = arith.constant 0 : index
      %12 = vector.load %arg7[%c0_10, %c0_11] : memref<64x128xf32, #tpu.memory_space<vmem>>, vector<64x128xf32>
      %c0_12 = arith.constant 0 : index
      %c0_13 = arith.constant 0 : index
      %13 = vector.load %arg5[%c0_12, %c0_13] : memref<1x128xf32, #tpu.memory_space<vmem>>, vector<1x128xf32>
      %14 = vector.broadcast %13 : vector<1x128xf32> to vector<64x128xf32>
      %15 = arith.addf %12, %14 : vector<64x128xf32>
      %16 = arith.truncf %15 : vector<64x128xf32> to vector<64x128xbf16>
      %c0_14 = arith.constant 0 : index
      %c0_15 = arith.constant 0 : index
      %17 = vector.load %arg6[%c0_14, %c0_15] : memref<64x128xbf16, #tpu.memory_space<vmem>>, vector<64x128xbf16>
      tpu.vector_store %arg6[%c0_14, %c0_15], %16 {strides = array<i32>} : memref<64x128xbf16, #tpu.memory_space<vmem>>, vector<64x128xbf16>,
    } else {
    }
    return
  }
  func.func @transform_0(%arg0: i32, %arg1: i32, %arg2: i32) -> (i32, i32) {
    %c0_i32 = arith.constant 0 : i32
    return %arg0, %arg2 : i32, i32
  }
  func.func @transform_1(%arg0: i32, %arg1: i32, %arg2: i32) -> (i32, i32) {
    %c0_i32 = arith.constant 0 : i32
    return %arg2, %arg1 : i32, i32
  }
  func.func @transform_2(%arg0: i32, %arg1: i32, %arg2: i32) -> (i32, i32) {
    %c0_i32 = arith.constant 0 : i32
    %c0_i32_0 = arith.constant 0 : i32
    return %c0_i32, %arg1 : i32, i32
  }
  func.func @transform_3(%arg0: i32, %arg1: i32, %arg2: i32) -> (i32, i32) {
    %c0_i32 = arith.constant 0 : i32
    return %arg0, %arg1 : i32, i32
  }
}

module attributes {stable_mosaic.version = 11 : i64} {
  func.func @_matmul_bn_kernel(%arg0: i32, %arg1: i32, %arg2: i32, %arg3: memref<64x1152xbf16, #tpu.memory_space<vmem>>, %arg4: memref<1152x128xbf16, #tpu.memory_space<vmem>>, %arg5: memref<1x128xf32, #tpu.memory_space<vmem>>, %arg6: memref<64x128xbf16, #tpu.memory_space<vmem>>, %arg7: memref<64x128xf32, #tpu.memory_space<vmem>>) attributes {dimension_semantics = [#tpu.dimension_semantics<parallel>, #tpu.dimension_semantics<parallel>, #tpu.dimension_semantics<arbitrary>], iteration_bounds = array<i64: 2, 1, 1>, scalar_prefetch = 0 : i64, scratch_operands = 1 : i64, tpu.core_type = #tpu.core_type<tc>, window_params = [{transform_indices = @transform_0, window_bounds = array<i64: 64, 1152>}, {transform_indices = @transform_1, window_bounds = array<i64: 1152, 128>}, {transform_indices = @transform_2, window_bounds = array<i64: 1, 128>}, {transform_indices = @transform_3, window_bounds = array<i64: 64, 128>}]} {
    %c0_i32 = arith.constant 0 : i32
    %0 = arith.cmpi eq, %arg2, %c0_i32 : i32
    %1 = arith.extui %0 : i1 to i32
    %c0_i32_0 = arith.constant 0 : i32
    %2 = arith.cmpi ne, %1, %c0_i32_0 : i32
    scf.if %2 {
      %cst_10 = arith.constant 0.000000e+00 : f32
      %12 = vector.broadcast %cst_10 : f32 to vector<64x128xf32>
      %c0_11 = arith.constant 0 : index
      %c0_12 = arith.constant 0 : index
      %13 = vector.load %arg7[%c0_11, %c0_12] : memref<64x128xf32, #tpu.memory_space<vmem>>, vector<64x128xf32>
      tpu.vector_store %arg7[%c0_11, %c0_12], %12 {strides = array<i32>} : memref<64x128xf32, #tpu.memory_space<vmem>>, vector<64x128xf32>,
    } else {
    }
    %c0 = arith.constant 0 : index
    %c0_1 = arith.constant 0 : index
    %3 = vector.load %arg7[%c0, %c0_1] : memref<64x128xf32, #tpu.memory_space<vmem>>, vector<64x128xf32>
    %c0_2 = arith.constant 0 : index
    %c0_3 = arith.constant 0 : index
    %4 = vector.load %arg3[%c0_2, %c0_3] : memref<64x1152xbf16, #tpu.memory_space<vmem>>, vector<64x1152xbf16>
    %c0_4 = arith.constant 0 : index
    %c0_5 = arith.constant 0 : index
    %5 = vector.load %arg4[%c0_4, %c0_5] : memref<1152x128xbf16, #tpu.memory_space<vmem>>, vector<1152x128xbf16>
    %cst = arith.constant dense<0.000000e+00> : vector<64x128xf32>
    %6 = tpu.matmul %4, %5, %cst {dimension_numbers = #tpu.dot_dimension_numbers<[1], [0], [0], [1], [0, 0, 1, 1], [], []>} : vector<64x1152xbf16>, vector<1152x128xbf16>, vector<64x128xf32> -> vector<64x128xf32>
    %7 = arith.addf %3, %6 : vector<64x128xf32>
    %c0_6 = arith.constant 0 : index
    %c0_7 = arith.constant 0 : index
    %8 = vector.load %arg7[%c0_6, %c0_7] : memref<64x128xf32, #tpu.memory_space<vmem>>, vector<64x128xf32>
    tpu.vector_store %arg7[%c0_6, %c0_7], %7 {strides = array<i32>} : memref<64x128xf32, #tpu.memory_space<vmem>>, vector<64x128xf32>,
    %c0_i32_8 = arith.constant 0 : i32
    %9 = arith.cmpi eq, %arg2, %c0_i32_8 : i32
    %10 = arith.extui %9 : i1 to i32
    %c0_i32_9 = arith.constant 0 : i32
    %11 = arith.cmpi ne, %10, %c0_i32_9 : i32
    scf.if %11 {
      %c0_10 = arith.constant 0 : index
      %c0_11 = arith.constant 0 : index
      %12 = vector.load %arg7[%c0_10, %c0_11] : memref<64x128xf32, #tpu.memory_space<vmem>>, vector<64x128xf32>
      %c0_12 = arith.constant 0 : index
      %c0_13 = arith.constant 0 : index
      %13 = vector.load %arg5[%c0_12, %c0_13] : memref<1x128xf32, #tpu.memory_space<vmem>>, vector<1x128xf32>
      %14 = vector.broadcast %13 : vector<1x128xf32> to vector<64x128xf32>
      %15 = arith.addf %12, %14 : vector<64x128xf32>
      %cst_14 = arith.constant 0.000000e+00 : f32
      %16 = vector.broadcast %cst_14 : f32 to vector<64x128xf32>
      %17 = arith.maximumf %15, %16 : vector<64x128xf32>
      %18 = arith.truncf %17 : vector<64x128xf32> to vector<64x128xbf16>
      %c0_15 = arith.constant 0 : index
      %c0_16 = arith.constant 0 : index
      %19 = vector.load %arg6[%c0_15, %c0_16] : memref<64x128xbf16, #tpu.memory_space<vmem>>, vector<64x128xbf16>
      tpu.vector_store %arg6[%c0_15, %c0_16], %18 {strides = array<i32>} : memref<64x128xbf16, #tpu.memory_space<vmem>>, vector<64x128xbf16>,
    } else {
    }
    return
  }
  func.func @transform_0(%arg0: i32, %arg1: i32, %arg2: i32) -> (i32, i32) {
    %c0_i32 = arith.constant 0 : i32
    return %arg0, %arg2 : i32, i32
  }
  func.func @transform_1(%arg0: i32, %arg1: i32, %arg2: i32) -> (i32, i32) {
    %c0_i32 = arith.constant 0 : i32
    return %arg2, %arg1 : i32, i32
  }
  func.func @transform_2(%arg0: i32, %arg1: i32, %arg2: i32) -> (i32, i32) {
    %c0_i32 = arith.constant 0 : i32
    %c0_i32_0 = arith.constant 0 : i32
    return %c0_i32, %arg1 : i32, i32
  }
  func.func @transform_3(%arg0: i32, %arg1: i32, %arg2: i32) -> (i32, i32) {
    %c0_i32 = arith.constant 0 : i32
    return %arg0, %arg1 : i32, i32
  }
}

module attributes {stable_mosaic.version = 11 : i64} {
  func.func @_gap_fc_kernel(%arg0: i32, %arg1: memref<2x64x128xbf16, #tpu.memory_space<vmem>>, %arg2: memref<128x128xf32, #tpu.memory_space<vmem>>, %arg3: memref<1x128xf32, #tpu.memory_space<vmem>>, %arg4: memref<8x128xf32, #tpu.memory_space<vmem>>, %arg5: memref<8x128xf32, #tpu.memory_space<vmem>>) attributes {dimension_semantics = [#tpu.dimension_semantics<arbitrary>], iteration_bounds = array<i64: 1>, scalar_prefetch = 0 : i64, scratch_operands = 1 : i64, tpu.core_type = #tpu.core_type<tc>, window_params = [{pipeline_mode = #tpu.pipeline_mode<synchronous>, transform_indices = @transform_0, window_bounds = array<i64: 2, 64, 128>}, {pipeline_mode = #tpu.pipeline_mode<synchronous>, transform_indices = @transform_1, window_bounds = array<i64: 128, 128>}, {pipeline_mode = #tpu.pipeline_mode<synchronous>, transform_indices = @transform_2, window_bounds = array<i64: 1, 128>}, {pipeline_mode = #tpu.pipeline_mode<synchronous>, transform_indices = @transform_3, window_bounds = array<i64: 8, 128>}]} {
    %cst = arith.constant 0.000000e+00 : f32
    %0 = vector.broadcast %cst : f32 to vector<8x128xf32>
    %c0 = arith.constant 0 : index
    %c0_0 = arith.constant 0 : index
    %1 = vector.load %arg5[%c0, %c0_0] : memref<8x128xf32, #tpu.memory_space<vmem>>, vector<8x128xf32>
    tpu.vector_store %arg5[%c0, %c0_0], %0 {strides = array<i32>} : memref<8x128xf32, #tpu.memory_space<vmem>>, vector<8x128xf32>,
    %c0_1 = arith.constant 0 : index
    %c0_2 = arith.constant 0 : index
    %c0_3 = arith.constant 0 : index
    %2 = vector.load %arg1[%c0_1, %c0_2, %c0_3] : memref<2x64x128xbf16, #tpu.memory_space<vmem>>, vector<2x64x128xbf16>
    %3 = arith.extf %2 : vector<2x64x128xbf16> to vector<2x64x128xf32>
    %cst_4 = arith.constant dense<0.000000e+00> : vector<2x128xf32>
    %4 = vector.multi_reduction <add>, %3, %cst_4 [1] : vector<2x64x128xf32> to vector<2x128xf32>
    %cst_5 = arith.constant 6.400000e+01 : f32
    %5 = vector.broadcast %cst_5 : f32 to vector<2x128xf32>
    %6 = arith.divf %4, %5 : vector<2x128xf32>
    %c0_6 = arith.constant 0 : index
    %c0_7 = arith.constant 0 : index
    %7 = vector.load %arg5[%c0_6, %c0_7] : memref<8x128xf32, #tpu.memory_space<vmem>>, vector<2x128xf32>
    tpu.vector_store %arg5[%c0_6, %c0_7], %6 {strides = array<i32>} : memref<8x128xf32, #tpu.memory_space<vmem>>, vector<2x128xf32>,
    %c0_8 = arith.constant 0 : index
    %c0_9 = arith.constant 0 : index
    %8 = vector.load %arg5[%c0_8, %c0_9] : memref<8x128xf32, #tpu.memory_space<vmem>>, vector<8x128xf32>
    %c0_10 = arith.constant 0 : index
    %c0_11 = arith.constant 0 : index
    %9 = vector.load %arg2[%c0_10, %c0_11] : memref<128x128xf32, #tpu.memory_space<vmem>>, vector<128x128xf32>
    %cst_12 = arith.constant dense<0.000000e+00> : vector<8x128xf32>
    %10 = tpu.matmul %8, %9, %cst_12 {dimension_numbers = #tpu.dot_dimension_numbers<[1], [0], [0], [1], [0, 0, 1, 1], [], []>} : vector<8x128xf32>, vector<128x128xf32>, vector<8x128xf32> -> vector<8x128xf32>
    %c0_13 = arith.constant 0 : index
    %c0_14 = arith.constant 0 : index
    %11 = vector.load %arg3[%c0_13, %c0_14] : memref<1x128xf32, #tpu.memory_space<vmem>>, vector<1x128xf32>
    %12 = vector.broadcast %11 : vector<1x128xf32> to vector<8x128xf32>
    %13 = arith.addf %10, %12 : vector<8x128xf32>
    %c0_15 = arith.constant 0 : index
    %c0_16 = arith.constant 0 : index
    %14 = vector.load %arg4[%c0_15, %c0_16] : memref<8x128xf32, #tpu.memory_space<vmem>>, vector<8x128xf32>
    tpu.vector_store %arg4[%c0_15, %c0_16], %13 {strides = array<i32>} : memref<8x128xf32, #tpu.memory_space<vmem>>, vector<8x128xf32>,
    return
  }
  func.func @transform_0(%arg0: i32) -> (i32, i32, i32) {
    %c0_i32 = arith.constant 0 : i32
    %c0_i32_0 = arith.constant 0 : i32
    %c0_i32_1 = arith.constant 0 : i32
    %c0_i32_2 = arith.constant 0 : i32
    return %c0_i32, %c0_i32_0, %c0_i32_1 : i32, i32, i32
  }
  func.func @transform_1(%arg0: i32) -> (i32, i32) {
    %c0_i32 = arith.constant 0 : i32
    %c0_i32_0 = arith.constant 0 : i32
    %c0_i32_1 = arith.constant 0 : i32
    return %c0_i32, %c0_i32_0 : i32, i32
  }
  func.func @transform_2(%arg0: i32) -> (i32, i32) {
    %c0_i32 = arith.constant 0 : i32
    %c0_i32_0 = arith.constant 0 : i32
    %c0_i32_1 = arith.constant 0 : i32
    return %c0_i32, %c0_i32_0 : i32, i32
  }
  func.func @transform_3(%arg0: i32) -> (i32, i32) {
    %c0_i32 = arith.constant 0 : i32
    %c0_i32_0 = arith.constant 0 : i32
    %c0_i32_1 = arith.constant 0 : i32
    return %c0_i32, %c0_i32_0 : i32, i32
  }
}

module attributes {stable_mosaic.version = 11 : i64} {
  func.func @_matmul_bn_kernel(%arg0: i32, %arg1: i32, %arg2: i32, %arg3: memref<64x1152xbf16, #tpu.memory_space<vmem>>, %arg4: memref<1152x128xbf16, #tpu.memory_space<vmem>>, %arg5: memref<1x128xf32, #tpu.memory_space<vmem>>, %arg6: memref<64x128xbf16, #tpu.memory_space<vmem>>, %arg7: memref<64x128xbf16, #tpu.memory_space<vmem>>, %arg8: memref<64x128xf32, #tpu.memory_space<vmem>>) attributes {dimension_semantics = [#tpu.dimension_semantics<parallel>, #tpu.dimension_semantics<parallel>, #tpu.dimension_semantics<arbitrary>], iteration_bounds = array<i64: 2, 1, 1>, scalar_prefetch = 0 : i64, scratch_operands = 1 : i64, tpu.core_type = #tpu.core_type<tc>, window_params = [{transform_indices = @transform_0, window_bounds = array<i64: 64, 1152>}, {transform_indices = @transform_1, window_bounds = array<i64: 1152, 128>}, {transform_indices = @transform_2, window_bounds = array<i64: 1, 128>}, {transform_indices = @transform_3, window_bounds = array<i64: 64, 128>}, {transform_indices = @transform_4, window_bounds = array<i64: 64, 128>}]} {
    %c0_i32 = arith.constant 0 : i32
    %0 = arith.cmpi eq, %arg2, %c0_i32 : i32
    %1 = arith.extui %0 : i1 to i32
    %c0_i32_0 = arith.constant 0 : i32
    %2 = arith.cmpi ne, %1, %c0_i32_0 : i32
    scf.if %2 {
      %cst_10 = arith.constant 0.000000e+00 : f32
      %12 = vector.broadcast %cst_10 : f32 to vector<64x128xf32>
      %c0_11 = arith.constant 0 : index
      %c0_12 = arith.constant 0 : index
      %13 = vector.load %arg8[%c0_11, %c0_12] : memref<64x128xf32, #tpu.memory_space<vmem>>, vector<64x128xf32>
      tpu.vector_store %arg8[%c0_11, %c0_12], %12 {strides = array<i32>} : memref<64x128xf32, #tpu.memory_space<vmem>>, vector<64x128xf32>,
    } else {
    }
    %c0 = arith.constant 0 : index
    %c0_1 = arith.constant 0 : index
    %3 = vector.load %arg8[%c0, %c0_1] : memref<64x128xf32, #tpu.memory_space<vmem>>, vector<64x128xf32>
    %c0_2 = arith.constant 0 : index
    %c0_3 = arith.constant 0 : index
    %4 = vector.load %arg3[%c0_2, %c0_3] : memref<64x1152xbf16, #tpu.memory_space<vmem>>, vector<64x1152xbf16>
    %c0_4 = arith.constant 0 : index
    %c0_5 = arith.constant 0 : index
    %5 = vector.load %arg4[%c0_4, %c0_5] : memref<1152x128xbf16, #tpu.memory_space<vmem>>, vector<1152x128xbf16>
    %cst = arith.constant dense<0.000000e+00> : vector<64x128xf32>
    %6 = tpu.matmul %4, %5, %cst {dimension_numbers = #tpu.dot_dimension_numbers<[1], [0], [0], [1], [0, 0, 1, 1], [], []>} : vector<64x1152xbf16>, vector<1152x128xbf16>, vector<64x128xf32> -> vector<64x128xf32>
    %7 = arith.addf %3, %6 : vector<64x128xf32>
    %c0_6 = arith.constant 0 : index
    %c0_7 = arith.constant 0 : index
    %8 = vector.load %arg8[%c0_6, %c0_7] : memref<64x128xf32, #tpu.memory_space<vmem>>, vector<64x128xf32>
    tpu.vector_store %arg8[%c0_6, %c0_7], %7 {strides = array<i32>} : memref<64x128xf32, #tpu.memory_space<vmem>>, vector<64x128xf32>,
    %c0_i32_8 = arith.constant 0 : i32
    %9 = arith.cmpi eq, %arg2, %c0_i32_8 : i32
    %10 = arith.extui %9 : i1 to i32
    %c0_i32_9 = arith.constant 0 : i32
    %11 = arith.cmpi ne, %10, %c0_i32_9 : i32
    scf.if %11 {
      %c0_10 = arith.constant 0 : index
      %c0_11 = arith.constant 0 : index
      %12 = vector.load %arg8[%c0_10, %c0_11] : memref<64x128xf32, #tpu.memory_space<vmem>>, vector<64x128xf32>
      %c0_12 = arith.constant 0 : index
      %c0_13 = arith.constant 0 : index
      %13 = vector.load %arg5[%c0_12, %c0_13] : memref<1x128xf32, #tpu.memory_space<vmem>>, vector<1x128xf32>
      %14 = vector.broadcast %13 : vector<1x128xf32> to vector<64x128xf32>
      %15 = arith.addf %12, %14 : vector<64x128xf32>
      %c0_14 = arith.constant 0 : index
      %c0_15 = arith.constant 0 : index
      %16 = vector.load %arg6[%c0_14, %c0_15] : memref<64x128xbf16, #tpu.memory_space<vmem>>, vector<64x128xbf16>
      %17 = arith.extf %16 : vector<64x128xbf16> to vector<64x128xf32>
      %18 = arith.addf %15, %17 : vector<64x128xf32>
      %cst_16 = arith.constant 0.000000e+00 : f32
      %19 = vector.broadcast %cst_16 : f32 to vector<64x128xf32>
      %20 = arith.maximumf %18, %19 : vector<64x128xf32>
      %21 = arith.truncf %20 : vector<64x128xf32> to vector<64x128xbf16>
      %c0_17 = arith.constant 0 : index
      %c0_18 = arith.constant 0 : index
      %22 = vector.load %arg7[%c0_17, %c0_18] : memref<64x128xbf16, #tpu.memory_space<vmem>>, vector<64x128xbf16>
      tpu.vector_store %arg7[%c0_17, %c0_18], %21 {strides = array<i32>} : memref<64x128xbf16, #tpu.memory_space<vmem>>, vector<64x128xbf16>,
    } else {
    }
    return
  }
  func.func @transform_0(%arg0: i32, %arg1: i32, %arg2: i32) -> (i32, i32) {
    %c0_i32 = arith.constant 0 : i32
    return %arg0, %arg2 : i32, i32
  }
  func.func @transform_1(%arg0: i32, %arg1: i32, %arg2: i32) -> (i32, i32) {
    %c0_i32 = arith.constant 0 : i32
    return %arg2, %arg1 : i32, i32
  }
  func.func @transform_2(%arg0: i32, %arg1: i32, %arg2: i32) -> (i32, i32) {
    %c0_i32 = arith.constant 0 : i32
    %c0_i32_0 = arith.constant 0 : i32
    return %c0_i32, %arg1 : i32, i32
  }
  func.func @transform_3(%arg0: i32, %arg1: i32, %arg2: i32) -> (i32, i32) {
    %c0_i32 = arith.constant 0 : i32
    return %arg0, %arg1 : i32, i32
  }
  func.func @transform_4(%arg0: i32, %arg1: i32, %arg2: i32) -> (i32, i32) {
    %c0_i32 = arith.constant 0 : i32
    return %arg0, %arg1 : i32, i32
  }
}

</mosaic_0001>

<llo_original>
// kernel: resnet_forward.11
$region0: #{resnet_forward.11}
  #allocation0 [shape = 'u32[]', space=smem, size = 0x4, offset = 0x4, fixed_abs, tag = 'smem constant byte address 0x4 - core index']
  #allocation1 [shape = 'u32[144,128]{1,0:T(1,128)}', space=vmem, size = 0x12000, scoped, tag = 'internal scratch']
  #allocation2 [shape = 'f32[256,128]{1,0:T(8,128)}', space=vmem, size = 0x20000, scoped, tag = 'scratch operand']
  %s0 = inlined_call_operand.vmem [shape: bf16[512,72], index: 0, kind: input, shape index: {}]
  %s1 = inlined_call_operand.vmem [shape: bf16[72,128], index: 1, kind: input, shape index: {}]
  %s2 = inlined_call_operand.vmem [shape: f32[1,128], index: 2, kind: input, shape index: {}]
  %s3 = inlined_call_operand.vmem [shape: bf16[512,128], index: 3, kind: output, shape index: {}]
  %s4 = sld [smem:[#allocation0]]
  $region53: #{resnet_forward.11} parent=0
    _
  %s6 = ssub.s32 1, %s4
  %s7 = scalar_select 0, %s6, %s4
  loop: start=0, step=1, limit=4
  $region2: #{resnet_forward.11} parent=0 // loop_pre_header
    _
  $region3: #{resnet_forward.11} parent=0 // loop_header
    %s9 = sphi 0, %s13
    %p10 = scmp.ge.s32.totalorder %s9, 4
    %s16 = sphi 0, %s35
    %s17 = sphi 0, %s31
    %s18 = sphi 0, %s27
    %s19 = sphi 0, %s16
    %s20 = sphi 0, %s17
    %s21 = sphi 0, %s18
    %s22 = sphi 0, %s19
    %s23 = sphi 0, %s20
    %s24 = sphi 0, %s21
    %s40 = sphi 0, %s42
    %s43 = sphi 0, %s40
    %s44 = sphi 0, %s43
    %s60 = sphi 0, %s44
    %s68 = sphi 0, %s70
    %s71 = sphi 0, %s68
    %s72 = sphi 0, %s71
    %s88 = sphi 0, %s72
    %s94 = sphi 0, %s96
    %s97 = sphi 0, %s94
    %s98 = sphi 0, %s97
    %s114 = sphi 0, %s98
    %s122 = sphi 0, %s124
    %s125 = sphi 0, %s122
    %s126 = sphi 0, %s125
    %s142 = sphi 0, %s126
  $region4: #{resnet_forward.11} parent=0 // loop_header_branch
    %12 = sbr.rel (%p10) target = $region8
  $region5: #{resnet_forward.11} parent=0 // loop_body
    %s14 = ssub.s32 %s9, 1
    %s15 = ssub.s32 %s9, 2
    %s25 = sadd.s32 1, %s18
    %p26 = scmp.ge.s32.totalorder %s25, 1
    %s27 = scalar_select %p26, 0, %s25
    %s28 = sadd.s32 1, %s17
    %s29 = scalar_select %p26, %s28, %s17
    %p30 = scmp.ge.s32.totalorder %s29, 1
    %s31 = scalar_select %p30, 0, %s29
    %s32 = sadd.s32 1, %s16
    %s33 = scalar_select %p30, %s32, %s16
    %p34 = scmp.ge.s32.totalorder %s33, 2
    %s35 = scalar_select %p34, 0, %s33
    %s36 = ssub.s32 %s16, %s35
    %s37 = ssub.s32 %s18, %s27
    %s38 = sor.u32 %s36, %s37
    %p39 = scmp.eq.s32.totalorder %s38, 0
    %s41 = sadd.s32 %s40, 1
    %s42 = scalar_select %p39, %s40, %s41
    %p45 = pneg %p39
    %p46 = scmp.eq.s32.totalorder %s9, 1
    %p47 = por %p45, %p46
    %p48 = scmp.ne.s32.totalorder %s40, %s43
    %p49 = scmp.eq.s32.totalorder %s9, 0
    %p50 = por %p48, %p49
    %p51 = scmp.ne.s32.totalorder %s40, %s43
    %p52 = scmp.eq.s32.totalorder %s14, 1
    %p53 = por %p51, %p52
    %p54 = scmp.ne.s32.totalorder %s43, %s44
    %p55 = scmp.eq.s32.totalorder %s14, 0
    %p56 = por %p54, %p55
    %p57 = scmp.ne.s32.totalorder %s43, %s44
    %p58 = scmp.eq.s32.totalorder %s15, 1
    %p59 = por %p57, %p58
    %p61 = scmp.ne.s32.totalorder %s44, %s60
    %p62 = scmp.eq.s32.totalorder %s15, 0
    %p63 = por %p61, %p62
    %s64 = ssub.s32 %s18, %s27
    %s65 = ssub.s32 %s17, %s31
    %s66 = sor.u32 %s64, %s65
    %p67 = scmp.eq.s32.totalorder %s66, 0
    %s69 = sadd.s32 %s68, 1
    %s70 = scalar_select %p67, %s68, %s69
    %p73 = pneg %p67
    %p74 = scmp.eq.s32.totalorder %s9, 1
    %p75 = por %p73, %p74
    %p76 = scmp.ne.s32.totalorder %s68, %s71
    %p77 = scmp.eq.s32.totalorder %s9, 0
    %p78 = por %p76, %p77
    %p79 = scmp.ne.s32.totalorder %s68, %s71
    %p80 = scmp.eq.s32.totalorder %s14, 1
    %p81 = por %p79, %p80
    %p82 = scmp.ne.s32.totalorder %s71, %s72
    %p83 = scmp.eq.s32.totalorder %s14, 0
    %p84 = por %p82, %p83
    %p85 = scmp.ne.s32.totalorder %s71, %s72
    %p86 = scmp.eq.s32.totalorder %s15, 1
    %p87 = por %p85, %p86
    %p89 = scmp.ne.s32.totalorder %s72, %s88
    %p90 = scmp.eq.s32.totalorder %s15, 0
    %p91 = por %p89, %p90
    %s92 = ssub.s32 %s17, %s31
    %p93 = scmp.eq.s32.totalorder %s92, 0
    %s95 = sadd.s32 %s94, 1
    %s96 = scalar_select %p93, %s94, %s95
    %p99 = pneg %p93
    %p100 = scmp.eq.s32.totalorder %s9, 1
    %p101 = por %p99, %p100
    %p102 = scmp.ne.s32.totalorder %s94, %s97
    %p103 = scmp.eq.s32.totalorder %s9, 0
    %p104 = por %p102, %p103
    %p105 = scmp.ne.s32.totalorder %s94, %s97
    %p106 = scmp.eq.s32.totalorder %s14, 1
    %p107 = por %p105, %p106
    %p108 = scmp.ne.s32.totalorder %s97, %s98
    %p109 = scmp.eq.s32.totalorder %s14, 0
    %p110 = por %p108, %p109
    %p111 = scmp.ne.s32.totalorder %s97, %s98
    %p112 = scmp.eq.s32.totalorder %s15, 1
    %p113 = por %p111, %p112
    %p115 = scmp.ne.s32.totalorder %s98, %s114
    %p116 = scmp.eq.s32.totalorder %s15, 0
    %p117 = por %p115, %p116
    %s118 = ssub.s32 %s16, %s35
    %s119 = ssub.s32 %s17, %s31
    %s120 = sor.u32 %s118, %s119
    %p121 = scmp.eq.s32.totalorder %s120, 0
    %s123 = sadd.s32 %s122, 1
    %s124 = scalar_select %p121, %s122, %s123
    %p127 = pneg %p121
    %p128 = scmp.eq.s32.totalorder %s9, 1
    %p129 = por %p127, %p128
    %p130 = scmp.ne.s32.totalorder %s122, %s125
    %p131 = scmp.eq.s32.totalorder %s9, 0
    %p132 = por %p130, %p131
    %p133 = scmp.ne.s32.totalorder %s122, %s125
    %p134 = scmp.eq.s32.totalorder %s14, 1
    %p135 = por %p133, %p134
    %p136 = scmp.ne.s32.totalorder %s125, %s126
    %p137 = scmp.eq.s32.totalorder %s14, 0
    %p138 = por %p136, %p137
    %p139 = scmp.ne.s32.totalorder %s125, %s126
    %p140 = scmp.eq.s32.totalorder %s15, 1
    %p141 = por %p139, %p140
    %p143 = scmp.ne.s32.totalorder %s126, %s142
    %p144 = scmp.eq.s32.totalorder %s15, 0
    %p145 = por %p143, %p144
    %p146 = scmp.le.s32.totalorder 1, %s9
    %p147 = scmp.lt.s32.totalorder %s9, 3
    %p148 = pnand %p146, %p147
    %p149 = pneg %p148
    // Predicated region
    $region9: #{resnet_forward.11} parent=5 // pred_check
      _
    $region10: #{resnet_forward.11} parent=5 // pred_check_branch
      %151 = sbr.rel (%p148) target = $region12
    $region11: #{resnet_forward.11} parent=5 // pred_region
      %s152 = ssub.s32 %s9, 1
      // Predicated region
      $region13: #{resnet_forward.11} parent=11 // pred_check
        %p153 = pneg %p84
      $region14: #{resnet_forward.11} parent=11 // pred_check_branch
        %155 = sbr.rel (%p153) target = $region16
      $region15: #{resnet_forward.11} parent=11 // pred_region
        %s156 = smul.u32 9, %s21
        %p157 = scmp.lt.s32.totalorder %s156, 8
        %s158 = scalar_select %p157, %s156, 8
        %p159 = scmp.lt.s32.totalorder %s20, 0
        %s160 = scalar_select %p159, %s20, 0
        %s161 = sadd.s32 %s160, %s158
        %s162 = smul.addr %s161, 4
        %s163 = scalar_lea.vmem %s1, %s162
        %s164 = smul.u32 9, %s21
      $region16: #{resnet_forward.11} parent=11 // pred_fallthru
        _
      // Predicated region
      $region17: #{resnet_forward.11} parent=11 // pred_check
        %p165 = pneg %p110
      $region18: #{resnet_forward.11} parent=11 // pred_check_branch
        %167 = sbr.rel (%p165) target = $region20
      $region19: #{resnet_forward.11} parent=11 // pred_region
        %p168 = scmp.lt.s32.totalorder %s20, 0
        %s169 = scalar_select %p168, %s20, 0
        %s170 = scalar_lea.vmem %s2, %s169
      $region20: #{resnet_forward.11} parent=11 // pred_fallthru
        _
    $region12: #{resnet_forward.11} parent=5 // pred_fallthru
      _
    %p171 = scmp.lt.s32.totalorder %s9, 2
    // Predicated region
    $region21: #{resnet_forward.11} parent=5 // pred_check
      %p172 = pneg %p171
    $region22: #{resnet_forward.11} parent=5 // pred_check_branch
      %174 = sbr.rel (%p172) target = $region24
    $region23: #{resnet_forward.11} parent=5 // pred_region
      // Predicated region
      $region25: #{resnet_forward.11} parent=23 // pred_check
        %p175 = pneg %p50
      $region26: #{resnet_forward.11} parent=23 // pred_check_branch
        %177 = sbr.rel (%p175) target = $region28
      $region27: #{resnet_forward.11} parent=23 // pred_region
        %s178 = smul.u32 32, %s16
        %p179 = scmp.lt.s32.totalorder %s178, 63
        %s180 = scalar_select %p179, %s178, 63
        %p181 = scmp.lt.s32.totalorder %s18, 0
        %s182 = scalar_select %p181, %s18, 0
        %s183 = sadd.s32 %s182, %s180
        %s184 = smul.addr %s183, 4
        %s185 = scalar_lea.vmem %s0, %s184
        %s186 = smul.u32 32, %s16
      $region28: #{resnet_forward.11} parent=23 // pred_fallthru
        _
    $region24: #{resnet_forward.11} parent=5 // pred_fallthru
      _
    %p187 = scmp.le.s32.totalorder 1, %s9
    %p188 = scmp.lt.s32.totalorder %s9, 3
    %p189 = pnand %p187, %p188
    %p190 = pneg %p189
    // Predicated region
    $region29: #{resnet_forward.11} parent=5 // pred_check
      _
    $region30: #{resnet_forward.11} parent=5 // pred_check_branch
      %192 = sbr.rel (%p189) target = $region32
    $region31: #{resnet_forward.11} parent=5 // pred_region
      %s193 = ssub.s32 %s9, 1
      %s194 = smul.u32 32, %s19
      %p195 = scmp.lt.s32.totalorder %s194, 63
      %s196 = scalar_select %p195, %s194, 63
      %p197 = scmp.lt.s32.totalorder %s21, 0
      %s198 = scalar_select %p197, %s21, 0
      %s199 = sadd.s32 %s198, %s196
      %s200 = smul.addr %s199, 4
      %s201 = scalar_lea.vmem %s0, %s200
      %p202 = pneg %p56
      %p203 = pneg %p53
      %s204 = smul.u32 9, %s21
      %p205 = scmp.lt.s32.totalorder %s204, 8
      %s206 = scalar_select %p205, %s204, 8
      %p207 = scmp.lt.s32.totalorder %s20, 0
      %s208 = scalar_select %p207, %s20, 0
      %s209 = sadd.s32 %s208, %s206
      %s210 = smul.addr %s209, 4
      %s211 = scalar_lea.vmem %s1, %s210
      %p212 = pneg %p84
      %p213 = pneg %p81
      %p214 = scmp.lt.s32.totalorder %s20, 0
      %s215 = scalar_select %p214, %s20, 0
      %s216 = scalar_lea.vmem %s2, %s215
      %p217 = pneg %p110
      %p218 = pneg %p107
      %p219 = pneg %p138
      %p220 = pneg %p135
      %s221 = smul.u32 32, %s19
      %p222 = scmp.lt.s32.totalorder %s221, 63
      %s223 = scalar_select %p222, %s221, 63
      %p224 = scmp.lt.s32.totalorder %s20, 0
      %s225 = scalar_select %p224, %s20, 0
      %s226 = sadd.s32 %s225, %s223
      %s227 = smul.addr %s226, 4
      %s228 = scalar_lea.vmem %s3, %s227
      %s229 = smul.u32 32, %s19
      %p230 = scmp.lt.s32.totalorder %s229, 63
      %s231 = scalar_select %p230, %s229, 63
      %p232 = scmp.lt.s32.totalorder %s21, 0
      %s233 = scalar_select %p232, %s21, 0
      %s234 = sadd.s32 %s233, %s231
      %s235 = smul.addr %s234, 4
      %s236 = scalar_lea.vmem %s0, %s235
      %s237 = smul.u32 32, %s19
      %s238 = smul.u32 9, %s21
      %p239 = scmp.lt.s32.totalorder %s238, 8
      %s240 = scalar_select %p239, %s238, 8
      %p241 = scmp.lt.s32.totalorder %s20, 0
      %s242 = scalar_select %p241, %s20, 0
      %s243 = sadd.s32 %s242, %s240
      %s244 = smul.addr %s243, 4
      %s245 = scalar_lea.vmem %s1, %s244
      %s246 = smul.u32 9, %s21
      %p247 = scmp.lt.s32.totalorder %s20, 0
      %s248 = scalar_select %p247, %s20, 0
      %s249 = scalar_lea.vmem %s2, %s248
      %s250 = smul.u32 32, %s19
      %p251 = scmp.lt.s32.totalorder %s250, 63
      %s252 = scalar_select %p251, %s250, 63
      %p253 = scmp.lt.s32.totalorder %s20, 0
      %s254 = scalar_select %p253, %s20, 0
      %s255 = sadd.s32 %s254, %s252
      %s256 = smul.addr %s255, 4
      %s257 = scalar_lea.vmem %s3, %s256
      %s258 = smul.u32 32, %s19
      %p260 = scmp.eq.s32.totalorder %s21, 0
      // Predicated region
      $region33: #{resnet_forward.11} parent=31 // pred_check
        %p261 = pneg %p260
      $region34: #{resnet_forward.11} parent=31 // pred_check_branch
        %263 = sbr.rel (%p261) target = $region36
      $region35: #{resnet_forward.11} parent=31 // pred_region
        %264 = vst [vmem:[#allocation2] sm:$0xff] 0.0
        %265 = vst [vmem:[#allocation2 + $0x8] sm:$0xff] 0.0
        %266 = vst [vmem:[#allocation2 + $0x10] sm:$0xff] 0.0
        %267 = vst [vmem:[#allocation2 + $0x18] sm:$0xff] 0.0
        %268 = vst [vmem:[#allocation2 + $0x20] sm:$0xff] 0.0
        %269 = vst [vmem:[#allocation2 + $0x28] sm:$0xff] 0.0
        %270 = vst [vmem:[#allocation2 + $0x30] sm:$0xff] 0.0
        %271 = vst [vmem:[#allocation2 + $0x38] sm:$0xff] 0.0
        %272 = vst [vmem:[#allocation2 + $0x40] sm:$0xff] 0.0
        %273 = vst [vmem:[#allocation2 + $0x48] sm:$0xff] 0.0
        %274 = vst [vmem:[#allocation2 + $0x50] sm:$0xff] 0.0
        %275 = vst [vmem:[#allocation2 + $0x58] sm:$0xff] 0.0
        %276 = vst [vmem:[#allocation2 + $0x60] sm:$0xff] 0.0
        %277 = vst [vmem:[#allocation2 + $0x68] sm:$0xff] 0.0
        %278 = vst [vmem:[#allocation2 + $0x70] sm:$0xff] 0.0
        %279 = vst [vmem:[#allocation2 + $0x78] sm:$0xff] 0.0
        %280 = vst [vmem:[#allocation2 + $0x80] sm:$0xff] 0.0
        %281 = vst [vmem:[#allocation2 + $0x88] sm:$0xff] 0.0
        %282 = vst [vmem:[#allocation2 + $0x90] sm:$0xff] 0.0
        %283 = vst [vmem:[#allocation2 + $0x98] sm:$0xff] 0.0
        %284 = vst [vmem:[#allocation2 + $0xa0] sm:$0xff] 0.0
        %285 = vst [vmem:[#allocation2 + $0xa8] sm:$0xff] 0.0
        %286 = vst [vmem:[#allocation2 + $0xb0] sm:$0xff] 0.0
        %287 = vst [vmem:[#allocation2 + $0xb8] sm:$0xff] 0.0
        %288 = vst [vmem:[#allocation2 + $0xc0] sm:$0xff] 0.0
        %289 = vst [vmem:[#allocation2 + $0xc8] sm:$0xff] 0.0
        %290 = vst [vmem:[#allocation2 + $0xd0] sm:$0xff] 0.0
        %291 = vst [vmem:[#allocation2 + $0xd8] sm:$0xff] 0.0
        %292 = vst [vmem:[#allocation2 + $0xe0] sm:$0xff] 0.0
        %293 = vst [vmem:[#allocation2 + $0xe8] sm:$0xff] 0.0
        %294 = vst [vmem:[#allocation2 + $0xf0] sm:$0xff] 0.0
        %295 = vst [vmem:[#allocation2 + $0xf8] sm:$0xff] 0.0
      $region36: #{resnet_forward.11} parent=31 // pred_fallthru
        _
      %v296 = vld [vmem:[#allocation2] sm:$0xff]
      %v297 = vld [vmem:[#allocation2 + $0x8] sm:$0xff]
      %v298 = vld [vmem:[#allocation2 + $0x10] sm:$0xff]
      %v299 = vld [vmem:[#allocation2 + $0x18] sm:$0xff]
      %v300 = vld [vmem:[#allocation2 + $0x20] sm:$0xff]
      %v301 = vld [vmem:[#allocation2 + $0x28] sm:$0xff]
      %v302 = vld [vmem:[#allocation2 + $0x30] sm:$0xff]
      %v303 = vld [vmem:[#allocation2 + $0x38] sm:$0xff]
      %v304 = vld [vmem:[#allocation2 + $0x40] sm:$0xff]
      %v305 = vld [vmem:[#allocation2 + $0x48] sm:$0xff]
      %v306 = vld [vmem:[#allocation2 + $0x50] sm:$0xff]
      %v307 = vld [vmem:[#allocation2 + $0x58] sm:$0xff]
      %v308 = vld [vmem:[#allocation2 + $0x60] sm:$0xff]
      %v309 = vld [vmem:[#allocation2 + $0x68] sm:$0xff]
      %v310 = vld [vmem:[#allocation2 + $0x70] sm:$0xff]
      %v311 = vld [vmem:[#allocation2 + $0x78] sm:$0xff]
      %v312 = vld [vmem:[#allocation2 + $0x80] sm:$0xff]
      %v313 = vld [vmem:[#allocation2 + $0x88] sm:$0xff]
      %v314 = vld [vmem:[#allocation2 + $0x90] sm:$0xff]
      %v315 = vld [vmem:[#allocation2 + $0x98] sm:$0xff]
      %v316 = vld [vmem:[#allocation2 + $0xa0] sm:$0xff]
      %v317 = vld [vmem:[#allocation2 + $0xa8] sm:$0xff]
      %v318 = vld [vmem:[#allocation2 + $0xb0] sm:$0xff]
      %v319 = vld [vmem:[#allocation2 + $0xb8] sm:$0xff]
      %v320 = vld [vmem:[#allocation2 + $0xc0] sm:$0xff]
      %v321 = vld [vmem:[#allocation2 + $0xc8] sm:$0xff]
      %v322 = vld [vmem:[#allocation2 + $0xd0] sm:$0xff]
      %v323 = vld [vmem:[#allocation2 + $0xd8] sm:$0xff]
      %v324 = vld [vmem:[#allocation2 + $0xe0] sm:$0xff]
      %v325 = vld [vmem:[#allocation2 + $0xe8] sm:$0xff]
      %v326 = vld [vmem:[#allocation2 + $0xf0] sm:$0xff]
      %v327 = vld [vmem:[#allocation2 + $0xf8] sm:$0xff]
      %v328 = vld [vmem:[%s236] sm:$0xf]
      %v329 = vld [vmem:[%s236 + $0x4] sm:$0xf]
      %v330 = vld [vmem:[%s236 + $0x8] sm:$0xf]
      %v331 = vld [vmem:[%s236 + $0xc] sm:$0xf]
      %v332 = vld [vmem:[%s236 + $0x10] sm:$0xf]
      %v333 = vld [vmem:[%s236 + $0x14] sm:$0xf]
      %v334 = vld [vmem:[%s236 + $0x18] sm:$0xf]
      %v335 = vld [vmem:[%s236 + $0x1c] sm:$0xf]
      %v336 = vld [vmem:[%s236 + $0x20] sm:$0xf]
      %v337 = vld [vmem:[%s236 + $0x24] sm:$0xf]
      %v338 = vld [vmem:[%s236 + $0x28] sm:$0xf]
      %v339 = vld [vmem:[%s236 + $0x2c] sm:$0xf]
      %v340 = vld [vmem:[%s236 + $0x30] sm:$0xf]
      %v341 = vld [vmem:[%s236 + $0x34] sm:$0xf]
      %v342 = vld [vmem:[%s236 + $0x38] sm:$0xf]
      %v343 = vld [vmem:[%s236 + $0x3c] sm:$0xf]
      %v344 = vld [vmem:[%s236 + $0x40] sm:$0xf]
      %v345 = vld [vmem:[%s236 + $0x44] sm:$0xf]
      %v346 = vld [vmem:[%s236 + $0x48] sm:$0xf]
      %v347 = vld [vmem:[%s236 + $0x4c] sm:$0xf]
      %v348 = vld [vmem:[%s236 + $0x50] sm:$0xf]
      %v349 = vld [vmem:[%s236 + $0x54] sm:$0xf]
      %v350 = vld [vmem:[%s236 + $0x58] sm:$0xf]
      %v351 = vld [vmem:[%s236 + $0x5c] sm:$0xf]
      %v352 = vld [vmem:[%s236 + $0x60] sm:$0xf]
      %v353 = vld [vmem:[%s236 + $0x64] sm:$0xf]
      %v354 = vld [vmem:[%s236 + $0x68] sm:$0xf]
      %v355 = vld [vmem:[%s236 + $0x6c] sm:$0xf]
      %v356 = vld [vmem:[%s236 + $0x70] sm:$0xf]
      %v357 = vld [vmem:[%s236 + $0x74] sm:$0xf]
      %v358 = vld [vmem:[%s236 + $0x78] sm:$0xf]
      %v359 = vld [vmem:[%s236 + $0x7c] sm:$0xf]
      %v360 = vld [vmem:[%s245] sm:$0xf]
      %v361 = vld [vmem:[%s245 + $0x4] sm:$0xf]
      %v362 = vld [vmem:[%s245 + $0x8] sm:$0xf]
      %v363 = vld [vmem:[%s245 + $0xc] sm:$0xf]
      %v364 = vld [vmem:[%s245 + $0x10] sm:$0xf]
      %v365 = vld [vmem:[%s245 + $0x14] sm:$0xf]
      %v366 = vld [vmem:[%s245 + $0x18] sm:$0xf]
      %v367 = vld [vmem:[%s245 + $0x1c] sm:$0xf]
      %v368 = vld [vmem:[%s245 + $0x20] sm:$0xf]
      %v401 = vunpack.c.l.b16 %v328
      %v402 = vunpack.c.l.b16 %v329
      %v403 = vunpack.c.l.b16 %v330
      %v404 = vunpack.c.l.b16 %v331
      %v405 = vunpack.c.l.b16 %v332
      %v406 = vunpack.c.l.b16 %v333
      %v407 = vunpack.c.l.b16 %v334
      %v408 = vunpack.c.l.b16 %v335
      %v409 = vunpack.c.l.b16 %v336
      %v410 = vunpack.c.l.b16 %v337
      %v411 = vunpack.c.l.b16 %v338
      %v412 = vunpack.c.l.b16 %v339
      %v413 = vunpack.c.l.b16 %v340
      %v414 = vunpack.c.l.b16 %v341
      %v415 = vunpack.c.l.b16 %v342
      %v416 = vunpack.c.l.b16 %v343
      %v417 = vunpack.c.l.b16 %v344
      %v418 = vunpack.c.l.b16 %v345
      %v419 = vunpack.c.l.b16 %v346
      %v420 = vunpack.c.l.b16 %v347
      %v421 = vunpack.c.l.b16 %v348
      %v422 = vunpack.c.l.b16 %v349
      %v423 = vunpack.c.l.b16 %v350
      %v424 = vunpack.c.l.b16 %v351
      %v425 = vunpack.c.l.b16 %v352
      %v426 = vunpack.c.l.b16 %v353
      %v427 = vunpack.c.l.b16 %v354
      %v428 = vunpack.c.l.b16 %v355
      %v429 = vunpack.c.l.b16 %v356
      %v430 = vunpack.c.l.b16 %v357
      %v431 = vunpack.c.l.b16 %v358
      %v432 = vunpack.c.l.b16 %v359
      %v433 = vpack.c.b16 %v402, %v401
      %v434 = vpack.c.b16 %v404, %v403
      %v435 = vpack.c.b16 %v406, %v405
      %v436 = vpack.c.b16 %v408, %v407
      %v437 = vpack.c.b16 %v410, %v409
      %v438 = vpack.c.b16 %v412, %v411
      %v439 = vpack.c.b16 %v414, %v413
      %v440 = vpack.c.b16 %v416, %v415
      %v441 = vpack.c.b16 %v418, %v417
      %v442 = vpack.c.b16 %v420, %v419
      %v443 = vpack.c.b16 %v422, %v421
      %v444 = vpack.c.b16 %v424, %v423
      %v445 = vpack.c.b16 %v426, %v425
      %v446 = vpack.c.b16 %v428, %v427
      %v447 = vpack.c.b16 %v430, %v429
      %v448 = vpack.c.b16 %v432, %v431
      %v458 = vunpack.c.l.b16 %v360
      %v459 = vunpack.c.l.b16 %v361
      %v460 = vunpack.c.l.b16 %v362
      %v461 = vunpack.c.l.b16 %v363
      %v462 = vunpack.c.l.b16 %v364
      %v463 = vunpack.c.l.b16 %v365
      %v464 = vunpack.c.l.b16 %v366
      %v465 = vunpack.c.l.b16 %v367
      %v466 = vunpack.c.l.b16 %v368
      %v467 = vpack.c.b16 %v459, %v458
      %v468 = vpack.c.b16 %v461, %v460
      %v469 = vpack.c.b16 %v463, %v462
      %v470 = vpack.c.b16 %v465, %v464
      %v471 = vpack.c.b16 %v466, %v466
      %vm476 = vcmask 588800
      %v478 = vsel %vm476, %v433, 0
      %v481 = vsel %vm476, %v434, 0
      %v484 = vsel %vm476, %v435, 0
      %v487 = vsel %vm476, %v436, 0
      %v490 = vsel %vm476, %v437, 0
      %v493 = vsel %vm476, %v438, 0
      %v496 = vsel %vm476, %v439, 0
      %v499 = vsel %vm476, %v440, 0
      %v502 = vsel %vm476, %v441, 0
      %v505 = vsel %vm476, %v442, 0
      %v508 = vsel %vm476, %v443, 0
      %v511 = vsel %vm476, %v444, 0
      %v514 = vsel %vm476, %v445, 0
      %v517 = vsel %vm476, %v446, 0
      %v520 = vsel %vm476, %v447, 0
      %v523 = vsel %vm476, %v448, 0
      %vm525 = vcmask 1043456
      %v527 = vsel %vm525, %v471, 0
      %529 = vmatprep.subr.bf16.mxu0 0
      %530 = vmatpush1.bf16.msra.mxu0 %v467
      %531 = vmatprep.subr.bf16.mxu0 0
      %532 = vmatpush1.bf16.msra.mxu0 %v468
      %533 = vmatprep.subr.bf16.mxu0 0
      %534 = vmatpush1.bf16.msra.mxu0 %v469
      %535 = vmatprep.subr.bf16.mxu0 0
      %536 = vmatpush1.bf16.msra.mxu0 %v470
      %537 = vmatprep.subr.bf16.mxu0 0
      %538 = vmatpush1.bf16.msra.mxu0 %v527
      %539 = vmatprep.subr.bf16.mxu0 0
      %540 = vmatpush1.bf16.msra.mxu0 0
      %541 = vmatprep.subr.bf16.mxu0 0
      %542 = vmatpush1.bf16.msra.mxu0 0
      %543 = vmatprep.subr.bf16.mxu0 0
      %544 = vmatpush1.bf16.msra.mxu0 0
      %545 = vmatprep.subr.bf16.mxu0 0
      %546 = vmatpush1.bf16.msra.mxu0 0
      %547 = vmatprep.subr.bf16.mxu0 0
      %548 = vmatpush1.bf16.msra.mxu0 0
      %549 = vmatprep.subr.bf16.mxu0 0
      %550 = vmatpush1.bf16.msra.mxu0 0
      %551 = vmatprep.subr.bf16.mxu0 0
      %552 = vmatpush1.bf16.msra.mxu0 0
      %553 = vmatprep.subr.bf16.mxu0 0
      %554 = vmatpush1.bf16.msra.mxu0 0
      %555 = vmatprep.subr.bf16.mxu0 0
      %556 = vmatpush1.bf16.msra.mxu0 0
      %557 = vmatprep.subr.bf16.mxu0 0
      %558 = vmatpush1.bf16.msra.mxu0 0
      %559 = vmatprep.subr.bf16.mxu0 0
      %560 = vmatpush1.bf16.msra.mxu0 0
      %561 = vmatprep.mubr.bf16.mxu0 0
      %562 = vmatmul.mubr.bf16.gmra.mrb[0].mxu0 %v478
      %v563 = vpop.f32.mrb[0].mxu0
      %v564 = vadd.f32 0.0, %v563
      %v565 = vpop.f32.mrb[0].mxu0
      %v566 = vpop.f32.mrb[0].mxu0
      %v567 = vadd.f32 0.0, %v566
      %v568 = vpop.f32.mrb[0].mxu0
      %569 = vmatprep.mubr.bf16.mxu0 0
      %570 = vmatmul.mubr.bf16.gmra.mrb[0].mxu0 %v481
      %v571 = vpop.f32.mrb[0].mxu0
      %v572 = vadd.f32 0.0, %v571
      %v573 = vpop.f32.mrb[0].mxu0
      %v574 = vpop.f32.mrb[0].mxu0
      %v575 = vadd.f32 0.0, %v574
      %v576 = vpop.f32.mrb[0].mxu0
      %577 = vmatprep.mubr.bf16.mxu0 0
      %578 = vmatmul.mubr.bf16.gmra.mrb[0].mxu0 %v484
      %v579 = vpop.f32.mrb[0].mxu0
      %v580 = vadd.f32 0.0, %v579
      %v581 = vpop.f32.mrb[0].mxu0
      %v582 = vpop.f32.mrb[0].mxu0
      %v583 = vadd.f32 0.0, %v582
      %v584 = vpop.f32.mrb[0].mxu0
      %585 = vmatprep.mubr.bf16.mxu0 0
      %586 = vmatmul.mubr.bf16.gmra.mrb[0].mxu0 %v487
      %v587 = vpop.f32.mrb[0].mxu0
      %v588 = vadd.f32 0.0, %v587
      %v589 = vpop.f32.mrb[0].mxu0
      %v590 = vpop.f32.mrb[0].mxu0
      %v591 = vadd.f32 0.0, %v590
      %v592 = vpop.f32.mrb[0].mxu0
      %593 = vmatprep.mubr.bf16.mxu0 0
      %594 = vmatmul.mubr.bf16.gmra.mrb[0].mxu0 %v490
      %v595 = vpop.f32.mrb[0].mxu0
      %v596 = vadd.f32 0.0, %v595
      %v597 = vpop.f32.mrb[0].mxu0
      %v598 = vpop.f32.mrb[0].mxu0
      %v599 = vadd.f32 0.0, %v598
      %v600 = vpop.f32.mrb[0].mxu0
      %601 = vmatprep.mubr.bf16.mxu0 0
      %602 = vmatmul.mubr.bf16.gmra.mrb[0].mxu0 %v493
      %v603 = vpop.f32.mrb[0].mxu0
      %v604 = vadd.f32 0.0, %v603
      %v605 = vpop.f32.mrb[0].mxu0
      %v606 = vpop.f32.mrb[0].mxu0
      %v607 = vadd.f32 0.0, %v606
      %v608 = vpop.f32.mrb[0].mxu0
      %609 = vmatprep.mubr.bf16.mxu0 0
      %610 = vmatmul.mubr.bf16.gmra.mrb[0].mxu0 %v496
      %v611 = vpop.f32.mrb[0].mxu0
      %v612 = vadd.f32 0.0, %v611
      %v613 = vpop.f32.mrb[0].mxu0
      %v614 = vpop.f32.mrb[0].mxu0
      %v615 = vadd.f32 0.0, %v614
      %v616 = vpop.f32.mrb[0].mxu0
      %617 = vmatprep.mubr.bf16.mxu0 0
      %618 = vmatmul.mubr.bf16.gmra.mrb[0].mxu0 %v499
      %v619 = vpop.f32.mrb[0].mxu0
      %v620 = vadd.f32 0.0, %v619
      %v621 = vpop.f32.mrb[0].mxu0
      %v622 = vpop.f32.mrb[0].mxu0
      %v623 = vadd.f32 0.0, %v622
      %v624 = vpop.f32.mrb[0].mxu0
      %625 = vmatprep.mubr.bf16.mxu0 0
      %626 = vmatmul.mubr.bf16.gmra.mrb[0].mxu0 %v502
      %v627 = vpop.f32.mrb[0].mxu0
      %v628 = vadd.f32 0.0, %v627
      %v629 = vpop.f32.mrb[0].mxu0
      %v630 = vpop.f32.mrb[0].mxu0
      %v631 = vadd.f32 0.0, %v630
      %v632 = vpop.f32.mrb[0].mxu0
      %633 = vmatprep.mubr.bf16.mxu0 0
      %634 = vmatmul.mubr.bf16.gmra.mrb[0].mxu0 %v505
      %v635 = vpop.f32.mrb[0].mxu0
      %v636 = vadd.f32 0.0, %v635
      %v637 = vpop.f32.mrb[0].mxu0
      %v638 = vpop.f32.mrb[0].mxu0
      %v639 = vadd.f32 0.0, %v638
      %v640 = vpop.f32.mrb[0].mxu0
      %641 = vmatprep.mubr.bf16.mxu0 0
      %642 = vmatmul.mubr.bf16.gmra.mrb[0].mxu0 %v508
      %v643 = vpop.f32.mrb[0].mxu0
      %v644 = vadd.f32 0.0, %v643
      %v645 = vpop.f32.mrb[0].mxu0
      %v646 = vpop.f32.mrb[0].mxu0
      %v647 = vadd.f32 0.0, %v646
      %v648 = vpop.f32.mrb[0].mxu0
      %649 = vmatprep.mubr.bf16.mxu0 0
      %650 = vmatmul.mubr.bf16.gmra.mrb[0].mxu0 %v511
      %v651 = vpop.f32.mrb[0].mxu0
      %v652 = vadd.f32 0.0, %v651
      %v653 = vpop.f32.mrb[0].mxu0
      %v654 = vpop.f32.mrb[0].mxu0
      %v655 = vadd.f32 0.0, %v654
      %v656 = vpop.f32.mrb[0].mxu0
      %657 = vmatprep.mubr.bf16.mxu0 0
      %658 = vmatmul.mubr.bf16.gmra.mrb[0].mxu0 %v514
      %v659 = vpop.f32.mrb[0].mxu0
      %v660 = vadd.f32 0.0, %v659
      %v661 = vpop.f32.mrb[0].mxu0
      %v662 = vpop.f32.mrb[0].mxu0
      %v663 = vadd.f32 0.0, %v662
      %v664 = vpop.f32.mrb[0].mxu0
      %665 = vmatprep.mubr.bf16.mxu0 0
      %666 = vmatmul.mubr.bf16.gmra.mrb[0].mxu0 %v517
      %v667 = vpop.f32.mrb[0].mxu0
      %v668 = vadd.f32 0.0, %v667
      %v669 = vpop.f32.mrb[0].mxu0
      %v670 = vpop.f32.mrb[0].mxu0
      %v671 = vadd.f32 0.0, %v670
      %v672 = vpop.f32.mrb[0].mxu0
      %673 = vmatprep.mubr.bf16.mxu0 0
      %674 = vmatmul.mubr.bf16.gmra.mrb[0].mxu0 %v520
      %v675 = vpop.f32.mrb[0].mxu0
      %v676 = vadd.f32 0.0, %v675
      %v677 = vpop.f32.mrb[0].mxu0
      %v678 = vpop.f32.mrb[0].mxu0
      %v679 = vadd.f32 0.0, %v678
      %v680 = vpop.f32.mrb[0].mxu0
      %681 = vmatprep.mubr.bf16.mxu0 0
      %682 = vmatmul.mubr.bf16.gmra.mrb[0].mxu0 %v523
      %v683 = vpop.f32.mrb[0].mxu0
      %v684 = vadd.f32 0.0, %v683
      %v685 = vpop.f32.mrb[0].mxu0
      %v686 = vpop.f32.mrb[0].mxu0
      %v687 = vadd.f32 0.0, %v686
      %v688 = vpop.f32.mrb[0].mxu0
      %689 = vdwg.mxu0
      %v690 = vadd.f32 %v296, %v564
      %v691 = vadd.f32 %v297, %v567
      %v692 = vadd.f32 %v298, %v572
      %v693 = vadd.f32 %v299, %v575
      %v694 = vadd.f32 %v300, %v580
      %v695 = vadd.f32 %v301, %v583
      %v696 = vadd.f32 %v302, %v588
      %v697 = vadd.f32 %v303, %v591
      %v698 = vadd.f32 %v304, %v596
      %v699 = vadd.f32 %v305, %v599
      %v700 = vadd.f32 %v306, %v604
      %v701 = vadd.f32 %v307, %v607
      %v702 = vadd.f32 %v308, %v612
      %v703 = vadd.f32 %v309, %v615
      %v704 = vadd.f32 %v310, %v620
      %v705 = vadd.f32 %v311, %v623
      %v706 = vadd.f32 %v312, %v628
      %v707 = vadd.f32 %v313, %v631
      %v708 = vadd.f32 %v314, %v636
      %v709 = vadd.f32 %v315, %v639
      %v710 = vadd.f32 %v316, %v644
      %v711 = vadd.f32 %v317, %v647
      %v712 = vadd.f32 %v318, %v652
      %v713 = vadd.f32 %v319, %v655
      %v714 = vadd.f32 %v320, %v660
      %v715 = vadd.f32 %v321, %v663
      %v716 = vadd.f32 %v322, %v668
      %v717 = vadd.f32 %v323, %v671
      %v718 = vadd.f32 %v324, %v676
      %v719 = vadd.f32 %v325, %v679
      %v720 = vadd.f32 %v326, %v684
      %v721 = vadd.f32 %v327, %v687
      %722 = vst [vmem:[#allocation2] sm:$0xff] %v690
      %723 = vst [vmem:[#allocation2 + $0x8] sm:$0xff] %v691
      %724 = vst [vmem:[#allocation2 + $0x10] sm:$0xff] %v692
      %725 = vst [vmem:[#allocation2 + $0x18] sm:$0xff] %v693
      %726 = vst [vmem:[#allocation2 + $0x20] sm:$0xff] %v694
      %727 = vst [vmem:[#allocation2 + $0x28] sm:$0xff] %v695
      %728 = vst [vmem:[#allocation2 + $0x30] sm:$0xff] %v696
      %729 = vst [vmem:[#allocation2 + $0x38] sm:$0xff] %v697
      %730 = vst [vmem:[#allocation2 + $0x40] sm:$0xff] %v698
      %731 = vst [vmem:[#allocation2 + $0x48] sm:$0xff] %v699
      %732 = vst [vmem:[#allocation2 + $0x50] sm:$0xff] %v700
      %733 = vst [vmem:[#allocation2 + $0x58] sm:$0xff] %v701
      %734 = vst [vmem:[#allocation2 + $0x60] sm:$0xff] %v702
      %735 = vst [vmem:[#allocation2 + $0x68] sm:$0xff] %v703
      %736 = vst [vmem:[#allocation2 + $0x70] sm:$0xff] %v704
      %737 = vst [vmem:[#allocation2 + $0x78] sm:$0xff] %v705
      %738 = vst [vmem:[#allocation2 + $0x80] sm:$0xff] %v706
      %739 = vst [vmem:[#allocation2 + $0x88] sm:$0xff] %v707
      %740 = vst [vmem:[#allocation2 + $0x90] sm:$0xff] %v708
      %741 = vst [vmem:[#allocation2 + $0x98] sm:$0xff] %v709
      %742 = vst [vmem:[#allocation2 + $0xa0] sm:$0xff] %v710
      %743 = vst [vmem:[#allocation2 + $0xa8] sm:$0xff] %v711
      %744 = vst [vmem:[#allocation2 + $0xb0] sm:$0xff] %v712
      %745 = vst [vmem:[#allocation2 + $0xb8] sm:$0xff] %v713
      %746 = vst [vmem:[#allocation2 + $0xc0] sm:$0xff] %v714
      %747 = vst [vmem:[#allocation2 + $0xc8] sm:$0xff] %v715
      %748 = vst [vmem:[#allocation2 + $0xd0] sm:$0xff] %v716
      %749 = vst [vmem:[#allocation2 + $0xd8] sm:$0xff] %v717
      %750 = vst [vmem:[#allocation2 + $0xe0] sm:$0xff] %v718
      %751 = vst [vmem:[#allocation2 + $0xe8] sm:$0xff] %v719
      %752 = vst [vmem:[#allocation2 + $0xf0] sm:$0xff] %v720
      %753 = vst [vmem:[#allocation2 + $0xf8] sm:$0xff] %v721
      // Predicated region
      $region37: #{resnet_forward.11} parent=31 // pred_check
        %p754 = pneg %p260
      $region38: #{resnet_forward.11} parent=31 // pred_check_branch
        %756 = sbr.rel (%p754) target = $region40
      $region39: #{resnet_forward.11} parent=31 // pred_region
        %v757 = vld [vmem:[#allocation2] sm:$0xff]
        %v758 = vld [vmem:[#allocation2 + $0x8] sm:$0xff]
        %v759 = vld [vmem:[#allocation2 + $0x10] sm:$0xff]
        %v760 = vld [vmem:[#allocation2 + $0x18] sm:$0xff]
        %v761 = vld [vmem:[#allocation2 + $0x20] sm:$0xff]
        %v762 = vld [vmem:[#allocation2 + $0x28] sm:$0xff]
        %v763 = vld [vmem:[#allocation2 + $0x30] sm:$0xff]
        %v764 = vld [vmem:[#allocation2 + $0x38] sm:$0xff]
        %v765 = vld [vmem:[#allocation2 + $0x40] sm:$0xff]
        %v766 = vld [vmem:[#allocation2 + $0x48] sm:$0xff]
        %v767 = vld [vmem:[#allocation2 + $0x50] sm:$0xff]
        %v768 = vld [vmem:[#allocation2 + $0x58] sm:$0xff]
        %v769 = vld [vmem:[#allocation2 + $0x60] sm:$0xff]
        %v770 = vld [vmem:[#allocation2 + $0x68] sm:$0xff]
        %v771 = vld [vmem:[#allocation2 + $0x70] sm:$0xff]
        %v772 = vld [vmem:[#allocation2 + $0x78] sm:$0xff]
        %v773 = vld [vmem:[#allocation2 + $0x80] sm:$0xff]
        %v774 = vld [vmem:[#allocation2 + $0x88] sm:$0xff]
        %v775 = vld [vmem:[#allocation2 + $0x90] sm:$0xff]
        %v776 = vld [vmem:[#allocation2 + $0x98] sm:$0xff]
        %v777 = vld [vmem:[#allocation2 + $0xa0] sm:$0xff]
        %v778 = vld [vmem:[#allocation2 + $0xa8] sm:$0xff]
        %v779 = vld [vmem:[#allocation2 + $0xb0] sm:$0xff]
        %v780 = vld [vmem:[#allocation2 + $0xb8] sm:$0xff]
        %v781 = vld [vmem:[#allocation2 + $0xc0] sm:$0xff]
        %v782 = vld [vmem:[#allocation2 + $0xc8] sm:$0xff]
        %v783 = vld [vmem:[#allocation2 + $0xd0] sm:$0xff]
        %v784 = vld [vmem:[#allocation2 + $0xd8] sm:$0xff]
        %v785 = vld [vmem:[#allocation2 + $0xe0] sm:$0xff]
        %v786 = vld [vmem:[#allocation2 + $0xe8] sm:$0xff]
        %v787 = vld [vmem:[#allocation2 + $0xf0] sm:$0xff]
        %v788 = vld [vmem:[#allocation2 + $0xf8] sm:$0xff]
        %v789 = vld [vmem:[%s249] sm:$0x1]
        %v791 = vlaneseq
        %v792 = vshrl.u32 %v791, 7
        %v793 = vsub.s32 0, %v792
        %v794 = vrot.slane %v789, %v793
        %v796 = vadd.f32 %v757, %v794
        %v797 = vadd.f32 %v758, %v794
        %v798 = vadd.f32 %v759, %v794
        %v799 = vadd.f32 %v760, %v794
        %v800 = vadd.f32 %v761, %v794
        %v801 = vadd.f32 %v762, %v794
        %v802 = vadd.f32 %v763, %v794
        %v803 = vadd.f32 %v764, %v794
        %v804 = vadd.f32 %v765, %v794
        %v805 = vadd.f32 %v766, %v794
        %v806 = vadd.f32 %v767, %v794
        %v807 = vadd.f32 %v768, %v794
        %v808 = vadd.f32 %v769, %v794
        %v809 = vadd.f32 %v770, %v794
        %v810 = vadd.f32 %v771, %v794
        %v811 = vadd.f32 %v772, %v794
        %v812 = vadd.f32 %v773, %v794
        %v813 = vadd.f32 %v774, %v794
        %v814 = vadd.f32 %v775, %v794
        %v815 = vadd.f32 %v776, %v794
        %v816 = vadd.f32 %v777, %v794
        %v817 = vadd.f32 %v778, %v794
        %v818 = vadd.f32 %v779, %v794
        %v819 = vadd.f32 %v780, %v794
        %v820 = vadd.f32 %v781, %v794
        %v821 = vadd.f32 %v782, %v794
        %v822 = vadd.f32 %v783, %v794
        %v823 = vadd.f32 %v784, %v794
        %v824 = vadd.f32 %v785, %v794
        %v825 = vadd.f32 %v786, %v794
        %v826 = vadd.f32 %v787, %v794
        %v827 = vadd.f32 %v788, %v794
        %v828 = vmax.f32 %v796, 0.0
        %v829 = vmax.f32 %v797, 0.0
        %v830 = vmax.f32 %v798, 0.0
        %v831 = vmax.f32 %v799, 0.0
        %v832 = vmax.f32 %v800, 0.0
        %v833 = vmax.f32 %v801, 0.0
        %v834 = vmax.f32 %v802, 0.0
        %v835 = vmax.f32 %v803, 0.0
        %v836 = vmax.f32 %v804, 0.0
        %v837 = vmax.f32 %v805, 0.0
        %v838 = vmax.f32 %v806, 0.0
        %v839 = vmax.f32 %v807, 0.0
        %v840 = vmax.f32 %v808, 0.0
        %v841 = vmax.f32 %v809, 0.0
        %v842 = vmax.f32 %v810, 0.0
        %v843 = vmax.f32 %v811, 0.0
        %v844 = vmax.f32 %v812, 0.0
        %v845 = vmax.f32 %v813, 0.0
        %v846 = vmax.f32 %v814, 0.0
        %v847 = vmax.f32 %v815, 0.0
        %v848 = vmax.f32 %v816, 0.0
        %v849 = vmax.f32 %v817, 0.0
        %v850 = vmax.f32 %v818, 0.0
        %v851 = vmax.f32 %v819, 0.0
        %v852 = vmax.f32 %v820, 0.0
        %v853 = vmax.f32 %v821, 0.0
        %v854 = vmax.f32 %v822, 0.0
        %v855 = vmax.f32 %v823, 0.0
        %v856 = vmax.f32 %v824, 0.0
        %v857 = vmax.f32 %v825, 0.0
        %v858 = vmax.f32 %v826, 0.0
        %v859 = vmax.f32 %v827, 0.0
        %v860 = vpack.c.bf16 %v829, %v828
        %v861 = vpack.c.bf16 %v831, %v830
        %v862 = vpack.c.bf16 %v833, %v832
        %v863 = vpack.c.bf16 %v835, %v834
        %v864 = vpack.c.bf16 %v837, %v836
        %v865 = vpack.c.bf16 %v839, %v838
        %v866 = vpack.c.bf16 %v841, %v840
        %v867 = vpack.c.bf16 %v843, %v842
        %v868 = vpack.c.bf16 %v845, %v844
        %v869 = vpack.c.bf16 %v847, %v846
        %v870 = vpack.c.bf16 %v849, %v848
        %v871 = vpack.c.bf16 %v851, %v850
        %v872 = vpack.c.bf16 %v853, %v852
        %v873 = vpack.c.bf16 %v855, %v854
        %v874 = vpack.c.bf16 %v857, %v856
        %v875 = vpack.c.bf16 %v859, %v858
        %v892 = vunpack.c.l.b16 %v860
        %v893 = vunpack.c.h.b16 %v860
        %v894 = vunpack.c.l.b16 %v861
        %v895 = vunpack.c.h.b16 %v861
        %v896 = vunpack.c.l.b16 %v862
        %v897 = vunpack.c.h.b16 %v862
        %v898 = vunpack.c.l.b16 %v863
        %v899 = vunpack.c.h.b16 %v863
        %v900 = vunpack.c.l.b16 %v864
        %v901 = vunpack.c.h.b16 %v864
        %v902 = vunpack.c.l.b16 %v865
        %v903 = vunpack.c.h.b16 %v865
        %v904 = vunpack.c.l.b16 %v866
        %v905 = vunpack.c.h.b16 %v866
        %v906 = vunpack.c.l.b16 %v867
        %v907 = vunpack.c.h.b16 %v867
        %v908 = vunpack.c.l.b16 %v868
        %v909 = vunpack.c.h.b16 %v868
        %v910 = vunpack.c.l.b16 %v869
        %v911 = vunpack.c.h.b16 %v869
        %v912 = vunpack.c.l.b16 %v870
        %v913 = vunpack.c.h.b16 %v870
        %v914 = vunpack.c.l.b16 %v871
        %v915 = vunpack.c.h.b16 %v871
        %v916 = vunpack.c.l.b16 %v872
        %v917 = vunpack.c.h.b16 %v872
        %v918 = vunpack.c.l.b16 %v873
        %v919 = vunpack.c.h.b16 %v873
        %v920 = vunpack.c.l.b16 %v874
        %v921 = vunpack.c.h.b16 %v874
        %v922 = vunpack.c.l.b16 %v875
        %v923 = vunpack.c.h.b16 %v875
        %v924 = vpack.c.b16 %v892, %v892
        %v925 = vpack.c.b16 %v893, %v893
        %v926 = vpack.c.b16 %v894, %v894
        %v927 = vpack.c.b16 %v895, %v895
        %v928 = vpack.c.b16 %v896, %v896
        %v929 = vpack.c.b16 %v897, %v897
        %v930 = vpack.c.b16 %v898, %v898
        %v931 = vpack.c.b16 %v899, %v899
        %v932 = vpack.c.b16 %v900, %v900
        %v933 = vpack.c.b16 %v901, %v901
        %v934 = vpack.c.b16 %v902, %v902
        %v935 = vpack.c.b16 %v903, %v903
        %v936 = vpack.c.b16 %v904, %v904
        %v937 = vpack.c.b16 %v905, %v905
        %v938 = vpack.c.b16 %v906, %v906
        %v939 = vpack.c.b16 %v907, %v907
        %v940 = vpack.c.b16 %v908, %v908
        %v941 = vpack.c.b16 %v909, %v909
        %v942 = vpack.c.b16 %v910, %v910
        %v943 = vpack.c.b16 %v911, %v911
        %v944 = vpack.c.b16 %v912, %v912
        %v945 = vpack.c.b16 %v913, %v913
        %v946 = vpack.c.b16 %v914, %v914
        %v947 = vpack.c.b16 %v915, %v915
        %v948 = vpack.c.b16 %v916, %v916
        %v949 = vpack.c.b16 %v917, %v917
        %v950 = vpack.c.b16 %v918, %v918
        %v951 = vpack.c.b16 %v919, %v919
        %v952 = vpack.c.b16 %v920, %v920
        %v953 = vpack.c.b16 %v921, %v921
        %v954 = vpack.c.b16 %v922, %v922
        %v955 = vpack.c.b16 %v923, %v923
        %988 = vst [vmem:[%s257] sm:$0xf] %v924
        %989 = vst [vmem:[%s257 + $0x4] sm:$0xf] %v925
        %990 = vst [vmem:[%s257 + $0x8] sm:$0xf] %v926
        %991 = vst [vmem:[%s257 + $0xc] sm:$0xf] %v927
        %992 = vst [vmem:[%s257 + $0x10] sm:$0xf] %v928
        %993 = vst [vmem:[%s257 + $0x14] sm:$0xf] %v929
        %994 = vst [vmem:[%s257 + $0x18] sm:$0xf] %v930
        %995 = vst [vmem:[%s257 + $0x1c] sm:$0xf] %v931
        %996 = vst [vmem:[%s257 + $0x20] sm:$0xf] %v932
        %997 = vst [vmem:[%s257 + $0x24] sm:$0xf] %v933
        %998 = vst [vmem:[%s257 + $0x28] sm:$0xf] %v934
        %999 = vst [vmem:[%s257 + $0x2c] sm:$0xf] %v935
        %1000 = vst [vmem:[%s257 + $0x30] sm:$0xf] %v936
        %1001 = vst [vmem:[%s257 + $0x34] sm:$0xf] %v937
        %1002 = vst [vmem:[%s257 + $0x38] sm:$0xf] %v938
        %1003 = vst [vmem:[%s257 + $0x3c] sm:$0xf] %v939
        %1004 = vst [vmem:[%s257 + $0x40] sm:$0xf] %v940
        %1005 = vst [vmem:[%s257 + $0x44] sm:$0xf] %v941
        %1006 = vst [vmem:[%s257 + $0x48] sm:$0xf] %v942
        %1007 = vst [vmem:[%s257 + $0x4c] sm:$0xf] %v943
        %1008 = vst [vmem:[%s257 + $0x50] sm:$0xf] %v944
        %1009 = vst [vmem:[%s257 + $0x54] sm:$0xf] %v945
        %1010 = vst [vmem:[%s257 + $0x58] sm:$0xf] %v946
        %1011 = vst [vmem:[%s257 + $0x5c] sm:$0xf] %v947
        %1012 = vst [vmem:[%s257 + $0x60] sm:$0xf] %v948
        %1013 = vst [vmem:[%s257 + $0x64] sm:$0xf] %v949
        %1014 = vst [vmem:[%s257 + $0x68] sm:$0xf] %v950
        %1015 = vst [vmem:[%s257 + $0x6c] sm:$0xf] %v951
        %1016 = vst [vmem:[%s257 + $0x70] sm:$0xf] %v952
        %1017 = vst [vmem:[%s257 + $0x74] sm:$0xf] %v953
        %1018 = vst [vmem:[%s257 + $0x78] sm:$0xf] %v954
        %1019 = vst [vmem:[%s257 + $0x7c] sm:$0xf] %v955
      $region40: #{resnet_forward.11} parent=31 // pred_fallthru
        _
      %s1020 = smul.u32 32, %s19
      %p1021 = scmp.lt.s32.totalorder %s1020, 63
      %s1022 = scalar_select %p1021, %s1020, 63
      %p1023 = scmp.lt.s32.totalorder %s20, 0
      %s1024 = scalar_select %p1023, %s20, 0
      %s1025 = sadd.s32 %s1024, %s1022
      %s1026 = smul.addr %s1025, 4
      %s1027 = scalar_lea.vmem %s3, %s1026
      // Predicated region
      $region41: #{resnet_forward.11} parent=31 // pred_check
        %p1028 = pneg %p135
      $region42: #{resnet_forward.11} parent=31 // pred_check_branch
        %1030 = sbr.rel (%p1028) target = $region44
      $region43: #{resnet_forward.11} parent=31 // pred_region
        %s1031 = smul.u32 32, %s19
      $region44: #{resnet_forward.11} parent=31 // pred_fallthru
        _
    $region32: #{resnet_forward.11} parent=5 // pred_fallthru
      _
    %p1032 = scmp.le.s32.totalorder 2, %s9
    // Predicated region
    $region45: #{resnet_forward.11} parent=5 // pred_check
      %p1033 = pneg %p1032
    $region46: #{resnet_forward.11} parent=5 // pred_check_branch
      %1035 = sbr.rel (%p1033) target = $region48
    $region47: #{resnet_forward.11} parent=5 // pred_region
      %s1036 = ssub.s32 %s9, 2
      // Predicated region
      $region49: #{resnet_forward.11} parent=47 // pred_check
        %p1037 = pneg %p141
      $region50: #{resnet_forward.11} parent=47 // pred_check_branch
        %1039 = sbr.rel (%p1037) target = $region52
      $region51: #{resnet_forward.11} parent=47 // pred_region
        %s1040 = smul.u32 32, %s22
        %p1041 = scmp.lt.s32.totalorder %s1040, 63
        %s1042 = scalar_select %p1041, %s1040, 63
        %p1043 = scmp.lt.s32.totalorder %s23, 0
        %s1044 = scalar_select %p1043, %s23, 0
        %s1045 = sadd.s32 %s1044, %s1042
        %s1046 = smul.addr %s1045, 4
        %s1047 = scalar_lea.vmem %s3, %s1046
      $region52: #{resnet_forward.11} parent=47 // pred_fallthru
        _
    $region48: #{resnet_forward.11} parent=5 // pred_fallthru
      _
  $region6: #{resnet_forward.11} parent=0 // loop_footer
    %s13 = sadd.s32 1, %s9
  $region7: #{resnet_forward.11} parent=0 // loop_footer_branch
    %8 = sbr.rel target = $region3
  $region8: #{resnet_forward.11} parent=0 // loop_exit
    _

// kernel: resnet_forward.16
$region0: #{resnet_forward.16}
  #allocation0 [shape = 'u32[]', space=smem, size = 0x4, offset = 0x4, fixed_abs, tag = 'smem constant byte address 0x4 - core index']
  #allocation1 [shape = 'u32[144,128]{1,0:T(1,128)}', space=vmem, size = 0x12000, scoped, tag = 'internal scratch']
  #allocation2 [shape = 'f32[64,128]{1,0:T(8,128)}', space=vmem, size = 0x8000, scoped, tag = 'scratch operand']
  %s0 = inlined_call_operand.vmem [shape: bf16[128,128], index: 0, kind: input, shape index: {}]
  %s1 = inlined_call_operand.vmem [shape: bf16[128,128], index: 1, kind: input, shape index: {}]
  %s2 = inlined_call_operand.vmem [shape: f32[1,128], index: 2, kind: input, shape index: {}]
  %s3 = inlined_call_operand.vmem [shape: bf16[128,128], index: 3, kind: output, shape index: {}]
  %s4 = sld [smem:[#allocation0]]
  $region53: #{resnet_forward.16} parent=0
    _
  %s6 = ssub.s32 1, %s4
  %s7 = scalar_select 0, %s6, %s4
  loop: start=0, step=1, limit=4
  $region2: #{resnet_forward.16} parent=0 // loop_pre_header
    _
  $region3: #{resnet_forward.16} parent=0 // loop_header
    %s9 = sphi 0, %s13
    %p10 = scmp.ge.s32.totalorder %s9, 4
    %s16 = sphi 0, %s35
    %s17 = sphi 0, %s31
    %s18 = sphi 0, %s27
    %s19 = sphi 0, %s16
    %s20 = sphi 0, %s17
    %s21 = sphi 0, %s18
    %s22 = sphi 0, %s19
    %s23 = sphi 0, %s20
    %s24 = sphi 0, %s21
    %s40 = sphi 0, %s42
    %s43 = sphi 0, %s40
    %s44 = sphi 0, %s43
    %s60 = sphi 0, %s44
    %s68 = sphi 0, %s70
    %s71 = sphi 0, %s68
    %s72 = sphi 0, %s71
    %s88 = sphi 0, %s72
    %s94 = sphi 0, %s96
    %s97 = sphi 0, %s94
    %s98 = sphi 0, %s97
    %s114 = sphi 0, %s98
    %s122 = sphi 0, %s124
    %s125 = sphi 0, %s122
    %s126 = sphi 0, %s125
    %s142 = sphi 0, %s126
  $region4: #{resnet_forward.16} parent=0 // loop_header_branch
    %12 = sbr.rel (%p10) target = $region8
  $region5: #{resnet_forward.16} parent=0 // loop_body
    %s14 = ssub.s32 %s9, 1
    %s15 = ssub.s32 %s9, 2
    %s25 = sadd.s32 1, %s18
    %p26 = scmp.ge.s32.totalorder %s25, 1
    %s27 = scalar_select %p26, 0, %s25
    %s28 = sadd.s32 1, %s17
    %s29 = scalar_select %p26, %s28, %s17
    %p30 = scmp.ge.s32.totalorder %s29, 1
    %s31 = scalar_select %p30, 0, %s29
    %s32 = sadd.s32 1, %s16
    %s33 = scalar_select %p30, %s32, %s16
    %p34 = scmp.ge.s32.totalorder %s33, 2
    %s35 = scalar_select %p34, 0, %s33
    %s36 = ssub.s32 %s16, %s35
    %s37 = ssub.s32 %s18, %s27
    %s38 = sor.u32 %s36, %s37
    %p39 = scmp.eq.s32.totalorder %s38, 0
    %s41 = sadd.s32 %s40, 1
    %s42 = scalar_select %p39, %s40, %s41
    %p45 = pneg %p39
    %p46 = scmp.eq.s32.totalorder %s9, 1
    %p47 = por %p45, %p46
    %p48 = scmp.ne.s32.totalorder %s40, %s43
    %p49 = scmp.eq.s32.totalorder %s9, 0
    %p50 = por %p48, %p49
    %p51 = scmp.ne.s32.totalorder %s40, %s43
    %p52 = scmp.eq.s32.totalorder %s14, 1
    %p53 = por %p51, %p52
    %p54 = scmp.ne.s32.totalorder %s43, %s44
    %p55 = scmp.eq.s32.totalorder %s14, 0
    %p56 = por %p54, %p55
    %p57 = scmp.ne.s32.totalorder %s43, %s44
    %p58 = scmp.eq.s32.totalorder %s15, 1
    %p59 = por %p57, %p58
    %p61 = scmp.ne.s32.totalorder %s44, %s60
    %p62 = scmp.eq.s32.totalorder %s15, 0
    %p63 = por %p61, %p62
    %s64 = ssub.s32 %s18, %s27
    %s65 = ssub.s32 %s17, %s31
    %s66 = sor.u32 %s64, %s65
    %p67 = scmp.eq.s32.totalorder %s66, 0
    %s69 = sadd.s32 %s68, 1
    %s70 = scalar_select %p67, %s68, %s69
    %p73 = pneg %p67
    %p74 = scmp.eq.s32.totalorder %s9, 1
    %p75 = por %p73, %p74
    %p76 = scmp.ne.s32.totalorder %s68, %s71
    %p77 = scmp.eq.s32.totalorder %s9, 0
    %p78 = por %p76, %p77
    %p79 = scmp.ne.s32.totalorder %s68, %s71
    %p80 = scmp.eq.s32.totalorder %s14, 1
    %p81 = por %p79, %p80
    %p82 = scmp.ne.s32.totalorder %s71, %s72
    %p83 = scmp.eq.s32.totalorder %s14, 0
    %p84 = por %p82, %p83
    %p85 = scmp.ne.s32.totalorder %s71, %s72
    %p86 = scmp.eq.s32.totalorder %s15, 1
    %p87 = por %p85, %p86
    %p89 = scmp.ne.s32.totalorder %s72, %s88
    %p90 = scmp.eq.s32.totalorder %s15, 0
    %p91 = por %p89, %p90
    %s92 = ssub.s32 %s17, %s31
    %p93 = scmp.eq.s32.totalorder %s92, 0
    %s95 = sadd.s32 %s94, 1
    %s96 = scalar_select %p93, %s94, %s95
    %p99 = pneg %p93
    %p100 = scmp.eq.s32.totalorder %s9, 1
    %p101 = por %p99, %p100
    %p102 = scmp.ne.s32.totalorder %s94, %s97
    %p103 = scmp.eq.s32.totalorder %s9, 0
    %p104 = por %p102, %p103
    %p105 = scmp.ne.s32.totalorder %s94, %s97
    %p106 = scmp.eq.s32.totalorder %s14, 1
    %p107 = por %p105, %p106
    %p108 = scmp.ne.s32.totalorder %s97, %s98
    %p109 = scmp.eq.s32.totalorder %s14, 0
    %p110 = por %p108, %p109
    %p111 = scmp.ne.s32.totalorder %s97, %s98
    %p112 = scmp.eq.s32.totalorder %s15, 1
    %p113 = por %p111, %p112
    %p115 = scmp.ne.s32.totalorder %s98, %s114
    %p116 = scmp.eq.s32.totalorder %s15, 0
    %p117 = por %p115, %p116
    %s118 = ssub.s32 %s16, %s35
    %s119 = ssub.s32 %s17, %s31
    %s120 = sor.u32 %s118, %s119
    %p121 = scmp.eq.s32.totalorder %s120, 0
    %s123 = sadd.s32 %s122, 1
    %s124 = scalar_select %p121, %s122, %s123
    %p127 = pneg %p121
    %p128 = scmp.eq.s32.totalorder %s9, 1
    %p129 = por %p127, %p128
    %p130 = scmp.ne.s32.totalorder %s122, %s125
    %p131 = scmp.eq.s32.totalorder %s9, 0
    %p132 = por %p130, %p131
    %p133 = scmp.ne.s32.totalorder %s122, %s125
    %p134 = scmp.eq.s32.totalorder %s14, 1
    %p135 = por %p133, %p134
    %p136 = scmp.ne.s32.totalorder %s125, %s126
    %p137 = scmp.eq.s32.totalorder %s14, 0
    %p138 = por %p136, %p137
    %p139 = scmp.ne.s32.totalorder %s125, %s126
    %p140 = scmp.eq.s32.totalorder %s15, 1
    %p141 = por %p139, %p140
    %p143 = scmp.ne.s32.totalorder %s126, %s142
    %p144 = scmp.eq.s32.totalorder %s15, 0
    %p145 = por %p143, %p144
    %p146 = scmp.le.s32.totalorder 1, %s9
    %p147 = scmp.lt.s32.totalorder %s9, 3
    %p148 = pnand %p146, %p147
    %p149 = pneg %p148
    // Predicated region
    $region9: #{resnet_forward.16} parent=5 // pred_check
      _
    $region10: #{resnet_forward.16} parent=5 // pred_check_branch
      %151 = sbr.rel (%p148) target = $region12
    $region11: #{resnet_forward.16} parent=5 // pred_region
      %s152 = ssub.s32 %s9, 1
      // Predicated region
      $region13: #{resnet_forward.16} parent=11 // pred_check
        %p153 = pneg %p84
      $region14: #{resnet_forward.16} parent=11 // pred_check_branch
        %155 = sbr.rel (%p153) target = $region16
      $region15: #{resnet_forward.16} parent=11 // pred_region
        %s156 = smul.u32 16, %s21
        %p157 = scmp.lt.s32.totalorder %s156, 15
        %s158 = scalar_select %p157, %s156, 15
        %p159 = scmp.lt.s32.totalorder %s20, 0
        %s160 = scalar_select %p159, %s20, 0
        %s161 = sadd.s32 %s160, %s158
        %s162 = smul.addr %s161, 4
        %s163 = scalar_lea.vmem %s1, %s162
        %s164 = smul.u32 16, %s21
      $region16: #{resnet_forward.16} parent=11 // pred_fallthru
        _
      // Predicated region
      $region17: #{resnet_forward.16} parent=11 // pred_check
        %p165 = pneg %p110
      $region18: #{resnet_forward.16} parent=11 // pred_check_branch
        %167 = sbr.rel (%p165) target = $region20
      $region19: #{resnet_forward.16} parent=11 // pred_region
        %p168 = scmp.lt.s32.totalorder %s20, 0
        %s169 = scalar_select %p168, %s20, 0
        %s170 = scalar_lea.vmem %s2, %s169
      $region20: #{resnet_forward.16} parent=11 // pred_fallthru
        _
    $region12: #{resnet_forward.16} parent=5 // pred_fallthru
      _
    %p171 = scmp.lt.s32.totalorder %s9, 2
    // Predicated region
    $region21: #{resnet_forward.16} parent=5 // pred_check
      %p172 = pneg %p171
    $region22: #{resnet_forward.16} parent=5 // pred_check_branch
      %174 = sbr.rel (%p172) target = $region24
    $region23: #{resnet_forward.16} parent=5 // pred_region
      // Predicated region
      $region25: #{resnet_forward.16} parent=23 // pred_check
        %p175 = pneg %p50
      $region26: #{resnet_forward.16} parent=23 // pred_check_branch
        %177 = sbr.rel (%p175) target = $region28
      $region27: #{resnet_forward.16} parent=23 // pred_region
        %s178 = smul.u32 8, %s16
        %p179 = scmp.lt.s32.totalorder %s178, 15
        %s180 = scalar_select %p179, %s178, 15
        %p181 = scmp.lt.s32.totalorder %s18, 0
        %s182 = scalar_select %p181, %s18, 0
        %s183 = sadd.s32 %s182, %s180
        %s184 = smul.addr %s183, 4
        %s185 = scalar_lea.vmem %s0, %s184
        %s186 = smul.u32 8, %s16
      $region28: #{resnet_forward.16} parent=23 // pred_fallthru
        _
    $region24: #{resnet_forward.16} parent=5 // pred_fallthru
      _
    %p187 = scmp.le.s32.totalorder 1, %s9
    %p188 = scmp.lt.s32.totalorder %s9, 3
    %p189 = pnand %p187, %p188
    %p190 = pneg %p189
    // Predicated region
    $region29: #{resnet_forward.16} parent=5 // pred_check
      _
    $region30: #{resnet_forward.16} parent=5 // pred_check_branch
      %192 = sbr.rel (%p189) target = $region32
    $region31: #{resnet_forward.16} parent=5 // pred_region
      %s193 = ssub.s32 %s9, 1
      %s194 = smul.u32 8, %s19
      %p195 = scmp.lt.s32.totalorder %s194, 15
      %s196 = scalar_select %p195, %s194, 15
      %p197 = scmp.lt.s32.totalorder %s21, 0
      %s198 = scalar_select %p197, %s21, 0
      %s199 = sadd.s32 %s198, %s196
      %s200 = smul.addr %s199, 4
      %s201 = scalar_lea.vmem %s0, %s200
      %p202 = pneg %p56
      %p203 = pneg %p53
      %s204 = smul.u32 16, %s21
      %p205 = scmp.lt.s32.totalorder %s204, 15
      %s206 = scalar_select %p205, %s204, 15
      %p207 = scmp.lt.s32.totalorder %s20, 0
      %s208 = scalar_select %p207, %s20, 0
      %s209 = sadd.s32 %s208, %s206
      %s210 = smul.addr %s209, 4
      %s211 = scalar_lea.vmem %s1, %s210
      %p212 = pneg %p84
      %p213 = pneg %p81
      %p214 = scmp.lt.s32.totalorder %s20, 0
      %s215 = scalar_select %p214, %s20, 0
      %s216 = scalar_lea.vmem %s2, %s215
      %p217 = pneg %p110
      %p218 = pneg %p107
      %p219 = pneg %p138
      %p220 = pneg %p135
      %s221 = smul.u32 8, %s19
      %p222 = scmp.lt.s32.totalorder %s221, 15
      %s223 = scalar_select %p222, %s221, 15
      %p224 = scmp.lt.s32.totalorder %s20, 0
      %s225 = scalar_select %p224, %s20, 0
      %s226 = sadd.s32 %s225, %s223
      %s227 = smul.addr %s226, 4
      %s228 = scalar_lea.vmem %s3, %s227
      %s229 = smul.u32 8, %s19
      %p230 = scmp.lt.s32.totalorder %s229, 15
      %s231 = scalar_select %p230, %s229, 15
      %p232 = scmp.lt.s32.totalorder %s21, 0
      %s233 = scalar_select %p232, %s21, 0
      %s234 = sadd.s32 %s233, %s231
      %s235 = smul.addr %s234, 4
      %s236 = scalar_lea.vmem %s0, %s235
      %s237 = smul.u32 8, %s19
      %s238 = smul.u32 16, %s21
      %p239 = scmp.lt.s32.totalorder %s238, 15
      %s240 = scalar_select %p239, %s238, 15
      %p241 = scmp.lt.s32.totalorder %s20, 0
      %s242 = scalar_select %p241, %s20, 0
      %s243 = sadd.s32 %s242, %s240
      %s244 = smul.addr %s243, 4
      %s245 = scalar_lea.vmem %s1, %s244
      %s246 = smul.u32 16, %s21
      %p247 = scmp.lt.s32.totalorder %s20, 0
      %s248 = scalar_select %p247, %s20, 0
      %s249 = scalar_lea.vmem %s2, %s248
      %s250 = smul.u32 8, %s19
      %p251 = scmp.lt.s32.totalorder %s250, 15
      %s252 = scalar_select %p251, %s250, 15
      %p253 = scmp.lt.s32.totalorder %s20, 0
      %s254 = scalar_select %p253, %s20, 0
      %s255 = sadd.s32 %s254, %s252
      %s256 = smul.addr %s255, 4
      %s257 = scalar_lea.vmem %s3, %s256
      %s258 = smul.u32 8, %s19
      %p260 = scmp.eq.s32.totalorder %s21, 0
      // Predicated region
      $region33: #{resnet_forward.16} parent=31 // pred_check
        %p261 = pneg %p260
      $region34: #{resnet_forward.16} parent=31 // pred_check_branch
        %263 = sbr.rel (%p261) target = $region36
      $region35: #{resnet_forward.16} parent=31 // pred_region
        %264 = vst [vmem:[#allocation2] sm:$0xff] 0.0
        %265 = vst [vmem:[#allocation2 + $0x8] sm:$0xff] 0.0
        %266 = vst [vmem:[#allocation2 + $0x10] sm:$0xff] 0.0
        %267 = vst [vmem:[#allocation2 + $0x18] sm:$0xff] 0.0
        %268 = vst [vmem:[#allocation2 + $0x20] sm:$0xff] 0.0
        %269 = vst [vmem:[#allocation2 + $0x28] sm:$0xff] 0.0
        %270 = vst [vmem:[#allocation2 + $0x30] sm:$0xff] 0.0
        %271 = vst [vmem:[#allocation2 + $0x38] sm:$0xff] 0.0
      $region36: #{resnet_forward.16} parent=31 // pred_fallthru
        _
      %v272 = vld [vmem:[#allocation2] sm:$0xff]
      %v273 = vld [vmem:[#allocation2 + $0x8] sm:$0xff]
      %v274 = vld [vmem:[#allocation2 + $0x10] sm:$0xff]
      %v275 = vld [vmem:[#allocation2 + $0x18] sm:$0xff]
      %v276 = vld [vmem:[#allocation2 + $0x20] sm:$0xff]
      %v277 = vld [vmem:[#allocation2 + $0x28] sm:$0xff]
      %v278 = vld [vmem:[#allocation2 + $0x30] sm:$0xff]
      %v279 = vld [vmem:[#allocation2 + $0x38] sm:$0xff]
      %v280 = vld [vmem:[%s236] sm:$0xf]
      %v281 = vld [vmem:[%s236 + $0x4] sm:$0xf]
      %v282 = vld [vmem:[%s236 + $0x8] sm:$0xf]
      %v283 = vld [vmem:[%s236 + $0xc] sm:$0xf]
      %v284 = vld [vmem:[%s236 + $0x10] sm:$0xf]
      %v285 = vld [vmem:[%s236 + $0x14] sm:$0xf]
      %v286 = vld [vmem:[%s236 + $0x18] sm:$0xf]
      %v287 = vld [vmem:[%s236 + $0x1c] sm:$0xf]
      %v288 = vld [vmem:[%s245] sm:$0xf]
      %v289 = vld [vmem:[%s245 + $0x4] sm:$0xf]
      %v290 = vld [vmem:[%s245 + $0x8] sm:$0xf]
      %v291 = vld [vmem:[%s245 + $0xc] sm:$0xf]
      %v292 = vld [vmem:[%s245 + $0x10] sm:$0xf]
      %v293 = vld [vmem:[%s245 + $0x14] sm:$0xf]
      %v294 = vld [vmem:[%s245 + $0x18] sm:$0xf]
      %v295 = vld [vmem:[%s245 + $0x1c] sm:$0xf]
      %v296 = vld [vmem:[%s245 + $0x20] sm:$0xf]
      %v297 = vld [vmem:[%s245 + $0x24] sm:$0xf]
      %v298 = vld [vmem:[%s245 + $0x28] sm:$0xf]
      %v299 = vld [vmem:[%s245 + $0x2c] sm:$0xf]
      %v300 = vld [vmem:[%s245 + $0x30] sm:$0xf]
      %v301 = vld [vmem:[%s245 + $0x34] sm:$0xf]
      %v302 = vld [vmem:[%s245 + $0x38] sm:$0xf]
      %v303 = vld [vmem:[%s245 + $0x3c] sm:$0xf]
      %v312 = vunpack.c.l.b16 %v280
      %v313 = vunpack.c.l.b16 %v281
      %v314 = vunpack.c.l.b16 %v282
      %v315 = vunpack.c.l.b16 %v283
      %v316 = vunpack.c.l.b16 %v284
      %v317 = vunpack.c.l.b16 %v285
      %v318 = vunpack.c.l.b16 %v286
      %v319 = vunpack.c.l.b16 %v287
      %v320 = vpack.c.b16 %v313, %v312
      %v321 = vpack.c.b16 %v315, %v314
      %v322 = vpack.c.b16 %v317, %v316
      %v323 = vpack.c.b16 %v319, %v318
      %v344 = vunpack.c.l.b16 %v288
      %v345 = vunpack.c.l.b16 %v289
      %v346 = vunpack.c.l.b16 %v290
      %v347 = vunpack.c.l.b16 %v291
      %v348 = vunpack.c.l.b16 %v292
      %v349 = vunpack.c.l.b16 %v293
      %v350 = vunpack.c.l.b16 %v294
      %v351 = vunpack.c.l.b16 %v295
      %v352 = vunpack.c.l.b16 %v296
      %v353 = vunpack.c.l.b16 %v297
      %v354 = vunpack.c.l.b16 %v298
      %v355 = vunpack.c.l.b16 %v299
      %v356 = vunpack.c.l.b16 %v300
      %v357 = vunpack.c.l.b16 %v301
      %v358 = vunpack.c.l.b16 %v302
      %v359 = vunpack.c.l.b16 %v303
      %v360 = vpack.c.b16 %v345, %v344
      %v361 = vpack.c.b16 %v347, %v346
      %v362 = vpack.c.b16 %v349, %v348
      %v363 = vpack.c.b16 %v351, %v350
      %v364 = vpack.c.b16 %v353, %v352
      %v365 = vpack.c.b16 %v355, %v354
      %v366 = vpack.c.b16 %v357, %v356
      %v367 = vpack.c.b16 %v359, %v358
      %376 = vmatprep.subr.bf16.mxu0 0
      %377 = vmatpush1.bf16.msra.mxu0 %v360
      %378 = vmatprep.subr.bf16.mxu0 0
      %379 = vmatpush1.bf16.msra.mxu0 %v361
      %380 = vmatprep.subr.bf16.mxu0 0
      %381 = vmatpush1.bf16.msra.mxu0 %v362
      %382 = vmatprep.subr.bf16.mxu0 0
      %383 = vmatpush1.bf16.msra.mxu0 %v363
      %384 = vmatprep.subr.bf16.mxu0 0
      %385 = vmatpush1.bf16.msra.mxu0 %v364
      %386 = vmatprep.subr.bf16.mxu0 0
      %387 = vmatpush1.bf16.msra.mxu0 %v365
      %388 = vmatprep.subr.bf16.mxu0 0
      %389 = vmatpush1.bf16.msra.mxu0 %v366
      %390 = vmatprep.subr.bf16.mxu0 0
      %391 = vmatpush1.bf16.msra.mxu0 %v367
      %392 = vmatprep.subr.bf16.mxu0 0
      %393 = vmatpush1.bf16.msra.mxu0 0
      %394 = vmatprep.subr.bf16.mxu0 0
      %395 = vmatpush1.bf16.msra.mxu0 0
      %396 = vmatprep.subr.bf16.mxu0 0
      %397 = vmatpush1.bf16.msra.mxu0 0
      %398 = vmatprep.subr.bf16.mxu0 0
      %399 = vmatpush1.bf16.msra.mxu0 0
      %400 = vmatprep.subr.bf16.mxu0 0
      %401 = vmatpush1.bf16.msra.mxu0 0
      %402 = vmatprep.subr.bf16.mxu0 0
      %403 = vmatpush1.bf16.msra.mxu0 0
      %404 = vmatprep.subr.bf16.mxu0 0
      %405 = vmatpush1.bf16.msra.mxu0 0
      %406 = vmatprep.subr.bf16.mxu0 0
      %407 = vmatpush1.bf16.msra.mxu0 0
      %408 = vmatprep.mubr.bf16.mxu0 0
      %409 = vmatmul.mubr.bf16.gmra.mrb[0].mxu0 %v320
      %v410 = vpop.f32.mrb[0].mxu0
      %v411 = vadd.f32 0.0, %v410
      %v412 = vpop.f32.mrb[0].mxu0
      %v413 = vpop.f32.mrb[0].mxu0
      %v414 = vadd.f32 0.0, %v413
      %v415 = vpop.f32.mrb[0].mxu0
      %416 = vmatprep.mubr.bf16.mxu0 0
      %417 = vmatmul.mubr.bf16.gmra.mrb[0].mxu0 %v321
      %v418 = vpop.f32.mrb[0].mxu0
      %v419 = vadd.f32 0.0, %v418
      %v420 = vpop.f32.mrb[0].mxu0
      %v421 = vpop.f32.mrb[0].mxu0
      %v422 = vadd.f32 0.0, %v421
      %v423 = vpop.f32.mrb[0].mxu0
      %424 = vmatprep.mubr.bf16.mxu0 0
      %425 = vmatmul.mubr.bf16.gmra.mrb[0].mxu0 %v322
      %v426 = vpop.f32.mrb[0].mxu0
      %v427 = vadd.f32 0.0, %v426
      %v428 = vpop.f32.mrb[0].mxu0
      %v429 = vpop.f32.mrb[0].mxu0
      %v430 = vadd.f32 0.0, %v429
      %v431 = vpop.f32.mrb[0].mxu0
      %432 = vmatprep.mubr.bf16.mxu0 0
      %433 = vmatmul.mubr.bf16.gmra.mrb[0].mxu0 %v323
      %v434 = vpop.f32.mrb[0].mxu0
      %v435 = vadd.f32 0.0, %v434
      %v436 = vpop.f32.mrb[0].mxu0
      %v437 = vpop.f32.mrb[0].mxu0
      %v438 = vadd.f32 0.0, %v437
      %v439 = vpop.f32.mrb[0].mxu0
      %440 = vdwg.mxu0
      %v441 = vadd.f32 %v272, %v411
      %v442 = vadd.f32 %v273, %v414
      %v443 = vadd.f32 %v274, %v419
      %v444 = vadd.f32 %v275, %v422
      %v445 = vadd.f32 %v276, %v427
      %v446 = vadd.f32 %v277, %v430
      %v447 = vadd.f32 %v278, %v435
      %v448 = vadd.f32 %v279, %v438
      %449 = vst [vmem:[#allocation2] sm:$0xff] %v441
      %450 = vst [vmem:[#allocation2 + $0x8] sm:$0xff] %v442
      %451 = vst [vmem:[#allocation2 + $0x10] sm:$0xff] %v443
      %452 = vst [vmem:[#allocation2 + $0x18] sm:$0xff] %v444
      %453 = vst [vmem:[#allocation2 + $0x20] sm:$0xff] %v445
      %454 = vst [vmem:[#allocation2 + $0x28] sm:$0xff] %v446
      %455 = vst [vmem:[#allocation2 + $0x30] sm:$0xff] %v447
      %456 = vst [vmem:[#allocation2 + $0x38] sm:$0xff] %v448
      // Predicated region
      $region37: #{resnet_forward.16} parent=31 // pred_check
        %p457 = pneg %p260
      $region38: #{resnet_forward.16} parent=31 // pred_check_branch
        %459 = sbr.rel (%p457) target = $region40
      $region39: #{resnet_forward.16} parent=31 // pred_region
        %v460 = vld [vmem:[#allocation2] sm:$0xff]
        %v461 = vld [vmem:[#allocation2 + $0x8] sm:$0xff]
        %v462 = vld [vmem:[#allocation2 + $0x10] sm:$0xff]
        %v463 = vld [vmem:[#allocation2 + $0x18] sm:$0xff]
        %v464 = vld [vmem:[#allocation2 + $0x20] sm:$0xff]
        %v465 = vld [vmem:[#allocation2 + $0x28] sm:$0xff]
        %v466 = vld [vmem:[#allocation2 + $0x30] sm:$0xff]
        %v467 = vld [vmem:[#allocation2 + $0x38] sm:$0xff]
        %v468 = vld [vmem:[%s249] sm:$0x1]
        %v470 = vlaneseq
        %v471 = vshrl.u32 %v470, 7
        %v472 = vsub.s32 0, %v471
        %v473 = vrot.slane %v468, %v472
        %v475 = vadd.f32 %v460, %v473
        %v476 = vadd.f32 %v461, %v473
        %v477 = vadd.f32 %v462, %v473
        %v478 = vadd.f32 %v463, %v473
        %v479 = vadd.f32 %v464, %v473
        %v480 = vadd.f32 %v465, %v473
        %v481 = vadd.f32 %v466, %v473
        %v482 = vadd.f32 %v467, %v473
        %v483 = vpack.c.bf16 %v476, %v475
        %v484 = vpack.c.bf16 %v478, %v477
        %v485 = vpack.c.bf16 %v480, %v479
        %v486 = vpack.c.bf16 %v482, %v481
        %v491 = vunpack.c.l.b16 %v483
        %v492 = vunpack.c.h.b16 %v483
        %v493 = vunpack.c.l.b16 %v484
        %v494 = vunpack.c.h.b16 %v484
        %v495 = vunpack.c.l.b16 %v485
        %v496 = vunpack.c.h.b16 %v485
        %v497 = vunpack.c.l.b16 %v486
        %v498 = vunpack.c.h.b16 %v486
        %v499 = vpack.c.b16 %v491, %v491
        %v500 = vpack.c.b16 %v492, %v492
        %v501 = vpack.c.b16 %v493, %v493
        %v502 = vpack.c.b16 %v494, %v494
        %v503 = vpack.c.b16 %v495, %v495
        %v504 = vpack.c.b16 %v496, %v496
        %v505 = vpack.c.b16 %v497, %v497
        %v506 = vpack.c.b16 %v498, %v498
        %515 = vst [vmem:[%s257] sm:$0xf] %v499
        %516 = vst [vmem:[%s257 + $0x4] sm:$0xf] %v500
        %517 = vst [vmem:[%s257 + $0x8] sm:$0xf] %v501
        %518 = vst [vmem:[%s257 + $0xc] sm:$0xf] %v502
        %519 = vst [vmem:[%s257 + $0x10] sm:$0xf] %v503
        %520 = vst [vmem:[%s257 + $0x14] sm:$0xf] %v504
        %521 = vst [vmem:[%s257 + $0x18] sm:$0xf] %v505
        %522 = vst [vmem:[%s257 + $0x1c] sm:$0xf] %v506
      $region40: #{resnet_forward.16} parent=31 // pred_fallthru
        _
      %s523 = smul.u32 8, %s19
      %p524 = scmp.lt.s32.totalorder %s523, 15
      %s525 = scalar_select %p524, %s523, 15
      %p526 = scmp.lt.s32.totalorder %s20, 0
      %s527 = scalar_select %p526, %s20, 0
      %s528 = sadd.s32 %s527, %s525
      %s529 = smul.addr %s528, 4
      %s530 = scalar_lea.vmem %s3, %s529
      // Predicated region
      $region41: #{resnet_forward.16} parent=31 // pred_check
        %p531 = pneg %p135
      $region42: #{resnet_forward.16} parent=31 // pred_check_branch
        %533 = sbr.rel (%p531) target = $region44
      $region43: #{resnet_forward.16} parent=31 // pred_region
        %s534 = smul.u32 8, %s19
      $region44: #{resnet_forward.16} parent=31 // pred_fallthru
        _
    $region32: #{resnet_forward.16} parent=5 // pred_fallthru
      _
    %p535 = scmp.le.s32.totalorder 2, %s9
    // Predicated region
    $region45: #{resnet_forward.16} parent=5 // pred_check
      %p536 = pneg %p535
    $region46: #{resnet_forward.16} parent=5 // pred_check_branch
      %538 = sbr.rel (%p536) target = $region48
    $region47: #{resnet_forward.16} parent=5 // pred_region
      %s539 = ssub.s32 %s9, 2
      // Predicated region
      $region49: #{resnet_forward.16} parent=47 // pred_check
        %p540 = pneg %p141
      $region50: #{resnet_forward.16} parent=47 // pred_check_branch
        %542 = sbr.rel (%p540) target = $region52
      $region51: #{resnet_forward.16} parent=47 // pred_region
        %s543 = smul.u32 8, %s22
        %p544 = scmp.lt.s32.totalorder %s543, 15
        %s545 = scalar_select %p544, %s543, 15
        %p546 = scmp.lt.s32.totalorder %s23, 0
        %s547 = scalar_select %p546, %s23, 0
        %s548 = sadd.s32 %s547, %s545
        %s549 = smul.addr %s548, 4
        %s550 = scalar_lea.vmem %s3, %s549
      $region52: #{resnet_forward.16} parent=47 // pred_fallthru
        _
    $region48: #{resnet_forward.16} parent=5 // pred_fallthru
      _
  $region6: #{resnet_forward.16} parent=0 // loop_footer
    %s13 = sadd.s32 1, %s9
  $region7: #{resnet_forward.16} parent=0 // loop_footer_branch
    %8 = sbr.rel target = $region3
  $region8: #{resnet_forward.16} parent=0 // loop_exit
    _

// kernel: resnet_forward.12
$region0: #{resnet_forward.12}
  #allocation0 [shape = 'u32[]', space=smem, size = 0x4, offset = 0x4, fixed_abs, tag = 'smem constant byte address 0x4 - core index']
  #allocation1 [shape = 'u32[144,128]{1,0:T(1,128)}', space=vmem, size = 0x12000, scoped, tag = 'internal scratch']
  #allocation2 [shape = 'f32[256,128]{1,0:T(8,128)}', space=vmem, size = 0x20000, scoped, tag = 'scratch operand']
  %s0 = inlined_call_operand.vmem [shape: bf16[512,1152], index: 0, kind: input, shape index: {}]
  %s1 = inlined_call_operand.vmem [shape: bf16[1152,128], index: 1, kind: input, shape index: {}]
  %s2 = inlined_call_operand.vmem [shape: f32[1,128], index: 2, kind: input, shape index: {}]
  %s3 = inlined_call_operand.vmem [shape: bf16[512,128], index: 3, kind: output, shape index: {}]
  %s4 = sld [smem:[#allocation0]]
  $region53: #{resnet_forward.12} parent=0
    _
  %s6 = ssub.s32 1, %s4
  %s7 = scalar_select 0, %s6, %s4
  loop: start=0, step=1, limit=4
  $region2: #{resnet_forward.12} parent=0 // loop_pre_header
    _
  $region3: #{resnet_forward.12} parent=0 // loop_header
    %s9 = sphi 0, %s13
    %p10 = scmp.ge.s32.totalorder %s9, 4
    %s16 = sphi 0, %s35
    %s17 = sphi 0, %s31
    %s18 = sphi 0, %s27
    %s19 = sphi 0, %s16
    %s20 = sphi 0, %s17
    %s21 = sphi 0, %s18
    %s22 = sphi 0, %s19
    %s23 = sphi 0, %s20
    %s24 = sphi 0, %s21
    %s40 = sphi 0, %s42
    %s43 = sphi 0, %s40
    %s44 = sphi 0, %s43
    %s60 = sphi 0, %s44
    %s68 = sphi 0, %s70
    %s71 = sphi 0, %s68
    %s72 = sphi 0, %s71
    %s88 = sphi 0, %s72
    %s94 = sphi 0, %s96
    %s97 = sphi 0, %s94
    %s98 = sphi 0, %s97
    %s114 = sphi 0, %s98
    %s122 = sphi 0, %s124
    %s125 = sphi 0, %s122
    %s126 = sphi 0, %s125
    %s142 = sphi 0, %s126
  $region4: #{resnet_forward.12} parent=0 // loop_header_branch
    %12 = sbr.rel (%p10) target = $region8
  $region5: #{resnet_forward.12} parent=0 // loop_body
    %s14 = ssub.s32 %s9, 1
    %s15 = ssub.s32 %s9, 2
    %s25 = sadd.s32 1, %s18
    %p26 = scmp.ge.s32.totalorder %s25, 1
    %s27 = scalar_select %p26, 0, %s25
    %s28 = sadd.s32 1, %s17
    %s29 = scalar_select %p26, %s28, %s17
    %p30 = scmp.ge.s32.totalorder %s29, 1
    %s31 = scalar_select %p30, 0, %s29
    %s32 = sadd.s32 1, %s16
    %s33 = scalar_select %p30, %s32, %s16
    %p34 = scmp.ge.s32.totalorder %s33, 2
    %s35 = scalar_select %p34, 0, %s33
    %s36 = ssub.s32 %s16, %s35
    %s37 = ssub.s32 %s18, %s27
    %s38 = sor.u32 %s36, %s37
    %p39 = scmp.eq.s32.totalorder %s38, 0
    %s41 = sadd.s32 %s40, 1
    %s42 = scalar_select %p39, %s40, %s41
    %p45 = pneg %p39
    %p46 = scmp.eq.s32.totalorder %s9, 1
    %p47 = por %p45, %p46
    %p48 = scmp.ne.s32.totalorder %s40, %s43
    %p49 = scmp.eq.s32.totalorder %s9, 0
    %p50 = por %p48, %p49
    %p51 = scmp.ne.s32.totalorder %s40, %s43
    %p52 = scmp.eq.s32.totalorder %s14, 1
    %p53 = por %p51, %p52
    %p54 = scmp.ne.s32.totalorder %s43, %s44
    %p55 = scmp.eq.s32.totalorder %s14, 0
    %p56 = por %p54, %p55
    %p57 = scmp.ne.s32.totalorder %s43, %s44
    %p58 = scmp.eq.s32.totalorder %s15, 1
    %p59 = por %p57, %p58
    %p61 = scmp.ne.s32.totalorder %s44, %s60
    %p62 = scmp.eq.s32.totalorder %s15, 0
    %p63 = por %p61, %p62
    %s64 = ssub.s32 %s18, %s27
    %s65 = ssub.s32 %s17, %s31
    %s66 = sor.u32 %s64, %s65
    %p67 = scmp.eq.s32.totalorder %s66, 0
    %s69 = sadd.s32 %s68, 1
    %s70 = scalar_select %p67, %s68, %s69
    %p73 = pneg %p67
    %p74 = scmp.eq.s32.totalorder %s9, 1
    %p75 = por %p73, %p74
    %p76 = scmp.ne.s32.totalorder %s68, %s71
    %p77 = scmp.eq.s32.totalorder %s9, 0
    %p78 = por %p76, %p77
    %p79 = scmp.ne.s32.totalorder %s68, %s71
    %p80 = scmp.eq.s32.totalorder %s14, 1
    %p81 = por %p79, %p80
    %p82 = scmp.ne.s32.totalorder %s71, %s72
    %p83 = scmp.eq.s32.totalorder %s14, 0
    %p84 = por %p82, %p83
    %p85 = scmp.ne.s32.totalorder %s71, %s72
    %p86 = scmp.eq.s32.totalorder %s15, 1
    %p87 = por %p85, %p86
    %p89 = scmp.ne.s32.totalorder %s72, %s88
    %p90 = scmp.eq.s32.totalorder %s15, 0
    %p91 = por %p89, %p90
    %s92 = ssub.s32 %s17, %s31
    %p93 = scmp.eq.s32.totalorder %s92, 0
    %s95 = sadd.s32 %s94, 1
    %s96 = scalar_select %p93, %s94, %s95
    %p99 = pneg %p93
    %p100 = scmp.eq.s32.totalorder %s9, 1
    %p101 = por %p99, %p100
    %p102 = scmp.ne.s32.totalorder %s94, %s97
    %p103 = scmp.eq.s32.totalorder %s9, 0
    %p104 = por %p102, %p103
    %p105 = scmp.ne.s32.totalorder %s94, %s97
    %p106 = scmp.eq.s32.totalorder %s14, 1
    %p107 = por %p105, %p106
    %p108 = scmp.ne.s32.totalorder %s97, %s98
    %p109 = scmp.eq.s32.totalorder %s14, 0
    %p110 = por %p108, %p109
    %p111 = scmp.ne.s32.totalorder %s97, %s98
    %p112 = scmp.eq.s32.totalorder %s15, 1
    %p113 = por %p111, %p112
    %p115 = scmp.ne.s32.totalorder %s98, %s114
    %p116 = scmp.eq.s32.totalorder %s15, 0
    %p117 = por %p115, %p116
    %s118 = ssub.s32 %s16, %s35
    %s119 = ssub.s32 %s17, %s31
    %s120 = sor.u32 %s118, %s119
    %p121 = scmp.eq.s32.totalorder %s120, 0
    %s123 = sadd.s32 %s122, 1
    %s124 = scalar_select %p121, %s122, %s123
    %p127 = pneg %p121
    %p128 = scmp.eq.s32.totalorder %s9, 1
    %p129 = por %p127, %p128
    %p130 = scmp.ne.s32.totalorder %s122, %s125
    %p131 = scmp.eq.s32.totalorder %s9, 0
    %p132 = por %p130, %p131
    %p133 = scmp.ne.s32.totalorder %s122, %s125
    %p134 = scmp.eq.s32.totalorder %s14, 1
    %p135 = por %p133, %p134
    %p136 = scmp.ne.s32.totalorder %s125, %s126
    %p137 = scmp.eq.s32.totalorder %s14, 0
    %p138 = por %p136, %p137
    %p139 = scmp.ne.s32.totalorder %s125, %s126
    %p140 = scmp.eq.s32.totalorder %s15, 1
    %p141 = por %p139, %p140
    %p143 = scmp.ne.s32.totalorder %s126, %s142
    %p144 = scmp.eq.s32.totalorder %s15, 0
    %p145 = por %p143, %p144
    %p146 = scmp.le.s32.totalorder 1, %s9
    %p147 = scmp.lt.s32.totalorder %s9, 3
    %p148 = pnand %p146, %p147
    %p149 = pneg %p148
    // Predicated region
    $region9: #{resnet_forward.12} parent=5 // pred_check
      _
    $region10: #{resnet_forward.12} parent=5 // pred_check_branch
      %151 = sbr.rel (%p148) target = $region12
    $region11: #{resnet_forward.12} parent=5 // pred_region
      %s152 = ssub.s32 %s9, 1
      // Predicated region
      $region13: #{resnet_forward.12} parent=11 // pred_check
        %p153 = pneg %p84
      $region14: #{resnet_forward.12} parent=11 // pred_check_branch
        %155 = sbr.rel (%p153) target = $region16
      $region15: #{resnet_forward.12} parent=11 // pred_region
        %s156 = smul.u32 144, %s21
        %p157 = scmp.lt.s32.totalorder %s156, 143
        %s158 = scalar_select %p157, %s156, 143
        %p159 = scmp.lt.s32.totalorder %s20, 0
        %s160 = scalar_select %p159, %s20, 0
        %s161 = sadd.s32 %s160, %s158
        %s162 = smul.addr %s161, 4
        %s163 = scalar_lea.vmem %s1, %s162
        %s164 = smul.u32 144, %s21
      $region16: #{resnet_forward.12} parent=11 // pred_fallthru
        _
      // Predicated region
      $region17: #{resnet_forward.12} parent=11 // pred_check
        %p165 = pneg %p110
      $region18: #{resnet_forward.12} parent=11 // pred_check_branch
        %167 = sbr.rel (%p165) target = $region20
      $region19: #{resnet_forward.12} parent=11 // pred_region
        %p168 = scmp.lt.s32.totalorder %s20, 0
        %s169 = scalar_select %p168, %s20, 0
        %s170 = scalar_lea.vmem %s2, %s169
      $region20: #{resnet_forward.12} parent=11 // pred_fallthru
        _
    $region12: #{resnet_forward.12} parent=5 // pred_fallthru
      _
    %p171 = scmp.lt.s32.totalorder %s9, 2
    // Predicated region
    $region21: #{resnet_forward.12} parent=5 // pred_check
      %p172 = pneg %p171
    $region22: #{resnet_forward.12} parent=5 // pred_check_branch
      %174 = sbr.rel (%p172) target = $region24
    $region23: #{resnet_forward.12} parent=5 // pred_region
      // Predicated region
      $region25: #{resnet_forward.12} parent=23 // pred_check
        %p175 = pneg %p50
      $region26: #{resnet_forward.12} parent=23 // pred_check_branch
        %177 = sbr.rel (%p175) target = $region28
      $region27: #{resnet_forward.12} parent=23 // pred_region
        %s178 = smul.u32 32, %s16
        %s179 = smul.u32 9, %s18
        %p180 = scmp.lt.s32.totalorder %s178, 63
        %s181 = scalar_select %p180, %s178, 63
        %p182 = scmp.lt.s32.totalorder %s179, 8
        %s183 = scalar_select %p182, %s179, 8
        %s184 = smul.addr %s181, 9
        %s185 = sadd.s32 %s183, %s184
        %s186 = smul.addr %s185, 4
        %s187 = scalar_lea.vmem %s0, %s186
        %s188 = smul.u32 32, %s16
        %s189 = smul.u32 9, %s18
      $region28: #{resnet_forward.12} parent=23 // pred_fallthru
        _
    $region24: #{resnet_forward.12} parent=5 // pred_fallthru
      _
    %p190 = scmp.le.s32.totalorder 1, %s9
    %p191 = scmp.lt.s32.totalorder %s9, 3
    %p192 = pnand %p190, %p191
    %p193 = pneg %p192
    // Predicated region
    $region29: #{resnet_forward.12} parent=5 // pred_check
      _
    $region30: #{resnet_forward.12} parent=5 // pred_check_branch
      %195 = sbr.rel (%p192) target = $region32
    $region31: #{resnet_forward.12} parent=5 // pred_region
      %s196 = ssub.s32 %s9, 1
      %s197 = smul.u32 32, %s19
      %s198 = smul.u32 9, %s21
      %p199 = scmp.lt.s32.totalorder %s197, 63
      %s200 = scalar_select %p199, %s197, 63
      %p201 = scmp.lt.s32.totalorder %s198, 8
      %s202 = scalar_select %p201, %s198, 8
      %s203 = smul.addr %s200, 9
      %s204 = sadd.s32 %s202, %s203
      %s205 = smul.addr %s204, 4
      %s206 = scalar_lea.vmem %s0, %s205
      %p207 = pneg %p56
      %p208 = pneg %p53
      %s209 = smul.u32 144, %s21
      %p210 = scmp.lt.s32.totalorder %s209, 143
      %s211 = scalar_select %p210, %s209, 143
      %p212 = scmp.lt.s32.totalorder %s20, 0
      %s213 = scalar_select %p212, %s20, 0
      %s214 = sadd.s32 %s213, %s211
      %s215 = smul.addr %s214, 4
      %s216 = scalar_lea.vmem %s1, %s215
      %p217 = pneg %p84
      %p218 = pneg %p81
      %p219 = scmp.lt.s32.totalorder %s20, 0
      %s220 = scalar_select %p219, %s20, 0
      %s221 = scalar_lea.vmem %s2, %s220
      %p222 = pneg %p110
      %p223 = pneg %p107
      %p224 = pneg %p138
      %p225 = pneg %p135
      %s226 = smul.u32 32, %s19
      %p227 = scmp.lt.s32.totalorder %s226, 63
      %s228 = scalar_select %p227, %s226, 63
      %p229 = scmp.lt.s32.totalorder %s20, 0
      %s230 = scalar_select %p229, %s20, 0
      %s231 = sadd.s32 %s230, %s228
      %s232 = smul.addr %s231, 4
      %s233 = scalar_lea.vmem %s3, %s232
      %s234 = smul.u32 32, %s19
      %s235 = smul.u32 9, %s21
      %p236 = scmp.lt.s32.totalorder %s234, 63
      %s237 = scalar_select %p236, %s234, 63
      %p238 = scmp.lt.s32.totalorder %s235, 8
      %s239 = scalar_select %p238, %s235, 8
      %s240 = smul.addr %s237, 9
      %s241 = sadd.s32 %s239, %s240
      %s242 = smul.addr %s241, 4
      %s243 = scalar_lea.vmem %s0, %s242
      %s244 = smul.u32 32, %s19
      %s245 = smul.u32 9, %s21
      %s246 = smul.u32 144, %s21
      %p247 = scmp.lt.s32.totalorder %s246, 143
      %s248 = scalar_select %p247, %s246, 143
      %p249 = scmp.lt.s32.totalorder %s20, 0
      %s250 = scalar_select %p249, %s20, 0
      %s251 = sadd.s32 %s250, %s248
      %s252 = smul.addr %s251, 4
      %s253 = scalar_lea.vmem %s1, %s252
      %s254 = smul.u32 144, %s21
      %p255 = scmp.lt.s32.totalorder %s20, 0
      %s256 = scalar_select %p255, %s20, 0
      %s257 = scalar_lea.vmem %s2, %s256
      %s258 = smul.u32 32, %s19
      %p259 = scmp.lt.s32.totalorder %s258, 63
      %s260 = scalar_select %p259, %s258, 63
      %p261 = scmp.lt.s32.totalorder %s20, 0
      %s262 = scalar_select %p261, %s20, 0
      %s263 = sadd.s32 %s262, %s260
      %s264 = smul.addr %s263, 4
      %s265 = scalar_lea.vmem %s3, %s264
      %s266 = smul.u32 32, %s19
      %p268 = scmp.eq.s32.totalorder %s21, 0
      // Predicated region
      $region33: #{resnet_forward.12} parent=31 // pred_check
        %p269 = pneg %p268
      $region34: #{resnet_forward.12} parent=31 // pred_check_branch
        %271 = sbr.rel (%p269) target = $region36
      $region35: #{resnet_forward.12} parent=31 // pred_region
        %272 = vst [vmem:[#allocation2] sm:$0xff] 0.0
        %273 = vst [vmem:[#allocation2 + $0x8] sm:$0xff] 0.0
        %274 = vst [vmem:[#allocation2 + $0x10] sm:$0xff] 0.0
        %275 = vst [vmem:[#allocation2 + $0x18] sm:$0xff] 0.0
        %276 = vst [vmem:[#allocation2 + $0x20] sm:$0xff] 0.0
        %277 = vst [vmem:[#allocation2 + $0x28] sm:$0xff] 0.0
        %278 = vst [vmem:[#allocation2 + $0x30] sm:$0xff] 0.0
        %279 = vst [vmem:[#allocation2 + $0x38] sm:$0xff] 0.0
        %280 = vst [vmem:[#allocation2 + $0x40] sm:$0xff] 0.0
        %281 = vst [vmem:[#allocation2 + $0x48] sm:$0xff] 0.0
        %282 = vst [vmem:[#allocation2 + $0x50] sm:$0xff] 0.0
        %283 = vst [vmem:[#allocation2 + $0x58] sm:$0xff] 0.0
        %284 = vst [vmem:[#allocation2 + $0x60] sm:$0xff] 0.0
        %285 = vst [vmem:[#allocation2 + $0x68] sm:$0xff] 0.0
        %286 = vst [vmem:[#allocation2 + $0x70] sm:$0xff] 0.0
        %287 = vst [vmem:[#allocation2 + $0x78] sm:$0xff] 0.0
        %288 = vst [vmem:[#allocation2 + $0x80] sm:$0xff] 0.0
        %289 = vst [vmem:[#allocation2 + $0x88] sm:$0xff] 0.0
        %290 = vst [vmem:[#allocation2 + $0x90] sm:$0xff] 0.0
        %291 = vst [vmem:[#allocation2 + $0x98] sm:$0xff] 0.0
        %292 = vst [vmem:[#allocation2 + $0xa0] sm:$0xff] 0.0
        %293 = vst [vmem:[#allocation2 + $0xa8] sm:$0xff] 0.0
        %294 = vst [vmem:[#allocation2 + $0xb0] sm:$0xff] 0.0
        %295 = vst [vmem:[#allocation2 + $0xb8] sm:$0xff] 0.0
        %296 = vst [vmem:[#allocation2 + $0xc0] sm:$0xff] 0.0
        %297 = vst [vmem:[#allocation2 + $0xc8] sm:$0xff] 0.0
        %298 = vst [vmem:[#allocation2 + $0xd0] sm:$0xff] 0.0
        %299 = vst [vmem:[#allocation2 + $0xd8] sm:$0xff] 0.0
        %300 = vst [vmem:[#allocation2 + $0xe0] sm:$0xff] 0.0
        %301 = vst [vmem:[#allocation2 + $0xe8] sm:$0xff] 0.0
        %302 = vst [vmem:[#allocation2 + $0xf0] sm:$0xff] 0.0
        %303 = vst [vmem:[#allocation2 + $0xf8] sm:$0xff] 0.0
      $region36: #{resnet_forward.12} parent=31 // pred_fallthru
        _
      %v304 = vld [vmem:[#allocation2] sm:$0xff]
      %v305 = vld [vmem:[#allocation2 + $0x8] sm:$0xff]
      %v306 = vld [vmem:[#allocation2 + $0x10] sm:$0xff]
      %v307 = vld [vmem:[#allocation2 + $0x18] sm:$0xff]
      %v308 = vld [vmem:[#allocation2 + $0x20] sm:$0xff]
      %v309 = vld [vmem:[#allocation2 + $0x28] sm:$0xff]
      %v310 = vld [vmem:[#allocation2 + $0x30] sm:$0xff]
      %v311 = vld [vmem:[#allocation2 + $0x38] sm:$0xff]
      %v312 = vld [vmem:[#allocation2 + $0x40] sm:$0xff]
      %v313 = vld [vmem:[#allocation2 + $0x48] sm:$0xff]
      %v314 = vld [vmem:[#allocation2 + $0x50] sm:$0xff]
      %v315 = vld [vmem:[#allocation2 + $0x58] sm:$0xff]
      %v316 = vld [vmem:[#allocation2 + $0x60] sm:$0xff]
      %v317 = vld [vmem:[#allocation2 + $0x68] sm:$0xff]
      %v318 = vld [vmem:[#allocation2 + $0x70] sm:$0xff]
      %v319 = vld [vmem:[#allocation2 + $0x78] sm:$0xff]
      %v320 = vld [vmem:[#allocation2 + $0x80] sm:$0xff]
      %v321 = vld [vmem:[#allocation2 + $0x88] sm:$0xff]
      %v322 = vld [vmem:[#allocation2 + $0x90] sm:$0xff]
      %v323 = vld [vmem:[#allocation2 + $0x98] sm:$0xff]
      %v324 = vld [vmem:[#allocation2 + $0xa0] sm:$0xff]
      %v325 = vld [vmem:[#allocation2 + $0xa8] sm:$0xff]
      %v326 = vld [vmem:[#allocation2 + $0xb0] sm:$0xff]
      %v327 = vld [vmem:[#allocation2 + $0xb8] sm:$0xff]
      %v328 = vld [vmem:[#allocation2 + $0xc0] sm:$0xff]
      %v329 = vld [vmem:[#allocation2 + $0xc8] sm:$0xff]
      %v330 = vld [vmem:[#allocation2 + $0xd0] sm:$0xff]
      %v331 = vld [vmem:[#allocation2 + $0xd8] sm:$0xff]
      %v332 = vld [vmem:[#allocation2 + $0xe0] sm:$0xff]
      %v333 = vld [vmem:[#allocation2 + $0xe8] sm:$0xff]
      %v334 = vld [vmem:[#allocation2 + $0xf0] sm:$0xff]
      %v335 = vld [vmem:[#allocation2 + $0xf8] sm:$0xff]
      %v336 = vld [vmem:[%s243] sm:$0xff]
      %v337 = vld [vmem:[%s243 + $0x8] sm:$0xff]
      %v338 = vld [vmem:[%s243 + $0x10] sm:$0xff]
      %v339 = vld [vmem:[%s243 + $0x18] sm:$0xff]
      %v340 = vld [vmem:[%s243 + $0x20] sm:$0xf]
      %v341 = vld [vmem:[%s243 + $0x24] sm:$0xff]
      %v342 = vld [vmem:[%s243 + $0x2c] sm:$0xff]
      %v343 = vld [vmem:[%s243 + $0x34] sm:$0xff]
      %v344 = vld [vmem:[%s243 + $0x3c] sm:$0xff]
      %v345 = vld [vmem:[%s243 + $0x44] sm:$0xf]
      %v346 = vld [vmem:[%s243 + $0x48] sm:$0xff]
      %v347 = vld [vmem:[%s243 + $0x50] sm:$0xff]
      %v348 = vld [vmem:[%s243 + $0x58] sm:$0xff]
      %v349 = vld [vmem:[%s243 + $0x60] sm:$0xff]
      %v350 = vld [vmem:[%s243 + $0x68] sm:$0xf]
      %v351 = vld [vmem:[%s243 + $0x6c] sm:$0xff]
      %v352 = vld [vmem:[%s243 + $0x74] sm:$0xff]
      %v353 = vld [vmem:[%s243 + $0x7c] sm:$0xff]
      %v354 = vld [vmem:[%s243 + $0x84] sm:$0xff]
      %v355 = vld [vmem:[%s243 + $0x8c] sm:$0xf]
      %v356 = vld [vmem:[%s243 + $0x90] sm:$0xff]
      %v357 = vld [vmem:[%s243 + $0x98] sm:$0xff]
      %v358 = vld [vmem:[%s243 + $0xa0] sm:$0xff]
      %v359 = vld [vmem:[%s243 + $0xa8] sm:$0xff]
      %v360 = vld [vmem:[%s243 + $0xb0] sm:$0xf]
      %v361 = vld [vmem:[%s243 + $0xb4] sm:$0xff]
      %v362 = vld [vmem:[%s243 + $0xbc] sm:$0xff]
      %v363 = vld [vmem:[%s243 + $0xc4] sm:$0xff]
      %v364 = vld [vmem:[%s243 + $0xcc] sm:$0xff]
      %v365 = vld [vmem:[%s243 + $0xd4] sm:$0xf]
      %v366 = vld [vmem:[%s243 + $0xd8] sm:$0xff]
      %v367 = vld [vmem:[%s243 + $0xe0] sm:$0xff]
      %v368 = vld [vmem:[%s243 + $0xe8] sm:$0xff]
      %v369 = vld [vmem:[%s243 + $0xf0] sm:$0xff]
      %v370 = vld [vmem:[%s243 + $0xf8] sm:$0xf]
      %v371 = vld [vmem:[%s243 + $0xfc] sm:$0xff]
      %v372 = vld [vmem:[%s243 + $0x104] sm:$0xff]
      %v373 = vld [vmem:[%s243 + $0x10c] sm:$0xff]
      %v374 = vld [vmem:[%s243 + $0x114] sm:$0xff]
      %v375 = vld [vmem:[%s243 + $0x11c] sm:$0xf]
      %v376 = vld [vmem:[%s243 + $0x120] sm:$0xff]
      %v377 = vld [vmem:[%s243 + $0x128] sm:$0xff]
      %v378 = vld [vmem:[%s243 + $0x130] sm:$0xff]
      %v379 = vld [vmem:[%s243 + $0x138] sm:$0xff]
      %v380 = vld [vmem:[%s243 + $0x140] sm:$0xf]
      %v381 = vld [vmem:[%s243 + $0x144] sm:$0xff]
      %v382 = vld [vmem:[%s243 + $0x14c] sm:$0xff]
      %v383 = vld [vmem:[%s243 + $0x154] sm:$0xff]
      %v384 = vld [vmem:[%s243 + $0x15c] sm:$0xff]
      %v385 = vld [vmem:[%s243 + $0x164] sm:$0xf]
      %v386 = vld [vmem:[%s243 + $0x168] sm:$0xff]
      %v387 = vld [vmem:[%s243 + $0x170] sm:$0xff]
      %v388 = vld [vmem:[%s243 + $0x178] sm:$0xff]
      %v389 = vld [vmem:[%s243 + $0x180] sm:$0xff]
      %v390 = vld [vmem:[%s243 + $0x188] sm:$0xf]
      %v391 = vld [vmem:[%s243 + $0x18c] sm:$0xff]
      %v392 = vld [vmem:[%s243 + $0x194] sm:$0xff]
      %v393 = vld [vmem:[%s243 + $0x19c] sm:$0xff]
      %v394 = vld [vmem:[%s243 + $0x1a4] sm:$0xff]
      %v395 = vld [vmem:[%s243 + $0x1ac] sm:$0xf]
      %v396 = vld [vmem:[%s243 + $0x1b0] sm:$0xff]
      %v397 = vld [vmem:[%s243 + $0x1b8] sm:$0xff]
      %v398 = vld [vmem:[%s243 + $0x1c0] sm:$0xff]
      %v399 = vld [vmem:[%s243 + $0x1c8] sm:$0xff]
      %v400 = vld [vmem:[%s243 + $0x1d0] sm:$0xf]
      %v401 = vld [vmem:[%s243 + $0x1d4] sm:$0xff]
      %v402 = vld [vmem:[%s243 + $0x1dc] sm:$0xff]
      %v403 = vld [vmem:[%s243 + $0x1e4] sm:$0xff]
      %v404 = vld [vmem:[%s243 + $0x1ec] sm:$0xff]
      %v405 = vld [vmem:[%s243 + $0x1f4] sm:$0xf]
      %v406 = vld [vmem:[%s243 + $0x1f8] sm:$0xff]
      %v407 = vld [vmem:[%s243 + $0x200] sm:$0xff]
      %v408 = vld [vmem:[%s243 + $0x208] sm:$0xff]
      %v409 = vld [vmem:[%s243 + $0x210] sm:$0xff]
      %v410 = vld [vmem:[%s243 + $0x218] sm:$0xf]
      %v411 = vld [vmem:[%s243 + $0x21c] sm:$0xff]
      %v412 = vld [vmem:[%s243 + $0x224] sm:$0xff]
      %v413 = vld [vmem:[%s243 + $0x22c] sm:$0xff]
      %v414 = vld [vmem:[%s243 + $0x234] sm:$0xff]
      %v415 = vld [vmem:[%s243 + $0x23c] sm:$0xf]
      %v416 = vld [vmem:[%s243 + $0x240] sm:$0xff]
      %v417 = vld [vmem:[%s243 + $0x248] sm:$0xff]
      %v418 = vld [vmem:[%s243 + $0x250] sm:$0xff]
      %v419 = vld [vmem:[%s243 + $0x258] sm:$0xff]
      %v420 = vld [vmem:[%s243 + $0x260] sm:$0xf]
      %v421 = vld [vmem:[%s243 + $0x264] sm:$0xff]
      %v422 = vld [vmem:[%s243 + $0x26c] sm:$0xff]
      %v423 = vld [vmem:[%s243 + $0x274] sm:$0xff]
      %v424 = vld [vmem:[%s243 + $0x27c] sm:$0xff]
      %v425 = vld [vmem:[%s243 + $0x284] sm:$0xf]
      %v426 = vld [vmem:[%s243 + $0x288] sm:$0xff]
      %v427 = vld [vmem:[%s243 + $0x290] sm:$0xff]
      %v428 = vld [vmem:[%s243 + $0x298] sm:$0xff]
      %v429 = vld [vmem:[%s243 + $0x2a0] sm:$0xff]
      %v430 = vld [vmem:[%s243 + $0x2a8] sm:$0xf]
      %v431 = vld [vmem:[%s243 + $0x2ac] sm:$0xff]
      %v432 = vld [vmem:[%s243 + $0x2b4] sm:$0xff]
      %v433 = vld [vmem:[%s243 + $0x2bc] sm:$0xff]
      %v434 = vld [vmem:[%s243 + $0x2c4] sm:$0xff]
      %v435 = vld [vmem:[%s243 + $0x2cc] sm:$0xf]
      %v436 = vld [vmem:[%s243 + $0x2d0] sm:$0xff]
      %v437 = vld [vmem:[%s243 + $0x2d8] sm:$0xff]
      %v438 = vld [vmem:[%s243 + $0x2e0] sm:$0xff]
      %v439 = vld [vmem:[%s243 + $0x2e8] sm:$0xff]
      %v440 = vld [vmem:[%s243 + $0x2f0] sm:$0xf]
      %v441 = vld [vmem:[%s243 + $0x2f4] sm:$0xff]
      %v442 = vld [vmem:[%s243 + $0x2fc] sm:$0xff]
      %v443 = vld [vmem:[%s243 + $0x304] sm:$0xff]
      %v444 = vld [vmem:[%s243 + $0x30c] sm:$0xff]
      %v445 = vld [vmem:[%s243 + $0x314] sm:$0xf]
      %v446 = vld [vmem:[%s243 + $0x318] sm:$0xff]
      %v447 = vld [vmem:[%s243 + $0x320] sm:$0xff]
      %v448 = vld [vmem:[%s243 + $0x328] sm:$0xff]
      %v449 = vld [vmem:[%s243 + $0x330] sm:$0xff]
      %v450 = vld [vmem:[%s243 + $0x338] sm:$0xf]
      %v451 = vld [vmem:[%s243 + $0x33c] sm:$0xff]
      %v452 = vld [vmem:[%s243 + $0x344] sm:$0xff]
      %v453 = vld [vmem:[%s243 + $0x34c] sm:$0xff]
      %v454 = vld [vmem:[%s243 + $0x354] sm:$0xff]
      %v455 = vld [vmem:[%s243 + $0x35c] sm:$0xf]
      %v456 = vld [vmem:[%s243 + $0x360] sm:$0xff]
      %v457 = vld [vmem:[%s243 + $0x368] sm:$0xff]
      %v458 = vld [vmem:[%s243 + $0x370] sm:$0xff]
      %v459 = vld [vmem:[%s243 + $0x378] sm:$0xff]
      %v460 = vld [vmem:[%s243 + $0x380] sm:$0xf]
      %v461 = vld [vmem:[%s243 + $0x384] sm:$0xff]
      %v462 = vld [vmem:[%s243 + $0x38c] sm:$0xff]
      %v463 = vld [vmem:[%s243 + $0x394] sm:$0xff]
      %v464 = vld [vmem:[%s243 + $0x39c] sm:$0xff]
      %v465 = vld [vmem:[%s243 + $0x3a4] sm:$0xf]
      %v466 = vld [vmem:[%s243 + $0x3a8] sm:$0xff]
      %v467 = vld [vmem:[%s243 + $0x3b0] sm:$0xff]
      %v468 = vld [vmem:[%s243 + $0x3b8] sm:$0xff]
      %v469 = vld [vmem:[%s243 + $0x3c0] sm:$0xff]
      %v470 = vld [vmem:[%s243 + $0x3c8] sm:$0xf]
      %v471 = vld [vmem:[%s243 + $0x3cc] sm:$0xff]
      %v472 = vld [vmem:[%s243 + $0x3d4] sm:$0xff]
      %v473 = vld [vmem:[%s243 + $0x3dc] sm:$0xff]
      %v474 = vld [vmem:[%s243 + $0x3e4] sm:$0xff]
      %v475 = vld [vmem:[%s243 + $0x3ec] sm:$0xf]
      %v476 = vld [vmem:[%s243 + $0x3f0] sm:$0xff]
      %v477 = vld [vmem:[%s243 + $0x3f8] sm:$0xff]
      %v478 = vld [vmem:[%s243 + $0x400] sm:$0xff]
      %v479 = vld [vmem:[%s243 + $0x408] sm:$0xff]
      %v480 = vld [vmem:[%s243 + $0x410] sm:$0xf]
      %v481 = vld [vmem:[%s243 + $0x414] sm:$0xff]
      %v482 = vld [vmem:[%s243 + $0x41c] sm:$0xff]
      %v483 = vld [vmem:[%s243 + $0x424] sm:$0xff]
      %v484 = vld [vmem:[%s243 + $0x42c] sm:$0xff]
      %v485 = vld [vmem:[%s243 + $0x434] sm:$0xf]
      %v486 = vld [vmem:[%s243 + $0x438] sm:$0xff]
      %v487 = vld [vmem:[%s243 + $0x440] sm:$0xff]
      %v488 = vld [vmem:[%s243 + $0x448] sm:$0xff]
      %v489 = vld [vmem:[%s243 + $0x450] sm:$0xff]
      %v490 = vld [vmem:[%s243 + $0x458] sm:$0xf]
      %v491 = vld [vmem:[%s243 + $0x45c] sm:$0xff]
      %v492 = vld [vmem:[%s243 + $0x464] sm:$0xff]
      %v493 = vld [vmem:[%s243 + $0x46c] sm:$0xff]
      %v494 = vld [vmem:[%s243 + $0x474] sm:$0xff]
      %v495 = vld [vmem:[%s243 + $0x47c] sm:$0xf]
      %v496 = vld [vmem:[%s253] sm:$0xf]
      %v497 = vld [vmem:[%s253 + $0x4] sm:$0xf]
      %v498 = vld [vmem:[%s253 + $0x8] sm:$0xf]
      %v499 = vld [vmem:[%s253 + $0xc] sm:$0xf]
      %v500 = vld [vmem:[%s253 + $0x10] sm:$0xf]
      %v501 = vld [vmem:[%s253 + $0x14] sm:$0xf]
      %v502 = vld [vmem:[%s253 + $0x18] sm:$0xf]
      %v503 = vld [vmem:[%s253 + $0x1c] sm:$0xf]
      %v504 = vld [vmem:[%s253 + $0x20] sm:$0xf]
      %v505 = vld [vmem:[%s253 + $0x24] sm:$0xf]
      %v506 = vld [vmem:[%s253 + $0x28] sm:$0xf]
      %v507 = vld [vmem:[%s253 + $0x2c] sm:$0xf]
      %v508 = vld [vmem:[%s253 + $0x30] sm:$0xf]
      %v509 = vld [vmem:[%s253 + $0x34] sm:$0xf]
      %v510 = vld [vmem:[%s253 + $0x38] sm:$0xf]
      %v511 = vld [vmem:[%s253 + $0x3c] sm:$0xf]
      %v512 = vld [vmem:[%s253 + $0x40] sm:$0xf]
      %v513 = vld [vmem:[%s253 + $0x44] sm:$0xf]
      %v514 = vld [vmem:[%s253 + $0x48] sm:$0xf]
      %v515 = vld [vmem:[%s253 + $0x4c] sm:$0xf]
      %v516 = vld [vmem:[%s253 + $0x50] sm:$0xf]
      %v517 = vld [vmem:[%s253 + $0x54] sm:$0xf]
      %v518 = vld [vmem:[%s253 + $0x58] sm:$0xf]
      %v519 = vld [vmem:[%s253 + $0x5c] sm:$0xf]
      %v520 = vld [vmem:[%s253 + $0x60] sm:$0xf]
      %v521 = vld [vmem:[%s253 + $0x64] sm:$0xf]
      %v522 = vld [vmem:[%s253 + $0x68] sm:$0xf]
      %v523 = vld [vmem:[%s253 + $0x6c] sm:$0xf]
      %v524 = vld [vmem:[%s253 + $0x70] sm:$0xf]
      %v525 = vld [vmem:[%s253 + $0x74] sm:$0xf]
      %v526 = vld [vmem:[%s253 + $0x78] sm:$0xf]
      %v527 = vld [vmem:[%s253 + $0x7c] sm:$0xf]
      %v528 = vld [vmem:[%s253 + $0x80] sm:$0xf]
      %v529 = vld [vmem:[%s253 + $0x84] sm:$0xf]
      %v530 = vld [vmem:[%s253 + $0x88] sm:$0xf]
      %v531 = vld [vmem:[%s253 + $0x8c] sm:$0xf]
      %v532 = vld [vmem:[%s253 + $0x90] sm:$0xf]
      %v533 = vld [vmem:[%s253 + $0x94] sm:$0xf]
      %v534 = vld [vmem:[%s253 + $0x98] sm:$0xf]
      %v535 = vld [vmem:[%s253 + $0x9c] sm:$0xf]
      %v536 = vld [vmem:[%s253 + $0xa0] sm:$0xf]
      %v537 = vld [vmem:[%s253 + $0xa4] sm:$0xf]
      %v538 = vld [vmem:[%s253 + $0xa8] sm:$0xf]
      %v539 = vld [vmem:[%s253 + $0xac] sm:$0xf]
      %v540 = vld [vmem:[%s253 + $0xb0] sm:$0xf]
      %v541 = vld [vmem:[%s253 + $0xb4] sm:$0xf]
      %v542 = vld [vmem:[%s253 + $0xb8] sm:$0xf]
      %v543 = vld [vmem:[%s253 + $0xbc] sm:$0xf]
      %v544 = vld [vmem:[%s253 + $0xc0] sm:$0xf]
      %v545 = vld [vmem:[%s253 + $0xc4] sm:$0xf]
      %v546 = vld [vmem:[%s253 + $0xc8] sm:$0xf]
      %v547 = vld [vmem:[%s253 + $0xcc] sm:$0xf]
      %v548 = vld [vmem:[%s253 + $0xd0] sm:$0xf]
      %v549 = vld [vmem:[%s253 + $0xd4] sm:$0xf]
      %v550 = vld [vmem:[%s253 + $0xd8] sm:$0xf]
      %v551 = vld [vmem:[%s253 + $0xdc] sm:$0xf]
      %v552 = vld [vmem:[%s253 + $0xe0] sm:$0xf]
      %v553 = vld [vmem:[%s253 + $0xe4] sm:$0xf]
      %v554 = vld [vmem:[%s253 + $0xe8] sm:$0xf]
      %v555 = vld [vmem:[%s253 + $0xec] sm:$0xf]
      %v556 = vld [vmem:[%s253 + $0xf0] sm:$0xf]
      %v557 = vld [vmem:[%s253 + $0xf4] sm:$0xf]
      %v558 = vld [vmem:[%s253 + $0xf8] sm:$0xf]
      %v559 = vld [vmem:[%s253 + $0xfc] sm:$0xf]
      %v560 = vld [vmem:[%s253 + $0x100] sm:$0xf]
      %v561 = vld [vmem:[%s253 + $0x104] sm:$0xf]
      %v562 = vld [vmem:[%s253 + $0x108] sm:$0xf]
      %v563 = vld [vmem:[%s253 + $0x10c] sm:$0xf]
      %v564 = vld [vmem:[%s253 + $0x110] sm:$0xf]
      %v565 = vld [vmem:[%s253 + $0x114] sm:$0xf]
      %v566 = vld [vmem:[%s253 + $0x118] sm:$0xf]
      %v567 = vld [vmem:[%s253 + $0x11c] sm:$0xf]
      %v568 = vld [vmem:[%s253 + $0x120] sm:$0xf]
      %v569 = vld [vmem:[%s253 + $0x124] sm:$0xf]
      %v570 = vld [vmem:[%s253 + $0x128] sm:$0xf]
      %v571 = vld [vmem:[%s253 + $0x12c] sm:$0xf]
      %v572 = vld [vmem:[%s253 + $0x130] sm:$0xf]
      %v573 = vld [vmem:[%s253 + $0x134] sm:$0xf]
      %v574 = vld [vmem:[%s253 + $0x138] sm:$0xf]
      %v575 = vld [vmem:[%s253 + $0x13c] sm:$0xf]
      %v576 = vld [vmem:[%s253 + $0x140] sm:$0xf]
      %v577 = vld [vmem:[%s253 + $0x144] sm:$0xf]
      %v578 = vld [vmem:[%s253 + $0x148] sm:$0xf]
      %v579 = vld [vmem:[%s253 + $0x14c] sm:$0xf]
      %v580 = vld [vmem:[%s253 + $0x150] sm:$0xf]
      %v581 = vld [vmem:[%s253 + $0x154] sm:$0xf]
      %v582 = vld [vmem:[%s253 + $0x158] sm:$0xf]
      %v583 = vld [vmem:[%s253 + $0x15c] sm:$0xf]
      %v584 = vld [vmem:[%s253 + $0x160] sm:$0xf]
      %v585 = vld [vmem:[%s253 + $0x164] sm:$0xf]
      %v586 = vld [vmem:[%s253 + $0x168] sm:$0xf]
      %v587 = vld [vmem:[%s253 + $0x16c] sm:$0xf]
      %v588 = vld [vmem:[%s253 + $0x170] sm:$0xf]
      %v589 = vld [vmem:[%s253 + $0x174] sm:$0xf]
      %v590 = vld [vmem:[%s253 + $0x178] sm:$0xf]
      %v591 = vld [vmem:[%s253 + $0x17c] sm:$0xf]
      %v592 = vld [vmem:[%s253 + $0x180] sm:$0xf]
      %v593 = vld [vmem:[%s253 + $0x184] sm:$0xf]
      %v594 = vld [vmem:[%s253 + $0x188] sm:$0xf]
      %v595 = vld [vmem:[%s253 + $0x18c] sm:$0xf]
      %v596 = vld [vmem:[%s253 + $0x190] sm:$0xf]
      %v597 = vld [vmem:[%s253 + $0x194] sm:$0xf]
      %v598 = vld [vmem:[%s253 + $0x198] sm:$0xf]
      %v599 = vld [vmem:[%s253 + $0x19c] sm:$0xf]
      %v600 = vld [vmem:[%s253 + $0x1a0] sm:$0xf]
      %v601 = vld [vmem:[%s253 + $0x1a4] sm:$0xf]
      %v602 = vld [vmem:[%s253 + $0x1a8] sm:$0xf]
      %v603 = vld [vmem:[%s253 + $0x1ac] sm:$0xf]
      %v604 = vld [vmem:[%s253 + $0x1b0] sm:$0xf]
      %v605 = vld [vmem:[%s253 + $0x1b4] sm:$0xf]
      %v606 = vld [vmem:[%s253 + $0x1b8] sm:$0xf]
      %v607 = vld [vmem:[%s253 + $0x1bc] sm:$0xf]
      %v608 = vld [vmem:[%s253 + $0x1c0] sm:$0xf]
      %v609 = vld [vmem:[%s253 + $0x1c4] sm:$0xf]
      %v610 = vld [vmem:[%s253 + $0x1c8] sm:$0xf]
      %v611 = vld [vmem:[%s253 + $0x1cc] sm:$0xf]
      %v612 = vld [vmem:[%s253 + $0x1d0] sm:$0xf]
      %v613 = vld [vmem:[%s253 + $0x1d4] sm:$0xf]
      %v614 = vld [vmem:[%s253 + $0x1d8] sm:$0xf]
      %v615 = vld [vmem:[%s253 + $0x1dc] sm:$0xf]
      %v616 = vld [vmem:[%s253 + $0x1e0] sm:$0xf]
      %v617 = vld [vmem:[%s253 + $0x1e4] sm:$0xf]
      %v618 = vld [vmem:[%s253 + $0x1e8] sm:$0xf]
      %v619 = vld [vmem:[%s253 + $0x1ec] sm:$0xf]
      %v620 = vld [vmem:[%s253 + $0x1f0] sm:$0xf]
      %v621 = vld [vmem:[%s253 + $0x1f4] sm:$0xf]
      %v622 = vld [vmem:[%s253 + $0x1f8] sm:$0xf]
      %v623 = vld [vmem:[%s253 + $0x1fc] sm:$0xf]
      %v624 = vld [vmem:[%s253 + $0x200] sm:$0xf]
      %v625 = vld [vmem:[%s253 + $0x204] sm:$0xf]
      %v626 = vld [vmem:[%s253 + $0x208] sm:$0xf]
      %v627 = vld [vmem:[%s253 + $0x20c] sm:$0xf]
      %v628 = vld [vmem:[%s253 + $0x210] sm:$0xf]
      %v629 = vld [vmem:[%s253 + $0x214] sm:$0xf]
      %v630 = vld [vmem:[%s253 + $0x218] sm:$0xf]
      %v631 = vld [vmem:[%s253 + $0x21c] sm:$0xf]
      %v632 = vld [vmem:[%s253 + $0x220] sm:$0xf]
      %v633 = vld [vmem:[%s253 + $0x224] sm:$0xf]
      %v634 = vld [vmem:[%s253 + $0x228] sm:$0xf]
      %v635 = vld [vmem:[%s253 + $0x22c] sm:$0xf]
      %v636 = vld [vmem:[%s253 + $0x230] sm:$0xf]
      %v637 = vld [vmem:[%s253 + $0x234] sm:$0xf]
      %v638 = vld [vmem:[%s253 + $0x238] sm:$0xf]
      %v639 = vld [vmem:[%s253 + $0x23c] sm:$0xf]
      %v800 = vunpack.c.l.b16 %v336
      %v801 = vunpack.c.h.b16 %v336
      %v802 = vunpack.c.l.b16 %v337
      %v803 = vunpack.c.h.b16 %v337
      %v804 = vunpack.c.l.b16 %v338
      %v805 = vunpack.c.h.b16 %v338
      %v806 = vunpack.c.l.b16 %v339
      %v807 = vunpack.c.h.b16 %v339
      %v808 = vunpack.c.l.b16 %v340
      %v809 = vunpack.c.l.b16 %v341
      %v810 = vunpack.c.h.b16 %v341
      %v811 = vunpack.c.l.b16 %v342
      %v812 = vunpack.c.h.b16 %v342
      %v813 = vunpack.c.l.b16 %v343
      %v814 = vunpack.c.h.b16 %v343
      %v815 = vunpack.c.l.b16 %v344
      %v816 = vunpack.c.h.b16 %v344
      %v817 = vunpack.c.l.b16 %v345
      %v818 = vunpack.c.l.b16 %v346
      %v819 = vunpack.c.h.b16 %v346
      %v820 = vunpack.c.l.b16 %v347
      %v821 = vunpack.c.h.b16 %v347
      %v822 = vunpack.c.l.b16 %v348
      %v823 = vunpack.c.h.b16 %v348
      %v824 = vunpack.c.l.b16 %v349
      %v825 = vunpack.c.h.b16 %v349
      %v826 = vunpack.c.l.b16 %v350
      %v827 = vunpack.c.l.b16 %v351
      %v828 = vunpack.c.h.b16 %v351
      %v829 = vunpack.c.l.b16 %v352
      %v830 = vunpack.c.h.b16 %v352
      %v831 = vunpack.c.l.b16 %v353
      %v832 = vunpack.c.h.b16 %v353
      %v833 = vunpack.c.l.b16 %v354
      %v834 = vunpack.c.h.b16 %v354
      %v835 = vunpack.c.l.b16 %v355
      %v836 = vunpack.c.l.b16 %v356
      %v837 = vunpack.c.h.b16 %v356
      %v838 = vunpack.c.l.b16 %v357
      %v839 = vunpack.c.h.b16 %v357
      %v840 = vunpack.c.l.b16 %v358
      %v841 = vunpack.c.h.b16 %v358
      %v842 = vunpack.c.l.b16 %v359
      %v843 = vunpack.c.h.b16 %v359
      %v844 = vunpack.c.l.b16 %v360
      %v845 = vunpack.c.l.b16 %v361
      %v846 = vunpack.c.h.b16 %v361
      %v847 = vunpack.c.l.b16 %v362
      %v848 = vunpack.c.h.b16 %v362
      %v849 = vunpack.c.l.b16 %v363
      %v850 = vunpack.c.h.b16 %v363
      %v851 = vunpack.c.l.b16 %v364
      %v852 = vunpack.c.h.b16 %v364
      %v853 = vunpack.c.l.b16 %v365
      %v854 = vunpack.c.l.b16 %v366
      %v855 = vunpack.c.h.b16 %v366
      %v856 = vunpack.c.l.b16 %v367
      %v857 = vunpack.c.h.b16 %v367
      %v858 = vunpack.c.l.b16 %v368
      %v859 = vunpack.c.h.b16 %v368
      %v860 = vunpack.c.l.b16 %v369
      %v861 = vunpack.c.h.b16 %v369
      %v862 = vunpack.c.l.b16 %v370
      %v863 = vunpack.c.l.b16 %v371
      %v864 = vunpack.c.h.b16 %v371
      %v865 = vunpack.c.l.b16 %v372
      %v866 = vunpack.c.h.b16 %v372
      %v867 = vunpack.c.l.b16 %v373
      %v868 = vunpack.c.h.b16 %v373
      %v869 = vunpack.c.l.b16 %v374
      %v870 = vunpack.c.h.b16 %v374
      %v871 = vunpack.c.l.b16 %v375
      %v872 = vunpack.c.l.b16 %v376
      %v873 = vunpack.c.h.b16 %v376
      %v874 = vunpack.c.l.b16 %v377
      %v875 = vunpack.c.h.b16 %v377
      %v876 = vunpack.c.l.b16 %v378
      %v877 = vunpack.c.h.b16 %v378
      %v878 = vunpack.c.l.b16 %v379
      %v879 = vunpack.c.h.b16 %v379
      %v880 = vunpack.c.l.b16 %v380
      %v881 = vunpack.c.l.b16 %v381
      %v882 = vunpack.c.h.b16 %v381
      %v883 = vunpack.c.l.b16 %v382
      %v884 = vunpack.c.h.b16 %v382
      %v885 = vunpack.c.l.b16 %v383
      %v886 = vunpack.c.h.b16 %v383
      %v887 = vunpack.c.l.b16 %v384
      %v888 = vunpack.c.h.b16 %v384
      %v889 = vunpack.c.l.b16 %v385
      %v890 = vunpack.c.l.b16 %v386
      %v891 = vunpack.c.h.b16 %v386
      %v892 = vunpack.c.l.b16 %v387
      %v893 = vunpack.c.h.b16 %v387
      %v894 = vunpack.c.l.b16 %v388
      %v895 = vunpack.c.h.b16 %v388
      %v896 = vunpack.c.l.b16 %v389
      %v897 = vunpack.c.h.b16 %v389
      %v898 = vunpack.c.l.b16 %v390
      %v899 = vunpack.c.l.b16 %v391
      %v900 = vunpack.c.h.b16 %v391
      %v901 = vunpack.c.l.b16 %v392
      %v902 = vunpack.c.h.b16 %v392
      %v903 = vunpack.c.l.b16 %v393
      %v904 = vunpack.c.h.b16 %v393
      %v905 = vunpack.c.l.b16 %v394
      %v906 = vunpack.c.h.b16 %v394
      %v907 = vunpack.c.l.b16 %v395
      %v908 = vunpack.c.l.b16 %v396
      %v909 = vunpack.c.h.b16 %v396
      %v910 = vunpack.c.l.b16 %v397
      %v911 = vunpack.c.h.b16 %v397
      %v912 = vunpack.c.l.b16 %v398
      %v913 = vunpack.c.h.b16 %v398
      %v914 = vunpack.c.l.b16 %v399
      %v915 = vunpack.c.h.b16 %v399
      %v916 = vunpack.c.l.b16 %v400
      %v917 = vunpack.c.l.b16 %v401
      %v918 = vunpack.c.h.b16 %v401
      %v919 = vunpack.c.l.b16 %v402
      %v920 = vunpack.c.h.b16 %v402
      %v921 = vunpack.c.l.b16 %v403
      %v922 = vunpack.c.h.b16 %v403
      %v923 = vunpack.c.l.b16 %v404
      %v924 = vunpack.c.h.b16 %v404
      %v925 = vunpack.c.l.b16 %v405
      %v926 = vunpack.c.l.b16 %v406
      %v927 = vunpack.c.h.b16 %v406
      %v928 = vunpack.c.l.b16 %v407
      %v929 = vunpack.c.h.b16 %v407
      %v930 = vunpack.c.l.b16 %v408
      %v931 = vunpack.c.h.b16 %v408
      %v932 = vunpack.c.l.b16 %v409
      %v933 = vunpack.c.h.b16 %v409
      %v934 = vunpack.c.l.b16 %v410
      %v935 = vunpack.c.l.b16 %v411
      %v936 = vunpack.c.h.b16 %v411
      %v937 = vunpack.c.l.b16 %v412
      %v938 = vunpack.c.h.b16 %v412
      %v939 = vunpack.c.l.b16 %v413
      %v940 = vunpack.c.h.b16 %v413
      %v941 = vunpack.c.l.b16 %v414
      %v942 = vunpack.c.h.b16 %v414
      %v943 = vunpack.c.l.b16 %v415
      %v944 = vunpack.c.l.b16 %v416
      %v945 = vunpack.c.h.b16 %v416
      %v946 = vunpack.c.l.b16 %v417
      %v947 = vunpack.c.h.b16 %v417
      %v948 = vunpack.c.l.b16 %v418
      %v949 = vunpack.c.h.b16 %v418
      %v950 = vunpack.c.l.b16 %v419
      %v951 = vunpack.c.h.b16 %v419
      %v952 = vunpack.c.l.b16 %v420
      %v953 = vunpack.c.l.b16 %v421
      %v954 = vunpack.c.h.b16 %v421
      %v955 = vunpack.c.l.b16 %v422
      %v956 = vunpack.c.h.b16 %v422
      %v957 = vunpack.c.l.b16 %v423
      %v958 = vunpack.c.h.b16 %v423
      %v959 = vunpack.c.l.b16 %v424
      %v960 = vunpack.c.h.b16 %v424
      %v961 = vunpack.c.l.b16 %v425
      %v962 = vunpack.c.l.b16 %v426
      %v963 = vunpack.c.h.b16 %v426
      %v964 = vunpack.c.l.b16 %v427
      %v965 = vunpack.c.h.b16 %v427
      %v966 = vunpack.c.l.b16 %v428
      %v967 = vunpack.c.h.b16 %v428
      %v968 = vunpack.c.l.b16 %v429
      %v969 = vunpack.c.h.b16 %v429
      %v970 = vunpack.c.l.b16 %v430
      %v971 = vunpack.c.l.b16 %v431
      %v972 = vunpack.c.h.b16 %v431
      %v973 = vunpack.c.l.b16 %v432
      %v974 = vunpack.c.h.b16 %v432
      %v975 = vunpack.c.l.b16 %v433
      %v976 = vunpack.c.h.b16 %v433
      %v977 = vunpack.c.l.b16 %v434
      %v978 = vunpack.c.h.b16 %v434
      %v979 = vunpack.c.l.b16 %v435
      %v980 = vunpack.c.l.b16 %v436
      %v981 = vunpack.c.h.b16 %v436
      %v982 = vunpack.c.l.b16 %v437
      %v983 = vunpack.c.h.b16 %v437
      %v984 = vunpack.c.l.b16 %v438
      %v985 = vunpack.c.h.b16 %v438
      %v986 = vunpack.c.l.b16 %v439
      %v987 = vunpack.c.h.b16 %v439
      %v988 = vunpack.c.l.b16 %v440
      %v989 = vunpack.c.l.b16 %v441
      %v990 = vunpack.c.h.b16 %v441
      %v991 = vunpack.c.l.b16 %v442
      %v992 = vunpack.c.h.b16 %v442
      %v993 = vunpack.c.l.b16 %v443
      %v994 = vunpack.c.h.b16 %v443
      %v995 = vunpack.c.l.b16 %v444
      %v996 = vunpack.c.h.b16 %v444
      %v997 = vunpack.c.l.b16 %v445
      %v998 = vunpack.c.l.b16 %v446
      %v999 = vunpack.c.h.b16 %v446
      %v1000 = vunpack.c.l.b16 %v447
      %v1001 = vunpack.c.h.b16 %v447
      %v1002 = vunpack.c.l.b16 %v448
      %v1003 = vunpack.c.h.b16 %v448
      %v1004 = vunpack.c.l.b16 %v449
      %v1005 = vunpack.c.h.b16 %v449
      %v1006 = vunpack.c.l.b16 %v450
      %v1007 = vunpack.c.l.b16 %v451
      %v1008 = vunpack.c.h.b16 %v451
      %v1009 = vunpack.c.l.b16 %v452
      %v1010 = vunpack.c.h.b16 %v452
      %v1011 = vunpack.c.l.b16 %v453
      %v1012 = vunpack.c.h.b16 %v453
      %v1013 = vunpack.c.l.b16 %v454
      %v1014 = vunpack.c.h.b16 %v454
      %v1015 = vunpack.c.l.b16 %v455
      %v1016 = vunpack.c.l.b16 %v456
      %v1017 = vunpack.c.h.b16 %v456
      %v1018 = vunpack.c.l.b16 %v457
      %v1019 = vunpack.c.h.b16 %v457
      %v1020 = vunpack.c.l.b16 %v458
      %v1021 = vunpack.c.h.b16 %v458
      %v1022 = vunpack.c.l.b16 %v459
      %v1023 = vunpack.c.h.b16 %v459
      %v1024 = vunpack.c.l.b16 %v460
      %v1025 = vunpack.c.l.b16 %v461
      %v1026 = vunpack.c.h.b16 %v461
      %v1027 = vunpack.c.l.b16 %v462
      %v1028 = vunpack.c.h.b16 %v462
      %v1029 = vunpack.c.l.b16 %v463
      %v1030 = vunpack.c.h.b16 %v463
      %v1031 = vunpack.c.l.b16 %v464
      %v1032 = vunpack.c.h.b16 %v464
      %v1033 = vunpack.c.l.b16 %v465
      %v1034 = vunpack.c.l.b16 %v466
      %v1035 = vunpack.c.h.b16 %v466
      %v1036 = vunpack.c.l.b16 %v467
      %v1037 = vunpack.c.h.b16 %v467
      %v1038 = vunpack.c.l.b16 %v468
      %v1039 = vunpack.c.h.b16 %v468
      %v1040 = vunpack.c.l.b16 %v469
      %v1041 = vunpack.c.h.b16 %v469
      %v1042 = vunpack.c.l.b16 %v470
      %v1043 = vunpack.c.l.b16 %v471
      %v1044 = vunpack.c.h.b16 %v471
      %v1045 = vunpack.c.l.b16 %v472
      %v1046 = vunpack.c.h.b16 %v472
      %v1047 = vunpack.c.l.b16 %v473
      %v1048 = vunpack.c.h.b16 %v473
      %v1049 = vunpack.c.l.b16 %v474
      %v1050 = vunpack.c.h.b16 %v474
      %v1051 = vunpack.c.l.b16 %v475
      %v1052 = vunpack.c.l.b16 %v476
      %v1053 = vunpack.c.h.b16 %v476
      %v1054 = vunpack.c.l.b16 %v477
      %v1055 = vunpack.c.h.b16 %v477
      %v1056 = vunpack.c.l.b16 %v478
      %v1057 = vunpack.c.h.b16 %v478
      %v1058 = vunpack.c.l.b16 %v479
      %v1059 = vunpack.c.h.b16 %v479
      %v1060 = vunpack.c.l.b16 %v480
      %v1061 = vunpack.c.l.b16 %v481
      %v1062 = vunpack.c.h.b16 %v481
      %v1063 = vunpack.c.l.b16 %v482
      %v1064 = vunpack.c.h.b16 %v482
      %v1065 = vunpack.c.l.b16 %v483
      %v1066 = vunpack.c.h.b16 %v483
      %v1067 = vunpack.c.l.b16 %v484
      %v1068 = vunpack.c.h.b16 %v484
      %v1069 = vunpack.c.l.b16 %v485
      %v1070 = vunpack.c.l.b16 %v486
      %v1071 = vunpack.c.h.b16 %v486
      %v1072 = vunpack.c.l.b16 %v487
      %v1073 = vunpack.c.h.b16 %v487
      %v1074 = vunpack.c.l.b16 %v488
      %v1075 = vunpack.c.h.b16 %v488
      %v1076 = vunpack.c.l.b16 %v489
      %v1077 = vunpack.c.h.b16 %v489
      %v1078 = vunpack.c.l.b16 %v490
      %v1079 = vunpack.c.l.b16 %v491
      %v1080 = vunpack.c.h.b16 %v491
      %v1081 = vunpack.c.l.b16 %v492
      %v1082 = vunpack.c.h.b16 %v492
      %v1083 = vunpack.c.l.b16 %v493
      %v1084 = vunpack.c.h.b16 %v493
      %v1085 = vunpack.c.l.b16 %v494
      %v1086 = vunpack.c.h.b16 %v494
      %v1087 = vunpack.c.l.b16 %v495
      %v1088 = vpack.c.b16 %v809, %v800
      %v1089 = vpack.c.b16 %v810, %v801
      %v1090 = vpack.c.b16 %v811, %v802
      %v1091 = vpack.c.b16 %v812, %v803
      %v1092 = vpack.c.b16 %v813, %v804
      %v1093 = vpack.c.b16 %v814, %v805
      %v1094 = vpack.c.b16 %v815, %v806
      %v1095 = vpack.c.b16 %v816, %v807
      %v1096 = vpack.c.b16 %v817, %v808
      %v1097 = vpack.c.b16 %v827, %v818
      %v1098 = vpack.c.b16 %v828, %v819
      %v1099 = vpack.c.b16 %v829, %v820
      %v1100 = vpack.c.b16 %v830, %v821
      %v1101 = vpack.c.b16 %v831, %v822
      %v1102 = vpack.c.b16 %v832, %v823
      %v1103 = vpack.c.b16 %v833, %v824
      %v1104 = vpack.c.b16 %v834, %v825
      %v1105 = vpack.c.b16 %v835, %v826
      %v1106 = vpack.c.b16 %v845, %v836
      %v1107 = vpack.c.b16 %v846, %v837
      %v1108 = vpack.c.b16 %v847, %v838
      %v1109 = vpack.c.b16 %v848, %v839
      %v1110 = vpack.c.b16 %v849, %v840
      %v1111 = vpack.c.b16 %v850, %v841
      %v1112 = vpack.c.b16 %v851, %v842
      %v1113 = vpack.c.b16 %v852, %v843
      %v1114 = vpack.c.b16 %v853, %v844
      %v1115 = vpack.c.b16 %v863, %v854
      %v1116 = vpack.c.b16 %v864, %v855
      %v1117 = vpack.c.b16 %v865, %v856
      %v1118 = vpack.c.b16 %v866, %v857
      %v1119 = vpack.c.b16 %v867, %v858
      %v1120 = vpack.c.b16 %v868, %v859
      %v1121 = vpack.c.b16 %v869, %v860
      %v1122 = vpack.c.b16 %v870, %v861
      %v1123 = vpack.c.b16 %v871, %v862
      %v1124 = vpack.c.b16 %v881, %v872
      %v1125 = vpack.c.b16 %v882, %v873
      %v1126 = vpack.c.b16 %v883, %v874
      %v1127 = vpack.c.b16 %v884, %v875
      %v1128 = vpack.c.b16 %v885, %v876
      %v1129 = vpack.c.b16 %v886, %v877
      %v1130 = vpack.c.b16 %v887, %v878
      %v1131 = vpack.c.b16 %v888, %v879
      %v1132 = vpack.c.b16 %v889, %v880
      %v1133 = vpack.c.b16 %v899, %v890
      %v1134 = vpack.c.b16 %v900, %v891
      %v1135 = vpack.c.b16 %v901, %v892
      %v1136 = vpack.c.b16 %v902, %v893
      %v1137 = vpack.c.b16 %v903, %v894
      %v1138 = vpack.c.b16 %v904, %v895
      %v1139 = vpack.c.b16 %v905, %v896
      %v1140 = vpack.c.b16 %v906, %v897
      %v1141 = vpack.c.b16 %v907, %v898
      %v1142 = vpack.c.b16 %v917, %v908
      %v1143 = vpack.c.b16 %v918, %v909
      %v1144 = vpack.c.b16 %v919, %v910
      %v1145 = vpack.c.b16 %v920, %v911
      %v1146 = vpack.c.b16 %v921, %v912
      %v1147 = vpack.c.b16 %v922, %v913
      %v1148 = vpack.c.b16 %v923, %v914
      %v1149 = vpack.c.b16 %v924, %v915
      %v1150 = vpack.c.b16 %v925, %v916
      %v1151 = vpack.c.b16 %v935, %v926
      %v1152 = vpack.c.b16 %v936, %v927
      %v1153 = vpack.c.b16 %v937, %v928
      %v1154 = vpack.c.b16 %v938, %v929
      %v1155 = vpack.c.b16 %v939, %v930
      %v1156 = vpack.c.b16 %v940, %v931
      %v1157 = vpack.c.b16 %v941, %v932
      %v1158 = vpack.c.b16 %v942, %v933
      %v1159 = vpack.c.b16 %v943, %v934
      %v1160 = vpack.c.b16 %v953, %v944
      %v1161 = vpack.c.b16 %v954, %v945
      %v1162 = vpack.c.b16 %v955, %v946
      %v1163 = vpack.c.b16 %v956, %v947
      %v1164 = vpack.c.b16 %v957, %v948
      %v1165 = vpack.c.b16 %v958, %v949
      %v1166 = vpack.c.b16 %v959, %v950
      %v1167 = vpack.c.b16 %v960, %v951
      %v1168 = vpack.c.b16 %v961, %v952
      %v1169 = vpack.c.b16 %v971, %v962
      %v1170 = vpack.c.b16 %v972, %v963
      %v1171 = vpack.c.b16 %v973, %v964
      %v1172 = vpack.c.b16 %v974, %v965
      %v1173 = vpack.c.b16 %v975, %v966
      %v1174 = vpack.c.b16 %v976, %v967
      %v1175 = vpack.c.b16 %v977, %v968
      %v1176 = vpack.c.b16 %v978, %v969
      %v1177 = vpack.c.b16 %v979, %v970
      %v1178 = vpack.c.b16 %v989, %v980
      %v1179 = vpack.c.b16 %v990, %v981
      %v1180 = vpack.c.b16 %v991, %v982
      %v1181 = vpack.c.b16 %v992, %v983
      %v1182 = vpack.c.b16 %v993, %v984
      %v1183 = vpack.c.b16 %v994, %v985
      %v1184 = vpack.c.b16 %v995, %v986
      %v1185 = vpack.c.b16 %v996, %v987
      %v1186 = vpack.c.b16 %v997, %v988
      %v1187 = vpack.c.b16 %v1007, %v998
      %v1188 = vpack.c.b16 %v1008, %v999
      %v1189 = vpack.c.b16 %v1009, %v1000
      %v1190 = vpack.c.b16 %v1010, %v1001
      %v1191 = vpack.c.b16 %v1011, %v1002
      %v1192 = vpack.c.b16 %v1012, %v1003
      %v1193 = vpack.c.b16 %v1013, %v1004
      %v1194 = vpack.c.b16 %v1014, %v1005
      %v1195 = vpack.c.b16 %v1015, %v1006
      %v1196 = vpack.c.b16 %v1025, %v1016
      %v1197 = vpack.c.b16 %v1026, %v1017
      %v1198 = vpack.c.b16 %v1027, %v1018
      %v1199 = vpack.c.b16 %v1028, %v1019
      %v1200 = vpack.c.b16 %v1029, %v1020
      %v1201 = vpack.c.b16 %v1030, %v1021
      %v1202 = vpack.c.b16 %v1031, %v1022
      %v1203 = vpack.c.b16 %v1032, %v1023
      %v1204 = vpack.c.b16 %v1033, %v1024
      %v1205 = vpack.c.b16 %v1043, %v1034
      %v1206 = vpack.c.b16 %v1044, %v1035
      %v1207 = vpack.c.b16 %v1045, %v1036
      %v1208 = vpack.c.b16 %v1046, %v1037
      %v1209 = vpack.c.b16 %v1047, %v1038
      %v1210 = vpack.c.b16 %v1048, %v1039
      %v1211 = vpack.c.b16 %v1049, %v1040
      %v1212 = vpack.c.b16 %v1050, %v1041
      %v1213 = vpack.c.b16 %v1051, %v1042
      %v1214 = vpack.c.b16 %v1061, %v1052
      %v1215 = vpack.c.b16 %v1062, %v1053
      %v1216 = vpack.c.b16 %v1063, %v1054
      %v1217 = vpack.c.b16 %v1064, %v1055
      %v1218 = vpack.c.b16 %v1065, %v1056
      %v1219 = vpack.c.b16 %v1066, %v1057
      %v1220 = vpack.c.b16 %v1067, %v1058
      %v1221 = vpack.c.b16 %v1068, %v1059
      %v1222 = vpack.c.b16 %v1069, %v1060
      %v1223 = vpack.c.b16 %v1079, %v1070
      %v1224 = vpack.c.b16 %v1080, %v1071
      %v1225 = vpack.c.b16 %v1081, %v1072
      %v1226 = vpack.c.b16 %v1082, %v1073
      %v1227 = vpack.c.b16 %v1083, %v1074
      %v1228 = vpack.c.b16 %v1084, %v1075
      %v1229 = vpack.c.b16 %v1085, %v1076
      %v1230 = vpack.c.b16 %v1086, %v1077
      %v1231 = vpack.c.b16 %v1087, %v1078
      %v1520 = vunpack.c.l.b16 %v496
      %v1521 = vunpack.c.l.b16 %v497
      %v1522 = vunpack.c.l.b16 %v498
      %v1523 = vunpack.c.l.b16 %v499
      %v1524 = vunpack.c.l.b16 %v500
      %v1525 = vunpack.c.l.b16 %v501
      %v1526 = vunpack.c.l.b16 %v502
      %v1527 = vunpack.c.l.b16 %v503
      %v1528 = vunpack.c.l.b16 %v504
      %v1529 = vunpack.c.l.b16 %v505
      %v1530 = vunpack.c.l.b16 %v506
      %v1531 = vunpack.c.l.b16 %v507
      %v1532 = vunpack.c.l.b16 %v508
      %v1533 = vunpack.c.l.b16 %v509
      %v1534 = vunpack.c.l.b16 %v510
      %v1535 = vunpack.c.l.b16 %v511
      %v1536 = vunpack.c.l.b16 %v512
      %v1537 = vunpack.c.l.b16 %v513
      %v1538 = vunpack.c.l.b16 %v514
      %v1539 = vunpack.c.l.b16 %v515
      %v1540 = vunpack.c.l.b16 %v516
      %v1541 = vunpack.c.l.b16 %v517
      %v1542 = vunpack.c.l.b16 %v518
      %v1543 = vunpack.c.l.b16 %v519
      %v1544 = vunpack.c.l.b16 %v520
      %v1545 = vunpack.c.l.b16 %v521
      %v1546 = vunpack.c.l.b16 %v522
      %v1547 = vunpack.c.l.b16 %v523
      %v1548 = vunpack.c.l.b16 %v524
      %v1549 = vunpack.c.l.b16 %v525
      %v1550 = vunpack.c.l.b16 %v526
      %v1551 = vunpack.c.l.b16 %v527
      %v1552 = vunpack.c.l.b16 %v528
      %v1553 = vunpack.c.l.b16 %v529
      %v1554 = vunpack.c.l.b16 %v530
      %v1555 = vunpack.c.l.b16 %v531
      %v1556 = vunpack.c.l.b16 %v532
      %v1557 = vunpack.c.l.b16 %v533
      %v1558 = vunpack.c.l.b16 %v534
      %v1559 = vunpack.c.l.b16 %v535
      %v1560 = vunpack.c.l.b16 %v536
      %v1561 = vunpack.c.l.b16 %v537
      %v1562 = vunpack.c.l.b16 %v538
      %v1563 = vunpack.c.l.b16 %v539
      %v1564 = vunpack.c.l.b16 %v540
      %v1565 = vunpack.c.l.b16 %v541
      %v1566 = vunpack.c.l.b16 %v542
      %v1567 = vunpack.c.l.b16 %v543
      %v1568 = vunpack.c.l.b16 %v544
      %v1569 = vunpack.c.l.b16 %v545
      %v1570 = vunpack.c.l.b16 %v546
      %v1571 = vunpack.c.l.b16 %v547
      %v1572 = vunpack.c.l.b16 %v548
      %v1573 = vunpack.c.l.b16 %v549
      %v1574 = vunpack.c.l.b16 %v550
      %v1575 = vunpack.c.l.b16 %v551
      %v1576 = vunpack.c.l.b16 %v552
      %v1577 = vunpack.c.l.b16 %v553
      %v1578 = vunpack.c.l.b16 %v554
      %v1579 = vunpack.c.l.b16 %v555
      %v1580 = vunpack.c.l.b16 %v556
      %v1581 = vunpack.c.l.b16 %v557
      %v1582 = vunpack.c.l.b16 %v558
      %v1583 = vunpack.c.l.b16 %v559
      %v1584 = vunpack.c.l.b16 %v560
      %v1585 = vunpack.c.l.b16 %v561
      %v1586 = vunpack.c.l.b16 %v562
      %v1587 = vunpack.c.l.b16 %v563
      %v1588 = vunpack.c.l.b16 %v564
      %v1589 = vunpack.c.l.b16 %v565
      %v1590 = vunpack.c.l.b16 %v566
      %v1591 = vunpack.c.l.b16 %v567
      %v1592 = vunpack.c.l.b16 %v568
      %v1593 = vunpack.c.l.b16 %v569
      %v1594 = vunpack.c.l.b16 %v570
      %v1595 = vunpack.c.l.b16 %v571
      %v1596 = vunpack.c.l.b16 %v572
      %v1597 = vunpack.c.l.b16 %v573
      %v1598 = vunpack.c.l.b16 %v574
      %v1599 = vunpack.c.l.b16 %v575
      %v1600 = vunpack.c.l.b16 %v576
      %v1601 = vunpack.c.l.b16 %v577
      %v1602 = vunpack.c.l.b16 %v578
      %v1603 = vunpack.c.l.b16 %v579
      %v1604 = vunpack.c.l.b16 %v580
      %v1605 = vunpack.c.l.b16 %v581
      %v1606 = vunpack.c.l.b16 %v582
      %v1607 = vunpack.c.l.b16 %v583
      %v1608 = vunpack.c.l.b16 %v584
      %v1609 = vunpack.c.l.b16 %v585
      %v1610 = vunpack.c.l.b16 %v586
      %v1611 = vunpack.c.l.b16 %v587
      %v1612 = vunpack.c.l.b16 %v588
      %v1613 = vunpack.c.l.b16 %v589
      %v1614 = vunpack.c.l.b16 %v590
      %v1615 = vunpack.c.l.b16 %v591
      %v1616 = vunpack.c.l.b16 %v592
      %v1617 = vunpack.c.l.b16 %v593
      %v1618 = vunpack.c.l.b16 %v594
      %v1619 = vunpack.c.l.b16 %v595
      %v1620 = vunpack.c.l.b16 %v596
      %v1621 = vunpack.c.l.b16 %v597
      %v1622 = vunpack.c.l.b16 %v598
      %v1623 = vunpack.c.l.b16 %v599
      %v1624 = vunpack.c.l.b16 %v600
      %v1625 = vunpack.c.l.b16 %v601
      %v1626 = vunpack.c.l.b16 %v602
      %v1627 = vunpack.c.l.b16 %v603
      %v1628 = vunpack.c.l.b16 %v604
      %v1629 = vunpack.c.l.b16 %v605
      %v1630 = vunpack.c.l.b16 %v606
      %v1631 = vunpack.c.l.b16 %v607
      %v1632 = vunpack.c.l.b16 %v608
      %v1633 = vunpack.c.l.b16 %v609
      %v1634 = vunpack.c.l.b16 %v610
      %v1635 = vunpack.c.l.b16 %v611
      %v1636 = vunpack.c.l.b16 %v612
      %v1637 = vunpack.c.l.b16 %v613
      %v1638 = vunpack.c.l.b16 %v614
      %v1639 = vunpack.c.l.b16 %v615
      %v1640 = vunpack.c.l.b16 %v616
      %v1641 = vunpack.c.l.b16 %v617
      %v1642 = vunpack.c.l.b16 %v618
      %v1643 = vunpack.c.l.b16 %v619
      %v1644 = vunpack.c.l.b16 %v620
      %v1645 = vunpack.c.l.b16 %v621
      %v1646 = vunpack.c.l.b16 %v622
      %v1647 = vunpack.c.l.b16 %v623
      %v1648 = vunpack.c.l.b16 %v624
      %v1649 = vunpack.c.l.b16 %v625
      %v1650 = vunpack.c.l.b16 %v626
      %v1651 = vunpack.c.l.b16 %v627
      %v1652 = vunpack.c.l.b16 %v628
      %v1653 = vunpack.c.l.b16 %v629
      %v1654 = vunpack.c.l.b16 %v630
      %v1655 = vunpack.c.l.b16 %v631
      %v1656 = vunpack.c.l.b16 %v632
      %v1657 = vunpack.c.l.b16 %v633
      %v1658 = vunpack.c.l.b16 %v634
      %v1659 = vunpack.c.l.b16 %v635
      %v1660 = vunpack.c.l.b16 %v636
      %v1661 = vunpack.c.l.b16 %v637
      %v1662 = vunpack.c.l.b16 %v638
      %v1663 = vunpack.c.l.b16 %v639
      %v1664 = vpack.c.b16 %v1521, %v1520
      %v1665 = vpack.c.b16 %v1523, %v1522
      %v1666 = vpack.c.b16 %v1525, %v1524
      %v1667 = vpack.c.b16 %v1527, %v1526
      %v1668 = vpack.c.b16 %v1529, %v1528
      %v1669 = vpack.c.b16 %v1531, %v1530
      %v1670 = vpack.c.b16 %v1533, %v1532
      %v1671 = vpack.c.b16 %v1535, %v1534
      %v1672 = vpack.c.b16 %v1537, %v1536
      %v1673 = vpack.c.b16 %v1539, %v1538
      %v1674 = vpack.c.b16 %v1541, %v1540
      %v1675 = vpack.c.b16 %v1543, %v1542
      %v1676 = vpack.c.b16 %v1545, %v1544
      %v1677 = vpack.c.b16 %v1547, %v1546
      %v1678 = vpack.c.b16 %v1549, %v1548
      %v1679 = vpack.c.b16 %v1551, %v1550
      %v1680 = vpack.c.b16 %v1553, %v1552
      %v1681 = vpack.c.b16 %v1555, %v1554
      %v1682 = vpack.c.b16 %v1557, %v1556
      %v1683 = vpack.c.b16 %v1559, %v1558
      %v1684 = vpack.c.b16 %v1561, %v1560
      %v1685 = vpack.c.b16 %v1563, %v1562
      %v1686 = vpack.c.b16 %v1565, %v1564
      %v1687 = vpack.c.b16 %v1567, %v1566
      %v1688 = vpack.c.b16 %v1569, %v1568
      %v1689 = vpack.c.b16 %v1571, %v1570
      %v1690 = vpack.c.b16 %v1573, %v1572
      %v1691 = vpack.c.b16 %v1575, %v1574
      %v1692 = vpack.c.b16 %v1577, %v1576
      %v1693 = vpack.c.b16 %v1579, %v1578
      %v1694 = vpack.c.b16 %v1581, %v1580
      %v1695 = vpack.c.b16 %v1583, %v1582
      %v1696 = vpack.c.b16 %v1585, %v1584
      %v1697 = vpack.c.b16 %v1587, %v1586
      %v1698 = vpack.c.b16 %v1589, %v1588
      %v1699 = vpack.c.b16 %v1591, %v1590
      %v1700 = vpack.c.b16 %v1593, %v1592
      %v1701 = vpack.c.b16 %v1595, %v1594
      %v1702 = vpack.c.b16 %v1597, %v1596
      %v1703 = vpack.c.b16 %v1599, %v1598
      %v1704 = vpack.c.b16 %v1601, %v1600
      %v1705 = vpack.c.b16 %v1603, %v1602
      %v1706 = vpack.c.b16 %v1605, %v1604
      %v1707 = vpack.c.b16 %v1607, %v1606
      %v1708 = vpack.c.b16 %v1609, %v1608
      %v1709 = vpack.c.b16 %v1611, %v1610
      %v1710 = vpack.c.b16 %v1613, %v1612
      %v1711 = vpack.c.b16 %v1615, %v1614
      %v1712 = vpack.c.b16 %v1617, %v1616
      %v1713 = vpack.c.b16 %v1619, %v1618
      %v1714 = vpack.c.b16 %v1621, %v1620
      %v1715 = vpack.c.b16 %v1623, %v1622
      %v1716 = vpack.c.b16 %v1625, %v1624
      %v1717 = vpack.c.b16 %v1627, %v1626
      %v1718 = vpack.c.b16 %v1629, %v1628
      %v1719 = vpack.c.b16 %v1631, %v1630
      %v1720 = vpack.c.b16 %v1633, %v1632
      %v1721 = vpack.c.b16 %v1635, %v1634
      %v1722 = vpack.c.b16 %v1637, %v1636
      %v1723 = vpack.c.b16 %v1639, %v1638
      %v1724 = vpack.c.b16 %v1641, %v1640
      %v1725 = vpack.c.b16 %v1643, %v1642
      %v1726 = vpack.c.b16 %v1645, %v1644
      %v1727 = vpack.c.b16 %v1647, %v1646
      %v1728 = vpack.c.b16 %v1649, %v1648
      %v1729 = vpack.c.b16 %v1651, %v1650
      %v1730 = vpack.c.b16 %v1653, %v1652
      %v1731 = vpack.c.b16 %v1655, %v1654
      %v1732 = vpack.c.b16 %v1657, %v1656
      %v1733 = vpack.c.b16 %v1659, %v1658
      %v1734 = vpack.c.b16 %v1661, %v1660
      %v1735 = vpack.c.b16 %v1663, %v1662
      %1808 = vmatprep.subr.bf16.mxu0 0
      %1809 = vmatpush1.bf16.msra.mxu0 %v1664
      %1810 = vmatprep.subr.bf16.mxu0 0
      %1811 = vmatpush1.bf16.msra.mxu0 %v1665
      %1812 = vmatprep.subr.bf16.mxu0 0
      %1813 = vmatpush1.bf16.msra.mxu0 %v1666
      %1814 = vmatprep.subr.bf16.mxu0 0
      %1815 = vmatpush1.bf16.msra.mxu0 %v1667
      %1816 = vmatprep.subr.bf16.mxu0 0
      %1817 = vmatpush1.bf16.msra.mxu0 %v1668
      %1818 = vmatprep.subr.bf16.mxu0 0
      %1819 = vmatpush1.bf16.msra.mxu0 %v1669
      %1820 = vmatprep.subr.bf16.mxu0 0
      %1821 = vmatpush1.bf16.msra.mxu0 %v1670
      %1822 = vmatprep.subr.bf16.mxu0 0
      %1823 = vmatpush1.bf16.msra.mxu0 %v1671
      %1824 = vmatprep.subr.bf16.mxu0 0
      %1825 = vmatpush1.bf16.msra.mxu0 %v1672
      %1826 = vmatprep.subr.bf16.mxu0 0
      %1827 = vmatpush1.bf16.msra.mxu0 %v1673
      %1828 = vmatprep.subr.bf16.mxu0 0
      %1829 = vmatpush1.bf16.msra.mxu0 %v1674
      %1830 = vmatprep.subr.bf16.mxu0 0
      %1831 = vmatpush1.bf16.msra.mxu0 %v1675
      %1832 = vmatprep.subr.bf16.mxu0 0
      %1833 = vmatpush1.bf16.msra.mxu0 %v1676
      %1834 = vmatprep.subr.bf16.mxu0 0
      %1835 = vmatpush1.bf16.msra.mxu0 %v1677
      %1836 = vmatprep.subr.bf16.mxu0 0
      %1837 = vmatpush1.bf16.msra.mxu0 %v1678
      %1838 = vmatprep.subr.bf16.mxu0 0
      %1839 = vmatpush1.bf16.msra.mxu0 %v1679
      %1840 = vmatprep.mubr.bf16.mxu0 %v1089
      %1841 = vmatmul.mubr.bf16.gmra.mrb[0].mxu0 %v1088
      %v1842 = vpop.f32.mrb[0].mxu0
      %v1843 = vadd.f32 0.0, %v1842
      %v1844 = vpop.f32.mrb[0].mxu0
      %v1845 = vpop.f32.mrb[0].mxu0
      %v1846 = vadd.f32 0.0, %v1845
      %v1847 = vpop.f32.mrb[0].mxu0
      %1848 = vmatprep.mubr.bf16.mxu0 %v1098
      %1849 = vmatmul.mubr.bf16.gmra.mrb[0].mxu0 %v1097
      %v1850 = vpop.f32.mrb[0].mxu0
      %v1851 = vadd.f32 0.0, %v1850
      %v1852 = vpop.f32.mrb[0].mxu0
      %v1853 = vpop.f32.mrb[0].mxu0
      %v1854 = vadd.f32 0.0, %v1853
      %v1855 = vpop.f32.mrb[0].mxu0
      %1856 = vmatprep.mubr.bf16.mxu0 %v1107
      %1857 = vmatmul.mubr.bf16.gmra.mrb[0].mxu0 %v1106
      %v1858 = vpop.f32.mrb[0].mxu0
      %v1859 = vadd.f32 0.0, %v1858
      %v1860 = vpop.f32.mrb[0].mxu0
      %v1861 = vpop.f32.mrb[0].mxu0
      %v1862 = vadd.f32 0.0, %v1861
      %v1863 = vpop.f32.mrb[0].mxu0
      %1864 = vmatprep.mubr.bf16.mxu0 %v1116
      %1865 = vmatmul.mubr.bf16.gmra.mrb[0].mxu0 %v1115
      %v1866 = vpop.f32.mrb[0].mxu0
      %v1867 = vadd.f32 0.0, %v1866
      %v1868 = vpop.f32.mrb[0].mxu0
      %v1869 = vpop.f32.mrb[0].mxu0
      %v1870 = vadd.f32 0.0, %v1869
      %v1871 = vpop.f32.mrb[0].mxu0
      %1872 = vmatprep.mubr.bf16.mxu0 %v1125
      %1873 = vmatmul.mubr.bf16.gmra.mrb[0].mxu0 %v1124
      %v1874 = vpop.f32.mrb[0].mxu0
      %v1875 = vadd.f32 0.0, %v1874
      %v1876 = vpop.f32.mrb[0].mxu0
      %v1877 = vpop.f32.mrb[0].mxu0
      %v1878 = vadd.f32 0.0, %v1877
      %v1879 = vpop.f32.mrb[0].mxu0
      %1880 = vmatprep.mubr.bf16.mxu0 %v1134
      %1881 = vmatmul.mubr.bf16.gmra.mrb[0].mxu0 %v1133
      %v1882 = vpop.f32.mrb[0].mxu0
      %v1883 = vadd.f32 0.0, %v1882
      %v1884 = vpop.f32.mrb[0].mxu0
      %v1885 = vpop.f32.mrb[0].mxu0
      %v1886 = vadd.f32 0.0, %v1885
      %v1887 = vpop.f32.mrb[0].mxu0
      %1888 = vmatprep.mubr.bf16.mxu0 %v1143
      %1889 = vmatmul.mubr.bf16.gmra.mrb[0].mxu0 %v1142
      %v1890 = vpop.f32.mrb[0].mxu0
      %v1891 = vadd.f32 0.0, %v1890
      %v1892 = vpop.f32.mrb[0].mxu0
      %v1893 = vpop.f32.mrb[0].mxu0
      %v1894 = vadd.f32 0.0, %v1893
      %v1895 = vpop.f32.mrb[0].mxu0
      %1896 = vmatprep.mubr.bf16.mxu0 %v1152
      %1897 = vmatmul.mubr.bf16.gmra.mrb[0].mxu0 %v1151
      %v1898 = vpop.f32.mrb[0].mxu0
      %v1899 = vadd.f32 0.0, %v1898
      %v1900 = vpop.f32.mrb[0].mxu0
      %v1901 = vpop.f32.mrb[0].mxu0
      %v1902 = vadd.f32 0.0, %v1901
      %v1903 = vpop.f32.mrb[0].mxu0
      %1904 = vmatprep.mubr.bf16.mxu0 %v1161
      %1905 = vmatmul.mubr.bf16.gmra.mrb[0].mxu0 %v1160
      %v1906 = vpop.f32.mrb[0].mxu0
      %v1907 = vadd.f32 0.0, %v1906
      %v1908 = vpop.f32.mrb[0].mxu0
      %v1909 = vpop.f32.mrb[0].mxu0
      %v1910 = vadd.f32 0.0, %v1909
      %v1911 = vpop.f32.mrb[0].mxu0
      %1912 = vmatprep.mubr.bf16.mxu0 %v1170
      %1913 = vmatmul.mubr.bf16.gmra.mrb[0].mxu0 %v1169
      %v1914 = vpop.f32.mrb[0].mxu0
      %v1915 = vadd.f32 0.0, %v1914
      %v1916 = vpop.f32.mrb[0].mxu0
      %v1917 = vpop.f32.mrb[0].mxu0
      %v1918 = vadd.f32 0.0, %v1917
      %v1919 = vpop.f32.mrb[0].mxu0
      %1920 = vmatprep.mubr.bf16.mxu0 %v1179
      %1921 = vmatmul.mubr.bf16.gmra.mrb[0].mxu0 %v1178
      %v1922 = vpop.f32.mrb[0].mxu0
      %v1923 = vadd.f32 0.0, %v1922
      %v1924 = vpop.f32.mrb[0].mxu0
      %v1925 = vpop.f32.mrb[0].mxu0
      %v1926 = vadd.f32 0.0, %v1925
      %v1927 = vpop.f32.mrb[0].mxu0
      %1928 = vmatprep.mubr.bf16.mxu0 %v1188
      %1929 = vmatmul.mubr.bf16.gmra.mrb[0].mxu0 %v1187
      %v1930 = vpop.f32.mrb[0].mxu0
      %v1931 = vadd.f32 0.0, %v1930
      %v1932 = vpop.f32.mrb[0].mxu0
      %v1933 = vpop.f32.mrb[0].mxu0
      %v1934 = vadd.f32 0.0, %v1933
      %v1935 = vpop.f32.mrb[0].mxu0
      %1936 = vmatprep.mubr.bf16.mxu0 %v1197
      %1937 = vmatmul.mubr.bf16.gmra.mrb[0].mxu0 %v1196
      %v1938 = vpop.f32.mrb[0].mxu0
      %v1939 = vadd.f32 0.0, %v1938
      %v1940 = vpop.f32.mrb[0].mxu0
      %v1941 = vpop.f32.mrb[0].mxu0
      %v1942 = vadd.f32 0.0, %v1941
      %v1943 = vpop.f32.mrb[0].mxu0
      %1944 = vmatprep.mubr.bf16.mxu0 %v1206
      %1945 = vmatmul.mubr.bf16.gmra.mrb[0].mxu0 %v1205
      %v1946 = vpop.f32.mrb[0].mxu0
      %v1947 = vadd.f32 0.0, %v1946
      %v1948 = vpop.f32.mrb[0].mxu0
      %v1949 = vpop.f32.mrb[0].mxu0
      %v1950 = vadd.f32 0.0, %v1949
      %v1951 = vpop.f32.mrb[0].mxu0
      %1952 = vmatprep.mubr.bf16.mxu0 %v1215
      %1953 = vmatmul.mubr.bf16.gmra.mrb[0].mxu0 %v1214
      %v1954 = vpop.f32.mrb[0].mxu0
      %v1955 = vadd.f32 0.0, %v1954
      %v1956 = vpop.f32.mrb[0].mxu0
      %v1957 = vpop.f32.mrb[0].mxu0
      %v1958 = vadd.f32 0.0, %v1957
      %v1959 = vpop.f32.mrb[0].mxu0
      %1960 = vmatprep.mubr.bf16.mxu0 %v1224
      %1961 = vmatmul.mubr.bf16.gmra.mrb[0].mxu0 %v1223
      %v1962 = vpop.f32.mrb[0].mxu0
      %v1963 = vadd.f32 0.0, %v1962
      %v1964 = vpop.f32.mrb[0].mxu0
      %v1965 = vpop.f32.mrb[0].mxu0
      %v1966 = vadd.f32 0.0, %v1965
      %v1967 = vpop.f32.mrb[0].mxu0
      %1968 = vdwg.mxu0
      %1969 = vmatprep.subr.bf16.mxu0 0
      %1970 = vmatpush1.bf16.msra.mxu0 %v1680
      %1971 = vmatprep.subr.bf16.mxu0 0
      %1972 = vmatpush1.bf16.msra.mxu0 %v1681
      %1973 = vmatprep.subr.bf16.mxu0 0
      %1974 = vmatpush1.bf16.msra.mxu0 %v1682
      %1975 = vmatprep.subr.bf16.mxu0 0
      %1976 = vmatpush1.bf16.msra.mxu0 %v1683
      %1977 = vmatprep.subr.bf16.mxu0 0
      %1978 = vmatpush1.bf16.msra.mxu0 %v1684
      %1979 = vmatprep.subr.bf16.mxu0 0
      %1980 = vmatpush1.bf16.msra.mxu0 %v1685
      %1981 = vmatprep.subr.bf16.mxu0 0
      %1982 = vmatpush1.bf16.msra.mxu0 %v1686
      %1983 = vmatprep.subr.bf16.mxu0 0
      %1984 = vmatpush1.bf16.msra.mxu0 %v1687
      %1985 = vmatprep.subr.bf16.mxu0 0
      %1986 = vmatpush1.bf16.msra.mxu0 %v1688
      %1987 = vmatprep.subr.bf16.mxu0 0
      %1988 = vmatpush1.bf16.msra.mxu0 %v1689
      %1989 = vmatprep.subr.bf16.mxu0 0
      %1990 = vmatpush1.bf16.msra.mxu0 %v1690
      %1991 = vmatprep.subr.bf16.mxu0 0
      %1992 = vmatpush1.bf16.msra.mxu0 %v1691
      %1993 = vmatprep.subr.bf16.mxu0 0
      %1994 = vmatpush1.bf16.msra.mxu0 %v1692
      %1995 = vmatprep.subr.bf16.mxu0 0
      %1996 = vmatpush1.bf16.msra.mxu0 %v1693
      %1997 = vmatprep.subr.bf16.mxu0 0
      %1998 = vmatpush1.bf16.msra.mxu0 %v1694
      %1999 = vmatprep.subr.bf16.mxu0 0
      %2000 = vmatpush1.bf16.msra.mxu0 %v1695
      %2001 = vmatprep.mubr.bf16.mxu0 %v1091
      %2002 = vmatmul.mubr.bf16.gmra.mrb[0].mxu0 %v1090
      %v2003 = vpop.f32.mrb[0].mxu0
      %v2004 = vadd.f32 %v1843, %v2003
      %v2005 = vpop.f32.mrb[0].mxu0
      %v2006 = vpop.f32.mrb[0].mxu0
      %v2007 = vadd.f32 %v1846, %v2006
      %v2008 = vpop.f32.mrb[0].mxu0
      %2009 = vmatprep.mubr.bf16.mxu0 %v1100
      %2010 = vmatmul.mubr.bf16.gmra.mrb[0].mxu0 %v1099
      %v2011 = vpop.f32.mrb[0].mxu0
      %v2012 = vadd.f32 %v1851, %v2011
      %v2013 = vpop.f32.mrb[0].mxu0
      %v2014 = vpop.f32.mrb[0].mxu0
      %v2015 = vadd.f32 %v1854, %v2014
      %v2016 = vpop.f32.mrb[0].mxu0
      %2017 = vmatprep.mubr.bf16.mxu0 %v1109
      %2018 = vmatmul.mubr.bf16.gmra.mrb[0].mxu0 %v1108
      %v2019 = vpop.f32.mrb[0].mxu0
      %v2020 = vadd.f32 %v1859, %v2019
      %v2021 = vpop.f32.mrb[0].mxu0
      %v2022 = vpop.f32.mrb[0].mxu0
      %v2023 = vadd.f32 %v1862, %v2022
      %v2024 = vpop.f32.mrb[0].mxu0
      %2025 = vmatprep.mubr.bf16.mxu0 %v1118
      %2026 = vmatmul.mubr.bf16.gmra.mrb[0].mxu0 %v1117
      %v2027 = vpop.f32.mrb[0].mxu0
      %v2028 = vadd.f32 %v1867, %v2027
      %v2029 = vpop.f32.mrb[0].mxu0
      %v2030 = vpop.f32.mrb[0].mxu0
      %v2031 = vadd.f32 %v1870, %v2030
      %v2032 = vpop.f32.mrb[0].mxu0
      %2033 = vmatprep.mubr.bf16.mxu0 %v1127
      %2034 = vmatmul.mubr.bf16.gmra.mrb[0].mxu0 %v1126
      %v2035 = vpop.f32.mrb[0].mxu0
      %v2036 = vadd.f32 %v1875, %v2035
      %v2037 = vpop.f32.mrb[0].mxu0
      %v2038 = vpop.f32.mrb[0].mxu0
      %v2039 = vadd.f32 %v1878, %v2038
      %v2040 = vpop.f32.mrb[0].mxu0
      %2041 = vmatprep.mubr.bf16.mxu0 %v1136
      %2042 = vmatmul.mubr.bf16.gmra.mrb[0].mxu0 %v1135
      %v2043 = vpop.f32.mrb[0].mxu0
      %v2044 = vadd.f32 %v1883, %v2043
      %v2045 = vpop.f32.mrb[0].mxu0
      %v2046 = vpop.f32.mrb[0].mxu0
      %v2047 = vadd.f32 %v1886, %v2046
      %v2048 = vpop.f32.mrb[0].mxu0
      %2049 = vmatprep.mubr.bf16.mxu0 %v1145
      %2050 = vmatmul.mubr.bf16.gmra.mrb[0].mxu0 %v1144
      %v2051 = vpop.f32.mrb[0].mxu0
      %v2052 = vadd.f32 %v1891, %v2051
      %v2053 = vpop.f32.mrb[0].mxu0
      %v2054 = vpop.f32.mrb[0].mxu0
      %v2055 = vadd.f32 %v1894, %v2054
      %v2056 = vpop.f32.mrb[0].mxu0
      %2057 = vmatprep.mubr.bf16.mxu0 %v1154
      %2058 = vmatmul.mubr.bf16.gmra.mrb[0].mxu0 %v1153
      %v2059 = vpop.f32.mrb[0].mxu0
      %v2060 = vadd.f32 %v1899, %v2059
      %v2061 = vpop.f32.mrb[0].mxu0
      %v2062 = vpop.f32.mrb[0].mxu0
      %v2063 = vadd.f32 %v1902, %v2062
      %v2064 = vpop.f32.mrb[0].mxu0
      %2065 = vmatprep.mubr.bf16.mxu0 %v1163
      %2066 = vmatmul.mubr.bf16.gmra.mrb[0].mxu0 %v1162
      %v2067 = vpop.f32.mrb[0].mxu0
      %v2068 = vadd.f32 %v1907, %v2067
      %v2069 = vpop.f32.mrb[0].mxu0
      %v2070 = vpop.f32.mrb[0].mxu0
      %v2071 = vadd.f32 %v1910, %v2070
      %v2072 = vpop.f32.mrb[0].mxu0
      %2073 = vmatprep.mubr.bf16.mxu0 %v1172
      %2074 = vmatmul.mubr.bf16.gmra.mrb[0].mxu0 %v1171
      %v2075 = vpop.f32.mrb[0].mxu0
      %v2076 = vadd.f32 %v1915, %v2075
      %v2077 = vpop.f32.mrb[0].mxu0
      %v2078 = vpop.f32.mrb[0].mxu0
      %v2079 = vadd.f32 %v1918, %v2078
      %v2080 = vpop.f32.mrb[0].mxu0
      %2081 = vmatprep.mubr.bf16.mxu0 %v1181
      %2082 = vmatmul.mubr.bf16.gmra.mrb[0].mxu0 %v1180
      %v2083 = vpop.f32.mrb[0].mxu0
      %v2084 = vadd.f32 %v1923, %v2083
      %v2085 = vpop.f32.mrb[0].mxu0
      %v2086 = vpop.f32.mrb[0].mxu0
      %v2087 = vadd.f32 %v1926, %v2086
      %v2088 = vpop.f32.mrb[0].mxu0
      %2089 = vmatprep.mubr.bf16.mxu0 %v1190
      %2090 = vmatmul.mubr.bf16.gmra.mrb[0].mxu0 %v1189
      %v2091 = vpop.f32.mrb[0].mxu0
      %v2092 = vadd.f32 %v1931, %v2091
      %v2093 = vpop.f32.mrb[0].mxu0
      %v2094 = vpop.f32.mrb[0].mxu0
      %v2095 = vadd.f32 %v1934, %v2094
      %v2096 = vpop.f32.mrb[0].mxu0
      %2097 = vmatprep.mubr.bf16.mxu0 %v1199
      %2098 = vmatmul.mubr.bf16.gmra.mrb[0].mxu0 %v1198
      %v2099 = vpop.f32.mrb[0].mxu0
      %v2100 = vadd.f32 %v1939, %v2099
      %v2101 = vpop.f32.mrb[0].mxu0
      %v2102 = vpop.f32.mrb[0].mxu0
      %v2103 = vadd.f32 %v1942, %v2102
      %v2104 = vpop.f32.mrb[0].mxu0
      %2105 = vmatprep.mubr.bf16.mxu0 %v1208
      %2106 = vmatmul.mubr.bf16.gmra.mrb[0].mxu0 %v1207
      %v2107 = vpop.f32.mrb[0].mxu0
      %v2108 = vadd.f32 %v1947, %v2107
      %v2109 = vpop.f32.mrb[0].mxu0
      %v2110 = vpop.f32.mrb[0].mxu0
      %v2111 = vadd.f32 %v1950, %v2110
      %v2112 = vpop.f32.mrb[0].mxu0
      %2113 = vmatprep.mubr.bf16.mxu0 %v1217
      %2114 = vmatmul.mubr.bf16.gmra.mrb[0].mxu0 %v1216
      %v2115 = vpop.f32.mrb[0].mxu0
      %v2116 = vadd.f32 %v1955, %v2115
      %v2117 = vpop.f32.mrb[0].mxu0
      %v2118 = vpop.f32.mrb[0].mxu0
      %v2119 = vadd.f32 %v1958, %v2118
      %v2120 = vpop.f32.mrb[0].mxu0
      %2121 = vmatprep.mubr.bf16.mxu0 %v1226
      %2122 = vmatmul.mubr.bf16.gmra.mrb[0].mxu0 %v1225
      %v2123 = vpop.f32.mrb[0].mxu0
      %v2124 = vadd.f32 %v1963, %v2123
      %v2125 = vpop.f32.mrb[0].mxu0
      %v2126 = vpop.f32.mrb[0].mxu0
      %v2127 = vadd.f32 %v1966, %v2126
      %v2128 = vpop.f32.mrb[0].mxu0
      %2129 = vdwg.mxu0
      %2130 = vmatprep.subr.bf16.mxu0 0
      %2131 = vmatpush1.bf16.msra.mxu0 %v1696
      %2132 = vmatprep.subr.bf16.mxu0 0
      %2133 = vmatpush1.bf16.msra.mxu0 %v1697
      %2134 = vmatprep.subr.bf16.mxu0 0
      %2135 = vmatpush1.bf16.msra.mxu0 %v1698
      %2136 = vmatprep.subr.bf16.mxu0 0
      %2137 = vmatpush1.bf16.msra.mxu0 %v1699
      %2138 = vmatprep.subr.bf16.mxu0 0
      %2139 = vmatpush1.bf16.msra.mxu0 %v1700
      %2140 = vmatprep.subr.bf16.mxu0 0
      %2141 = vmatpush1.bf16.msra.mxu0 %v1701
      %2142 = vmatprep.subr.bf16.mxu0 0
      %2143 = vmatpush1.bf16.msra.mxu0 %v1702
      %2144 = vmatprep.subr.bf16.mxu0 0
      %2145 = vmatpush1.bf16.msra.mxu0 %v1703
      %2146 = vmatprep.subr.bf16.mxu0 0
      %2147 = vmatpush1.bf16.msra.mxu0 %v1704
      %2148 = vmatprep.subr.bf16.mxu0 0
      %2149 = vmatpush1.bf16.msra.mxu0 %v1705
      %2150 = vmatprep.subr.bf16.mxu0 0
      %2151 = vmatpush1.bf16.msra.mxu0 %v1706
      %2152 = vmatprep.subr.bf16.mxu0 0
      %2153 = vmatpush1.bf16.msra.mxu0 %v1707
      %2154 = vmatprep.subr.bf16.mxu0 0
      %2155 = vmatpush1.bf16.msra.mxu0 %v1708
      %2156 = vmatprep.subr.bf16.mxu0 0
      %2157 = vmatpush1.bf16.msra.mxu0 %v1709
      %2158 = vmatprep.subr.bf16.mxu0 0
      %2159 = vmatpush1.bf16.msra.mxu0 %v1710
      %2160 = vmatprep.subr.bf16.mxu0 0
      %2161 = vmatpush1.bf16.msra.mxu0 %v1711
      %2162 = vmatprep.mubr.bf16.mxu0 %v1093
      %2163 = vmatmul.mubr.bf16.gmra.mrb[0].mxu0 %v1092
      %v2164 = vpop.f32.mrb[0].mxu0
      %v2165 = vadd.f32 %v2004, %v2164
      %v2166 = vpop.f32.mrb[0].mxu0
      %v2167 = vpop.f32.mrb[0].mxu0
      %v2168 = vadd.f32 %v2007, %v2167
      %v2169 = vpop.f32.mrb[0].mxu0
      %2170 = vmatprep.mubr.bf16.mxu0 %v1102
      %2171 = vmatmul.mubr.bf16.gmra.mrb[0].mxu0 %v1101
      %v2172 = vpop.f32.mrb[0].mxu0
      %v2173 = vadd.f32 %v2012, %v2172
      %v2174 = vpop.f32.mrb[0].mxu0
      %v2175 = vpop.f32.mrb[0].mxu0
      %v2176 = vadd.f32 %v2015, %v2175
      %v2177 = vpop.f32.mrb[0].mxu0
      %2178 = vmatprep.mubr.bf16.mxu0 %v1111
      %2179 = vmatmul.mubr.bf16.gmra.mrb[0].mxu0 %v1110
      %v2180 = vpop.f32.mrb[0].mxu0
      %v2181 = vadd.f32 %v2020, %v2180
      %v2182 = vpop.f32.mrb[0].mxu0
      %v2183 = vpop.f32.mrb[0].mxu0
      %v2184 = vadd.f32 %v2023, %v2183
      %v2185 = vpop.f32.mrb[0].mxu0
      %2186 = vmatprep.mubr.bf16.mxu0 %v1120
      %2187 = vmatmul.mubr.bf16.gmra.mrb[0].mxu0 %v1119
      %v2188 = vpop.f32.mrb[0].mxu0
      %v2189 = vadd.f32 %v2028, %v2188
      %v2190 = vpop.f32.mrb[0].mxu0
      %v2191 = vpop.f32.mrb[0].mxu0
      %v2192 = vadd.f32 %v2031, %v2191
      %v2193 = vpop.f32.mrb[0].mxu0
      %2194 = vmatprep.mubr.bf16.mxu0 %v1129
      %2195 = vmatmul.mubr.bf16.gmra.mrb[0].mxu0 %v1128
      %v2196 = vpop.f32.mrb[0].mxu0
      %v2197 = vadd.f32 %v2036, %v2196
      %v2198 = vpop.f32.mrb[0].mxu0
      %v2199 = vpop.f32.mrb[0].mxu0
      %v2200 = vadd.f32 %v2039, %v2199
      %v2201 = vpop.f32.mrb[0].mxu0
      %2202 = vmatprep.mubr.bf16.mxu0 %v1138
      %2203 = vmatmul.mubr.bf16.gmra.mrb[0].mxu0 %v1137
      %v2204 = vpop.f32.mrb[0].mxu0
      %v2205 = vadd.f32 %v2044, %v2204
      %v2206 = vpop.f32.mrb[0].mxu0
      %v2207 = vpop.f32.mrb[0].mxu0
      %v2208 = vadd.f32 %v2047, %v2207
      %v2209 = vpop.f32.mrb[0].mxu0
      %2210 = vmatprep.mubr.bf16.mxu0 %v1147
      %2211 = vmatmul.mubr.bf16.gmra.mrb[0].mxu0 %v1146
      %v2212 = vpop.f32.mrb[0].mxu0
      %v2213 = vadd.f32 %v2052, %v2212
      %v2214 = vpop.f32.mrb[0].mxu0
      %v2215 = vpop.f32.mrb[0].mxu0
      %v2216 = vadd.f32 %v2055, %v2215
      %v2217 = vpop.f32.mrb[0].mxu0
      %2218 = vmatprep.mubr.bf16.mxu0 %v1156
      %2219 = vmatmul.mubr.bf16.gmra.mrb[0].mxu0 %v1155
      %v2220 = vpop.f32.mrb[0].mxu0
      %v2221 = vadd.f32 %v2060, %v2220
      %v2222 = vpop.f32.mrb[0].mxu0
      %v2223 = vpop.f32.mrb[0].mxu0
      %v2224 = vadd.f32 %v2063, %v2223
      %v2225 = vpop.f32.mrb[0].mxu0
      %2226 = vmatprep.mubr.bf16.mxu0 %v1165
      %2227 = vmatmul.mubr.bf16.gmra.mrb[0].mxu0 %v1164
      %v2228 = vpop.f32.mrb[0].mxu0
      %v2229 = vadd.f32 %v2068, %v2228
      %v2230 = vpop.f32.mrb[0].mxu0
      %v2231 = vpop.f32.mrb[0].mxu0
      %v2232 = vadd.f32 %v2071, %v2231
      %v2233 = vpop.f32.mrb[0].mxu0
      %2234 = vmatprep.mubr.bf16.mxu0 %v1174
      %2235 = vmatmul.mubr.bf16.gmra.mrb[0].mxu0 %v1173
      %v2236 = vpop.f32.mrb[0].mxu0
      %v2237 = vadd.f32 %v2076, %v2236
      %v2238 = vpop.f32.mrb[0].mxu0
      %v2239 = vpop.f32.mrb[0].mxu0
      %v2240 = vadd.f32 %v2079, %v2239
      %v2241 = vpop.f32.mrb[0].mxu0
      %2242 = vmatprep.mubr.bf16.mxu0 %v1183
      %2243 = vmatmul.mubr.bf16.gmra.mrb[0].mxu0 %v1182
      %v2244 = vpop.f32.mrb[0].mxu0
      %v2245 = vadd.f32 %v2084, %v2244
      %v2246 = vpop.f32.mrb[0].mxu0
      %v2247 = vpop.f32.mrb[0].mxu0
      %v2248 = vadd.f32 %v2087, %v2247
      %v2249 = vpop.f32.mrb[0].mxu0
      %2250 = vmatprep.mubr.bf16.mxu0 %v1192
      %2251 = vmatmul.mubr.bf16.gmra.mrb[0].mxu0 %v1191
      %v2252 = vpop.f32.mrb[0].mxu0
      %v2253 = vadd.f32 %v2092, %v2252
      %v2254 = vpop.f32.mrb[0].mxu0
      %v2255 = vpop.f32.mrb[0].mxu0
      %v2256 = vadd.f32 %v2095, %v2255
      %v2257 = vpop.f32.mrb[0].mxu0
      %2258 = vmatprep.mubr.bf16.mxu0 %v1201
      %2259 = vmatmul.mubr.bf16.gmra.mrb[0].mxu0 %v1200
      %v2260 = vpop.f32.mrb[0].mxu0
      %v2261 = vadd.f32 %v2100, %v2260
      %v2262 = vpop.f32.mrb[0].mxu0
      %v2263 = vpop.f32.mrb[0].mxu0
      %v2264 = vadd.f32 %v2103, %v2263
      %v2265 = vpop.f32.mrb[0].mxu0
      %2266 = vmatprep.mubr.bf16.mxu0 %v1210
      %2267 = vmatmul.mubr.bf16.gmra.mrb[0].mxu0 %v1209
      %v2268 = vpop.f32.mrb[0].mxu0
      %v2269 = vadd.f32 %v2108, %v2268
      %v2270 = vpop.f32.mrb[0].mxu0
      %v2271 = vpop.f32.mrb[0].mxu0
      %v2272 = vadd.f32 %v2111, %v2271
      %v2273 = vpop.f32.mrb[0].mxu0
      %2274 = vmatprep.mubr.bf16.mxu0 %v1219
      %2275 = vmatmul.mubr.bf16.gmra.mrb[0].mxu0 %v1218
      %v2276 = vpop.f32.mrb[0].mxu0
      %v2277 = vadd.f32 %v2116, %v2276
      %v2278 = vpop.f32.mrb[0].mxu0
      %v2279 = vpop.f32.mrb[0].mxu0
      %v2280 = vadd.f32 %v2119, %v2279
      %v2281 = vpop.f32.mrb[0].mxu0
      %2282 = vmatprep.mubr.bf16.mxu0 %v1228
      %2283 = vmatmul.mubr.bf16.gmra.mrb[0].mxu0 %v1227
      %v2284 = vpop.f32.mrb[0].mxu0
      %v2285 = vadd.f32 %v2124, %v2284
      %v2286 = vpop.f32.mrb[0].mxu0
      %v2287 = vpop.f32.mrb[0].mxu0
      %v2288 = vadd.f32 %v2127, %v2287
      %v2289 = vpop.f32.mrb[0].mxu0
      %2290 = vdwg.mxu0
      %2291 = vmatprep.subr.bf16.mxu0 0
      %2292 = vmatpush1.bf16.msra.mxu0 %v1712
      %2293 = vmatprep.subr.bf16.mxu0 0
      %2294 = vmatpush1.bf16.msra.mxu0 %v1713
      %2295 = vmatprep.subr.bf16.mxu0 0
      %2296 = vmatpush1.bf16.msra.mxu0 %v1714
      %2297 = vmatprep.subr.bf16.mxu0 0
      %2298 = vmatpush1.bf16.msra.mxu0 %v1715
      %2299 = vmatprep.subr.bf16.mxu0 0
      %2300 = vmatpush1.bf16.msra.mxu0 %v1716
      %2301 = vmatprep.subr.bf16.mxu0 0
      %2302 = vmatpush1.bf16.msra.mxu0 %v1717
      %2303 = vmatprep.subr.bf16.mxu0 0
      %2304 = vmatpush1.bf16.msra.mxu0 %v1718
      %2305 = vmatprep.subr.bf16.mxu0 0
      %2306 = vmatpush1.bf16.msra.mxu0 %v1719
      %2307 = vmatprep.subr.bf16.mxu0 0
      %2308 = vmatpush1.bf16.msra.mxu0 %v1720
      %2309 = vmatprep.subr.bf16.mxu0 0
      %2310 = vmatpush1.bf16.msra.mxu0 %v1721
      %2311 = vmatprep.subr.bf16.mxu0 0
      %2312 = vmatpush1.bf16.msra.mxu0 %v1722
      %2313 = vmatprep.subr.bf16.mxu0 0
      %2314 = vmatpush1.bf16.msra.mxu0 %v1723
      %2315 = vmatprep.subr.bf16.mxu0 0
      %2316 = vmatpush1.bf16.msra.mxu0 %v1724
      %2317 = vmatprep.subr.bf16.mxu0 0
      %2318 = vmatpush1.bf16.msra.mxu0 %v1725
      %2319 = vmatprep.subr.bf16.mxu0 0
      %2320 = vmatpush1.bf16.msra.mxu0 %v1726
      %2321 = vmatprep.subr.bf16.mxu0 0
      %2322 = vmatpush1.bf16.msra.mxu0 %v1727
      %2323 = vmatprep.mubr.bf16.mxu0 %v1095
      %2324 = vmatmul.mubr.bf16.gmra.mrb[0].mxu0 %v1094
      %v2325 = vpop.f32.mrb[0].mxu0
      %v2326 = vadd.f32 %v2165, %v2325
      %v2327 = vpop.f32.mrb[0].mxu0
      %v2328 = vpop.f32.mrb[0].mxu0
      %v2329 = vadd.f32 %v2168, %v2328
      %v2330 = vpop.f32.mrb[0].mxu0
      %2331 = vmatprep.mubr.bf16.mxu0 %v1104
      %2332 = vmatmul.mubr.bf16.gmra.mrb[0].mxu0 %v1103
      %v2333 = vpop.f32.mrb[0].mxu0
      %v2334 = vadd.f32 %v2173, %v2333
      %v2335 = vpop.f32.mrb[0].mxu0
      %v2336 = vpop.f32.mrb[0].mxu0
      %v2337 = vadd.f32 %v2176, %v2336
      %v2338 = vpop.f32.mrb[0].mxu0
      %2339 = vmatprep.mubr.bf16.mxu0 %v1113
      %2340 = vmatmul.mubr.bf16.gmra.mrb[0].mxu0 %v1112
      %v2341 = vpop.f32.mrb[0].mxu0
      %v2342 = vadd.f32 %v2181, %v2341
      %v2343 = vpop.f32.mrb[0].mxu0
      %v2344 = vpop.f32.mrb[0].mxu0
      %v2345 = vadd.f32 %v2184, %v2344
      %v2346 = vpop.f32.mrb[0].mxu0
      %2347 = vmatprep.mubr.bf16.mxu0 %v1122
      %2348 = vmatmul.mubr.bf16.gmra.mrb[0].mxu0 %v1121
      %v2349 = vpop.f32.mrb[0].mxu0
      %v2350 = vadd.f32 %v2189, %v2349
      %v2351 = vpop.f32.mrb[0].mxu0
      %v2352 = vpop.f32.mrb[0].mxu0
      %v2353 = vadd.f32 %v2192, %v2352
      %v2354 = vpop.f32.mrb[0].mxu0
      %2355 = vmatprep.mubr.bf16.mxu0 %v1131
      %2356 = vmatmul.mubr.bf16.gmra.mrb[0].mxu0 %v1130
      %v2357 = vpop.f32.mrb[0].mxu0
      %v2358 = vadd.f32 %v2197, %v2357
      %v2359 = vpop.f32.mrb[0].mxu0
      %v2360 = vpop.f32.mrb[0].mxu0
      %v2361 = vadd.f32 %v2200, %v2360
      %v2362 = vpop.f32.mrb[0].mxu0
      %2363 = vmatprep.mubr.bf16.mxu0 %v1140
      %2364 = vmatmul.mubr.bf16.gmra.mrb[0].mxu0 %v1139
      %v2365 = vpop.f32.mrb[0].mxu0
      %v2366 = vadd.f32 %v2205, %v2365
      %v2367 = vpop.f32.mrb[0].mxu0
      %v2368 = vpop.f32.mrb[0].mxu0
      %v2369 = vadd.f32 %v2208, %v2368
      %v2370 = vpop.f32.mrb[0].mxu0
      %2371 = vmatprep.mubr.bf16.mxu0 %v1149
      %2372 = vmatmul.mubr.bf16.gmra.mrb[0].mxu0 %v1148
      %v2373 = vpop.f32.mrb[0].mxu0
      %v2374 = vadd.f32 %v2213, %v2373
      %v2375 = vpop.f32.mrb[0].mxu0
      %v2376 = vpop.f32.mrb[0].mxu0
      %v2377 = vadd.f32 %v2216, %v2376
      %v2378 = vpop.f32.mrb[0].mxu0
      %2379 = vmatprep.mubr.bf16.mxu0 %v1158
      %2380 = vmatmul.mubr.bf16.gmra.mrb[0].mxu0 %v1157
      %v2381 = vpop.f32.mrb[0].mxu0
      %v2382 = vadd.f32 %v2221, %v2381
      %v2383 = vpop.f32.mrb[0].mxu0
      %v2384 = vpop.f32.mrb[0].mxu0
      %v2385 = vadd.f32 %v2224, %v2384
      %v2386 = vpop.f32.mrb[0].mxu0
      %2387 = vmatprep.mubr.bf16.mxu0 %v1167
      %2388 = vmatmul.mubr.bf16.gmra.mrb[0].mxu0 %v1166
      %v2389 = vpop.f32.mrb[0].mxu0
      %v2390 = vadd.f32 %v2229, %v2389
      %v2391 = vpop.f32.mrb[0].mxu0
      %v2392 = vpop.f32.mrb[0].mxu0
      %v2393 = vadd.f32 %v2232, %v2392
      %v2394 = vpop.f32.mrb[0].mxu0
      %2395 = vmatprep.mubr.bf16.mxu0 %v1176
      %2396 = vmatmul.mubr.bf16.gmra.mrb[0].mxu0 %v1175
      %v2397 = vpop.f32.mrb[0].mxu0
      %v2398 = vadd.f32 %v2237, %v2397
      %v2399 = vpop.f32.mrb[0].mxu0
      %v2400 = vpop.f32.mrb[0].mxu0
      %v2401 = vadd.f32 %v2240, %v2400
      %v2402 = vpop.f32.mrb[0].mxu0
      %2403 = vmatprep.mubr.bf16.mxu0 %v1185
      %2404 = vmatmul.mubr.bf16.gmra.mrb[0].mxu0 %v1184
      %v2405 = vpop.f32.mrb[0].mxu0
      %v2406 = vadd.f32 %v2245, %v2405
      %v2407 = vpop.f32.mrb[0].mxu0
      %v2408 = vpop.f32.mrb[0].mxu0
      %v2409 = vadd.f32 %v2248, %v2408
      %v2410 = vpop.f32.mrb[0].mxu0
      %2411 = vmatprep.mubr.bf16.mxu0 %v1194
      %2412 = vmatmul.mubr.bf16.gmra.mrb[0].mxu0 %v1193
      %v2413 = vpop.f32.mrb[0].mxu0
      %v2414 = vadd.f32 %v2253, %v2413
      %v2415 = vpop.f32.mrb[0].mxu0
      %v2416 = vpop.f32.mrb[0].mxu0
      %v2417 = vadd.f32 %v2256, %v2416
      %v2418 = vpop.f32.mrb[0].mxu0
      %2419 = vmatprep.mubr.bf16.mxu0 %v1203
      %2420 = vmatmul.mubr.bf16.gmra.mrb[0].mxu0 %v1202
      %v2421 = vpop.f32.mrb[0].mxu0
      %v2422 = vadd.f32 %v2261, %v2421
      %v2423 = vpop.f32.mrb[0].mxu0
      %v2424 = vpop.f32.mrb[0].mxu0
      %v2425 = vadd.f32 %v2264, %v2424
      %v2426 = vpop.f32.mrb[0].mxu0
      %2427 = vmatprep.mubr.bf16.mxu0 %v1212
      %2428 = vmatmul.mubr.bf16.gmra.mrb[0].mxu0 %v1211
      %v2429 = vpop.f32.mrb[0].mxu0
      %v2430 = vadd.f32 %v2269, %v2429
      %v2431 = vpop.f32.mrb[0].mxu0
      %v2432 = vpop.f32.mrb[0].mxu0
      %v2433 = vadd.f32 %v2272, %v2432
      %v2434 = vpop.f32.mrb[0].mxu0
      %2435 = vmatprep.mubr.bf16.mxu0 %v1221
      %2436 = vmatmul.mubr.bf16.gmra.mrb[0].mxu0 %v1220
      %v2437 = vpop.f32.mrb[0].mxu0
      %v2438 = vadd.f32 %v2277, %v2437
      %v2439 = vpop.f32.mrb[0].mxu0
      %v2440 = vpop.f32.mrb[0].mxu0
      %v2441 = vadd.f32 %v2280, %v2440
      %v2442 = vpop.f32.mrb[0].mxu0
      %2443 = vmatprep.mubr.bf16.mxu0 %v1230
      %2444 = vmatmul.mubr.bf16.gmra.mrb[0].mxu0 %v1229
      %v2445 = vpop.f32.mrb[0].mxu0
      %v2446 = vadd.f32 %v2285, %v2445
      %v2447 = vpop.f32.mrb[0].mxu0
      %v2448 = vpop.f32.mrb[0].mxu0
      %v2449 = vadd.f32 %v2288, %v2448
      %v2450 = vpop.f32.mrb[0].mxu0
      %2451 = vdwg.mxu0
      %2452 = vmatprep.subr.bf16.mxu0 0
      %2453 = vmatpush1.bf16.msra.mxu0 %v1728
      %2454 = vmatprep.subr.bf16.mxu0 0
      %2455 = vmatpush1.bf16.msra.mxu0 %v1729
      %2456 = vmatprep.subr.bf16.mxu0 0
      %2457 = vmatpush1.bf16.msra.mxu0 %v1730
      %2458 = vmatprep.subr.bf16.mxu0 0
      %2459 = vmatpush1.bf16.msra.mxu0 %v1731
      %2460 = vmatprep.subr.bf16.mxu0 0
      %2461 = vmatpush1.bf16.msra.mxu0 %v1732
      %2462 = vmatprep.subr.bf16.mxu0 0
      %2463 = vmatpush1.bf16.msra.mxu0 %v1733
      %2464 = vmatprep.subr.bf16.mxu0 0
      %2465 = vmatpush1.bf16.msra.mxu0 %v1734
      %2466 = vmatprep.subr.bf16.mxu0 0
      %2467 = vmatpush1.bf16.msra.mxu0 %v1735
      %2468 = vmatprep.subr.bf16.mxu0 0
      %2469 = vmatpush1.bf16.msra.mxu0 0
      %2470 = vmatprep.subr.bf16.mxu0 0
      %2471 = vmatpush1.bf16.msra.mxu0 0
      %2472 = vmatprep.subr.bf16.mxu0 0
      %2473 = vmatpush1.bf16.msra.mxu0 0
      %2474 = vmatprep.subr.bf16.mxu0 0
      %2475 = vmatpush1.bf16.msra.mxu0 0
      %2476 = vmatprep.subr.bf16.mxu0 0
      %2477 = vmatpush1.bf16.msra.mxu0 0
      %2478 = vmatprep.subr.bf16.mxu0 0
      %2479 = vmatpush1.bf16.msra.mxu0 0
      %2480 = vmatprep.subr.bf16.mxu0 0
      %2481 = vmatpush1.bf16.msra.mxu0 0
      %2482 = vmatprep.subr.bf16.mxu0 0
      %2483 = vmatpush1.bf16.msra.mxu0 0
      %2484 = vmatprep.mubr.bf16.mxu0 0
      %2485 = vmatmul.mubr.bf16.gmra.mrb[0].mxu0 %v1096
      %v2486 = vpop.f32.mrb[0].mxu0
      %v2487 = vadd.f32 %v2326, %v2486
      %v2488 = vpop.f32.mrb[0].mxu0
      %v2489 = vpop.f32.mrb[0].mxu0
      %v2490 = vadd.f32 %v2329, %v2489
      %v2491 = vpop.f32.mrb[0].mxu0
      %2492 = vmatprep.mubr.bf16.mxu0 0
      %2493 = vmatmul.mubr.bf16.gmra.mrb[0].mxu0 %v1105
      %v2494 = vpop.f32.mrb[0].mxu0
      %v2495 = vadd.f32 %v2334, %v2494
      %v2496 = vpop.f32.mrb[0].mxu0
      %v2497 = vpop.f32.mrb[0].mxu0
      %v2498 = vadd.f32 %v2337, %v2497
      %v2499 = vpop.f32.mrb[0].mxu0
      %2500 = vmatprep.mubr.bf16.mxu0 0
      %2501 = vmatmul.mubr.bf16.gmra.mrb[0].mxu0 %v1114
      %v2502 = vpop.f32.mrb[0].mxu0
      %v2503 = vadd.f32 %v2342, %v2502
      %v2504 = vpop.f32.mrb[0].mxu0
      %v2505 = vpop.f32.mrb[0].mxu0
      %v2506 = vadd.f32 %v2345, %v2505
      %v2507 = vpop.f32.mrb[0].mxu0
      %2508 = vmatprep.mubr.bf16.mxu0 0
      %2509 = vmatmul.mubr.bf16.gmra.mrb[0].mxu0 %v1123
      %v2510 = vpop.f32.mrb[0].mxu0
      %v2511 = vadd.f32 %v2350, %v2510
      %v2512 = vpop.f32.mrb[0].mxu0
      %v2513 = vpop.f32.mrb[0].mxu0
      %v2514 = vadd.f32 %v2353, %v2513
      %v2515 = vpop.f32.mrb[0].mxu0
      %2516 = vmatprep.mubr.bf16.mxu0 0
      %2517 = vmatmul.mubr.bf16.gmra.mrb[0].mxu0 %v1132
      %v2518 = vpop.f32.mrb[0].mxu0
      %v2519 = vadd.f32 %v2358, %v2518
      %v2520 = vpop.f32.mrb[0].mxu0
      %v2521 = vpop.f32.mrb[0].mxu0
      %v2522 = vadd.f32 %v2361, %v2521
      %v2523 = vpop.f32.mrb[0].mxu0
      %2524 = vmatprep.mubr.bf16.mxu0 0
      %2525 = vmatmul.mubr.bf16.gmra.mrb[0].mxu0 %v1141
      %v2526 = vpop.f32.mrb[0].mxu0
      %v2527 = vadd.f32 %v2366, %v2526
      %v2528 = vpop.f32.mrb[0].mxu0
      %v2529 = vpop.f32.mrb[0].mxu0
      %v2530 = vadd.f32 %v2369, %v2529
      %v2531 = vpop.f32.mrb[0].mxu0
      %2532 = vmatprep.mubr.bf16.mxu0 0
      %2533 = vmatmul.mubr.bf16.gmra.mrb[0].mxu0 %v1150
      %v2534 = vpop.f32.mrb[0].mxu0
      %v2535 = vadd.f32 %v2374, %v2534
      %v2536 = vpop.f32.mrb[0].mxu0
      %v2537 = vpop.f32.mrb[0].mxu0
      %v2538 = vadd.f32 %v2377, %v2537
      %v2539 = vpop.f32.mrb[0].mxu0
      %2540 = vmatprep.mubr.bf16.mxu0 0
      %2541 = vmatmul.mubr.bf16.gmra.mrb[0].mxu0 %v1159
      %v2542 = vpop.f32.mrb[0].mxu0
      %v2543 = vadd.f32 %v2382, %v2542
      %v2544 = vpop.f32.mrb[0].mxu0
      %v2545 = vpop.f32.mrb[0].mxu0
      %v2546 = vadd.f32 %v2385, %v2545
      %v2547 = vpop.f32.mrb[0].mxu0
      %2548 = vmatprep.mubr.bf16.mxu0 0
      %2549 = vmatmul.mubr.bf16.gmra.mrb[0].mxu0 %v1168
      %v2550 = vpop.f32.mrb[0].mxu0
      %v2551 = vadd.f32 %v2390, %v2550
      %v2552 = vpop.f32.mrb[0].mxu0
      %v2553 = vpop.f32.mrb[0].mxu0
      %v2554 = vadd.f32 %v2393, %v2553
      %v2555 = vpop.f32.mrb[0].mxu0
      %2556 = vmatprep.mubr.bf16.mxu0 0
      %2557 = vmatmul.mubr.bf16.gmra.mrb[0].mxu0 %v1177
      %v2558 = vpop.f32.mrb[0].mxu0
      %v2559 = vadd.f32 %v2398, %v2558
      %v2560 = vpop.f32.mrb[0].mxu0
      %v2561 = vpop.f32.mrb[0].mxu0
      %v2562 = vadd.f32 %v2401, %v2561
      %v2563 = vpop.f32.mrb[0].mxu0
      %2564 = vmatprep.mubr.bf16.mxu0 0
      %2565 = vmatmul.mubr.bf16.gmra.mrb[0].mxu0 %v1186
      %v2566 = vpop.f32.mrb[0].mxu0
      %v2567 = vadd.f32 %v2406, %v2566
      %v2568 = vpop.f32.mrb[0].mxu0
      %v2569 = vpop.f32.mrb[0].mxu0
      %v2570 = vadd.f32 %v2409, %v2569
      %v2571 = vpop.f32.mrb[0].mxu0
      %2572 = vmatprep.mubr.bf16.mxu0 0
      %2573 = vmatmul.mubr.bf16.gmra.mrb[0].mxu0 %v1195
      %v2574 = vpop.f32.mrb[0].mxu0
      %v2575 = vadd.f32 %v2414, %v2574
      %v2576 = vpop.f32.mrb[0].mxu0
      %v2577 = vpop.f32.mrb[0].mxu0
      %v2578 = vadd.f32 %v2417, %v2577
      %v2579 = vpop.f32.mrb[0].mxu0
      %2580 = vmatprep.mubr.bf16.mxu0 0
      %2581 = vmatmul.mubr.bf16.gmra.mrb[0].mxu0 %v1204
      %v2582 = vpop.f32.mrb[0].mxu0
      %v2583 = vadd.f32 %v2422, %v2582
      %v2584 = vpop.f32.mrb[0].mxu0
      %v2585 = vpop.f32.mrb[0].mxu0
      %v2586 = vadd.f32 %v2425, %v2585
      %v2587 = vpop.f32.mrb[0].mxu0
      %2588 = vmatprep.mubr.bf16.mxu0 0
      %2589 = vmatmul.mubr.bf16.gmra.mrb[0].mxu0 %v1213
      %v2590 = vpop.f32.mrb[0].mxu0
      %v2591 = vadd.f32 %v2430, %v2590
      %v2592 = vpop.f32.mrb[0].mxu0
      %v2593 = vpop.f32.mrb[0].mxu0
      %v2594 = vadd.f32 %v2433, %v2593
      %v2595 = vpop.f32.mrb[0].mxu0
      %2596 = vmatprep.mubr.bf16.mxu0 0
      %2597 = vmatmul.mubr.bf16.gmra.mrb[0].mxu0 %v1222
      %v2598 = vpop.f32.mrb[0].mxu0
      %v2599 = vadd.f32 %v2438, %v2598
      %v2600 = vpop.f32.mrb[0].mxu0
      %v2601 = vpop.f32.mrb[0].mxu0
      %v2602 = vadd.f32 %v2441, %v2601
      %v2603 = vpop.f32.mrb[0].mxu0
      %2604 = vmatprep.mubr.bf16.mxu0 0
      %2605 = vmatmul.mubr.bf16.gmra.mrb[0].mxu0 %v1231
      %v2606 = vpop.f32.mrb[0].mxu0
      %v2607 = vadd.f32 %v2446, %v2606
      %v2608 = vpop.f32.mrb[0].mxu0
      %v2609 = vpop.f32.mrb[0].mxu0
      %v2610 = vadd.f32 %v2449, %v2609
      %v2611 = vpop.f32.mrb[0].mxu0
      %2612 = vdwg.mxu0
      %v2613 = vadd.f32 %v304, %v2487
      %v2614 = vadd.f32 %v305, %v2490
      %v2615 = vadd.f32 %v306, %v2495
      %v2616 = vadd.f32 %v307, %v2498
      %v2617 = vadd.f32 %v308, %v2503
      %v2618 = vadd.f32 %v309, %v2506
      %v2619 = vadd.f32 %v310, %v2511
      %v2620 = vadd.f32 %v311, %v2514
      %v2621 = vadd.f32 %v312, %v2519
      %v2622 = vadd.f32 %v313, %v2522
      %v2623 = vadd.f32 %v314, %v2527
      %v2624 = vadd.f32 %v315, %v2530
      %v2625 = vadd.f32 %v316, %v2535
      %v2626 = vadd.f32 %v317, %v2538
      %v2627 = vadd.f32 %v318, %v2543
      %v2628 = vadd.f32 %v319, %v2546
      %v2629 = vadd.f32 %v320, %v2551
      %v2630 = vadd.f32 %v321, %v2554
      %v2631 = vadd.f32 %v322, %v2559
      %v2632 = vadd.f32 %v323, %v2562
      %v2633 = vadd.f32 %v324, %v2567
      %v2634 = vadd.f32 %v325, %v2570
      %v2635 = vadd.f32 %v326, %v2575
      %v2636 = vadd.f32 %v327, %v2578
      %v2637 = vadd.f32 %v328, %v2583
      %v2638 = vadd.f32 %v329, %v2586
      %v2639 = vadd.f32 %v330, %v2591
      %v2640 = vadd.f32 %v331, %v2594
      %v2641 = vadd.f32 %v332, %v2599
      %v2642 = vadd.f32 %v333, %v2602
      %v2643 = vadd.f32 %v334, %v2607
      %v2644 = vadd.f32 %v335, %v2610
      %2645 = vst [vmem:[#allocation2] sm:$0xff] %v2613
      %2646 = vst [vmem:[#allocation2 + $0x8] sm:$0xff] %v2614
      %2647 = vst [vmem:[#allocation2 + $0x10] sm:$0xff] %v2615
      %2648 = vst [vmem:[#allocation2 + $0x18] sm:$0xff] %v2616
      %2649 = vst [vmem:[#allocation2 + $0x20] sm:$0xff] %v2617
      %2650 = vst [vmem:[#allocation2 + $0x28] sm:$0xff] %v2618
      %2651 = vst [vmem:[#allocation2 + $0x30] sm:$0xff] %v2619
      %2652 = vst [vmem:[#allocation2 + $0x38] sm:$0xff] %v2620
      %2653 = vst [vmem:[#allocation2 + $0x40] sm:$0xff] %v2621
      %2654 = vst [vmem:[#allocation2 + $0x48] sm:$0xff] %v2622
      %2655 = vst [vmem:[#allocation2 + $0x50] sm:$0xff] %v2623
      %2656 = vst [vmem:[#allocation2 + $0x58] sm:$0xff] %v2624
      %2657 = vst [vmem:[#allocation2 + $0x60] sm:$0xff] %v2625
      %2658 = vst [vmem:[#allocation2 + $0x68] sm:$0xff] %v2626
      %2659 = vst [vmem:[#allocation2 + $0x70] sm:$0xff] %v2627
      %2660 = vst [vmem:[#allocation2 + $0x78] sm:$0xff] %v2628
      %2661 = vst [vmem:[#allocation2 + $0x80] sm:$0xff] %v2629
      %2662 = vst [vmem:[#allocation2 + $0x88] sm:$0xff] %v2630
      %2663 = vst [vmem:[#allocation2 + $0x90] sm:$0xff] %v2631
      %2664 = vst [vmem:[#allocation2 + $0x98] sm:$0xff] %v2632
      %2665 = vst [vmem:[#allocation2 + $0xa0] sm:$0xff] %v2633
      %2666 = vst [vmem:[#allocation2 + $0xa8] sm:$0xff] %v2634
      %2667 = vst [vmem:[#allocation2 + $0xb0] sm:$0xff] %v2635
      %2668 = vst [vmem:[#allocation2 + $0xb8] sm:$0xff] %v2636
      %2669 = vst [vmem:[#allocation2 + $0xc0] sm:$0xff] %v2637
      %2670 = vst [vmem:[#allocation2 + $0xc8] sm:$0xff] %v2638
      %2671 = vst [vmem:[#allocation2 + $0xd0] sm:$0xff] %v2639
      %2672 = vst [vmem:[#allocation2 + $0xd8] sm:$0xff] %v2640
      %2673 = vst [vmem:[#allocation2 + $0xe0] sm:$0xff] %v2641
      %2674 = vst [vmem:[#allocation2 + $0xe8] sm:$0xff] %v2642
      %2675 = vst [vmem:[#allocation2 + $0xf0] sm:$0xff] %v2643
      %2676 = vst [vmem:[#allocation2 + $0xf8] sm:$0xff] %v2644
      // Predicated region
      $region37: #{resnet_forward.12} parent=31 // pred_check
        %p2677 = pneg %p268
      $region38: #{resnet_forward.12} parent=31 // pred_check_branch
        %2679 = sbr.rel (%p2677) target = $region40
      $region39: #{resnet_forward.12} parent=31 // pred_region
        %v2680 = vld [vmem:[#allocation2] sm:$0xff]
        %v2681 = vld [vmem:[#allocation2 + $0x8] sm:$0xff]
        %v2682 = vld [vmem:[#allocation2 + $0x10] sm:$0xff]
        %v2683 = vld [vmem:[#allocation2 + $0x18] sm:$0xff]
        %v2684 = vld [vmem:[#allocation2 + $0x20] sm:$0xff]
        %v2685 = vld [vmem:[#allocation2 + $0x28] sm:$0xff]
        %v2686 = vld [vmem:[#allocation2 + $0x30] sm:$0xff]
        %v2687 = vld [vmem:[#allocation2 + $0x38] sm:$0xff]
        %v2688 = vld [vmem:[#allocation2 + $0x40] sm:$0xff]
        %v2689 = vld [vmem:[#allocation2 + $0x48] sm:$0xff]
        %v2690 = vld [vmem:[#allocation2 + $0x50] sm:$0xff]
        %v2691 = vld [vmem:[#allocation2 + $0x58] sm:$0xff]
        %v2692 = vld [vmem:[#allocation2 + $0x60] sm:$0xff]
        %v2693 = vld [vmem:[#allocation2 + $0x68] sm:$0xff]
        %v2694 = vld [vmem:[#allocation2 + $0x70] sm:$0xff]
        %v2695 = vld [vmem:[#allocation2 + $0x78] sm:$0xff]
        %v2696 = vld [vmem:[#allocation2 + $0x80] sm:$0xff]
        %v2697 = vld [vmem:[#allocation2 + $0x88] sm:$0xff]
        %v2698 = vld [vmem:[#allocation2 + $0x90] sm:$0xff]
        %v2699 = vld [vmem:[#allocation2 + $0x98] sm:$0xff]
        %v2700 = vld [vmem:[#allocation2 + $0xa0] sm:$0xff]
        %v2701 = vld [vmem:[#allocation2 + $0xa8] sm:$0xff]
        %v2702 = vld [vmem:[#allocation2 + $0xb0] sm:$0xff]
        %v2703 = vld [vmem:[#allocation2 + $0xb8] sm:$0xff]
        %v2704 = vld [vmem:[#allocation2 + $0xc0] sm:$0xff]
        %v2705 = vld [vmem:[#allocation2 + $0xc8] sm:$0xff]
        %v2706 = vld [vmem:[#allocation2 + $0xd0] sm:$0xff]
        %v2707 = vld [vmem:[#allocation2 + $0xd8] sm:$0xff]
        %v2708 = vld [vmem:[#allocation2 + $0xe0] sm:$0xff]
        %v2709 = vld [vmem:[#allocation2 + $0xe8] sm:$0xff]
        %v2710 = vld [vmem:[#allocation2 + $0xf0] sm:$0xff]
        %v2711 = vld [vmem:[#allocation2 + $0xf8] sm:$0xff]
        %v2712 = vld [vmem:[%s257] sm:$0x1]
        %v2714 = vlaneseq
        %v2715 = vshrl.u32 %v2714, 7
        %v2716 = vsub.s32 0, %v2715
        %v2717 = vrot.slane %v2712, %v2716
        %v2719 = vadd.f32 %v2680, %v2717
        %v2720 = vadd.f32 %v2681, %v2717
        %v2721 = vadd.f32 %v2682, %v2717
        %v2722 = vadd.f32 %v2683, %v2717
        %v2723 = vadd.f32 %v2684, %v2717
        %v2724 = vadd.f32 %v2685, %v2717
        %v2725 = vadd.f32 %v2686, %v2717
        %v2726 = vadd.f32 %v2687, %v2717
        %v2727 = vadd.f32 %v2688, %v2717
        %v2728 = vadd.f32 %v2689, %v2717
        %v2729 = vadd.f32 %v2690, %v2717
        %v2730 = vadd.f32 %v2691, %v2717
        %v2731 = vadd.f32 %v2692, %v2717
        %v2732 = vadd.f32 %v2693, %v2717
        %v2733 = vadd.f32 %v2694, %v2717
        %v2734 = vadd.f32 %v2695, %v2717
        %v2735 = vadd.f32 %v2696, %v2717
        %v2736 = vadd.f32 %v2697, %v2717
        %v2737 = vadd.f32 %v2698, %v2717
        %v2738 = vadd.f32 %v2699, %v2717
        %v2739 = vadd.f32 %v2700, %v2717
        %v2740 = vadd.f32 %v2701, %v2717
        %v2741 = vadd.f32 %v2702, %v2717
        %v2742 = vadd.f32 %v2703, %v2717
        %v2743 = vadd.f32 %v2704, %v2717
        %v2744 = vadd.f32 %v2705, %v2717
        %v2745 = vadd.f32 %v2706, %v2717
        %v2746 = vadd.f32 %v2707, %v2717
        %v2747 = vadd.f32 %v2708, %v2717
        %v2748 = vadd.f32 %v2709, %v2717
        %v2749 = vadd.f32 %v2710, %v2717
        %v2750 = vadd.f32 %v2711, %v2717
        %v2751 = vmax.f32 %v2719, 0.0
        %v2752 = vmax.f32 %v2720, 0.0
        %v2753 = vmax.f32 %v2721, 0.0
        %v2754 = vmax.f32 %v2722, 0.0
        %v2755 = vmax.f32 %v2723, 0.0
        %v2756 = vmax.f32 %v2724, 0.0
        %v2757 = vmax.f32 %v2725, 0.0
        %v2758 = vmax.f32 %v2726, 0.0
        %v2759 = vmax.f32 %v2727, 0.0
        %v2760 = vmax.f32 %v2728, 0.0
        %v2761 = vmax.f32 %v2729, 0.0
        %v2762 = vmax.f32 %v2730, 0.0
        %v2763 = vmax.f32 %v2731, 0.0
        %v2764 = vmax.f32 %v2732, 0.0
        %v2765 = vmax.f32 %v2733, 0.0
        %v2766 = vmax.f32 %v2734, 0.0
        %v2767 = vmax.f32 %v2735, 0.0
        %v2768 = vmax.f32 %v2736, 0.0
        %v2769 = vmax.f32 %v2737, 0.0
        %v2770 = vmax.f32 %v2738, 0.0
        %v2771 = vmax.f32 %v2739, 0.0
        %v2772 = vmax.f32 %v2740, 0.0
        %v2773 = vmax.f32 %v2741, 0.0
        %v2774 = vmax.f32 %v2742, 0.0
        %v2775 = vmax.f32 %v2743, 0.0
        %v2776 = vmax.f32 %v2744, 0.0
        %v2777 = vmax.f32 %v2745, 0.0
        %v2778 = vmax.f32 %v2746, 0.0
        %v2779 = vmax.f32 %v2747, 0.0
        %v2780 = vmax.f32 %v2748, 0.0
        %v2781 = vmax.f32 %v2749, 0.0
        %v2782 = vmax.f32 %v2750, 0.0
        %v2783 = vpack.c.bf16 %v2752, %v2751
        %v2784 = vpack.c.bf16 %v2754, %v2753
        %v2785 = vpack.c.bf16 %v2756, %v2755
        %v2786 = vpack.c.bf16 %v2758, %v2757
        %v2787 = vpack.c.bf16 %v2760, %v2759
        %v2788 = vpack.c.bf16 %v2762, %v2761
        %v2789 = vpack.c.bf16 %v2764, %v2763
        %v2790 = vpack.c.bf16 %v2766, %v2765
        %v2791 = vpack.c.bf16 %v2768, %v2767
        %v2792 = vpack.c.bf16 %v2770, %v2769
        %v2793 = vpack.c.bf16 %v2772, %v2771
        %v2794 = vpack.c.bf16 %v2774, %v2773
        %v2795 = vpack.c.bf16 %v2776, %v2775
        %v2796 = vpack.c.bf16 %v2778, %v2777
        %v2797 = vpack.c.bf16 %v2780, %v2779
        %v2798 = vpack.c.bf16 %v2782, %v2781
        %v2815 = vunpack.c.l.b16 %v2783
        %v2816 = vunpack.c.h.b16 %v2783
        %v2817 = vunpack.c.l.b16 %v2784
        %v2818 = vunpack.c.h.b16 %v2784
        %v2819 = vunpack.c.l.b16 %v2785
        %v2820 = vunpack.c.h.b16 %v2785
        %v2821 = vunpack.c.l.b16 %v2786
        %v2822 = vunpack.c.h.b16 %v2786
        %v2823 = vunpack.c.l.b16 %v2787
        %v2824 = vunpack.c.h.b16 %v2787
        %v2825 = vunpack.c.l.b16 %v2788
        %v2826 = vunpack.c.h.b16 %v2788
        %v2827 = vunpack.c.l.b16 %v2789
        %v2828 = vunpack.c.h.b16 %v2789
        %v2829 = vunpack.c.l.b16 %v2790
        %v2830 = vunpack.c.h.b16 %v2790
        %v2831 = vunpack.c.l.b16 %v2791
        %v2832 = vunpack.c.h.b16 %v2791
        %v2833 = vunpack.c.l.b16 %v2792
        %v2834 = vunpack.c.h.b16 %v2792
        %v2835 = vunpack.c.l.b16 %v2793
        %v2836 = vunpack.c.h.b16 %v2793
        %v2837 = vunpack.c.l.b16 %v2794
        %v2838 = vunpack.c.h.b16 %v2794
        %v2839 = vunpack.c.l.b16 %v2795
        %v2840 = vunpack.c.h.b16 %v2795
        %v2841 = vunpack.c.l.b16 %v2796
        %v2842 = vunpack.c.h.b16 %v2796
        %v2843 = vunpack.c.l.b16 %v2797
        %v2844 = vunpack.c.h.b16 %v2797
        %v2845 = vunpack.c.l.b16 %v2798
        %v2846 = vunpack.c.h.b16 %v2798
        %v2847 = vpack.c.b16 %v2815, %v2815
        %v2848 = vpack.c.b16 %v2816, %v2816
        %v2849 = vpack.c.b16 %v2817, %v2817
        %v2850 = vpack.c.b16 %v2818, %v2818
        %v2851 = vpack.c.b16 %v2819, %v2819
        %v2852 = vpack.c.b16 %v2820, %v2820
        %v2853 = vpack.c.b16 %v2821, %v2821
        %v2854 = vpack.c.b16 %v2822, %v2822
        %v2855 = vpack.c.b16 %v2823, %v2823
        %v2856 = vpack.c.b16 %v2824, %v2824
        %v2857 = vpack.c.b16 %v2825, %v2825
        %v2858 = vpack.c.b16 %v2826, %v2826
        %v2859 = vpack.c.b16 %v2827, %v2827
        %v2860 = vpack.c.b16 %v2828, %v2828
        %v2861 = vpack.c.b16 %v2829, %v2829
        %v2862 = vpack.c.b16 %v2830, %v2830
        %v2863 = vpack.c.b16 %v2831, %v2831
        %v2864 = vpack.c.b16 %v2832, %v2832
        %v2865 = vpack.c.b16 %v2833, %v2833
        %v2866 = vpack.c.b16 %v2834, %v2834
        %v2867 = vpack.c.b16 %v2835, %v2835
        %v2868 = vpack.c.b16 %v2836, %v2836
        %v2869 = vpack.c.b16 %v2837, %v2837
        %v2870 = vpack.c.b16 %v2838, %v2838
        %v2871 = vpack.c.b16 %v2839, %v2839
        %v2872 = vpack.c.b16 %v2840, %v2840
        %v2873 = vpack.c.b16 %v2841, %v2841
        %v2874 = vpack.c.b16 %v2842, %v2842
        %v2875 = vpack.c.b16 %v2843, %v2843
        %v2876 = vpack.c.b16 %v2844, %v2844
        %v2877 = vpack.c.b16 %v2845, %v2845
        %v2878 = vpack.c.b16 %v2846, %v2846
        %2911 = vst [vmem:[%s265] sm:$0xf] %v2847
        %2912 = vst [vmem:[%s265 + $0x4] sm:$0xf] %v2848
        %2913 = vst [vmem:[%s265 + $0x8] sm:$0xf] %v2849
        %2914 = vst [vmem:[%s265 + $0xc] sm:$0xf] %v2850
        %2915 = vst [vmem:[%s265 + $0x10] sm:$0xf] %v2851
        %2916 = vst [vmem:[%s265 + $0x14] sm:$0xf] %v2852
        %2917 = vst [vmem:[%s265 + $0x18] sm:$0xf] %v2853
        %2918 = vst [vmem:[%s265 + $0x1c] sm:$0xf] %v2854
        %2919 = vst [vmem:[%s265 + $0x20] sm:$0xf] %v2855
        %2920 = vst [vmem:[%s265 + $0x24] sm:$0xf] %v2856
        %2921 = vst [vmem:[%s265 + $0x28] sm:$0xf] %v2857
        %2922 = vst [vmem:[%s265 + $0x2c] sm:$0xf] %v2858
        %2923 = vst [vmem:[%s265 + $0x30] sm:$0xf] %v2859
        %2924 = vst [vmem:[%s265 + $0x34] sm:$0xf] %v2860
        %2925 = vst [vmem:[%s265 + $0x38] sm:$0xf] %v2861
        %2926 = vst [vmem:[%s265 + $0x3c] sm:$0xf] %v2862
        %2927 = vst [vmem:[%s265 + $0x40] sm:$0xf] %v2863
        %2928 = vst [vmem:[%s265 + $0x44] sm:$0xf] %v2864
        %2929 = vst [vmem:[%s265 + $0x48] sm:$0xf] %v2865
        %2930 = vst [vmem:[%s265 + $0x4c] sm:$0xf] %v2866
        %2931 = vst [vmem:[%s265 + $0x50] sm:$0xf] %v2867
        %2932 = vst [vmem:[%s265 + $0x54] sm:$0xf] %v2868
        %2933 = vst [vmem:[%s265 + $0x58] sm:$0xf] %v2869
        %2934 = vst [vmem:[%s265 + $0x5c] sm:$0xf] %v2870
        %2935 = vst [vmem:[%s265 + $0x60] sm:$0xf] %v2871
        %2936 = vst [vmem:[%s265 + $0x64] sm:$0xf] %v2872
        %2937 = vst [vmem:[%s265 + $0x68] sm:$0xf] %v2873
        %2938 = vst [vmem:[%s265 + $0x6c] sm:$0xf] %v2874
        %2939 = vst [vmem:[%s265 + $0x70] sm:$0xf] %v2875
        %2940 = vst [vmem:[%s265 + $0x74] sm:$0xf] %v2876
        %2941 = vst [vmem:[%s265 + $0x78] sm:$0xf] %v2877
        %2942 = vst [vmem:[%s265 + $0x7c] sm:$0xf] %v2878
      $region40: #{resnet_forward.12} parent=31 // pred_fallthru
        _
      %s2943 = smul.u32 32, %s19
      %p2944 = scmp.lt.s32.totalorder %s2943, 63
      %s2945 = scalar_select %p2944, %s2943, 63
      %p2946 = scmp.lt.s32.totalorder %s20, 0
      %s2947 = scalar_select %p2946, %s20, 0
      %s2948 = sadd.s32 %s2947, %s2945
      %s2949 = smul.addr %s2948, 4
      %s2950 = scalar_lea.vmem %s3, %s2949
      // Predicated region
      $region41: #{resnet_forward.12} parent=31 // pred_check
        %p2951 = pneg %p135
      $region42: #{resnet_forward.12} parent=31 // pred_check_branch
        %2953 = sbr.rel (%p2951) target = $region44
      $region43: #{resnet_forward.12} parent=31 // pred_region
        %s2954 = smul.u32 32, %s19
      $region44: #{resnet_forward.12} parent=31 // pred_fallthru
        _
    $region32: #{resnet_forward.12} parent=5 // pred_fallthru
      _
    %p2955 = scmp.le.s32.totalorder 2, %s9
    // Predicated region
    $region45: #{resnet_forward.12} parent=5 // pred_check
      %p2956 = pneg %p2955
    $region46: #{resnet_forward.12} parent=5 // pred_check_branch
      %2958 = sbr.rel (%p2956) target = $region48
    $region47: #{resnet_forward.12} parent=5 // pred_region
      %s2959 = ssub.s32 %s9, 2
      // Predicated region
      $region49: #{resnet_forward.12} parent=47 // pred_check
        %p2960 = pneg %p141
      $region50: #{resnet_forward.12} parent=47 // pred_check_branch
        %2962 = sbr.rel (%p2960) target = $region52
      $region51: #{resnet_forward.12} parent=47 // pred_region
        %s2963 = smul.u32 32, %s22
        %p2964 = scmp.lt.s32.totalorder %s2963, 63
        %s2965 = scalar_select %p2964, %s2963, 63
        %p2966 = scmp.lt.s32.totalorder %s23, 0
        %s2967 = scalar_select %p2966, %s23, 0
        %s2968 = sadd.s32 %s2967, %s2965
        %s2969 = smul.addr %s2968, 4
        %s2970 = scalar_lea.vmem %s3, %s2969
      $region52: #{resnet_forward.12} parent=47 // pred_fallthru
        _
    $region48: #{resnet_forward.12} parent=5 // pred_fallthru
      _
  $region6: #{resnet_forward.12} parent=0 // loop_footer
    %s13 = sadd.s32 1, %s9
  $region7: #{resnet_forward.12} parent=0 // loop_footer_branch
    %8 = sbr.rel target = $region3
  $region8: #{resnet_forward.12} parent=0 // loop_exit
    _

// kernel: resnet_forward.13
$region0: #{resnet_forward.13}
  #allocation0 [shape = 'u32[]', space=smem, size = 0x4, offset = 0x4, fixed_abs, tag = 'smem constant byte address 0x4 - core index']
  #allocation1 [shape = 'u32[144,128]{1,0:T(1,128)}', space=vmem, size = 0x12000, scoped, tag = 'internal scratch']
  #allocation2 [shape = 'f32[256,128]{1,0:T(8,128)}', space=vmem, size = 0x20000, scoped, tag = 'scratch operand']
  %s0 = inlined_call_operand.vmem [shape: bf16[512,1152], index: 0, kind: input, shape index: {}]
  %s1 = inlined_call_operand.vmem [shape: bf16[1152,128], index: 1, kind: input, shape index: {}]
  %s2 = inlined_call_operand.vmem [shape: f32[1,128], index: 2, kind: input, shape index: {}]
  %s3 = inlined_call_operand.vmem [shape: bf16[512,128], index: 3, kind: input, shape index: {}]
  %s4 = inlined_call_operand.vmem [shape: bf16[512,128], index: 4, kind: output, shape index: {}]
  %s5 = sld [smem:[#allocation0]]
  $region57: #{resnet_forward.13} parent=0
    _
  %s7 = ssub.s32 1, %s5
  %s8 = scalar_select 0, %s7, %s5
  loop: start=0, step=1, limit=4
  $region2: #{resnet_forward.13} parent=0 // loop_pre_header
    _
  $region3: #{resnet_forward.13} parent=0 // loop_header
    %s10 = sphi 0, %s14
    %p11 = scmp.ge.s32.totalorder %s10, 4
    %s17 = sphi 0, %s36
    %s18 = sphi 0, %s32
    %s19 = sphi 0, %s28
    %s20 = sphi 0, %s17
    %s21 = sphi 0, %s18
    %s22 = sphi 0, %s19
    %s23 = sphi 0, %s20
    %s24 = sphi 0, %s21
    %s25 = sphi 0, %s22
    %s41 = sphi 0, %s43
    %s44 = sphi 0, %s41
    %s45 = sphi 0, %s44
    %s61 = sphi 0, %s45
    %s69 = sphi 0, %s71
    %s72 = sphi 0, %s69
    %s73 = sphi 0, %s72
    %s89 = sphi 0, %s73
    %s95 = sphi 0, %s97
    %s98 = sphi 0, %s95
    %s99 = sphi 0, %s98
    %s115 = sphi 0, %s99
    %s123 = sphi 0, %s125
    %s126 = sphi 0, %s123
    %s127 = sphi 0, %s126
    %s143 = sphi 0, %s127
    %s151 = sphi 0, %s153
    %s154 = sphi 0, %s151
    %s155 = sphi 0, %s154
    %s171 = sphi 0, %s155
  $region4: #{resnet_forward.13} parent=0 // loop_header_branch
    %13 = sbr.rel (%p11) target = $region8
  $region5: #{resnet_forward.13} parent=0 // loop_body
    %s15 = ssub.s32 %s10, 1
    %s16 = ssub.s32 %s10, 2
    %s26 = sadd.s32 1, %s19
    %p27 = scmp.ge.s32.totalorder %s26, 1
    %s28 = scalar_select %p27, 0, %s26
    %s29 = sadd.s32 1, %s18
    %s30 = scalar_select %p27, %s29, %s18
    %p31 = scmp.ge.s32.totalorder %s30, 1
    %s32 = scalar_select %p31, 0, %s30
    %s33 = sadd.s32 1, %s17
    %s34 = scalar_select %p31, %s33, %s17
    %p35 = scmp.ge.s32.totalorder %s34, 2
    %s36 = scalar_select %p35, 0, %s34
    %s37 = ssub.s32 %s17, %s36
    %s38 = ssub.s32 %s19, %s28
    %s39 = sor.u32 %s37, %s38
    %p40 = scmp.eq.s32.totalorder %s39, 0
    %s42 = sadd.s32 %s41, 1
    %s43 = scalar_select %p40, %s41, %s42
    %p46 = pneg %p40
    %p47 = scmp.eq.s32.totalorder %s10, 1
    %p48 = por %p46, %p47
    %p49 = scmp.ne.s32.totalorder %s41, %s44
    %p50 = scmp.eq.s32.totalorder %s10, 0
    %p51 = por %p49, %p50
    %p52 = scmp.ne.s32.totalorder %s41, %s44
    %p53 = scmp.eq.s32.totalorder %s15, 1
    %p54 = por %p52, %p53
    %p55 = scmp.ne.s32.totalorder %s44, %s45
    %p56 = scmp.eq.s32.totalorder %s15, 0
    %p57 = por %p55, %p56
    %p58 = scmp.ne.s32.totalorder %s44, %s45
    %p59 = scmp.eq.s32.totalorder %s16, 1
    %p60 = por %p58, %p59
    %p62 = scmp.ne.s32.totalorder %s45, %s61
    %p63 = scmp.eq.s32.totalorder %s16, 0
    %p64 = por %p62, %p63
    %s65 = ssub.s32 %s19, %s28
    %s66 = ssub.s32 %s18, %s32
    %s67 = sor.u32 %s65, %s66
    %p68 = scmp.eq.s32.totalorder %s67, 0
    %s70 = sadd.s32 %s69, 1
    %s71 = scalar_select %p68, %s69, %s70
    %p74 = pneg %p68
    %p75 = scmp.eq.s32.totalorder %s10, 1
    %p76 = por %p74, %p75
    %p77 = scmp.ne.s32.totalorder %s69, %s72
    %p78 = scmp.eq.s32.totalorder %s10, 0
    %p79 = por %p77, %p78
    %p80 = scmp.ne.s32.totalorder %s69, %s72
    %p81 = scmp.eq.s32.totalorder %s15, 1
    %p82 = por %p80, %p81
    %p83 = scmp.ne.s32.totalorder %s72, %s73
    %p84 = scmp.eq.s32.totalorder %s15, 0
    %p85 = por %p83, %p84
    %p86 = scmp.ne.s32.totalorder %s72, %s73
    %p87 = scmp.eq.s32.totalorder %s16, 1
    %p88 = por %p86, %p87
    %p90 = scmp.ne.s32.totalorder %s73, %s89
    %p91 = scmp.eq.s32.totalorder %s16, 0
    %p92 = por %p90, %p91
    %s93 = ssub.s32 %s18, %s32
    %p94 = scmp.eq.s32.totalorder %s93, 0
    %s96 = sadd.s32 %s95, 1
    %s97 = scalar_select %p94, %s95, %s96
    %p100 = pneg %p94
    %p101 = scmp.eq.s32.totalorder %s10, 1
    %p102 = por %p100, %p101
    %p103 = scmp.ne.s32.totalorder %s95, %s98
    %p104 = scmp.eq.s32.totalorder %s10, 0
    %p105 = por %p103, %p104
    %p106 = scmp.ne.s32.totalorder %s95, %s98
    %p107 = scmp.eq.s32.totalorder %s15, 1
    %p108 = por %p106, %p107
    %p109 = scmp.ne.s32.totalorder %s98, %s99
    %p110 = scmp.eq.s32.totalorder %s15, 0
    %p111 = por %p109, %p110
    %p112 = scmp.ne.s32.totalorder %s98, %s99
    %p113 = scmp.eq.s32.totalorder %s16, 1
    %p114 = por %p112, %p113
    %p116 = scmp.ne.s32.totalorder %s99, %s115
    %p117 = scmp.eq.s32.totalorder %s16, 0
    %p118 = por %p116, %p117
    %s119 = ssub.s32 %s17, %s36
    %s120 = ssub.s32 %s18, %s32
    %s121 = sor.u32 %s119, %s120
    %p122 = scmp.eq.s32.totalorder %s121, 0
    %s124 = sadd.s32 %s123, 1
    %s125 = scalar_select %p122, %s123, %s124
    %p128 = pneg %p122
    %p129 = scmp.eq.s32.totalorder %s10, 1
    %p130 = por %p128, %p129
    %p131 = scmp.ne.s32.totalorder %s123, %s126
    %p132 = scmp.eq.s32.totalorder %s10, 0
    %p133 = por %p131, %p132
    %p134 = scmp.ne.s32.totalorder %s123, %s126
    %p135 = scmp.eq.s32.totalorder %s15, 1
    %p136 = por %p134, %p135
    %p137 = scmp.ne.s32.totalorder %s126, %s127
    %p138 = scmp.eq.s32.totalorder %s15, 0
    %p139 = por %p137, %p138
    %p140 = scmp.ne.s32.totalorder %s126, %s127
    %p141 = scmp.eq.s32.totalorder %s16, 1
    %p142 = por %p140, %p141
    %p144 = scmp.ne.s32.totalorder %s127, %s143
    %p145 = scmp.eq.s32.totalorder %s16, 0
    %p146 = por %p144, %p145
    %s147 = ssub.s32 %s17, %s36
    %s148 = ssub.s32 %s18, %s32
    %s149 = sor.u32 %s147, %s148
    %p150 = scmp.eq.s32.totalorder %s149, 0
    %s152 = sadd.s32 %s151, 1
    %s153 = scalar_select %p150, %s151, %s152
    %p156 = pneg %p150
    %p157 = scmp.eq.s32.totalorder %s10, 1
    %p158 = por %p156, %p157
    %p159 = scmp.ne.s32.totalorder %s151, %s154
    %p160 = scmp.eq.s32.totalorder %s10, 0
    %p161 = por %p159, %p160
    %p162 = scmp.ne.s32.totalorder %s151, %s154
    %p163 = scmp.eq.s32.totalorder %s15, 1
    %p164 = por %p162, %p163
    %p165 = scmp.ne.s32.totalorder %s154, %s155
    %p166 = scmp.eq.s32.totalorder %s15, 0
    %p167 = por %p165, %p166
    %p168 = scmp.ne.s32.totalorder %s154, %s155
    %p169 = scmp.eq.s32.totalorder %s16, 1
    %p170 = por %p168, %p169
    %p172 = scmp.ne.s32.totalorder %s155, %s171
    %p173 = scmp.eq.s32.totalorder %s16, 0
    %p174 = por %p172, %p173
    %p175 = scmp.le.s32.totalorder 1, %s10
    %p176 = scmp.lt.s32.totalorder %s10, 3
    %p177 = pnand %p175, %p176
    %p178 = pneg %p177
    // Predicated region
    $region9: #{resnet_forward.13} parent=5 // pred_check
      _
    $region10: #{resnet_forward.13} parent=5 // pred_check_branch
      %180 = sbr.rel (%p177) target = $region12
    $region11: #{resnet_forward.13} parent=5 // pred_region
      %s181 = ssub.s32 %s10, 1
      // Predicated region
      $region13: #{resnet_forward.13} parent=11 // pred_check
        %p182 = pneg %p85
      $region14: #{resnet_forward.13} parent=11 // pred_check_branch
        %184 = sbr.rel (%p182) target = $region16
      $region15: #{resnet_forward.13} parent=11 // pred_region
        %s185 = smul.u32 144, %s22
        %p186 = scmp.lt.s32.totalorder %s185, 143
        %s187 = scalar_select %p186, %s185, 143
        %p188 = scmp.lt.s32.totalorder %s21, 0
        %s189 = scalar_select %p188, %s21, 0
        %s190 = sadd.s32 %s189, %s187
        %s191 = smul.addr %s190, 4
        %s192 = scalar_lea.vmem %s1, %s191
        %s193 = smul.u32 144, %s22
      $region16: #{resnet_forward.13} parent=11 // pred_fallthru
        _
      // Predicated region
      $region17: #{resnet_forward.13} parent=11 // pred_check
        %p194 = pneg %p111
      $region18: #{resnet_forward.13} parent=11 // pred_check_branch
        %196 = sbr.rel (%p194) target = $region20
      $region19: #{resnet_forward.13} parent=11 // pred_region
        %p197 = scmp.lt.s32.totalorder %s21, 0
        %s198 = scalar_select %p197, %s21, 0
        %s199 = scalar_lea.vmem %s2, %s198
      $region20: #{resnet_forward.13} parent=11 // pred_fallthru
        _
    $region12: #{resnet_forward.13} parent=5 // pred_fallthru
      _
    %p200 = scmp.lt.s32.totalorder %s10, 2
    // Predicated region
    $region21: #{resnet_forward.13} parent=5 // pred_check
      %p201 = pneg %p200
    $region22: #{resnet_forward.13} parent=5 // pred_check_branch
      %203 = sbr.rel (%p201) target = $region24
    $region23: #{resnet_forward.13} parent=5 // pred_region
      // Predicated region
      $region25: #{resnet_forward.13} parent=23 // pred_check
        %p204 = pneg %p51
      $region26: #{resnet_forward.13} parent=23 // pred_check_branch
        %206 = sbr.rel (%p204) target = $region28
      $region27: #{resnet_forward.13} parent=23 // pred_region
        %s207 = smul.u32 32, %s17
        %s208 = smul.u32 9, %s19
        %p209 = scmp.lt.s32.totalorder %s207, 63
        %s210 = scalar_select %p209, %s207, 63
        %p211 = scmp.lt.s32.totalorder %s208, 8
        %s212 = scalar_select %p211, %s208, 8
        %s213 = smul.addr %s210, 9
        %s214 = sadd.s32 %s212, %s213
        %s215 = smul.addr %s214, 4
        %s216 = scalar_lea.vmem %s0, %s215
        %s217 = smul.u32 32, %s17
        %s218 = smul.u32 9, %s19
      $region28: #{resnet_forward.13} parent=23 // pred_fallthru
        _
      // Predicated region
      $region29: #{resnet_forward.13} parent=23 // pred_check
        %p219 = pneg %p133
      $region30: #{resnet_forward.13} parent=23 // pred_check_branch
        %221 = sbr.rel (%p219) target = $region32
      $region31: #{resnet_forward.13} parent=23 // pred_region
        %s222 = smul.u32 32, %s17
        %p223 = scmp.lt.s32.totalorder %s222, 63
        %s224 = scalar_select %p223, %s222, 63
        %p225 = scmp.lt.s32.totalorder %s18, 0
        %s226 = scalar_select %p225, %s18, 0
        %s227 = sadd.s32 %s226, %s224
        %s228 = smul.addr %s227, 4
        %s229 = scalar_lea.vmem %s3, %s228
        %s230 = smul.u32 32, %s17
      $region32: #{resnet_forward.13} parent=23 // pred_fallthru
        _
    $region24: #{resnet_forward.13} parent=5 // pred_fallthru
      _
    %p231 = scmp.le.s32.totalorder 1, %s10
    %p232 = scmp.lt.s32.totalorder %s10, 3
    %p233 = pnand %p231, %p232
    %p234 = pneg %p233
    // Predicated region
    $region33: #{resnet_forward.13} parent=5 // pred_check
      _
    $region34: #{resnet_forward.13} parent=5 // pred_check_branch
      %236 = sbr.rel (%p233) target = $region36
    $region35: #{resnet_forward.13} parent=5 // pred_region
      %s237 = ssub.s32 %s10, 1
      %s238 = smul.u32 32, %s20
      %s239 = smul.u32 9, %s22
      %p240 = scmp.lt.s32.totalorder %s238, 63
      %s241 = scalar_select %p240, %s238, 63
      %p242 = scmp.lt.s32.totalorder %s239, 8
      %s243 = scalar_select %p242, %s239, 8
      %s244 = smul.addr %s241, 9
      %s245 = sadd.s32 %s243, %s244
      %s246 = smul.addr %s245, 4
      %s247 = scalar_lea.vmem %s0, %s246
      %p248 = pneg %p57
      %p249 = pneg %p54
      %s250 = smul.u32 144, %s22
      %p251 = scmp.lt.s32.totalorder %s250, 143
      %s252 = scalar_select %p251, %s250, 143
      %p253 = scmp.lt.s32.totalorder %s21, 0
      %s254 = scalar_select %p253, %s21, 0
      %s255 = sadd.s32 %s254, %s252
      %s256 = smul.addr %s255, 4
      %s257 = scalar_lea.vmem %s1, %s256
      %p258 = pneg %p85
      %p259 = pneg %p82
      %p260 = scmp.lt.s32.totalorder %s21, 0
      %s261 = scalar_select %p260, %s21, 0
      %s262 = scalar_lea.vmem %s2, %s261
      %p263 = pneg %p111
      %p264 = pneg %p108
      %s265 = smul.u32 32, %s20
      %p266 = scmp.lt.s32.totalorder %s265, 63
      %s267 = scalar_select %p266, %s265, 63
      %p268 = scmp.lt.s32.totalorder %s21, 0
      %s269 = scalar_select %p268, %s21, 0
      %s270 = sadd.s32 %s269, %s267
      %s271 = smul.addr %s270, 4
      %s272 = scalar_lea.vmem %s3, %s271
      %p273 = pneg %p139
      %p274 = pneg %p136
      %p275 = pneg %p167
      %p276 = pneg %p164
      %s277 = smul.u32 32, %s20
      %p278 = scmp.lt.s32.totalorder %s277, 63
      %s279 = scalar_select %p278, %s277, 63
      %p280 = scmp.lt.s32.totalorder %s21, 0
      %s281 = scalar_select %p280, %s21, 0
      %s282 = sadd.s32 %s281, %s279
      %s283 = smul.addr %s282, 4
      %s284 = scalar_lea.vmem %s4, %s283
      %s285 = smul.u32 32, %s20
      %s286 = smul.u32 9, %s22
      %p287 = scmp.lt.s32.totalorder %s285, 63
      %s288 = scalar_select %p287, %s285, 63
      %p289 = scmp.lt.s32.totalorder %s286, 8
      %s290 = scalar_select %p289, %s286, 8
      %s291 = smul.addr %s288, 9
      %s292 = sadd.s32 %s290, %s291
      %s293 = smul.addr %s292, 4
      %s294 = scalar_lea.vmem %s0, %s293
      %s295 = smul.u32 32, %s20
      %s296 = smul.u32 9, %s22
      %s297 = smul.u32 144, %s22
      %p298 = scmp.lt.s32.totalorder %s297, 143
      %s299 = scalar_select %p298, %s297, 143
      %p300 = scmp.lt.s32.totalorder %s21, 0
      %s301 = scalar_select %p300, %s21, 0
      %s302 = sadd.s32 %s301, %s299
      %s303 = smul.addr %s302, 4
      %s304 = scalar_lea.vmem %s1, %s303
      %s305 = smul.u32 144, %s22
      %p306 = scmp.lt.s32.totalorder %s21, 0
      %s307 = scalar_select %p306, %s21, 0
      %s308 = scalar_lea.vmem %s2, %s307
      %s309 = smul.u32 32, %s20
      %p310 = scmp.lt.s32.totalorder %s309, 63
      %s311 = scalar_select %p310, %s309, 63
      %p312 = scmp.lt.s32.totalorder %s21, 0
      %s313 = scalar_select %p312, %s21, 0
      %s314 = sadd.s32 %s313, %s311
      %s315 = smul.addr %s314, 4
      %s316 = scalar_lea.vmem %s3, %s315
      %s317 = smul.u32 32, %s20
      %s318 = smul.u32 32, %s20
      %p319 = scmp.lt.s32.totalorder %s318, 63
      %s320 = scalar_select %p319, %s318, 63
      %p321 = scmp.lt.s32.totalorder %s21, 0
      %s322 = scalar_select %p321, %s21, 0
      %s323 = sadd.s32 %s322, %s320
      %s324 = smul.addr %s323, 4
      %s325 = scalar_lea.vmem %s4, %s324
      %s326 = smul.u32 32, %s20
      %p328 = scmp.eq.s32.totalorder %s22, 0
      // Predicated region
      $region37: #{resnet_forward.13} parent=35 // pred_check
        %p329 = pneg %p328
      $region38: #{resnet_forward.13} parent=35 // pred_check_branch
        %331 = sbr.rel (%p329) target = $region40
      $region39: #{resnet_forward.13} parent=35 // pred_region
        %332 = vst [vmem:[#allocation2] sm:$0xff] 0.0
        %333 = vst [vmem:[#allocation2 + $0x8] sm:$0xff] 0.0
        %334 = vst [vmem:[#allocation2 + $0x10] sm:$0xff] 0.0
        %335 = vst [vmem:[#allocation2 + $0x18] sm:$0xff] 0.0
        %336 = vst [vmem:[#allocation2 + $0x20] sm:$0xff] 0.0
        %337 = vst [vmem:[#allocation2 + $0x28] sm:$0xff] 0.0
        %338 = vst [vmem:[#allocation2 + $0x30] sm:$0xff] 0.0
        %339 = vst [vmem:[#allocation2 + $0x38] sm:$0xff] 0.0
        %340 = vst [vmem:[#allocation2 + $0x40] sm:$0xff] 0.0
        %341 = vst [vmem:[#allocation2 + $0x48] sm:$0xff] 0.0
        %342 = vst [vmem:[#allocation2 + $0x50] sm:$0xff] 0.0
        %343 = vst [vmem:[#allocation2 + $0x58] sm:$0xff] 0.0
        %344 = vst [vmem:[#allocation2 + $0x60] sm:$0xff] 0.0
        %345 = vst [vmem:[#allocation2 + $0x68] sm:$0xff] 0.0
        %346 = vst [vmem:[#allocation2 + $0x70] sm:$0xff] 0.0
        %347 = vst [vmem:[#allocation2 + $0x78] sm:$0xff] 0.0
        %348 = vst [vmem:[#allocation2 + $0x80] sm:$0xff] 0.0
        %349 = vst [vmem:[#allocation2 + $0x88] sm:$0xff] 0.0
        %350 = vst [vmem:[#allocation2 + $0x90] sm:$0xff] 0.0
        %351 = vst [vmem:[#allocation2 + $0x98] sm:$0xff] 0.0
        %352 = vst [vmem:[#allocation2 + $0xa0] sm:$0xff] 0.0
        %353 = vst [vmem:[#allocation2 + $0xa8] sm:$0xff] 0.0
        %354 = vst [vmem:[#allocation2 + $0xb0] sm:$0xff] 0.0
        %355 = vst [vmem:[#allocation2 + $0xb8] sm:$0xff] 0.0
        %356 = vst [vmem:[#allocation2 + $0xc0] sm:$0xff] 0.0
        %357 = vst [vmem:[#allocation2 + $0xc8] sm:$0xff] 0.0
        %358 = vst [vmem:[#allocation2 + $0xd0] sm:$0xff] 0.0
        %359 = vst [vmem:[#allocation2 + $0xd8] sm:$0xff] 0.0
        %360 = vst [vmem:[#allocation2 + $0xe0] sm:$0xff] 0.0
        %361 = vst [vmem:[#allocation2 + $0xe8] sm:$0xff] 0.0
        %362 = vst [vmem:[#allocation2 + $0xf0] sm:$0xff] 0.0
        %363 = vst [vmem:[#allocation2 + $0xf8] sm:$0xff] 0.0
      $region40: #{resnet_forward.13} parent=35 // pred_fallthru
        _
      %v364 = vld [vmem:[#allocation2] sm:$0xff]
      %v365 = vld [vmem:[#allocation2 + $0x8] sm:$0xff]
      %v366 = vld [vmem:[#allocation2 + $0x10] sm:$0xff]
      %v367 = vld [vmem:[#allocation2 + $0x18] sm:$0xff]
      %v368 = vld [vmem:[#allocation2 + $0x20] sm:$0xff]
      %v369 = vld [vmem:[#allocation2 + $0x28] sm:$0xff]
      %v370 = vld [vmem:[#allocation2 + $0x30] sm:$0xff]
      %v371 = vld [vmem:[#allocation2 + $0x38] sm:$0xff]
      %v372 = vld [vmem:[#allocation2 + $0x40] sm:$0xff]
      %v373 = vld [vmem:[#allocation2 + $0x48] sm:$0xff]
      %v374 = vld [vmem:[#allocation2 + $0x50] sm:$0xff]
      %v375 = vld [vmem:[#allocation2 + $0x58] sm:$0xff]
      %v376 = vld [vmem:[#allocation2 + $0x60] sm:$0xff]
      %v377 = vld [vmem:[#allocation2 + $0x68] sm:$0xff]
      %v378 = vld [vmem:[#allocation2 + $0x70] sm:$0xff]
      %v379 = vld [vmem:[#allocation2 + $0x78] sm:$0xff]
      %v380 = vld [vmem:[#allocation2 + $0x80] sm:$0xff]
      %v381 = vld [vmem:[#allocation2 + $0x88] sm:$0xff]
      %v382 = vld [vmem:[#allocation2 + $0x90] sm:$0xff]
      %v383 = vld [vmem:[#allocation2 + $0x98] sm:$0xff]
      %v384 = vld [vmem:[#allocation2 + $0xa0] sm:$0xff]
      %v385 = vld [vmem:[#allocation2 + $0xa8] sm:$0xff]
      %v386 = vld [vmem:[#allocation2 + $0xb0] sm:$0xff]
      %v387 = vld [vmem:[#allocation2 + $0xb8] sm:$0xff]
      %v388 = vld [vmem:[#allocation2 + $0xc0] sm:$0xff]
      %v389 = vld [vmem:[#allocation2 + $0xc8] sm:$0xff]
      %v390 = vld [vmem:[#allocation2 + $0xd0] sm:$0xff]
      %v391 = vld [vmem:[#allocation2 + $0xd8] sm:$0xff]
      %v392 = vld [vmem:[#allocation2 + $0xe0] sm:$0xff]
      %v393 = vld [vmem:[#allocation2 + $0xe8] sm:$0xff]
      %v394 = vld [vmem:[#allocation2 + $0xf0] sm:$0xff]
      %v395 = vld [vmem:[#allocation2 + $0xf8] sm:$0xff]
      %v396 = vld [vmem:[%s294] sm:$0xff]
      %v397 = vld [vmem:[%s294 + $0x8] sm:$0xff]
      %v398 = vld [vmem:[%s294 + $0x10] sm:$0xff]
      %v399 = vld [vmem:[%s294 + $0x18] sm:$0xff]
      %v400 = vld [vmem:[%s294 + $0x20] sm:$0xf]
      %v401 = vld [vmem:[%s294 + $0x24] sm:$0xff]
      %v402 = vld [vmem:[%s294 + $0x2c] sm:$0xff]
      %v403 = vld [vmem:[%s294 + $0x34] sm:$0xff]
      %v404 = vld [vmem:[%s294 + $0x3c] sm:$0xff]
      %v405 = vld [vmem:[%s294 + $0x44] sm:$0xf]
      %v406 = vld [vmem:[%s294 + $0x48] sm:$0xff]
      %v407 = vld [vmem:[%s294 + $0x50] sm:$0xff]
      %v408 = vld [vmem:[%s294 + $0x58] sm:$0xff]
      %v409 = vld [vmem:[%s294 + $0x60] sm:$0xff]
      %v410 = vld [vmem:[%s294 + $0x68] sm:$0xf]
      %v411 = vld [vmem:[%s294 + $0x6c] sm:$0xff]
      %v412 = vld [vmem:[%s294 + $0x74] sm:$0xff]
      %v413 = vld [vmem:[%s294 + $0x7c] sm:$0xff]
      %v414 = vld [vmem:[%s294 + $0x84] sm:$0xff]
      %v415 = vld [vmem:[%s294 + $0x8c] sm:$0xf]
      %v416 = vld [vmem:[%s294 + $0x90] sm:$0xff]
      %v417 = vld [vmem:[%s294 + $0x98] sm:$0xff]
      %v418 = vld [vmem:[%s294 + $0xa0] sm:$0xff]
      %v419 = vld [vmem:[%s294 + $0xa8] sm:$0xff]
      %v420 = vld [vmem:[%s294 + $0xb0] sm:$0xf]
      %v421 = vld [vmem:[%s294 + $0xb4] sm:$0xff]
      %v422 = vld [vmem:[%s294 + $0xbc] sm:$0xff]
      %v423 = vld [vmem:[%s294 + $0xc4] sm:$0xff]
      %v424 = vld [vmem:[%s294 + $0xcc] sm:$0xff]
      %v425 = vld [vmem:[%s294 + $0xd4] sm:$0xf]
      %v426 = vld [vmem:[%s294 + $0xd8] sm:$0xff]
      %v427 = vld [vmem:[%s294 + $0xe0] sm:$0xff]
      %v428 = vld [vmem:[%s294 + $0xe8] sm:$0xff]
      %v429 = vld [vmem:[%s294 + $0xf0] sm:$0xff]
      %v430 = vld [vmem:[%s294 + $0xf8] sm:$0xf]
      %v431 = vld [vmem:[%s294 + $0xfc] sm:$0xff]
      %v432 = vld [vmem:[%s294 + $0x104] sm:$0xff]
      %v433 = vld [vmem:[%s294 + $0x10c] sm:$0xff]
      %v434 = vld [vmem:[%s294 + $0x114] sm:$0xff]
      %v435 = vld [vmem:[%s294 + $0x11c] sm:$0xf]
      %v436 = vld [vmem:[%s294 + $0x120] sm:$0xff]
      %v437 = vld [vmem:[%s294 + $0x128] sm:$0xff]
      %v438 = vld [vmem:[%s294 + $0x130] sm:$0xff]
      %v439 = vld [vmem:[%s294 + $0x138] sm:$0xff]
      %v440 = vld [vmem:[%s294 + $0x140] sm:$0xf]
      %v441 = vld [vmem:[%s294 + $0x144] sm:$0xff]
      %v442 = vld [vmem:[%s294 + $0x14c] sm:$0xff]
      %v443 = vld [vmem:[%s294 + $0x154] sm:$0xff]
      %v444 = vld [vmem:[%s294 + $0x15c] sm:$0xff]
      %v445 = vld [vmem:[%s294 + $0x164] sm:$0xf]
      %v446 = vld [vmem:[%s294 + $0x168] sm:$0xff]
      %v447 = vld [vmem:[%s294 + $0x170] sm:$0xff]
      %v448 = vld [vmem:[%s294 + $0x178] sm:$0xff]
      %v449 = vld [vmem:[%s294 + $0x180] sm:$0xff]
      %v450 = vld [vmem:[%s294 + $0x188] sm:$0xf]
      %v451 = vld [vmem:[%s294 + $0x18c] sm:$0xff]
      %v452 = vld [vmem:[%s294 + $0x194] sm:$0xff]
      %v453 = vld [vmem:[%s294 + $0x19c] sm:$0xff]
      %v454 = vld [vmem:[%s294 + $0x1a4] sm:$0xff]
      %v455 = vld [vmem:[%s294 + $0x1ac] sm:$0xf]
      %v456 = vld [vmem:[%s294 + $0x1b0] sm:$0xff]
      %v457 = vld [vmem:[%s294 + $0x1b8] sm:$0xff]
      %v458 = vld [vmem:[%s294 + $0x1c0] sm:$0xff]
      %v459 = vld [vmem:[%s294 + $0x1c8] sm:$0xff]
      %v460 = vld [vmem:[%s294 + $0x1d0] sm:$0xf]
      %v461 = vld [vmem:[%s294 + $0x1d4] sm:$0xff]
      %v462 = vld [vmem:[%s294 + $0x1dc] sm:$0xff]
      %v463 = vld [vmem:[%s294 + $0x1e4] sm:$0xff]
      %v464 = vld [vmem:[%s294 + $0x1ec] sm:$0xff]
      %v465 = vld [vmem:[%s294 + $0x1f4] sm:$0xf]
      %v466 = vld [vmem:[%s294 + $0x1f8] sm:$0xff]
      %v467 = vld [vmem:[%s294 + $0x200] sm:$0xff]
      %v468 = vld [vmem:[%s294 + $0x208] sm:$0xff]
      %v469 = vld [vmem:[%s294 + $0x210] sm:$0xff]
      %v470 = vld [vmem:[%s294 + $0x218] sm:$0xf]
      %v471 = vld [vmem:[%s294 + $0x21c] sm:$0xff]
      %v472 = vld [vmem:[%s294 + $0x224] sm:$0xff]
      %v473 = vld [vmem:[%s294 + $0x22c] sm:$0xff]
      %v474 = vld [vmem:[%s294 + $0x234] sm:$0xff]
      %v475 = vld [vmem:[%s294 + $0x23c] sm:$0xf]
      %v476 = vld [vmem:[%s294 + $0x240] sm:$0xff]
      %v477 = vld [vmem:[%s294 + $0x248] sm:$0xff]
      %v478 = vld [vmem:[%s294 + $0x250] sm:$0xff]
      %v479 = vld [vmem:[%s294 + $0x258] sm:$0xff]
      %v480 = vld [vmem:[%s294 + $0x260] sm:$0xf]
      %v481 = vld [vmem:[%s294 + $0x264] sm:$0xff]
      %v482 = vld [vmem:[%s294 + $0x26c] sm:$0xff]
      %v483 = vld [vmem:[%s294 + $0x274] sm:$0xff]
      %v484 = vld [vmem:[%s294 + $0x27c] sm:$0xff]
      %v485 = vld [vmem:[%s294 + $0x284] sm:$0xf]
      %v486 = vld [vmem:[%s294 + $0x288] sm:$0xff]
      %v487 = vld [vmem:[%s294 + $0x290] sm:$0xff]
      %v488 = vld [vmem:[%s294 + $0x298] sm:$0xff]
      %v489 = vld [vmem:[%s294 + $0x2a0] sm:$0xff]
      %v490 = vld [vmem:[%s294 + $0x2a8] sm:$0xf]
      %v491 = vld [vmem:[%s294 + $0x2ac] sm:$0xff]
      %v492 = vld [vmem:[%s294 + $0x2b4] sm:$0xff]
      %v493 = vld [vmem:[%s294 + $0x2bc] sm:$0xff]
      %v494 = vld [vmem:[%s294 + $0x2c4] sm:$0xff]
      %v495 = vld [vmem:[%s294 + $0x2cc] sm:$0xf]
      %v496 = vld [vmem:[%s294 + $0x2d0] sm:$0xff]
      %v497 = vld [vmem:[%s294 + $0x2d8] sm:$0xff]
      %v498 = vld [vmem:[%s294 + $0x2e0] sm:$0xff]
      %v499 = vld [vmem:[%s294 + $0x2e8] sm:$0xff]
      %v500 = vld [vmem:[%s294 + $0x2f0] sm:$0xf]
      %v501 = vld [vmem:[%s294 + $0x2f4] sm:$0xff]
      %v502 = vld [vmem:[%s294 + $0x2fc] sm:$0xff]
      %v503 = vld [vmem:[%s294 + $0x304] sm:$0xff]
      %v504 = vld [vmem:[%s294 + $0x30c] sm:$0xff]
      %v505 = vld [vmem:[%s294 + $0x314] sm:$0xf]
      %v506 = vld [vmem:[%s294 + $0x318] sm:$0xff]
      %v507 = vld [vmem:[%s294 + $0x320] sm:$0xff]
      %v508 = vld [vmem:[%s294 + $0x328] sm:$0xff]
      %v509 = vld [vmem:[%s294 + $0x330] sm:$0xff]
      %v510 = vld [vmem:[%s294 + $0x338] sm:$0xf]
      %v511 = vld [vmem:[%s294 + $0x33c] sm:$0xff]
      %v512 = vld [vmem:[%s294 + $0x344] sm:$0xff]
      %v513 = vld [vmem:[%s294 + $0x34c] sm:$0xff]
      %v514 = vld [vmem:[%s294 + $0x354] sm:$0xff]
      %v515 = vld [vmem:[%s294 + $0x35c] sm:$0xf]
      %v516 = vld [vmem:[%s294 + $0x360] sm:$0xff]
      %v517 = vld [vmem:[%s294 + $0x368] sm:$0xff]
      %v518 = vld [vmem:[%s294 + $0x370] sm:$0xff]
      %v519 = vld [vmem:[%s294 + $0x378] sm:$0xff]
      %v520 = vld [vmem:[%s294 + $0x380] sm:$0xf]
      %v521 = vld [vmem:[%s294 + $0x384] sm:$0xff]
      %v522 = vld [vmem:[%s294 + $0x38c] sm:$0xff]
      %v523 = vld [vmem:[%s294 + $0x394] sm:$0xff]
      %v524 = vld [vmem:[%s294 + $0x39c] sm:$0xff]
      %v525 = vld [vmem:[%s294 + $0x3a4] sm:$0xf]
      %v526 = vld [vmem:[%s294 + $0x3a8] sm:$0xff]
      %v527 = vld [vmem:[%s294 + $0x3b0] sm:$0xff]
      %v528 = vld [vmem:[%s294 + $0x3b8] sm:$0xff]
      %v529 = vld [vmem:[%s294 + $0x3c0] sm:$0xff]
      %v530 = vld [vmem:[%s294 + $0x3c8] sm:$0xf]
      %v531 = vld [vmem:[%s294 + $0x3cc] sm:$0xff]
      %v532 = vld [vmem:[%s294 + $0x3d4] sm:$0xff]
      %v533 = vld [vmem:[%s294 + $0x3dc] sm:$0xff]
      %v534 = vld [vmem:[%s294 + $0x3e4] sm:$0xff]
      %v535 = vld [vmem:[%s294 + $0x3ec] sm:$0xf]
      %v536 = vld [vmem:[%s294 + $0x3f0] sm:$0xff]
      %v537 = vld [vmem:[%s294 + $0x3f8] sm:$0xff]
      %v538 = vld [vmem:[%s294 + $0x400] sm:$0xff]
      %v539 = vld [vmem:[%s294 + $0x408] sm:$0xff]
      %v540 = vld [vmem:[%s294 + $0x410] sm:$0xf]
      %v541 = vld [vmem:[%s294 + $0x414] sm:$0xff]
      %v542 = vld [vmem:[%s294 + $0x41c] sm:$0xff]
      %v543 = vld [vmem:[%s294 + $0x424] sm:$0xff]
      %v544 = vld [vmem:[%s294 + $0x42c] sm:$0xff]
      %v545 = vld [vmem:[%s294 + $0x434] sm:$0xf]
      %v546 = vld [vmem:[%s294 + $0x438] sm:$0xff]
      %v547 = vld [vmem:[%s294 + $0x440] sm:$0xff]
      %v548 = vld [vmem:[%s294 + $0x448] sm:$0xff]
      %v549 = vld [vmem:[%s294 + $0x450] sm:$0xff]
      %v550 = vld [vmem:[%s294 + $0x458] sm:$0xf]
      %v551 = vld [vmem:[%s294 + $0x45c] sm:$0xff]
      %v552 = vld [vmem:[%s294 + $0x464] sm:$0xff]
      %v553 = vld [vmem:[%s294 + $0x46c] sm:$0xff]
      %v554 = vld [vmem:[%s294 + $0x474] sm:$0xff]
      %v555 = vld [vmem:[%s294 + $0x47c] sm:$0xf]
      %v556 = vld [vmem:[%s304] sm:$0xf]
      %v557 = vld [vmem:[%s304 + $0x4] sm:$0xf]
      %v558 = vld [vmem:[%s304 + $0x8] sm:$0xf]
      %v559 = vld [vmem:[%s304 + $0xc] sm:$0xf]
      %v560 = vld [vmem:[%s304 + $0x10] sm:$0xf]
      %v561 = vld [vmem:[%s304 + $0x14] sm:$0xf]
      %v562 = vld [vmem:[%s304 + $0x18] sm:$0xf]
      %v563 = vld [vmem:[%s304 + $0x1c] sm:$0xf]
      %v564 = vld [vmem:[%s304 + $0x20] sm:$0xf]
      %v565 = vld [vmem:[%s304 + $0x24] sm:$0xf]
      %v566 = vld [vmem:[%s304 + $0x28] sm:$0xf]
      %v567 = vld [vmem:[%s304 + $0x2c] sm:$0xf]
      %v568 = vld [vmem:[%s304 + $0x30] sm:$0xf]
      %v569 = vld [vmem:[%s304 + $0x34] sm:$0xf]
      %v570 = vld [vmem:[%s304 + $0x38] sm:$0xf]
      %v571 = vld [vmem:[%s304 + $0x3c] sm:$0xf]
      %v572 = vld [vmem:[%s304 + $0x40] sm:$0xf]
      %v573 = vld [vmem:[%s304 + $0x44] sm:$0xf]
      %v574 = vld [vmem:[%s304 + $0x48] sm:$0xf]
      %v575 = vld [vmem:[%s304 + $0x4c] sm:$0xf]
      %v576 = vld [vmem:[%s304 + $0x50] sm:$0xf]
      %v577 = vld [vmem:[%s304 + $0x54] sm:$0xf]
      %v578 = vld [vmem:[%s304 + $0x58] sm:$0xf]
      %v579 = vld [vmem:[%s304 + $0x5c] sm:$0xf]
      %v580 = vld [vmem:[%s304 + $0x60] sm:$0xf]
      %v581 = vld [vmem:[%s304 + $0x64] sm:$0xf]
      %v582 = vld [vmem:[%s304 + $0x68] sm:$0xf]
      %v583 = vld [vmem:[%s304 + $0x6c] sm:$0xf]
      %v584 = vld [vmem:[%s304 + $0x70] sm:$0xf]
      %v585 = vld [vmem:[%s304 + $0x74] sm:$0xf]
      %v586 = vld [vmem:[%s304 + $0x78] sm:$0xf]
      %v587 = vld [vmem:[%s304 + $0x7c] sm:$0xf]
      %v588 = vld [vmem:[%s304 + $0x80] sm:$0xf]
      %v589 = vld [vmem:[%s304 + $0x84] sm:$0xf]
      %v590 = vld [vmem:[%s304 + $0x88] sm:$0xf]
      %v591 = vld [vmem:[%s304 + $0x8c] sm:$0xf]
      %v592 = vld [vmem:[%s304 + $0x90] sm:$0xf]
      %v593 = vld [vmem:[%s304 + $0x94] sm:$0xf]
      %v594 = vld [vmem:[%s304 + $0x98] sm:$0xf]
      %v595 = vld [vmem:[%s304 + $0x9c] sm:$0xf]
      %v596 = vld [vmem:[%s304 + $0xa0] sm:$0xf]
      %v597 = vld [vmem:[%s304 + $0xa4] sm:$0xf]
      %v598 = vld [vmem:[%s304 + $0xa8] sm:$0xf]
      %v599 = vld [vmem:[%s304 + $0xac] sm:$0xf]
      %v600 = vld [vmem:[%s304 + $0xb0] sm:$0xf]
      %v601 = vld [vmem:[%s304 + $0xb4] sm:$0xf]
      %v602 = vld [vmem:[%s304 + $0xb8] sm:$0xf]
      %v603 = vld [vmem:[%s304 + $0xbc] sm:$0xf]
      %v604 = vld [vmem:[%s304 + $0xc0] sm:$0xf]
      %v605 = vld [vmem:[%s304 + $0xc4] sm:$0xf]
      %v606 = vld [vmem:[%s304 + $0xc8] sm:$0xf]
      %v607 = vld [vmem:[%s304 + $0xcc] sm:$0xf]
      %v608 = vld [vmem:[%s304 + $0xd0] sm:$0xf]
      %v609 = vld [vmem:[%s304 + $0xd4] sm:$0xf]
      %v610 = vld [vmem:[%s304 + $0xd8] sm:$0xf]
      %v611 = vld [vmem:[%s304 + $0xdc] sm:$0xf]
      %v612 = vld [vmem:[%s304 + $0xe0] sm:$0xf]
      %v613 = vld [vmem:[%s304 + $0xe4] sm:$0xf]
      %v614 = vld [vmem:[%s304 + $0xe8] sm:$0xf]
      %v615 = vld [vmem:[%s304 + $0xec] sm:$0xf]
      %v616 = vld [vmem:[%s304 + $0xf0] sm:$0xf]
      %v617 = vld [vmem:[%s304 + $0xf4] sm:$0xf]
      %v618 = vld [vmem:[%s304 + $0xf8] sm:$0xf]
      %v619 = vld [vmem:[%s304 + $0xfc] sm:$0xf]
      %v620 = vld [vmem:[%s304 + $0x100] sm:$0xf]
      %v621 = vld [vmem:[%s304 + $0x104] sm:$0xf]
      %v622 = vld [vmem:[%s304 + $0x108] sm:$0xf]
      %v623 = vld [vmem:[%s304 + $0x10c] sm:$0xf]
      %v624 = vld [vmem:[%s304 + $0x110] sm:$0xf]
      %v625 = vld [vmem:[%s304 + $0x114] sm:$0xf]
      %v626 = vld [vmem:[%s304 + $0x118] sm:$0xf]
      %v627 = vld [vmem:[%s304 + $0x11c] sm:$0xf]
      %v628 = vld [vmem:[%s304 + $0x120] sm:$0xf]
      %v629 = vld [vmem:[%s304 + $0x124] sm:$0xf]
      %v630 = vld [vmem:[%s304 + $0x128] sm:$0xf]
      %v631 = vld [vmem:[%s304 + $0x12c] sm:$0xf]
      %v632 = vld [vmem:[%s304 + $0x130] sm:$0xf]
      %v633 = vld [vmem:[%s304 + $0x134] sm:$0xf]
      %v634 = vld [vmem:[%s304 + $0x138] sm:$0xf]
      %v635 = vld [vmem:[%s304 + $0x13c] sm:$0xf]
      %v636 = vld [vmem:[%s304 + $0x140] sm:$0xf]
      %v637 = vld [vmem:[%s304 + $0x144] sm:$0xf]
      %v638 = vld [vmem:[%s304 + $0x148] sm:$0xf]
      %v639 = vld [vmem:[%s304 + $0x14c] sm:$0xf]
      %v640 = vld [vmem:[%s304 + $0x150] sm:$0xf]
      %v641 = vld [vmem:[%s304 + $0x154] sm:$0xf]
      %v642 = vld [vmem:[%s304 + $0x158] sm:$0xf]
      %v643 = vld [vmem:[%s304 + $0x15c] sm:$0xf]
      %v644 = vld [vmem:[%s304 + $0x160] sm:$0xf]
      %v645 = vld [vmem:[%s304 + $0x164] sm:$0xf]
      %v646 = vld [vmem:[%s304 + $0x168] sm:$0xf]
      %v647 = vld [vmem:[%s304 + $0x16c] sm:$0xf]
      %v648 = vld [vmem:[%s304 + $0x170] sm:$0xf]
      %v649 = vld [vmem:[%s304 + $0x174] sm:$0xf]
      %v650 = vld [vmem:[%s304 + $0x178] sm:$0xf]
      %v651 = vld [vmem:[%s304 + $0x17c] sm:$0xf]
      %v652 = vld [vmem:[%s304 + $0x180] sm:$0xf]
      %v653 = vld [vmem:[%s304 + $0x184] sm:$0xf]
      %v654 = vld [vmem:[%s304 + $0x188] sm:$0xf]
      %v655 = vld [vmem:[%s304 + $0x18c] sm:$0xf]
      %v656 = vld [vmem:[%s304 + $0x190] sm:$0xf]
      %v657 = vld [vmem:[%s304 + $0x194] sm:$0xf]
      %v658 = vld [vmem:[%s304 + $0x198] sm:$0xf]
      %v659 = vld [vmem:[%s304 + $0x19c] sm:$0xf]
      %v660 = vld [vmem:[%s304 + $0x1a0] sm:$0xf]
      %v661 = vld [vmem:[%s304 + $0x1a4] sm:$0xf]
      %v662 = vld [vmem:[%s304 + $0x1a8] sm:$0xf]
      %v663 = vld [vmem:[%s304 + $0x1ac] sm:$0xf]
      %v664 = vld [vmem:[%s304 + $0x1b0] sm:$0xf]
      %v665 = vld [vmem:[%s304 + $0x1b4] sm:$0xf]
      %v666 = vld [vmem:[%s304 + $0x1b8] sm:$0xf]
      %v667 = vld [vmem:[%s304 + $0x1bc] sm:$0xf]
      %v668 = vld [vmem:[%s304 + $0x1c0] sm:$0xf]
      %v669 = vld [vmem:[%s304 + $0x1c4] sm:$0xf]
      %v670 = vld [vmem:[%s304 + $0x1c8] sm:$0xf]
      %v671 = vld [vmem:[%s304 + $0x1cc] sm:$0xf]
      %v672 = vld [vmem:[%s304 + $0x1d0] sm:$0xf]
      %v673 = vld [vmem:[%s304 + $0x1d4] sm:$0xf]
      %v674 = vld [vmem:[%s304 + $0x1d8] sm:$0xf]
      %v675 = vld [vmem:[%s304 + $0x1dc] sm:$0xf]
      %v676 = vld [vmem:[%s304 + $0x1e0] sm:$0xf]
      %v677 = vld [vmem:[%s304 + $0x1e4] sm:$0xf]
      %v678 = vld [vmem:[%s304 + $0x1e8] sm:$0xf]
      %v679 = vld [vmem:[%s304 + $0x1ec] sm:$0xf]
      %v680 = vld [vmem:[%s304 + $0x1f0] sm:$0xf]
      %v681 = vld [vmem:[%s304 + $0x1f4] sm:$0xf]
      %v682 = vld [vmem:[%s304 + $0x1f8] sm:$0xf]
      %v683 = vld [vmem:[%s304 + $0x1fc] sm:$0xf]
      %v684 = vld [vmem:[%s304 + $0x200] sm:$0xf]
      %v685 = vld [vmem:[%s304 + $0x204] sm:$0xf]
      %v686 = vld [vmem:[%s304 + $0x208] sm:$0xf]
      %v687 = vld [vmem:[%s304 + $0x20c] sm:$0xf]
      %v688 = vld [vmem:[%s304 + $0x210] sm:$0xf]
      %v689 = vld [vmem:[%s304 + $0x214] sm:$0xf]
      %v690 = vld [vmem:[%s304 + $0x218] sm:$0xf]
      %v691 = vld [vmem:[%s304 + $0x21c] sm:$0xf]
      %v692 = vld [vmem:[%s304 + $0x220] sm:$0xf]
      %v693 = vld [vmem:[%s304 + $0x224] sm:$0xf]
      %v694 = vld [vmem:[%s304 + $0x228] sm:$0xf]
      %v695 = vld [vmem:[%s304 + $0x22c] sm:$0xf]
      %v696 = vld [vmem:[%s304 + $0x230] sm:$0xf]
      %v697 = vld [vmem:[%s304 + $0x234] sm:$0xf]
      %v698 = vld [vmem:[%s304 + $0x238] sm:$0xf]
      %v699 = vld [vmem:[%s304 + $0x23c] sm:$0xf]
      %v860 = vunpack.c.l.b16 %v396
      %v861 = vunpack.c.h.b16 %v396
      %v862 = vunpack.c.l.b16 %v397
      %v863 = vunpack.c.h.b16 %v397
      %v864 = vunpack.c.l.b16 %v398
      %v865 = vunpack.c.h.b16 %v398
      %v866 = vunpack.c.l.b16 %v399
      %v867 = vunpack.c.h.b16 %v399
      %v868 = vunpack.c.l.b16 %v400
      %v869 = vunpack.c.l.b16 %v401
      %v870 = vunpack.c.h.b16 %v401
      %v871 = vunpack.c.l.b16 %v402
      %v872 = vunpack.c.h.b16 %v402
      %v873 = vunpack.c.l.b16 %v403
      %v874 = vunpack.c.h.b16 %v403
      %v875 = vunpack.c.l.b16 %v404
      %v876 = vunpack.c.h.b16 %v404
      %v877 = vunpack.c.l.b16 %v405
      %v878 = vunpack.c.l.b16 %v406
      %v879 = vunpack.c.h.b16 %v406
      %v880 = vunpack.c.l.b16 %v407
      %v881 = vunpack.c.h.b16 %v407
      %v882 = vunpack.c.l.b16 %v408
      %v883 = vunpack.c.h.b16 %v408
      %v884 = vunpack.c.l.b16 %v409
      %v885 = vunpack.c.h.b16 %v409
      %v886 = vunpack.c.l.b16 %v410
      %v887 = vunpack.c.l.b16 %v411
      %v888 = vunpack.c.h.b16 %v411
      %v889 = vunpack.c.l.b16 %v412
      %v890 = vunpack.c.h.b16 %v412
      %v891 = vunpack.c.l.b16 %v413
      %v892 = vunpack.c.h.b16 %v413
      %v893 = vunpack.c.l.b16 %v414
      %v894 = vunpack.c.h.b16 %v414
      %v895 = vunpack.c.l.b16 %v415
      %v896 = vunpack.c.l.b16 %v416
      %v897 = vunpack.c.h.b16 %v416
      %v898 = vunpack.c.l.b16 %v417
      %v899 = vunpack.c.h.b16 %v417
      %v900 = vunpack.c.l.b16 %v418
      %v901 = vunpack.c.h.b16 %v418
      %v902 = vunpack.c.l.b16 %v419
      %v903 = vunpack.c.h.b16 %v419
      %v904 = vunpack.c.l.b16 %v420
      %v905 = vunpack.c.l.b16 %v421
      %v906 = vunpack.c.h.b16 %v421
      %v907 = vunpack.c.l.b16 %v422
      %v908 = vunpack.c.h.b16 %v422
      %v909 = vunpack.c.l.b16 %v423
      %v910 = vunpack.c.h.b16 %v423
      %v911 = vunpack.c.l.b16 %v424
      %v912 = vunpack.c.h.b16 %v424
      %v913 = vunpack.c.l.b16 %v425
      %v914 = vunpack.c.l.b16 %v426
      %v915 = vunpack.c.h.b16 %v426
      %v916 = vunpack.c.l.b16 %v427
      %v917 = vunpack.c.h.b16 %v427
      %v918 = vunpack.c.l.b16 %v428
      %v919 = vunpack.c.h.b16 %v428
      %v920 = vunpack.c.l.b16 %v429
      %v921 = vunpack.c.h.b16 %v429
      %v922 = vunpack.c.l.b16 %v430
      %v923 = vunpack.c.l.b16 %v431
      %v924 = vunpack.c.h.b16 %v431
      %v925 = vunpack.c.l.b16 %v432
      %v926 = vunpack.c.h.b16 %v432
      %v927 = vunpack.c.l.b16 %v433
      %v928 = vunpack.c.h.b16 %v433
      %v929 = vunpack.c.l.b16 %v434
      %v930 = vunpack.c.h.b16 %v434
      %v931 = vunpack.c.l.b16 %v435
      %v932 = vunpack.c.l.b16 %v436
      %v933 = vunpack.c.h.b16 %v436
      %v934 = vunpack.c.l.b16 %v437
      %v935 = vunpack.c.h.b16 %v437
      %v936 = vunpack.c.l.b16 %v438
      %v937 = vunpack.c.h.b16 %v438
      %v938 = vunpack.c.l.b16 %v439
      %v939 = vunpack.c.h.b16 %v439
      %v940 = vunpack.c.l.b16 %v440
      %v941 = vunpack.c.l.b16 %v441
      %v942 = vunpack.c.h.b16 %v441
      %v943 = vunpack.c.l.b16 %v442
      %v944 = vunpack.c.h.b16 %v442
      %v945 = vunpack.c.l.b16 %v443
      %v946 = vunpack.c.h.b16 %v443
      %v947 = vunpack.c.l.b16 %v444
      %v948 = vunpack.c.h.b16 %v444
      %v949 = vunpack.c.l.b16 %v445
      %v950 = vunpack.c.l.b16 %v446
      %v951 = vunpack.c.h.b16 %v446
      %v952 = vunpack.c.l.b16 %v447
      %v953 = vunpack.c.h.b16 %v447
      %v954 = vunpack.c.l.b16 %v448
      %v955 = vunpack.c.h.b16 %v448
      %v956 = vunpack.c.l.b16 %v449
      %v957 = vunpack.c.h.b16 %v449
      %v958 = vunpack.c.l.b16 %v450
      %v959 = vunpack.c.l.b16 %v451
      %v960 = vunpack.c.h.b16 %v451
      %v961 = vunpack.c.l.b16 %v452
      %v962 = vunpack.c.h.b16 %v452
      %v963 = vunpack.c.l.b16 %v453
      %v964 = vunpack.c.h.b16 %v453
      %v965 = vunpack.c.l.b16 %v454
      %v966 = vunpack.c.h.b16 %v454
      %v967 = vunpack.c.l.b16 %v455
      %v968 = vunpack.c.l.b16 %v456
      %v969 = vunpack.c.h.b16 %v456
      %v970 = vunpack.c.l.b16 %v457
      %v971 = vunpack.c.h.b16 %v457
      %v972 = vunpack.c.l.b16 %v458
      %v973 = vunpack.c.h.b16 %v458
      %v974 = vunpack.c.l.b16 %v459
      %v975 = vunpack.c.h.b16 %v459
      %v976 = vunpack.c.l.b16 %v460
      %v977 = vunpack.c.l.b16 %v461
      %v978 = vunpack.c.h.b16 %v461
      %v979 = vunpack.c.l.b16 %v462
      %v980 = vunpack.c.h.b16 %v462
      %v981 = vunpack.c.l.b16 %v463
      %v982 = vunpack.c.h.b16 %v463
      %v983 = vunpack.c.l.b16 %v464
      %v984 = vunpack.c.h.b16 %v464
      %v985 = vunpack.c.l.b16 %v465
      %v986 = vunpack.c.l.b16 %v466
      %v987 = vunpack.c.h.b16 %v466
      %v988 = vunpack.c.l.b16 %v467
      %v989 = vunpack.c.h.b16 %v467
      %v990 = vunpack.c.l.b16 %v468
      %v991 = vunpack.c.h.b16 %v468
      %v992 = vunpack.c.l.b16 %v469
      %v993 = vunpack.c.h.b16 %v469
      %v994 = vunpack.c.l.b16 %v470
      %v995 = vunpack.c.l.b16 %v471
      %v996 = vunpack.c.h.b16 %v471
      %v997 = vunpack.c.l.b16 %v472
      %v998 = vunpack.c.h.b16 %v472
      %v999 = vunpack.c.l.b16 %v473
      %v1000 = vunpack.c.h.b16 %v473
      %v1001 = vunpack.c.l.b16 %v474
      %v1002 = vunpack.c.h.b16 %v474
      %v1003 = vunpack.c.l.b16 %v475
      %v1004 = vunpack.c.l.b16 %v476
      %v1005 = vunpack.c.h.b16 %v476
      %v1006 = vunpack.c.l.b16 %v477
      %v1007 = vunpack.c.h.b16 %v477
      %v1008 = vunpack.c.l.b16 %v478
      %v1009 = vunpack.c.h.b16 %v478
      %v1010 = vunpack.c.l.b16 %v479
      %v1011 = vunpack.c.h.b16 %v479
      %v1012 = vunpack.c.l.b16 %v480
      %v1013 = vunpack.c.l.b16 %v481
      %v1014 = vunpack.c.h.b16 %v481
      %v1015 = vunpack.c.l.b16 %v482
      %v1016 = vunpack.c.h.b16 %v482
      %v1017 = vunpack.c.l.b16 %v483
      %v1018 = vunpack.c.h.b16 %v483
      %v1019 = vunpack.c.l.b16 %v484
      %v1020 = vunpack.c.h.b16 %v484
      %v1021 = vunpack.c.l.b16 %v485
      %v1022 = vunpack.c.l.b16 %v486
      %v1023 = vunpack.c.h.b16 %v486
      %v1024 = vunpack.c.l.b16 %v487
      %v1025 = vunpack.c.h.b16 %v487
      %v1026 = vunpack.c.l.b16 %v488
      %v1027 = vunpack.c.h.b16 %v488
      %v1028 = vunpack.c.l.b16 %v489
      %v1029 = vunpack.c.h.b16 %v489
      %v1030 = vunpack.c.l.b16 %v490
      %v1031 = vunpack.c.l.b16 %v491
      %v1032 = vunpack.c.h.b16 %v491
      %v1033 = vunpack.c.l.b16 %v492
      %v1034 = vunpack.c.h.b16 %v492
      %v1035 = vunpack.c.l.b16 %v493
      %v1036 = vunpack.c.h.b16 %v493
      %v1037 = vunpack.c.l.b16 %v494
      %v1038 = vunpack.c.h.b16 %v494
      %v1039 = vunpack.c.l.b16 %v495
      %v1040 = vunpack.c.l.b16 %v496
      %v1041 = vunpack.c.h.b16 %v496
      %v1042 = vunpack.c.l.b16 %v497
      %v1043 = vunpack.c.h.b16 %v497
      %v1044 = vunpack.c.l.b16 %v498
      %v1045 = vunpack.c.h.b16 %v498
      %v1046 = vunpack.c.l.b16 %v499
      %v1047 = vunpack.c.h.b16 %v499
      %v1048 = vunpack.c.l.b16 %v500
      %v1049 = vunpack.c.l.b16 %v501
      %v1050 = vunpack.c.h.b16 %v501
      %v1051 = vunpack.c.l.b16 %v502
      %v1052 = vunpack.c.h.b16 %v502
      %v1053 = vunpack.c.l.b16 %v503
      %v1054 = vunpack.c.h.b16 %v503
      %v1055 = vunpack.c.l.b16 %v504
      %v1056 = vunpack.c.h.b16 %v504
      %v1057 = vunpack.c.l.b16 %v505
      %v1058 = vunpack.c.l.b16 %v506
      %v1059 = vunpack.c.h.b16 %v506
      %v1060 = vunpack.c.l.b16 %v507
      %v1061 = vunpack.c.h.b16 %v507
      %v1062 = vunpack.c.l.b16 %v508
      %v1063 = vunpack.c.h.b16 %v508
      %v1064 = vunpack.c.l.b16 %v509
      %v1065 = vunpack.c.h.b16 %v509
      %v1066 = vunpack.c.l.b16 %v510
      %v1067 = vunpack.c.l.b16 %v511
      %v1068 = vunpack.c.h.b16 %v511
      %v1069 = vunpack.c.l.b16 %v512
      %v1070 = vunpack.c.h.b16 %v512
      %v1071 = vunpack.c.l.b16 %v513
      %v1072 = vunpack.c.h.b16 %v513
      %v1073 = vunpack.c.l.b16 %v514
      %v1074 = vunpack.c.h.b16 %v514
      %v1075 = vunpack.c.l.b16 %v515
      %v1076 = vunpack.c.l.b16 %v516
      %v1077 = vunpack.c.h.b16 %v516
      %v1078 = vunpack.c.l.b16 %v517
      %v1079 = vunpack.c.h.b16 %v517
      %v1080 = vunpack.c.l.b16 %v518
      %v1081 = vunpack.c.h.b16 %v518
      %v1082 = vunpack.c.l.b16 %v519
      %v1083 = vunpack.c.h.b16 %v519
      %v1084 = vunpack.c.l.b16 %v520
      %v1085 = vunpack.c.l.b16 %v521
      %v1086 = vunpack.c.h.b16 %v521
      %v1087 = vunpack.c.l.b16 %v522
      %v1088 = vunpack.c.h.b16 %v522
      %v1089 = vunpack.c.l.b16 %v523
      %v1090 = vunpack.c.h.b16 %v523
      %v1091 = vunpack.c.l.b16 %v524
      %v1092 = vunpack.c.h.b16 %v524
      %v1093 = vunpack.c.l.b16 %v525
      %v1094 = vunpack.c.l.b16 %v526
      %v1095 = vunpack.c.h.b16 %v526
      %v1096 = vunpack.c.l.b16 %v527
      %v1097 = vunpack.c.h.b16 %v527
      %v1098 = vunpack.c.l.b16 %v528
      %v1099 = vunpack.c.h.b16 %v528
      %v1100 = vunpack.c.l.b16 %v529
      %v1101 = vunpack.c.h.b16 %v529
      %v1102 = vunpack.c.l.b16 %v530
      %v1103 = vunpack.c.l.b16 %v531
      %v1104 = vunpack.c.h.b16 %v531
      %v1105 = vunpack.c.l.b16 %v532
      %v1106 = vunpack.c.h.b16 %v532
      %v1107 = vunpack.c.l.b16 %v533
      %v1108 = vunpack.c.h.b16 %v533
      %v1109 = vunpack.c.l.b16 %v534
      %v1110 = vunpack.c.h.b16 %v534
      %v1111 = vunpack.c.l.b16 %v535
      %v1112 = vunpack.c.l.b16 %v536
      %v1113 = vunpack.c.h.b16 %v536
      %v1114 = vunpack.c.l.b16 %v537
      %v1115 = vunpack.c.h.b16 %v537
      %v1116 = vunpack.c.l.b16 %v538
      %v1117 = vunpack.c.h.b16 %v538
      %v1118 = vunpack.c.l.b16 %v539
      %v1119 = vunpack.c.h.b16 %v539
      %v1120 = vunpack.c.l.b16 %v540
      %v1121 = vunpack.c.l.b16 %v541
      %v1122 = vunpack.c.h.b16 %v541
      %v1123 = vunpack.c.l.b16 %v542
      %v1124 = vunpack.c.h.b16 %v542
      %v1125 = vunpack.c.l.b16 %v543
      %v1126 = vunpack.c.h.b16 %v543
      %v1127 = vunpack.c.l.b16 %v544
      %v1128 = vunpack.c.h.b16 %v544
      %v1129 = vunpack.c.l.b16 %v545
      %v1130 = vunpack.c.l.b16 %v546
      %v1131 = vunpack.c.h.b16 %v546
      %v1132 = vunpack.c.l.b16 %v547
      %v1133 = vunpack.c.h.b16 %v547
      %v1134 = vunpack.c.l.b16 %v548
      %v1135 = vunpack.c.h.b16 %v548
      %v1136 = vunpack.c.l.b16 %v549
      %v1137 = vunpack.c.h.b16 %v549
      %v1138 = vunpack.c.l.b16 %v550
      %v1139 = vunpack.c.l.b16 %v551
      %v1140 = vunpack.c.h.b16 %v551
      %v1141 = vunpack.c.l.b16 %v552
      %v1142 = vunpack.c.h.b16 %v552
      %v1143 = vunpack.c.l.b16 %v553
      %v1144 = vunpack.c.h.b16 %v553
      %v1145 = vunpack.c.l.b16 %v554
      %v1146 = vunpack.c.h.b16 %v554
      %v1147 = vunpack.c.l.b16 %v555
      %v1148 = vpack.c.b16 %v869, %v860
      %v1149 = vpack.c.b16 %v870, %v861
      %v1150 = vpack.c.b16 %v871, %v862
      %v1151 = vpack.c.b16 %v872, %v863
      %v1152 = vpack.c.b16 %v873, %v864
      %v1153 = vpack.c.b16 %v874, %v865
      %v1154 = vpack.c.b16 %v875, %v866
      %v1155 = vpack.c.b16 %v876, %v867
      %v1156 = vpack.c.b16 %v877, %v868
      %v1157 = vpack.c.b16 %v887, %v878
      %v1158 = vpack.c.b16 %v888, %v879
      %v1159 = vpack.c.b16 %v889, %v880
      %v1160 = vpack.c.b16 %v890, %v881
      %v1161 = vpack.c.b16 %v891, %v882
      %v1162 = vpack.c.b16 %v892, %v883
      %v1163 = vpack.c.b16 %v893, %v884
      %v1164 = vpack.c.b16 %v894, %v885
      %v1165 = vpack.c.b16 %v895, %v886
      %v1166 = vpack.c.b16 %v905, %v896
      %v1167 = vpack.c.b16 %v906, %v897
      %v1168 = vpack.c.b16 %v907, %v898
      %v1169 = vpack.c.b16 %v908, %v899
      %v1170 = vpack.c.b16 %v909, %v900
      %v1171 = vpack.c.b16 %v910, %v901
      %v1172 = vpack.c.b16 %v911, %v902
      %v1173 = vpack.c.b16 %v912, %v903
      %v1174 = vpack.c.b16 %v913, %v904
      %v1175 = vpack.c.b16 %v923, %v914
      %v1176 = vpack.c.b16 %v924, %v915
      %v1177 = vpack.c.b16 %v925, %v916
      %v1178 = vpack.c.b16 %v926, %v917
      %v1179 = vpack.c.b16 %v927, %v918
      %v1180 = vpack.c.b16 %v928, %v919
      %v1181 = vpack.c.b16 %v929, %v920
      %v1182 = vpack.c.b16 %v930, %v921
      %v1183 = vpack.c.b16 %v931, %v922
      %v1184 = vpack.c.b16 %v941, %v932
      %v1185 = vpack.c.b16 %v942, %v933
      %v1186 = vpack.c.b16 %v943, %v934
      %v1187 = vpack.c.b16 %v944, %v935
      %v1188 = vpack.c.b16 %v945, %v936
      %v1189 = vpack.c.b16 %v946, %v937
      %v1190 = vpack.c.b16 %v947, %v938
      %v1191 = vpack.c.b16 %v948, %v939
      %v1192 = vpack.c.b16 %v949, %v940
      %v1193 = vpack.c.b16 %v959, %v950
      %v1194 = vpack.c.b16 %v960, %v951
      %v1195 = vpack.c.b16 %v961, %v952
      %v1196 = vpack.c.b16 %v962, %v953
      %v1197 = vpack.c.b16 %v963, %v954
      %v1198 = vpack.c.b16 %v964, %v955
      %v1199 = vpack.c.b16 %v965, %v956
      %v1200 = vpack.c.b16 %v966, %v957
      %v1201 = vpack.c.b16 %v967, %v958
      %v1202 = vpack.c.b16 %v977, %v968
      %v1203 = vpack.c.b16 %v978, %v969
      %v1204 = vpack.c.b16 %v979, %v970
      %v1205 = vpack.c.b16 %v980, %v971
      %v1206 = vpack.c.b16 %v981, %v972
      %v1207 = vpack.c.b16 %v982, %v973
      %v1208 = vpack.c.b16 %v983, %v974
      %v1209 = vpack.c.b16 %v984, %v975
      %v1210 = vpack.c.b16 %v985, %v976
      %v1211 = vpack.c.b16 %v995, %v986
      %v1212 = vpack.c.b16 %v996, %v987
      %v1213 = vpack.c.b16 %v997, %v988
      %v1214 = vpack.c.b16 %v998, %v989
      %v1215 = vpack.c.b16 %v999, %v990
      %v1216 = vpack.c.b16 %v1000, %v991
      %v1217 = vpack.c.b16 %v1001, %v992
      %v1218 = vpack.c.b16 %v1002, %v993
      %v1219 = vpack.c.b16 %v1003, %v994
      %v1220 = vpack.c.b16 %v1013, %v1004
      %v1221 = vpack.c.b16 %v1014, %v1005
      %v1222 = vpack.c.b16 %v1015, %v1006
      %v1223 = vpack.c.b16 %v1016, %v1007
      %v1224 = vpack.c.b16 %v1017, %v1008
      %v1225 = vpack.c.b16 %v1018, %v1009
      %v1226 = vpack.c.b16 %v1019, %v1010
      %v1227 = vpack.c.b16 %v1020, %v1011
      %v1228 = vpack.c.b16 %v1021, %v1012
      %v1229 = vpack.c.b16 %v1031, %v1022
      %v1230 = vpack.c.b16 %v1032, %v1023
      %v1231 = vpack.c.b16 %v1033, %v1024
      %v1232 = vpack.c.b16 %v1034, %v1025
      %v1233 = vpack.c.b16 %v1035, %v1026
      %v1234 = vpack.c.b16 %v1036, %v1027
      %v1235 = vpack.c.b16 %v1037, %v1028
      %v1236 = vpack.c.b16 %v1038, %v1029
      %v1237 = vpack.c.b16 %v1039, %v1030
      %v1238 = vpack.c.b16 %v1049, %v1040
      %v1239 = vpack.c.b16 %v1050, %v1041
      %v1240 = vpack.c.b16 %v1051, %v1042
      %v1241 = vpack.c.b16 %v1052, %v1043
      %v1242 = vpack.c.b16 %v1053, %v1044
      %v1243 = vpack.c.b16 %v1054, %v1045
      %v1244 = vpack.c.b16 %v1055, %v1046
      %v1245 = vpack.c.b16 %v1056, %v1047
      %v1246 = vpack.c.b16 %v1057, %v1048
      %v1247 = vpack.c.b16 %v1067, %v1058
      %v1248 = vpack.c.b16 %v1068, %v1059
      %v1249 = vpack.c.b16 %v1069, %v1060
      %v1250 = vpack.c.b16 %v1070, %v1061
      %v1251 = vpack.c.b16 %v1071, %v1062
      %v1252 = vpack.c.b16 %v1072, %v1063
      %v1253 = vpack.c.b16 %v1073, %v1064
      %v1254 = vpack.c.b16 %v1074, %v1065
      %v1255 = vpack.c.b16 %v1075, %v1066
      %v1256 = vpack.c.b16 %v1085, %v1076
      %v1257 = vpack.c.b16 %v1086, %v1077
      %v1258 = vpack.c.b16 %v1087, %v1078
      %v1259 = vpack.c.b16 %v1088, %v1079
      %v1260 = vpack.c.b16 %v1089, %v1080
      %v1261 = vpack.c.b16 %v1090, %v1081
      %v1262 = vpack.c.b16 %v1091, %v1082
      %v1263 = vpack.c.b16 %v1092, %v1083
      %v1264 = vpack.c.b16 %v1093, %v1084
      %v1265 = vpack.c.b16 %v1103, %v1094
      %v1266 = vpack.c.b16 %v1104, %v1095
      %v1267 = vpack.c.b16 %v1105, %v1096
      %v1268 = vpack.c.b16 %v1106, %v1097
      %v1269 = vpack.c.b16 %v1107, %v1098
      %v1270 = vpack.c.b16 %v1108, %v1099
      %v1271 = vpack.c.b16 %v1109, %v1100
      %v1272 = vpack.c.b16 %v1110, %v1101
      %v1273 = vpack.c.b16 %v1111, %v1102
      %v1274 = vpack.c.b16 %v1121, %v1112
      %v1275 = vpack.c.b16 %v1122, %v1113
      %v1276 = vpack.c.b16 %v1123, %v1114
      %v1277 = vpack.c.b16 %v1124, %v1115
      %v1278 = vpack.c.b16 %v1125, %v1116
      %v1279 = vpack.c.b16 %v1126, %v1117
      %v1280 = vpack.c.b16 %v1127, %v1118
      %v1281 = vpack.c.b16 %v1128, %v1119
      %v1282 = vpack.c.b16 %v1129, %v1120
      %v1283 = vpack.c.b16 %v1139, %v1130
      %v1284 = vpack.c.b16 %v1140, %v1131
      %v1285 = vpack.c.b16 %v1141, %v1132
      %v1286 = vpack.c.b16 %v1142, %v1133
      %v1287 = vpack.c.b16 %v1143, %v1134
      %v1288 = vpack.c.b16 %v1144, %v1135
      %v1289 = vpack.c.b16 %v1145, %v1136
      %v1290 = vpack.c.b16 %v1146, %v1137
      %v1291 = vpack.c.b16 %v1147, %v1138
      %v1580 = vunpack.c.l.b16 %v556
      %v1581 = vunpack.c.l.b16 %v557
      %v1582 = vunpack.c.l.b16 %v558
      %v1583 = vunpack.c.l.b16 %v559
      %v1584 = vunpack.c.l.b16 %v560
      %v1585 = vunpack.c.l.b16 %v561
      %v1586 = vunpack.c.l.b16 %v562
      %v1587 = vunpack.c.l.b16 %v563
      %v1588 = vunpack.c.l.b16 %v564
      %v1589 = vunpack.c.l.b16 %v565
      %v1590 = vunpack.c.l.b16 %v566
      %v1591 = vunpack.c.l.b16 %v567
      %v1592 = vunpack.c.l.b16 %v568
      %v1593 = vunpack.c.l.b16 %v569
      %v1594 = vunpack.c.l.b16 %v570
      %v1595 = vunpack.c.l.b16 %v571
      %v1596 = vunpack.c.l.b16 %v572
      %v1597 = vunpack.c.l.b16 %v573
      %v1598 = vunpack.c.l.b16 %v574
      %v1599 = vunpack.c.l.b16 %v575
      %v1600 = vunpack.c.l.b16 %v576
      %v1601 = vunpack.c.l.b16 %v577
      %v1602 = vunpack.c.l.b16 %v578
      %v1603 = vunpack.c.l.b16 %v579
      %v1604 = vunpack.c.l.b16 %v580
      %v1605 = vunpack.c.l.b16 %v581
      %v1606 = vunpack.c.l.b16 %v582
      %v1607 = vunpack.c.l.b16 %v583
      %v1608 = vunpack.c.l.b16 %v584
      %v1609 = vunpack.c.l.b16 %v585
      %v1610 = vunpack.c.l.b16 %v586
      %v1611 = vunpack.c.l.b16 %v587
      %v1612 = vunpack.c.l.b16 %v588
      %v1613 = vunpack.c.l.b16 %v589
      %v1614 = vunpack.c.l.b16 %v590
      %v1615 = vunpack.c.l.b16 %v591
      %v1616 = vunpack.c.l.b16 %v592
      %v1617 = vunpack.c.l.b16 %v593
      %v1618 = vunpack.c.l.b16 %v594
      %v1619 = vunpack.c.l.b16 %v595
      %v1620 = vunpack.c.l.b16 %v596
      %v1621 = vunpack.c.l.b16 %v597
      %v1622 = vunpack.c.l.b16 %v598
      %v1623 = vunpack.c.l.b16 %v599
      %v1624 = vunpack.c.l.b16 %v600
      %v1625 = vunpack.c.l.b16 %v601
      %v1626 = vunpack.c.l.b16 %v602
      %v1627 = vunpack.c.l.b16 %v603
      %v1628 = vunpack.c.l.b16 %v604
      %v1629 = vunpack.c.l.b16 %v605
      %v1630 = vunpack.c.l.b16 %v606
      %v1631 = vunpack.c.l.b16 %v607
      %v1632 = vunpack.c.l.b16 %v608
      %v1633 = vunpack.c.l.b16 %v609
      %v1634 = vunpack.c.l.b16 %v610
      %v1635 = vunpack.c.l.b16 %v611
      %v1636 = vunpack.c.l.b16 %v612
      %v1637 = vunpack.c.l.b16 %v613
      %v1638 = vunpack.c.l.b16 %v614
      %v1639 = vunpack.c.l.b16 %v615
      %v1640 = vunpack.c.l.b16 %v616
      %v1641 = vunpack.c.l.b16 %v617
      %v1642 = vunpack.c.l.b16 %v618
      %v1643 = vunpack.c.l.b16 %v619
      %v1644 = vunpack.c.l.b16 %v620
      %v1645 = vunpack.c.l.b16 %v621
      %v1646 = vunpack.c.l.b16 %v622
      %v1647 = vunpack.c.l.b16 %v623
      %v1648 = vunpack.c.l.b16 %v624
      %v1649 = vunpack.c.l.b16 %v625
      %v1650 = vunpack.c.l.b16 %v626
      %v1651 = vunpack.c.l.b16 %v627
      %v1652 = vunpack.c.l.b16 %v628
      %v1653 = vunpack.c.l.b16 %v629
      %v1654 = vunpack.c.l.b16 %v630
      %v1655 = vunpack.c.l.b16 %v631
      %v1656 = vunpack.c.l.b16 %v632
      %v1657 = vunpack.c.l.b16 %v633
      %v1658 = vunpack.c.l.b16 %v634
      %v1659 = vunpack.c.l.b16 %v635
      %v1660 = vunpack.c.l.b16 %v636
      %v1661 = vunpack.c.l.b16 %v637
      %v1662 = vunpack.c.l.b16 %v638
      %v1663 = vunpack.c.l.b16 %v639
      %v1664 = vunpack.c.l.b16 %v640
      %v1665 = vunpack.c.l.b16 %v641
      %v1666 = vunpack.c.l.b16 %v642
      %v1667 = vunpack.c.l.b16 %v643
      %v1668 = vunpack.c.l.b16 %v644
      %v1669 = vunpack.c.l.b16 %v645
      %v1670 = vunpack.c.l.b16 %v646
      %v1671 = vunpack.c.l.b16 %v647
      %v1672 = vunpack.c.l.b16 %v648
      %v1673 = vunpack.c.l.b16 %v649
      %v1674 = vunpack.c.l.b16 %v650
      %v1675 = vunpack.c.l.b16 %v651
      %v1676 = vunpack.c.l.b16 %v652
      %v1677 = vunpack.c.l.b16 %v653
      %v1678 = vunpack.c.l.b16 %v654
      %v1679 = vunpack.c.l.b16 %v655
      %v1680 = vunpack.c.l.b16 %v656
      %v1681 = vunpack.c.l.b16 %v657
      %v1682 = vunpack.c.l.b16 %v658
      %v1683 = vunpack.c.l.b16 %v659
      %v1684 = vunpack.c.l.b16 %v660
      %v1685 = vunpack.c.l.b16 %v661
      %v1686 = vunpack.c.l.b16 %v662
      %v1687 = vunpack.c.l.b16 %v663
      %v1688 = vunpack.c.l.b16 %v664
      %v1689 = vunpack.c.l.b16 %v665
      %v1690 = vunpack.c.l.b16 %v666
      %v1691 = vunpack.c.l.b16 %v667
      %v1692 = vunpack.c.l.b16 %v668
      %v1693 = vunpack.c.l.b16 %v669
      %v1694 = vunpack.c.l.b16 %v670
      %v1695 = vunpack.c.l.b16 %v671
      %v1696 = vunpack.c.l.b16 %v672
      %v1697 = vunpack.c.l.b16 %v673
      %v1698 = vunpack.c.l.b16 %v674
      %v1699 = vunpack.c.l.b16 %v675
      %v1700 = vunpack.c.l.b16 %v676
      %v1701 = vunpack.c.l.b16 %v677
      %v1702 = vunpack.c.l.b16 %v678
      %v1703 = vunpack.c.l.b16 %v679
      %v1704 = vunpack.c.l.b16 %v680
      %v1705 = vunpack.c.l.b16 %v681
      %v1706 = vunpack.c.l.b16 %v682
      %v1707 = vunpack.c.l.b16 %v683
      %v1708 = vunpack.c.l.b16 %v684
      %v1709 = vunpack.c.l.b16 %v685
      %v1710 = vunpack.c.l.b16 %v686
      %v1711 = vunpack.c.l.b16 %v687
      %v1712 = vunpack.c.l.b16 %v688
      %v1713 = vunpack.c.l.b16 %v689
      %v1714 = vunpack.c.l.b16 %v690
      %v1715 = vunpack.c.l.b16 %v691
      %v1716 = vunpack.c.l.b16 %v692
      %v1717 = vunpack.c.l.b16 %v693
      %v1718 = vunpack.c.l.b16 %v694
      %v1719 = vunpack.c.l.b16 %v695
      %v1720 = vunpack.c.l.b16 %v696
      %v1721 = vunpack.c.l.b16 %v697
      %v1722 = vunpack.c.l.b16 %v698
      %v1723 = vunpack.c.l.b16 %v699
      %v1724 = vpack.c.b16 %v1581, %v1580
      %v1725 = vpack.c.b16 %v1583, %v1582
      %v1726 = vpack.c.b16 %v1585, %v1584
      %v1727 = vpack.c.b16 %v1587, %v1586
      %v1728 = vpack.c.b16 %v1589, %v1588
      %v1729 = vpack.c.b16 %v1591, %v1590
      %v1730 = vpack.c.b16 %v1593, %v1592
      %v1731 = vpack.c.b16 %v1595, %v1594
      %v1732 = vpack.c.b16 %v1597, %v1596
      %v1733 = vpack.c.b16 %v1599, %v1598
      %v1734 = vpack.c.b16 %v1601, %v1600
      %v1735 = vpack.c.b16 %v1603, %v1602
      %v1736 = vpack.c.b16 %v1605, %v1604
      %v1737 = vpack.c.b16 %v1607, %v1606
      %v1738 = vpack.c.b16 %v1609, %v1608
      %v1739 = vpack.c.b16 %v1611, %v1610
      %v1740 = vpack.c.b16 %v1613, %v1612
      %v1741 = vpack.c.b16 %v1615, %v1614
      %v1742 = vpack.c.b16 %v1617, %v1616
      %v1743 = vpack.c.b16 %v1619, %v1618
      %v1744 = vpack.c.b16 %v1621, %v1620
      %v1745 = vpack.c.b16 %v1623, %v1622
      %v1746 = vpack.c.b16 %v1625, %v1624
      %v1747 = vpack.c.b16 %v1627, %v1626
      %v1748 = vpack.c.b16 %v1629, %v1628
      %v1749 = vpack.c.b16 %v1631, %v1630
      %v1750 = vpack.c.b16 %v1633, %v1632
      %v1751 = vpack.c.b16 %v1635, %v1634
      %v1752 = vpack.c.b16 %v1637, %v1636
      %v1753 = vpack.c.b16 %v1639, %v1638
      %v1754 = vpack.c.b16 %v1641, %v1640
      %v1755 = vpack.c.b16 %v1643, %v1642
      %v1756 = vpack.c.b16 %v1645, %v1644
      %v1757 = vpack.c.b16 %v1647, %v1646
      %v1758 = vpack.c.b16 %v1649, %v1648
      %v1759 = vpack.c.b16 %v1651, %v1650
      %v1760 = vpack.c.b16 %v1653, %v1652
      %v1761 = vpack.c.b16 %v1655, %v1654
      %v1762 = vpack.c.b16 %v1657, %v1656
      %v1763 = vpack.c.b16 %v1659, %v1658
      %v1764 = vpack.c.b16 %v1661, %v1660
      %v1765 = vpack.c.b16 %v1663, %v1662
      %v1766 = vpack.c.b16 %v1665, %v1664
      %v1767 = vpack.c.b16 %v1667, %v1666
      %v1768 = vpack.c.b16 %v1669, %v1668
      %v1769 = vpack.c.b16 %v1671, %v1670
      %v1770 = vpack.c.b16 %v1673, %v1672
      %v1771 = vpack.c.b16 %v1675, %v1674
      %v1772 = vpack.c.b16 %v1677, %v1676
      %v1773 = vpack.c.b16 %v1679, %v1678
      %v1774 = vpack.c.b16 %v1681, %v1680
      %v1775 = vpack.c.b16 %v1683, %v1682
      %v1776 = vpack.c.b16 %v1685, %v1684
      %v1777 = vpack.c.b16 %v1687, %v1686
      %v1778 = vpack.c.b16 %v1689, %v1688
      %v1779 = vpack.c.b16 %v1691, %v1690
      %v1780 = vpack.c.b16 %v1693, %v1692
      %v1781 = vpack.c.b16 %v1695, %v1694
      %v1782 = vpack.c.b16 %v1697, %v1696
      %v1783 = vpack.c.b16 %v1699, %v1698
      %v1784 = vpack.c.b16 %v1701, %v1700
      %v1785 = vpack.c.b16 %v1703, %v1702
      %v1786 = vpack.c.b16 %v1705, %v1704
      %v1787 = vpack.c.b16 %v1707, %v1706
      %v1788 = vpack.c.b16 %v1709, %v1708
      %v1789 = vpack.c.b16 %v1711, %v1710
      %v1790 = vpack.c.b16 %v1713, %v1712
      %v1791 = vpack.c.b16 %v1715, %v1714
      %v1792 = vpack.c.b16 %v1717, %v1716
      %v1793 = vpack.c.b16 %v1719, %v1718
      %v1794 = vpack.c.b16 %v1721, %v1720
      %v1795 = vpack.c.b16 %v1723, %v1722
      %1868 = vmatprep.subr.bf16.mxu0 0
      %1869 = vmatpush1.bf16.msra.mxu0 %v1724
      %1870 = vmatprep.subr.bf16.mxu0 0
      %1871 = vmatpush1.bf16.msra.mxu0 %v1725
      %1872 = vmatprep.subr.bf16.mxu0 0
      %1873 = vmatpush1.bf16.msra.mxu0 %v1726
      %1874 = vmatprep.subr.bf16.mxu0 0
      %1875 = vmatpush1.bf16.msra.mxu0 %v1727
      %1876 = vmatprep.subr.bf16.mxu0 0
      %1877 = vmatpush1.bf16.msra.mxu0 %v1728
      %1878 = vmatprep.subr.bf16.mxu0 0
      %1879 = vmatpush1.bf16.msra.mxu0 %v1729
      %1880 = vmatprep.subr.bf16.mxu0 0
      %1881 = vmatpush1.bf16.msra.mxu0 %v1730
      %1882 = vmatprep.subr.bf16.mxu0 0
      %1883 = vmatpush1.bf16.msra.mxu0 %v1731
      %1884 = vmatprep.subr.bf16.mxu0 0
      %1885 = vmatpush1.bf16.msra.mxu0 %v1732
      %1886 = vmatprep.subr.bf16.mxu0 0
      %1887 = vmatpush1.bf16.msra.mxu0 %v1733
      %1888 = vmatprep.subr.bf16.mxu0 0
      %1889 = vmatpush1.bf16.msra.mxu0 %v1734
      %1890 = vmatprep.subr.bf16.mxu0 0
      %1891 = vmatpush1.bf16.msra.mxu0 %v1735
      %1892 = vmatprep.subr.bf16.mxu0 0
      %1893 = vmatpush1.bf16.msra.mxu0 %v1736
      %1894 = vmatprep.subr.bf16.mxu0 0
      %1895 = vmatpush1.bf16.msra.mxu0 %v1737
      %1896 = vmatprep.subr.bf16.mxu0 0
      %1897 = vmatpush1.bf16.msra.mxu0 %v1738
      %1898 = vmatprep.subr.bf16.mxu0 0
      %1899 = vmatpush1.bf16.msra.mxu0 %v1739
      %1900 = vmatprep.mubr.bf16.mxu0 %v1149
      %1901 = vmatmul.mubr.bf16.gmra.mrb[0].mxu0 %v1148
      %v1902 = vpop.f32.mrb[0].mxu0
      %v1903 = vadd.f32 0.0, %v1902
      %v1904 = vpop.f32.mrb[0].mxu0
      %v1905 = vpop.f32.mrb[0].mxu0
      %v1906 = vadd.f32 0.0, %v1905
      %v1907 = vpop.f32.mrb[0].mxu0
      %1908 = vmatprep.mubr.bf16.mxu0 %v1158
      %1909 = vmatmul.mubr.bf16.gmra.mrb[0].mxu0 %v1157
      %v1910 = vpop.f32.mrb[0].mxu0
      %v1911 = vadd.f32 0.0, %v1910
      %v1912 = vpop.f32.mrb[0].mxu0
      %v1913 = vpop.f32.mrb[0].mxu0
      %v1914 = vadd.f32 0.0, %v1913
      %v1915 = vpop.f32.mrb[0].mxu0
      %1916 = vmatprep.mubr.bf16.mxu0 %v1167
      %1917 = vmatmul.mubr.bf16.gmra.mrb[0].mxu0 %v1166
      %v1918 = vpop.f32.mrb[0].mxu0
      %v1919 = vadd.f32 0.0, %v1918
      %v1920 = vpop.f32.mrb[0].mxu0
      %v1921 = vpop.f32.mrb[0].mxu0
      %v1922 = vadd.f32 0.0, %v1921
      %v1923 = vpop.f32.mrb[0].mxu0
      %1924 = vmatprep.mubr.bf16.mxu0 %v1176
      %1925 = vmatmul.mubr.bf16.gmra.mrb[0].mxu0 %v1175
      %v1926 = vpop.f32.mrb[0].mxu0
      %v1927 = vadd.f32 0.0, %v1926
      %v1928 = vpop.f32.mrb[0].mxu0
      %v1929 = vpop.f32.mrb[0].mxu0
      %v1930 = vadd.f32 0.0, %v1929
      %v1931 = vpop.f32.mrb[0].mxu0
      %1932 = vmatprep.mubr.bf16.mxu0 %v1185
      %1933 = vmatmul.mubr.bf16.gmra.mrb[0].mxu0 %v1184
      %v1934 = vpop.f32.mrb[0].mxu0
      %v1935 = vadd.f32 0.0, %v1934
      %v1936 = vpop.f32.mrb[0].mxu0
      %v1937 = vpop.f32.mrb[0].mxu0
      %v1938 = vadd.f32 0.0, %v1937
      %v1939 = vpop.f32.mrb[0].mxu0
      %1940 = vmatprep.mubr.bf16.mxu0 %v1194
      %1941 = vmatmul.mubr.bf16.gmra.mrb[0].mxu0 %v1193
      %v1942 = vpop.f32.mrb[0].mxu0
      %v1943 = vadd.f32 0.0, %v1942
      %v1944 = vpop.f32.mrb[0].mxu0
      %v1945 = vpop.f32.mrb[0].mxu0
      %v1946 = vadd.f32 0.0, %v1945
      %v1947 = vpop.f32.mrb[0].mxu0
      %1948 = vmatprep.mubr.bf16.mxu0 %v1203
      %1949 = vmatmul.mubr.bf16.gmra.mrb[0].mxu0 %v1202
      %v1950 = vpop.f32.mrb[0].mxu0
      %v1951 = vadd.f32 0.0, %v1950
      %v1952 = vpop.f32.mrb[0].mxu0
      %v1953 = vpop.f32.mrb[0].mxu0
      %v1954 = vadd.f32 0.0, %v1953
      %v1955 = vpop.f32.mrb[0].mxu0
      %1956 = vmatprep.mubr.bf16.mxu0 %v1212
      %1957 = vmatmul.mubr.bf16.gmra.mrb[0].mxu0 %v1211
      %v1958 = vpop.f32.mrb[0].mxu0
      %v1959 = vadd.f32 0.0, %v1958
      %v1960 = vpop.f32.mrb[0].mxu0
      %v1961 = vpop.f32.mrb[0].mxu0
      %v1962 = vadd.f32 0.0, %v1961
      %v1963 = vpop.f32.mrb[0].mxu0
      %1964 = vmatprep.mubr.bf16.mxu0 %v1221
      %1965 = vmatmul.mubr.bf16.gmra.mrb[0].mxu0 %v1220
      %v1966 = vpop.f32.mrb[0].mxu0
      %v1967 = vadd.f32 0.0, %v1966
      %v1968 = vpop.f32.mrb[0].mxu0
      %v1969 = vpop.f32.mrb[0].mxu0
      %v1970 = vadd.f32 0.0, %v1969
      %v1971 = vpop.f32.mrb[0].mxu0
      %1972 = vmatprep.mubr.bf16.mxu0 %v1230
      %1973 = vmatmul.mubr.bf16.gmra.mrb[0].mxu0 %v1229
      %v1974 = vpop.f32.mrb[0].mxu0
      %v1975 = vadd.f32 0.0, %v1974
      %v1976 = vpop.f32.mrb[0].mxu0
      %v1977 = vpop.f32.mrb[0].mxu0
      %v1978 = vadd.f32 0.0, %v1977
      %v1979 = vpop.f32.mrb[0].mxu0
      %1980 = vmatprep.mubr.bf16.mxu0 %v1239
      %1981 = vmatmul.mubr.bf16.gmra.mrb[0].mxu0 %v1238
      %v1982 = vpop.f32.mrb[0].mxu0
      %v1983 = vadd.f32 0.0, %v1982
      %v1984 = vpop.f32.mrb[0].mxu0
      %v1985 = vpop.f32.mrb[0].mxu0
      %v1986 = vadd.f32 0.0, %v1985
      %v1987 = vpop.f32.mrb[0].mxu0
      %1988 = vmatprep.mubr.bf16.mxu0 %v1248
      %1989 = vmatmul.mubr.bf16.gmra.mrb[0].mxu0 %v1247
      %v1990 = vpop.f32.mrb[0].mxu0
      %v1991 = vadd.f32 0.0, %v1990
      %v1992 = vpop.f32.mrb[0].mxu0
      %v1993 = vpop.f32.mrb[0].mxu0
      %v1994 = vadd.f32 0.0, %v1993
      %v1995 = vpop.f32.mrb[0].mxu0
      %1996 = vmatprep.mubr.bf16.mxu0 %v1257
      %1997 = vmatmul.mubr.bf16.gmra.mrb[0].mxu0 %v1256
      %v1998 = vpop.f32.mrb[0].mxu0
      %v1999 = vadd.f32 0.0, %v1998
      %v2000 = vpop.f32.mrb[0].mxu0
      %v2001 = vpop.f32.mrb[0].mxu0
      %v2002 = vadd.f32 0.0, %v2001
      %v2003 = vpop.f32.mrb[0].mxu0
      %2004 = vmatprep.mubr.bf16.mxu0 %v1266
      %2005 = vmatmul.mubr.bf16.gmra.mrb[0].mxu0 %v1265
      %v2006 = vpop.f32.mrb[0].mxu0
      %v2007 = vadd.f32 0.0, %v2006
      %v2008 = vpop.f32.mrb[0].mxu0
      %v2009 = vpop.f32.mrb[0].mxu0
      %v2010 = vadd.f32 0.0, %v2009
      %v2011 = vpop.f32.mrb[0].mxu0
      %2012 = vmatprep.mubr.bf16.mxu0 %v1275
      %2013 = vmatmul.mubr.bf16.gmra.mrb[0].mxu0 %v1274
      %v2014 = vpop.f32.mrb[0].mxu0
      %v2015 = vadd.f32 0.0, %v2014
      %v2016 = vpop.f32.mrb[0].mxu0
      %v2017 = vpop.f32.mrb[0].mxu0
      %v2018 = vadd.f32 0.0, %v2017
      %v2019 = vpop.f32.mrb[0].mxu0
      %2020 = vmatprep.mubr.bf16.mxu0 %v1284
      %2021 = vmatmul.mubr.bf16.gmra.mrb[0].mxu0 %v1283
      %v2022 = vpop.f32.mrb[0].mxu0
      %v2023 = vadd.f32 0.0, %v2022
      %v2024 = vpop.f32.mrb[0].mxu0
      %v2025 = vpop.f32.mrb[0].mxu0
      %v2026 = vadd.f32 0.0, %v2025
      %v2027 = vpop.f32.mrb[0].mxu0
      %2028 = vdwg.mxu0
      %2029 = vmatprep.subr.bf16.mxu0 0
      %2030 = vmatpush1.bf16.msra.mxu0 %v1740
      %2031 = vmatprep.subr.bf16.mxu0 0
      %2032 = vmatpush1.bf16.msra.mxu0 %v1741
      %2033 = vmatprep.subr.bf16.mxu0 0
      %2034 = vmatpush1.bf16.msra.mxu0 %v1742
      %2035 = vmatprep.subr.bf16.mxu0 0
      %2036 = vmatpush1.bf16.msra.mxu0 %v1743
      %2037 = vmatprep.subr.bf16.mxu0 0
      %2038 = vmatpush1.bf16.msra.mxu0 %v1744
      %2039 = vmatprep.subr.bf16.mxu0 0
      %2040 = vmatpush1.bf16.msra.mxu0 %v1745
      %2041 = vmatprep.subr.bf16.mxu0 0
      %2042 = vmatpush1.bf16.msra.mxu0 %v1746
      %2043 = vmatprep.subr.bf16.mxu0 0
      %2044 = vmatpush1.bf16.msra.mxu0 %v1747
      %2045 = vmatprep.subr.bf16.mxu0 0
      %2046 = vmatpush1.bf16.msra.mxu0 %v1748
      %2047 = vmatprep.subr.bf16.mxu0 0
      %2048 = vmatpush1.bf16.msra.mxu0 %v1749
      %2049 = vmatprep.subr.bf16.mxu0 0
      %2050 = vmatpush1.bf16.msra.mxu0 %v1750
      %2051 = vmatprep.subr.bf16.mxu0 0
      %2052 = vmatpush1.bf16.msra.mxu0 %v1751
      %2053 = vmatprep.subr.bf16.mxu0 0
      %2054 = vmatpush1.bf16.msra.mxu0 %v1752
      %2055 = vmatprep.subr.bf16.mxu0 0
      %2056 = vmatpush1.bf16.msra.mxu0 %v1753
      %2057 = vmatprep.subr.bf16.mxu0 0
      %2058 = vmatpush1.bf16.msra.mxu0 %v1754
      %2059 = vmatprep.subr.bf16.mxu0 0
      %2060 = vmatpush1.bf16.msra.mxu0 %v1755
      %2061 = vmatprep.mubr.bf16.mxu0 %v1151
      %2062 = vmatmul.mubr.bf16.gmra.mrb[0].mxu0 %v1150
      %v2063 = vpop.f32.mrb[0].mxu0
      %v2064 = vadd.f32 %v1903, %v2063
      %v2065 = vpop.f32.mrb[0].mxu0
      %v2066 = vpop.f32.mrb[0].mxu0
      %v2067 = vadd.f32 %v1906, %v2066
      %v2068 = vpop.f32.mrb[0].mxu0
      %2069 = vmatprep.mubr.bf16.mxu0 %v1160
      %2070 = vmatmul.mubr.bf16.gmra.mrb[0].mxu0 %v1159
      %v2071 = vpop.f32.mrb[0].mxu0
      %v2072 = vadd.f32 %v1911, %v2071
      %v2073 = vpop.f32.mrb[0].mxu0
      %v2074 = vpop.f32.mrb[0].mxu0
      %v2075 = vadd.f32 %v1914, %v2074
      %v2076 = vpop.f32.mrb[0].mxu0
      %2077 = vmatprep.mubr.bf16.mxu0 %v1169
      %2078 = vmatmul.mubr.bf16.gmra.mrb[0].mxu0 %v1168
      %v2079 = vpop.f32.mrb[0].mxu0
      %v2080 = vadd.f32 %v1919, %v2079
      %v2081 = vpop.f32.mrb[0].mxu0
      %v2082 = vpop.f32.mrb[0].mxu0
      %v2083 = vadd.f32 %v1922, %v2082
      %v2084 = vpop.f32.mrb[0].mxu0
      %2085 = vmatprep.mubr.bf16.mxu0 %v1178
      %2086 = vmatmul.mubr.bf16.gmra.mrb[0].mxu0 %v1177
      %v2087 = vpop.f32.mrb[0].mxu0
      %v2088 = vadd.f32 %v1927, %v2087
      %v2089 = vpop.f32.mrb[0].mxu0
      %v2090 = vpop.f32.mrb[0].mxu0
      %v2091 = vadd.f32 %v1930, %v2090
      %v2092 = vpop.f32.mrb[0].mxu0
      %2093 = vmatprep.mubr.bf16.mxu0 %v1187
      %2094 = vmatmul.mubr.bf16.gmra.mrb[0].mxu0 %v1186
      %v2095 = vpop.f32.mrb[0].mxu0
      %v2096 = vadd.f32 %v1935, %v2095
      %v2097 = vpop.f32.mrb[0].mxu0
      %v2098 = vpop.f32.mrb[0].mxu0
      %v2099 = vadd.f32 %v1938, %v2098
      %v2100 = vpop.f32.mrb[0].mxu0
      %2101 = vmatprep.mubr.bf16.mxu0 %v1196
      %2102 = vmatmul.mubr.bf16.gmra.mrb[0].mxu0 %v1195
      %v2103 = vpop.f32.mrb[0].mxu0
      %v2104 = vadd.f32 %v1943, %v2103
      %v2105 = vpop.f32.mrb[0].mxu0
      %v2106 = vpop.f32.mrb[0].mxu0
      %v2107 = vadd.f32 %v1946, %v2106
      %v2108 = vpop.f32.mrb[0].mxu0
      %2109 = vmatprep.mubr.bf16.mxu0 %v1205
      %2110 = vmatmul.mubr.bf16.gmra.mrb[0].mxu0 %v1204
      %v2111 = vpop.f32.mrb[0].mxu0
      %v2112 = vadd.f32 %v1951, %v2111
      %v2113 = vpop.f32.mrb[0].mxu0
      %v2114 = vpop.f32.mrb[0].mxu0
      %v2115 = vadd.f32 %v1954, %v2114
      %v2116 = vpop.f32.mrb[0].mxu0
      %2117 = vmatprep.mubr.bf16.mxu0 %v1214
      %2118 = vmatmul.mubr.bf16.gmra.mrb[0].mxu0 %v1213
      %v2119 = vpop.f32.mrb[0].mxu0
      %v2120 = vadd.f32 %v1959, %v2119
      %v2121 = vpop.f32.mrb[0].mxu0
      %v2122 = vpop.f32.mrb[0].mxu0
      %v2123 = vadd.f32 %v1962, %v2122
      %v2124 = vpop.f32.mrb[0].mxu0
      %2125 = vmatprep.mubr.bf16.mxu0 %v1223
      %2126 = vmatmul.mubr.bf16.gmra.mrb[0].mxu0 %v1222
      %v2127 = vpop.f32.mrb[0].mxu0
      %v2128 = vadd.f32 %v1967, %v2127
      %v2129 = vpop.f32.mrb[0].mxu0
      %v2130 = vpop.f32.mrb[0].mxu0
      %v2131 = vadd.f32 %v1970, %v2130
      %v2132 = vpop.f32.mrb[0].mxu0
      %2133 = vmatprep.mubr.bf16.mxu0 %v1232
      %2134 = vmatmul.mubr.bf16.gmra.mrb[0].mxu0 %v1231
      %v2135 = vpop.f32.mrb[0].mxu0
      %v2136 = vadd.f32 %v1975, %v2135
      %v2137 = vpop.f32.mrb[0].mxu0
      %v2138 = vpop.f32.mrb[0].mxu0
      %v2139 = vadd.f32 %v1978, %v2138
      %v2140 = vpop.f32.mrb[0].mxu0
      %2141 = vmatprep.mubr.bf16.mxu0 %v1241
      %2142 = vmatmul.mubr.bf16.gmra.mrb[0].mxu0 %v1240
      %v2143 = vpop.f32.mrb[0].mxu0
      %v2144 = vadd.f32 %v1983, %v2143
      %v2145 = vpop.f32.mrb[0].mxu0
      %v2146 = vpop.f32.mrb[0].mxu0
      %v2147 = vadd.f32 %v1986, %v2146
      %v2148 = vpop.f32.mrb[0].mxu0
      %2149 = vmatprep.mubr.bf16.mxu0 %v1250
      %2150 = vmatmul.mubr.bf16.gmra.mrb[0].mxu0 %v1249
      %v2151 = vpop.f32.mrb[0].mxu0
      %v2152 = vadd.f32 %v1991, %v2151
      %v2153 = vpop.f32.mrb[0].mxu0
      %v2154 = vpop.f32.mrb[0].mxu0
      %v2155 = vadd.f32 %v1994, %v2154
      %v2156 = vpop.f32.mrb[0].mxu0
      %2157 = vmatprep.mubr.bf16.mxu0 %v1259
      %2158 = vmatmul.mubr.bf16.gmra.mrb[0].mxu0 %v1258
      %v2159 = vpop.f32.mrb[0].mxu0
      %v2160 = vadd.f32 %v1999, %v2159
      %v2161 = vpop.f32.mrb[0].mxu0
      %v2162 = vpop.f32.mrb[0].mxu0
      %v2163 = vadd.f32 %v2002, %v2162
      %v2164 = vpop.f32.mrb[0].mxu0
      %2165 = vmatprep.mubr.bf16.mxu0 %v1268
      %2166 = vmatmul.mubr.bf16.gmra.mrb[0].mxu0 %v1267
      %v2167 = vpop.f32.mrb[0].mxu0
      %v2168 = vadd.f32 %v2007, %v2167
      %v2169 = vpop.f32.mrb[0].mxu0
      %v2170 = vpop.f32.mrb[0].mxu0
      %v2171 = vadd.f32 %v2010, %v2170
      %v2172 = vpop.f32.mrb[0].mxu0
      %2173 = vmatprep.mubr.bf16.mxu0 %v1277
      %2174 = vmatmul.mubr.bf16.gmra.mrb[0].mxu0 %v1276
      %v2175 = vpop.f32.mrb[0].mxu0
      %v2176 = vadd.f32 %v2015, %v2175
      %v2177 = vpop.f32.mrb[0].mxu0
      %v2178 = vpop.f32.mrb[0].mxu0
      %v2179 = vadd.f32 %v2018, %v2178
      %v2180 = vpop.f32.mrb[0].mxu0
      %2181 = vmatprep.mubr.bf16.mxu0 %v1286
      %2182 = vmatmul.mubr.bf16.gmra.mrb[0].mxu0 %v1285
      %v2183 = vpop.f32.mrb[0].mxu0
      %v2184 = vadd.f32 %v2023, %v2183
      %v2185 = vpop.f32.mrb[0].mxu0
      %v2186 = vpop.f32.mrb[0].mxu0
      %v2187 = vadd.f32 %v2026, %v2186
      %v2188 = vpop.f32.mrb[0].mxu0
      %2189 = vdwg.mxu0
      %2190 = vmatprep.subr.bf16.mxu0 0
      %2191 = vmatpush1.bf16.msra.mxu0 %v1756
      %2192 = vmatprep.subr.bf16.mxu0 0
      %2193 = vmatpush1.bf16.msra.mxu0 %v1757
      %2194 = vmatprep.subr.bf16.mxu0 0
      %2195 = vmatpush1.bf16.msra.mxu0 %v1758
      %2196 = vmatprep.subr.bf16.mxu0 0
      %2197 = vmatpush1.bf16.msra.mxu0 %v1759
      %2198 = vmatprep.subr.bf16.mxu0 0
      %2199 = vmatpush1.bf16.msra.mxu0 %v1760
      %2200 = vmatprep.subr.bf16.mxu0 0
      %2201 = vmatpush1.bf16.msra.mxu0 %v1761
      %2202 = vmatprep.subr.bf16.mxu0 0
      %2203 = vmatpush1.bf16.msra.mxu0 %v1762
      %2204 = vmatprep.subr.bf16.mxu0 0
      %2205 = vmatpush1.bf16.msra.mxu0 %v1763
      %2206 = vmatprep.subr.bf16.mxu0 0
      %2207 = vmatpush1.bf16.msra.mxu0 %v1764
      %2208 = vmatprep.subr.bf16.mxu0 0
      %2209 = vmatpush1.bf16.msra.mxu0 %v1765
      %2210 = vmatprep.subr.bf16.mxu0 0
      %2211 = vmatpush1.bf16.msra.mxu0 %v1766
      %2212 = vmatprep.subr.bf16.mxu0 0
      %2213 = vmatpush1.bf16.msra.mxu0 %v1767
      %2214 = vmatprep.subr.bf16.mxu0 0
      %2215 = vmatpush1.bf16.msra.mxu0 %v1768
      %2216 = vmatprep.subr.bf16.mxu0 0
      %2217 = vmatpush1.bf16.msra.mxu0 %v1769
      %2218 = vmatprep.subr.bf16.mxu0 0
      %2219 = vmatpush1.bf16.msra.mxu0 %v1770
      %2220 = vmatprep.subr.bf16.mxu0 0
      %2221 = vmatpush1.bf16.msra.mxu0 %v1771
      %2222 = vmatprep.mubr.bf16.mxu0 %v1153
      %2223 = vmatmul.mubr.bf16.gmra.mrb[0].mxu0 %v1152
      %v2224 = vpop.f32.mrb[0].mxu0
      %v2225 = vadd.f32 %v2064, %v2224
      %v2226 = vpop.f32.mrb[0].mxu0
      %v2227 = vpop.f32.mrb[0].mxu0
      %v2228 = vadd.f32 %v2067, %v2227
      %v2229 = vpop.f32.mrb[0].mxu0
      %2230 = vmatprep.mubr.bf16.mxu0 %v1162
      %2231 = vmatmul.mubr.bf16.gmra.mrb[0].mxu0 %v1161
      %v2232 = vpop.f32.mrb[0].mxu0
      %v2233 = vadd.f32 %v2072, %v2232
      %v2234 = vpop.f32.mrb[0].mxu0
      %v2235 = vpop.f32.mrb[0].mxu0
      %v2236 = vadd.f32 %v2075, %v2235
      %v2237 = vpop.f32.mrb[0].mxu0
      %2238 = vmatprep.mubr.bf16.mxu0 %v1171
      %2239 = vmatmul.mubr.bf16.gmra.mrb[0].mxu0 %v1170
      %v2240 = vpop.f32.mrb[0].mxu0
      %v2241 = vadd.f32 %v2080, %v2240
      %v2242 = vpop.f32.mrb[0].mxu0
      %v2243 = vpop.f32.mrb[0].mxu0
      %v2244 = vadd.f32 %v2083, %v2243
      %v2245 = vpop.f32.mrb[0].mxu0
      %2246 = vmatprep.mubr.bf16.mxu0 %v1180
      %2247 = vmatmul.mubr.bf16.gmra.mrb[0].mxu0 %v1179
      %v2248 = vpop.f32.mrb[0].mxu0
      %v2249 = vadd.f32 %v2088, %v2248
      %v2250 = vpop.f32.mrb[0].mxu0
      %v2251 = vpop.f32.mrb[0].mxu0
      %v2252 = vadd.f32 %v2091, %v2251
      %v2253 = vpop.f32.mrb[0].mxu0
      %2254 = vmatprep.mubr.bf16.mxu0 %v1189
      %2255 = vmatmul.mubr.bf16.gmra.mrb[0].mxu0 %v1188
      %v2256 = vpop.f32.mrb[0].mxu0
      %v2257 = vadd.f32 %v2096, %v2256
      %v2258 = vpop.f32.mrb[0].mxu0
      %v2259 = vpop.f32.mrb[0].mxu0
      %v2260 = vadd.f32 %v2099, %v2259
      %v2261 = vpop.f32.mrb[0].mxu0
      %2262 = vmatprep.mubr.bf16.mxu0 %v1198
      %2263 = vmatmul.mubr.bf16.gmra.mrb[0].mxu0 %v1197
      %v2264 = vpop.f32.mrb[0].mxu0
      %v2265 = vadd.f32 %v2104, %v2264
      %v2266 = vpop.f32.mrb[0].mxu0
      %v2267 = vpop.f32.mrb[0].mxu0
      %v2268 = vadd.f32 %v2107, %v2267
      %v2269 = vpop.f32.mrb[0].mxu0
      %2270 = vmatprep.mubr.bf16.mxu0 %v1207
      %2271 = vmatmul.mubr.bf16.gmra.mrb[0].mxu0 %v1206
      %v2272 = vpop.f32.mrb[0].mxu0
      %v2273 = vadd.f32 %v2112, %v2272
      %v2274 = vpop.f32.mrb[0].mxu0
      %v2275 = vpop.f32.mrb[0].mxu0
      %v2276 = vadd.f32 %v2115, %v2275
      %v2277 = vpop.f32.mrb[0].mxu0
      %2278 = vmatprep.mubr.bf16.mxu0 %v1216
      %2279 = vmatmul.mubr.bf16.gmra.mrb[0].mxu0 %v1215
      %v2280 = vpop.f32.mrb[0].mxu0
      %v2281 = vadd.f32 %v2120, %v2280
      %v2282 = vpop.f32.mrb[0].mxu0
      %v2283 = vpop.f32.mrb[0].mxu0
      %v2284 = vadd.f32 %v2123, %v2283
      %v2285 = vpop.f32.mrb[0].mxu0
      %2286 = vmatprep.mubr.bf16.mxu0 %v1225
      %2287 = vmatmul.mubr.bf16.gmra.mrb[0].mxu0 %v1224
      %v2288 = vpop.f32.mrb[0].mxu0
      %v2289 = vadd.f32 %v2128, %v2288
      %v2290 = vpop.f32.mrb[0].mxu0
      %v2291 = vpop.f32.mrb[0].mxu0
      %v2292 = vadd.f32 %v2131, %v2291
      %v2293 = vpop.f32.mrb[0].mxu0
      %2294 = vmatprep.mubr.bf16.mxu0 %v1234
      %2295 = vmatmul.mubr.bf16.gmra.mrb[0].mxu0 %v1233
      %v2296 = vpop.f32.mrb[0].mxu0
      %v2297 = vadd.f32 %v2136, %v2296
      %v2298 = vpop.f32.mrb[0].mxu0
      %v2299 = vpop.f32.mrb[0].mxu0
      %v2300 = vadd.f32 %v2139, %v2299
      %v2301 = vpop.f32.mrb[0].mxu0
      %2302 = vmatprep.mubr.bf16.mxu0 %v1243
      %2303 = vmatmul.mubr.bf16.gmra.mrb[0].mxu0 %v1242
      %v2304 = vpop.f32.mrb[0].mxu0
      %v2305 = vadd.f32 %v2144, %v2304
      %v2306 = vpop.f32.mrb[0].mxu0
      %v2307 = vpop.f32.mrb[0].mxu0
      %v2308 = vadd.f32 %v2147, %v2307
      %v2309 = vpop.f32.mrb[0].mxu0
      %2310 = vmatprep.mubr.bf16.mxu0 %v1252
      %2311 = vmatmul.mubr.bf16.gmra.mrb[0].mxu0 %v1251
      %v2312 = vpop.f32.mrb[0].mxu0
      %v2313 = vadd.f32 %v2152, %v2312
      %v2314 = vpop.f32.mrb[0].mxu0
      %v2315 = vpop.f32.mrb[0].mxu0
      %v2316 = vadd.f32 %v2155, %v2315
      %v2317 = vpop.f32.mrb[0].mxu0
      %2318 = vmatprep.mubr.bf16.mxu0 %v1261
      %2319 = vmatmul.mubr.bf16.gmra.mrb[0].mxu0 %v1260
      %v2320 = vpop.f32.mrb[0].mxu0
      %v2321 = vadd.f32 %v2160, %v2320
      %v2322 = vpop.f32.mrb[0].mxu0
      %v2323 = vpop.f32.mrb[0].mxu0
      %v2324 = vadd.f32 %v2163, %v2323
      %v2325 = vpop.f32.mrb[0].mxu0
      %2326 = vmatprep.mubr.bf16.mxu0 %v1270
      %2327 = vmatmul.mubr.bf16.gmra.mrb[0].mxu0 %v1269
      %v2328 = vpop.f32.mrb[0].mxu0
      %v2329 = vadd.f32 %v2168, %v2328
      %v2330 = vpop.f32.mrb[0].mxu0
      %v2331 = vpop.f32.mrb[0].mxu0
      %v2332 = vadd.f32 %v2171, %v2331
      %v2333 = vpop.f32.mrb[0].mxu0
      %2334 = vmatprep.mubr.bf16.mxu0 %v1279
      %2335 = vmatmul.mubr.bf16.gmra.mrb[0].mxu0 %v1278
      %v2336 = vpop.f32.mrb[0].mxu0
      %v2337 = vadd.f32 %v2176, %v2336
      %v2338 = vpop.f32.mrb[0].mxu0
      %v2339 = vpop.f32.mrb[0].mxu0
      %v2340 = vadd.f32 %v2179, %v2339
      %v2341 = vpop.f32.mrb[0].mxu0
      %2342 = vmatprep.mubr.bf16.mxu0 %v1288
      %2343 = vmatmul.mubr.bf16.gmra.mrb[0].mxu0 %v1287
      %v2344 = vpop.f32.mrb[0].mxu0
      %v2345 = vadd.f32 %v2184, %v2344
      %v2346 = vpop.f32.mrb[0].mxu0
      %v2347 = vpop.f32.mrb[0].mxu0
      %v2348 = vadd.f32 %v2187, %v2347
      %v2349 = vpop.f32.mrb[0].mxu0
      %2350 = vdwg.mxu0
      %2351 = vmatprep.subr.bf16.mxu0 0
      %2352 = vmatpush1.bf16.msra.mxu0 %v1772
      %2353 = vmatprep.subr.bf16.mxu0 0
      %2354 = vmatpush1.bf16.msra.mxu0 %v1773
      %2355 = vmatprep.subr.bf16.mxu0 0
      %2356 = vmatpush1.bf16.msra.mxu0 %v1774
      %2357 = vmatprep.subr.bf16.mxu0 0
      %2358 = vmatpush1.bf16.msra.mxu0 %v1775
      %2359 = vmatprep.subr.bf16.mxu0 0
      %2360 = vmatpush1.bf16.msra.mxu0 %v1776
      %2361 = vmatprep.subr.bf16.mxu0 0
      %2362 = vmatpush1.bf16.msra.mxu0 %v1777
      %2363 = vmatprep.subr.bf16.mxu0 0
      %2364 = vmatpush1.bf16.msra.mxu0 %v1778
      %2365 = vmatprep.subr.bf16.mxu0 0
      %2366 = vmatpush1.bf16.msra.mxu0 %v1779
      %2367 = vmatprep.subr.bf16.mxu0 0
      %2368 = vmatpush1.bf16.msra.mxu0 %v1780
      %2369 = vmatprep.subr.bf16.mxu0 0
      %2370 = vmatpush1.bf16.msra.mxu0 %v1781
      %2371 = vmatprep.subr.bf16.mxu0 0
      %2372 = vmatpush1.bf16.msra.mxu0 %v1782
      %2373 = vmatprep.subr.bf16.mxu0 0
      %2374 = vmatpush1.bf16.msra.mxu0 %v1783
      %2375 = vmatprep.subr.bf16.mxu0 0
      %2376 = vmatpush1.bf16.msra.mxu0 %v1784
      %2377 = vmatprep.subr.bf16.mxu0 0
      %2378 = vmatpush1.bf16.msra.mxu0 %v1785
      %2379 = vmatprep.subr.bf16.mxu0 0
      %2380 = vmatpush1.bf16.msra.mxu0 %v1786
      %2381 = vmatprep.subr.bf16.mxu0 0
      %2382 = vmatpush1.bf16.msra.mxu0 %v1787
      %2383 = vmatprep.mubr.bf16.mxu0 %v1155
      %2384 = vmatmul.mubr.bf16.gmra.mrb[0].mxu0 %v1154
      %v2385 = vpop.f32.mrb[0].mxu0
      %v2386 = vadd.f32 %v2225, %v2385
      %v2387 = vpop.f32.mrb[0].mxu0
      %v2388 = vpop.f32.mrb[0].mxu0
      %v2389 = vadd.f32 %v2228, %v2388
      %v2390 = vpop.f32.mrb[0].mxu0
      %2391 = vmatprep.mubr.bf16.mxu0 %v1164
      %2392 = vmatmul.mubr.bf16.gmra.mrb[0].mxu0 %v1163
      %v2393 = vpop.f32.mrb[0].mxu0
      %v2394 = vadd.f32 %v2233, %v2393
      %v2395 = vpop.f32.mrb[0].mxu0
      %v2396 = vpop.f32.mrb[0].mxu0
      %v2397 = vadd.f32 %v2236, %v2396
      %v2398 = vpop.f32.mrb[0].mxu0
      %2399 = vmatprep.mubr.bf16.mxu0 %v1173
      %2400 = vmatmul.mubr.bf16.gmra.mrb[0].mxu0 %v1172
      %v2401 = vpop.f32.mrb[0].mxu0
      %v2402 = vadd.f32 %v2241, %v2401
      %v2403 = vpop.f32.mrb[0].mxu0
      %v2404 = vpop.f32.mrb[0].mxu0
      %v2405 = vadd.f32 %v2244, %v2404
      %v2406 = vpop.f32.mrb[0].mxu0
      %2407 = vmatprep.mubr.bf16.mxu0 %v1182
      %2408 = vmatmul.mubr.bf16.gmra.mrb[0].mxu0 %v1181
      %v2409 = vpop.f32.mrb[0].mxu0
      %v2410 = vadd.f32 %v2249, %v2409
      %v2411 = vpop.f32.mrb[0].mxu0
      %v2412 = vpop.f32.mrb[0].mxu0
      %v2413 = vadd.f32 %v2252, %v2412
      %v2414 = vpop.f32.mrb[0].mxu0
      %2415 = vmatprep.mubr.bf16.mxu0 %v1191
      %2416 = vmatmul.mubr.bf16.gmra.mrb[0].mxu0 %v1190
      %v2417 = vpop.f32.mrb[0].mxu0
      %v2418 = vadd.f32 %v2257, %v2417
      %v2419 = vpop.f32.mrb[0].mxu0
      %v2420 = vpop.f32.mrb[0].mxu0
      %v2421 = vadd.f32 %v2260, %v2420
      %v2422 = vpop.f32.mrb[0].mxu0
      %2423 = vmatprep.mubr.bf16.mxu0 %v1200
      %2424 = vmatmul.mubr.bf16.gmra.mrb[0].mxu0 %v1199
      %v2425 = vpop.f32.mrb[0].mxu0
      %v2426 = vadd.f32 %v2265, %v2425
      %v2427 = vpop.f32.mrb[0].mxu0
      %v2428 = vpop.f32.mrb[0].mxu0
      %v2429 = vadd.f32 %v2268, %v2428
      %v2430 = vpop.f32.mrb[0].mxu0
      %2431 = vmatprep.mubr.bf16.mxu0 %v1209
      %2432 = vmatmul.mubr.bf16.gmra.mrb[0].mxu0 %v1208
      %v2433 = vpop.f32.mrb[0].mxu0
      %v2434 = vadd.f32 %v2273, %v2433
      %v2435 = vpop.f32.mrb[0].mxu0
      %v2436 = vpop.f32.mrb[0].mxu0
      %v2437 = vadd.f32 %v2276, %v2436
      %v2438 = vpop.f32.mrb[0].mxu0
      %2439 = vmatprep.mubr.bf16.mxu0 %v1218
      %2440 = vmatmul.mubr.bf16.gmra.mrb[0].mxu0 %v1217
      %v2441 = vpop.f32.mrb[0].mxu0
      %v2442 = vadd.f32 %v2281, %v2441
      %v2443 = vpop.f32.mrb[0].mxu0
      %v2444 = vpop.f32.mrb[0].mxu0
      %v2445 = vadd.f32 %v2284, %v2444
      %v2446 = vpop.f32.mrb[0].mxu0
      %2447 = vmatprep.mubr.bf16.mxu0 %v1227
      %2448 = vmatmul.mubr.bf16.gmra.mrb[0].mxu0 %v1226
      %v2449 = vpop.f32.mrb[0].mxu0
      %v2450 = vadd.f32 %v2289, %v2449
      %v2451 = vpop.f32.mrb[0].mxu0
      %v2452 = vpop.f32.mrb[0].mxu0
      %v2453 = vadd.f32 %v2292, %v2452
      %v2454 = vpop.f32.mrb[0].mxu0
      %2455 = vmatprep.mubr.bf16.mxu0 %v1236
      %2456 = vmatmul.mubr.bf16.gmra.mrb[0].mxu0 %v1235
      %v2457 = vpop.f32.mrb[0].mxu0
      %v2458 = vadd.f32 %v2297, %v2457
      %v2459 = vpop.f32.mrb[0].mxu0
      %v2460 = vpop.f32.mrb[0].mxu0
      %v2461 = vadd.f32 %v2300, %v2460
      %v2462 = vpop.f32.mrb[0].mxu0
      %2463 = vmatprep.mubr.bf16.mxu0 %v1245
      %2464 = vmatmul.mubr.bf16.gmra.mrb[0].mxu0 %v1244
      %v2465 = vpop.f32.mrb[0].mxu0
      %v2466 = vadd.f32 %v2305, %v2465
      %v2467 = vpop.f32.mrb[0].mxu0
      %v2468 = vpop.f32.mrb[0].mxu0
      %v2469 = vadd.f32 %v2308, %v2468
      %v2470 = vpop.f32.mrb[0].mxu0
      %2471 = vmatprep.mubr.bf16.mxu0 %v1254
      %2472 = vmatmul.mubr.bf16.gmra.mrb[0].mxu0 %v1253
      %v2473 = vpop.f32.mrb[0].mxu0
      %v2474 = vadd.f32 %v2313, %v2473
      %v2475 = vpop.f32.mrb[0].mxu0
      %v2476 = vpop.f32.mrb[0].mxu0
      %v2477 = vadd.f32 %v2316, %v2476
      %v2478 = vpop.f32.mrb[0].mxu0
      %2479 = vmatprep.mubr.bf16.mxu0 %v1263
      %2480 = vmatmul.mubr.bf16.gmra.mrb[0].mxu0 %v1262
      %v2481 = vpop.f32.mrb[0].mxu0
      %v2482 = vadd.f32 %v2321, %v2481
      %v2483 = vpop.f32.mrb[0].mxu0
      %v2484 = vpop.f32.mrb[0].mxu0
      %v2485 = vadd.f32 %v2324, %v2484
      %v2486 = vpop.f32.mrb[0].mxu0
      %2487 = vmatprep.mubr.bf16.mxu0 %v1272
      %2488 = vmatmul.mubr.bf16.gmra.mrb[0].mxu0 %v1271
      %v2489 = vpop.f32.mrb[0].mxu0
      %v2490 = vadd.f32 %v2329, %v2489
      %v2491 = vpop.f32.mrb[0].mxu0
      %v2492 = vpop.f32.mrb[0].mxu0
      %v2493 = vadd.f32 %v2332, %v2492
      %v2494 = vpop.f32.mrb[0].mxu0
      %2495 = vmatprep.mubr.bf16.mxu0 %v1281
      %2496 = vmatmul.mubr.bf16.gmra.mrb[0].mxu0 %v1280
      %v2497 = vpop.f32.mrb[0].mxu0
      %v2498 = vadd.f32 %v2337, %v2497
      %v2499 = vpop.f32.mrb[0].mxu0
      %v2500 = vpop.f32.mrb[0].mxu0
      %v2501 = vadd.f32 %v2340, %v2500
      %v2502 = vpop.f32.mrb[0].mxu0
      %2503 = vmatprep.mubr.bf16.mxu0 %v1290
      %2504 = vmatmul.mubr.bf16.gmra.mrb[0].mxu0 %v1289
      %v2505 = vpop.f32.mrb[0].mxu0
      %v2506 = vadd.f32 %v2345, %v2505
      %v2507 = vpop.f32.mrb[0].mxu0
      %v2508 = vpop.f32.mrb[0].mxu0
      %v2509 = vadd.f32 %v2348, %v2508
      %v2510 = vpop.f32.mrb[0].mxu0
      %2511 = vdwg.mxu0
      %2512 = vmatprep.subr.bf16.mxu0 0
      %2513 = vmatpush1.bf16.msra.mxu0 %v1788
      %2514 = vmatprep.subr.bf16.mxu0 0
      %2515 = vmatpush1.bf16.msra.mxu0 %v1789
      %2516 = vmatprep.subr.bf16.mxu0 0
      %2517 = vmatpush1.bf16.msra.mxu0 %v1790
      %2518 = vmatprep.subr.bf16.mxu0 0
      %2519 = vmatpush1.bf16.msra.mxu0 %v1791
      %2520 = vmatprep.subr.bf16.mxu0 0
      %2521 = vmatpush1.bf16.msra.mxu0 %v1792
      %2522 = vmatprep.subr.bf16.mxu0 0
      %2523 = vmatpush1.bf16.msra.mxu0 %v1793
      %2524 = vmatprep.subr.bf16.mxu0 0
      %2525 = vmatpush1.bf16.msra.mxu0 %v1794
      %2526 = vmatprep.subr.bf16.mxu0 0
      %2527 = vmatpush1.bf16.msra.mxu0 %v1795
      %2528 = vmatprep.subr.bf16.mxu0 0
      %2529 = vmatpush1.bf16.msra.mxu0 0
      %2530 = vmatprep.subr.bf16.mxu0 0
      %2531 = vmatpush1.bf16.msra.mxu0 0
      %2532 = vmatprep.subr.bf16.mxu0 0
      %2533 = vmatpush1.bf16.msra.mxu0 0
      %2534 = vmatprep.subr.bf16.mxu0 0
      %2535 = vmatpush1.bf16.msra.mxu0 0
      %2536 = vmatprep.subr.bf16.mxu0 0
      %2537 = vmatpush1.bf16.msra.mxu0 0
      %2538 = vmatprep.subr.bf16.mxu0 0
      %2539 = vmatpush1.bf16.msra.mxu0 0
      %2540 = vmatprep.subr.bf16.mxu0 0
      %2541 = vmatpush1.bf16.msra.mxu0 0
      %2542 = vmatprep.subr.bf16.mxu0 0
      %2543 = vmatpush1.bf16.msra.mxu0 0
      %2544 = vmatprep.mubr.bf16.mxu0 0
      %2545 = vmatmul.mubr.bf16.gmra.mrb[0].mxu0 %v1156
      %v2546 = vpop.f32.mrb[0].mxu0
      %v2547 = vadd.f32 %v2386, %v2546
      %v2548 = vpop.f32.mrb[0].mxu0
      %v2549 = vpop.f32.mrb[0].mxu0
      %v2550 = vadd.f32 %v2389, %v2549
      %v2551 = vpop.f32.mrb[0].mxu0
      %2552 = vmatprep.mubr.bf16.mxu0 0
      %2553 = vmatmul.mubr.bf16.gmra.mrb[0].mxu0 %v1165
      %v2554 = vpop.f32.mrb[0].mxu0
      %v2555 = vadd.f32 %v2394, %v2554
      %v2556 = vpop.f32.mrb[0].mxu0
      %v2557 = vpop.f32.mrb[0].mxu0
      %v2558 = vadd.f32 %v2397, %v2557
      %v2559 = vpop.f32.mrb[0].mxu0
      %2560 = vmatprep.mubr.bf16.mxu0 0
      %2561 = vmatmul.mubr.bf16.gmra.mrb[0].mxu0 %v1174
      %v2562 = vpop.f32.mrb[0].mxu0
      %v2563 = vadd.f32 %v2402, %v2562
      %v2564 = vpop.f32.mrb[0].mxu0
      %v2565 = vpop.f32.mrb[0].mxu0
      %v2566 = vadd.f32 %v2405, %v2565
      %v2567 = vpop.f32.mrb[0].mxu0
      %2568 = vmatprep.mubr.bf16.mxu0 0
      %2569 = vmatmul.mubr.bf16.gmra.mrb[0].mxu0 %v1183
      %v2570 = vpop.f32.mrb[0].mxu0
      %v2571 = vadd.f32 %v2410, %v2570
      %v2572 = vpop.f32.mrb[0].mxu0
      %v2573 = vpop.f32.mrb[0].mxu0
      %v2574 = vadd.f32 %v2413, %v2573
      %v2575 = vpop.f32.mrb[0].mxu0
      %2576 = vmatprep.mubr.bf16.mxu0 0
      %2577 = vmatmul.mubr.bf16.gmra.mrb[0].mxu0 %v1192
      %v2578 = vpop.f32.mrb[0].mxu0
      %v2579 = vadd.f32 %v2418, %v2578
      %v2580 = vpop.f32.mrb[0].mxu0
      %v2581 = vpop.f32.mrb[0].mxu0
      %v2582 = vadd.f32 %v2421, %v2581
      %v2583 = vpop.f32.mrb[0].mxu0
      %2584 = vmatprep.mubr.bf16.mxu0 0
      %2585 = vmatmul.mubr.bf16.gmra.mrb[0].mxu0 %v1201
      %v2586 = vpop.f32.mrb[0].mxu0
      %v2587 = vadd.f32 %v2426, %v2586
      %v2588 = vpop.f32.mrb[0].mxu0
      %v2589 = vpop.f32.mrb[0].mxu0
      %v2590 = vadd.f32 %v2429, %v2589
      %v2591 = vpop.f32.mrb[0].mxu0
      %2592 = vmatprep.mubr.bf16.mxu0 0
      %2593 = vmatmul.mubr.bf16.gmra.mrb[0].mxu0 %v1210
      %v2594 = vpop.f32.mrb[0].mxu0
      %v2595 = vadd.f32 %v2434, %v2594
      %v2596 = vpop.f32.mrb[0].mxu0
      %v2597 = vpop.f32.mrb[0].mxu0
      %v2598 = vadd.f32 %v2437, %v2597
      %v2599 = vpop.f32.mrb[0].mxu0
      %2600 = vmatprep.mubr.bf16.mxu0 0
      %2601 = vmatmul.mubr.bf16.gmra.mrb[0].mxu0 %v1219
      %v2602 = vpop.f32.mrb[0].mxu0
      %v2603 = vadd.f32 %v2442, %v2602
      %v2604 = vpop.f32.mrb[0].mxu0
      %v2605 = vpop.f32.mrb[0].mxu0
      %v2606 = vadd.f32 %v2445, %v2605
      %v2607 = vpop.f32.mrb[0].mxu0
      %2608 = vmatprep.mubr.bf16.mxu0 0
      %2609 = vmatmul.mubr.bf16.gmra.mrb[0].mxu0 %v1228
      %v2610 = vpop.f32.mrb[0].mxu0
      %v2611 = vadd.f32 %v2450, %v2610
      %v2612 = vpop.f32.mrb[0].mxu0
      %v2613 = vpop.f32.mrb[0].mxu0
      %v2614 = vadd.f32 %v2453, %v2613
      %v2615 = vpop.f32.mrb[0].mxu0
      %2616 = vmatprep.mubr.bf16.mxu0 0
      %2617 = vmatmul.mubr.bf16.gmra.mrb[0].mxu0 %v1237
      %v2618 = vpop.f32.mrb[0].mxu0
      %v2619 = vadd.f32 %v2458, %v2618
      %v2620 = vpop.f32.mrb[0].mxu0
      %v2621 = vpop.f32.mrb[0].mxu0
      %v2622 = vadd.f32 %v2461, %v2621
      %v2623 = vpop.f32.mrb[0].mxu0
      %2624 = vmatprep.mubr.bf16.mxu0 0
      %2625 = vmatmul.mubr.bf16.gmra.mrb[0].mxu0 %v1246
      %v2626 = vpop.f32.mrb[0].mxu0
      %v2627 = vadd.f32 %v2466, %v2626
      %v2628 = vpop.f32.mrb[0].mxu0
      %v2629 = vpop.f32.mrb[0].mxu0
      %v2630 = vadd.f32 %v2469, %v2629
      %v2631 = vpop.f32.mrb[0].mxu0
      %2632 = vmatprep.mubr.bf16.mxu0 0
      %2633 = vmatmul.mubr.bf16.gmra.mrb[0].mxu0 %v1255
      %v2634 = vpop.f32.mrb[0].mxu0
      %v2635 = vadd.f32 %v2474, %v2634
      %v2636 = vpop.f32.mrb[0].mxu0
      %v2637 = vpop.f32.mrb[0].mxu0
      %v2638 = vadd.f32 %v2477, %v2637
      %v2639 = vpop.f32.mrb[0].mxu0
      %2640 = vmatprep.mubr.bf16.mxu0 0
      %2641 = vmatmul.mubr.bf16.gmra.mrb[0].mxu0 %v1264
      %v2642 = vpop.f32.mrb[0].mxu0
      %v2643 = vadd.f32 %v2482, %v2642
      %v2644 = vpop.f32.mrb[0].mxu0
      %v2645 = vpop.f32.mrb[0].mxu0
      %v2646 = vadd.f32 %v2485, %v2645
      %v2647 = vpop.f32.mrb[0].mxu0
      %2648 = vmatprep.mubr.bf16.mxu0 0
      %2649 = vmatmul.mubr.bf16.gmra.mrb[0].mxu0 %v1273
      %v2650 = vpop.f32.mrb[0].mxu0
      %v2651 = vadd.f32 %v2490, %v2650
      %v2652 = vpop.f32.mrb[0].mxu0
      %v2653 = vpop.f32.mrb[0].mxu0
      %v2654 = vadd.f32 %v2493, %v2653
      %v2655 = vpop.f32.mrb[0].mxu0
      %2656 = vmatprep.mubr.bf16.mxu0 0
      %2657 = vmatmul.mubr.bf16.gmra.mrb[0].mxu0 %v1282
      %v2658 = vpop.f32.mrb[0].mxu0
      %v2659 = vadd.f32 %v2498, %v2658
      %v2660 = vpop.f32.mrb[0].mxu0
      %v2661 = vpop.f32.mrb[0].mxu0
      %v2662 = vadd.f32 %v2501, %v2661
      %v2663 = vpop.f32.mrb[0].mxu0
      %2664 = vmatprep.mubr.bf16.mxu0 0
      %2665 = vmatmul.mubr.bf16.gmra.mrb[0].mxu0 %v1291
      %v2666 = vpop.f32.mrb[0].mxu0
      %v2667 = vadd.f32 %v2506, %v2666
      %v2668 = vpop.f32.mrb[0].mxu0
      %v2669 = vpop.f32.mrb[0].mxu0
      %v2670 = vadd.f32 %v2509, %v2669
      %v2671 = vpop.f32.mrb[0].mxu0
      %2672 = vdwg.mxu0
      %v2673 = vadd.f32 %v364, %v2547
      %v2674 = vadd.f32 %v365, %v2550
      %v2675 = vadd.f32 %v366, %v2555
      %v2676 = vadd.f32 %v367, %v2558
      %v2677 = vadd.f32 %v368, %v2563
      %v2678 = vadd.f32 %v369, %v2566
      %v2679 = vadd.f32 %v370, %v2571
      %v2680 = vadd.f32 %v371, %v2574
      %v2681 = vadd.f32 %v372, %v2579
      %v2682 = vadd.f32 %v373, %v2582
      %v2683 = vadd.f32 %v374, %v2587
      %v2684 = vadd.f32 %v375, %v2590
      %v2685 = vadd.f32 %v376, %v2595
      %v2686 = vadd.f32 %v377, %v2598
      %v2687 = vadd.f32 %v378, %v2603
      %v2688 = vadd.f32 %v379, %v2606
      %v2689 = vadd.f32 %v380, %v2611
      %v2690 = vadd.f32 %v381, %v2614
      %v2691 = vadd.f32 %v382, %v2619
      %v2692 = vadd.f32 %v383, %v2622
      %v2693 = vadd.f32 %v384, %v2627
      %v2694 = vadd.f32 %v385, %v2630
      %v2695 = vadd.f32 %v386, %v2635
      %v2696 = vadd.f32 %v387, %v2638
      %v2697 = vadd.f32 %v388, %v2643
      %v2698 = vadd.f32 %v389, %v2646
      %v2699 = vadd.f32 %v390, %v2651
      %v2700 = vadd.f32 %v391, %v2654
      %v2701 = vadd.f32 %v392, %v2659
      %v2702 = vadd.f32 %v393, %v2662
      %v2703 = vadd.f32 %v394, %v2667
      %v2704 = vadd.f32 %v395, %v2670
      %2705 = vst [vmem:[#allocation2] sm:$0xff] %v2673
      %2706 = vst [vmem:[#allocation2 + $0x8] sm:$0xff] %v2674
      %2707 = vst [vmem:[#allocation2 + $0x10] sm:$0xff] %v2675
      %2708 = vst [vmem:[#allocation2 + $0x18] sm:$0xff] %v2676
      %2709 = vst [vmem:[#allocation2 + $0x20] sm:$0xff] %v2677
      %2710 = vst [vmem:[#allocation2 + $0x28] sm:$0xff] %v2678
      %2711 = vst [vmem:[#allocation2 + $0x30] sm:$0xff] %v2679
      %2712 = vst [vmem:[#allocation2 + $0x38] sm:$0xff] %v2680
      %2713 = vst [vmem:[#allocation2 + $0x40] sm:$0xff] %v2681
      %2714 = vst [vmem:[#allocation2 + $0x48] sm:$0xff] %v2682
      %2715 = vst [vmem:[#allocation2 + $0x50] sm:$0xff] %v2683
      %2716 = vst [vmem:[#allocation2 + $0x58] sm:$0xff] %v2684
      %2717 = vst [vmem:[#allocation2 + $0x60] sm:$0xff] %v2685
      %2718 = vst [vmem:[#allocation2 + $0x68] sm:$0xff] %v2686
      %2719 = vst [vmem:[#allocation2 + $0x70] sm:$0xff] %v2687
      %2720 = vst [vmem:[#allocation2 + $0x78] sm:$0xff] %v2688
      %2721 = vst [vmem:[#allocation2 + $0x80] sm:$0xff] %v2689
      %2722 = vst [vmem:[#allocation2 + $0x88] sm:$0xff] %v2690
      %2723 = vst [vmem:[#allocation2 + $0x90] sm:$0xff] %v2691
      %2724 = vst [vmem:[#allocation2 + $0x98] sm:$0xff] %v2692
      %2725 = vst [vmem:[#allocation2 + $0xa0] sm:$0xff] %v2693
      %2726 = vst [vmem:[#allocation2 + $0xa8] sm:$0xff] %v2694
      %2727 = vst [vmem:[#allocation2 + $0xb0] sm:$0xff] %v2695
      %2728 = vst [vmem:[#allocation2 + $0xb8] sm:$0xff] %v2696
      %2729 = vst [vmem:[#allocation2 + $0xc0] sm:$0xff] %v2697
      %2730 = vst [vmem:[#allocation2 + $0xc8] sm:$0xff] %v2698
      %2731 = vst [vmem:[#allocation2 + $0xd0] sm:$0xff] %v2699
      %2732 = vst [vmem:[#allocation2 + $0xd8] sm:$0xff] %v2700
      %2733 = vst [vmem:[#allocation2 + $0xe0] sm:$0xff] %v2701
      %2734 = vst [vmem:[#allocation2 + $0xe8] sm:$0xff] %v2702
      %2735 = vst [vmem:[#allocation2 + $0xf0] sm:$0xff] %v2703
      %2736 = vst [vmem:[#allocation2 + $0xf8] sm:$0xff] %v2704
      // Predicated region
      $region41: #{resnet_forward.13} parent=35 // pred_check
        %p2737 = pneg %p328
      $region42: #{resnet_forward.13} parent=35 // pred_check_branch
        %2739 = sbr.rel (%p2737) target = $region44
      $region43: #{resnet_forward.13} parent=35 // pred_region
        %v2740 = vld [vmem:[#allocation2] sm:$0xff]
        %v2741 = vld [vmem:[#allocation2 + $0x8] sm:$0xff]
        %v2742 = vld [vmem:[#allocation2 + $0x10] sm:$0xff]
        %v2743 = vld [vmem:[#allocation2 + $0x18] sm:$0xff]
        %v2744 = vld [vmem:[#allocation2 + $0x20] sm:$0xff]
        %v2745 = vld [vmem:[#allocation2 + $0x28] sm:$0xff]
        %v2746 = vld [vmem:[#allocation2 + $0x30] sm:$0xff]
        %v2747 = vld [vmem:[#allocation2 + $0x38] sm:$0xff]
        %v2748 = vld [vmem:[#allocation2 + $0x40] sm:$0xff]
        %v2749 = vld [vmem:[#allocation2 + $0x48] sm:$0xff]
        %v2750 = vld [vmem:[#allocation2 + $0x50] sm:$0xff]
        %v2751 = vld [vmem:[#allocation2 + $0x58] sm:$0xff]
        %v2752 = vld [vmem:[#allocation2 + $0x60] sm:$0xff]
        %v2753 = vld [vmem:[#allocation2 + $0x68] sm:$0xff]
        %v2754 = vld [vmem:[#allocation2 + $0x70] sm:$0xff]
        %v2755 = vld [vmem:[#allocation2 + $0x78] sm:$0xff]
        %v2756 = vld [vmem:[#allocation2 + $0x80] sm:$0xff]
        %v2757 = vld [vmem:[#allocation2 + $0x88] sm:$0xff]
        %v2758 = vld [vmem:[#allocation2 + $0x90] sm:$0xff]
        %v2759 = vld [vmem:[#allocation2 + $0x98] sm:$0xff]
        %v2760 = vld [vmem:[#allocation2 + $0xa0] sm:$0xff]
        %v2761 = vld [vmem:[#allocation2 + $0xa8] sm:$0xff]
        %v2762 = vld [vmem:[#allocation2 + $0xb0] sm:$0xff]
        %v2763 = vld [vmem:[#allocation2 + $0xb8] sm:$0xff]
        %v2764 = vld [vmem:[#allocation2 + $0xc0] sm:$0xff]
        %v2765 = vld [vmem:[#allocation2 + $0xc8] sm:$0xff]
        %v2766 = vld [vmem:[#allocation2 + $0xd0] sm:$0xff]
        %v2767 = vld [vmem:[#allocation2 + $0xd8] sm:$0xff]
        %v2768 = vld [vmem:[#allocation2 + $0xe0] sm:$0xff]
        %v2769 = vld [vmem:[#allocation2 + $0xe8] sm:$0xff]
        %v2770 = vld [vmem:[#allocation2 + $0xf0] sm:$0xff]
        %v2771 = vld [vmem:[#allocation2 + $0xf8] sm:$0xff]
        %v2772 = vld [vmem:[%s308] sm:$0x1]
        %v2774 = vlaneseq
        %v2775 = vshrl.u32 %v2774, 7
        %v2776 = vsub.s32 0, %v2775
        %v2777 = vrot.slane %v2772, %v2776
        %v2779 = vadd.f32 %v2740, %v2777
        %v2780 = vadd.f32 %v2741, %v2777
        %v2781 = vadd.f32 %v2742, %v2777
        %v2782 = vadd.f32 %v2743, %v2777
        %v2783 = vadd.f32 %v2744, %v2777
        %v2784 = vadd.f32 %v2745, %v2777
        %v2785 = vadd.f32 %v2746, %v2777
        %v2786 = vadd.f32 %v2747, %v2777
        %v2787 = vadd.f32 %v2748, %v2777
        %v2788 = vadd.f32 %v2749, %v2777
        %v2789 = vadd.f32 %v2750, %v2777
        %v2790 = vadd.f32 %v2751, %v2777
        %v2791 = vadd.f32 %v2752, %v2777
        %v2792 = vadd.f32 %v2753, %v2777
        %v2793 = vadd.f32 %v2754, %v2777
        %v2794 = vadd.f32 %v2755, %v2777
        %v2795 = vadd.f32 %v2756, %v2777
        %v2796 = vadd.f32 %v2757, %v2777
        %v2797 = vadd.f32 %v2758, %v2777
        %v2798 = vadd.f32 %v2759, %v2777
        %v2799 = vadd.f32 %v2760, %v2777
        %v2800 = vadd.f32 %v2761, %v2777
        %v2801 = vadd.f32 %v2762, %v2777
        %v2802 = vadd.f32 %v2763, %v2777
        %v2803 = vadd.f32 %v2764, %v2777
        %v2804 = vadd.f32 %v2765, %v2777
        %v2805 = vadd.f32 %v2766, %v2777
        %v2806 = vadd.f32 %v2767, %v2777
        %v2807 = vadd.f32 %v2768, %v2777
        %v2808 = vadd.f32 %v2769, %v2777
        %v2809 = vadd.f32 %v2770, %v2777
        %v2810 = vadd.f32 %v2771, %v2777
        %v2811 = vld [vmem:[%s316] sm:$0xf]
        %v2812 = vld [vmem:[%s316 + $0x4] sm:$0xf]
        %v2813 = vld [vmem:[%s316 + $0x8] sm:$0xf]
        %v2814 = vld [vmem:[%s316 + $0xc] sm:$0xf]
        %v2815 = vld [vmem:[%s316 + $0x10] sm:$0xf]
        %v2816 = vld [vmem:[%s316 + $0x14] sm:$0xf]
        %v2817 = vld [vmem:[%s316 + $0x18] sm:$0xf]
        %v2818 = vld [vmem:[%s316 + $0x1c] sm:$0xf]
        %v2819 = vld [vmem:[%s316 + $0x20] sm:$0xf]
        %v2820 = vld [vmem:[%s316 + $0x24] sm:$0xf]
        %v2821 = vld [vmem:[%s316 + $0x28] sm:$0xf]
        %v2822 = vld [vmem:[%s316 + $0x2c] sm:$0xf]
        %v2823 = vld [vmem:[%s316 + $0x30] sm:$0xf]
        %v2824 = vld [vmem:[%s316 + $0x34] sm:$0xf]
        %v2825 = vld [vmem:[%s316 + $0x38] sm:$0xf]
        %v2826 = vld [vmem:[%s316 + $0x3c] sm:$0xf]
        %v2827 = vld [vmem:[%s316 + $0x40] sm:$0xf]
        %v2828 = vld [vmem:[%s316 + $0x44] sm:$0xf]
        %v2829 = vld [vmem:[%s316 + $0x48] sm:$0xf]
        %v2830 = vld [vmem:[%s316 + $0x4c] sm:$0xf]
        %v2831 = vld [vmem:[%s316 + $0x50] sm:$0xf]
        %v2832 = vld [vmem:[%s316 + $0x54] sm:$0xf]
        %v2833 = vld [vmem:[%s316 + $0x58] sm:$0xf]
        %v2834 = vld [vmem:[%s316 + $0x5c] sm:$0xf]
        %v2835 = vld [vmem:[%s316 + $0x60] sm:$0xf]
        %v2836 = vld [vmem:[%s316 + $0x64] sm:$0xf]
        %v2837 = vld [vmem:[%s316 + $0x68] sm:$0xf]
        %v2838 = vld [vmem:[%s316 + $0x6c] sm:$0xf]
        %v2839 = vld [vmem:[%s316 + $0x70] sm:$0xf]
        %v2840 = vld [vmem:[%s316 + $0x74] sm:$0xf]
        %v2841 = vld [vmem:[%s316 + $0x78] sm:$0xf]
        %v2842 = vld [vmem:[%s316 + $0x7c] sm:$0xf]
        %v2843 = vunpack.c.l.bf16 %v2811
        %v2844 = vunpack.c.l.bf16 %v2812
        %v2845 = vunpack.c.l.bf16 %v2813
        %v2846 = vunpack.c.l.bf16 %v2814
        %v2847 = vunpack.c.l.bf16 %v2815
        %v2848 = vunpack.c.l.bf16 %v2816
        %v2849 = vunpack.c.l.bf16 %v2817
        %v2850 = vunpack.c.l.bf16 %v2818
        %v2851 = vunpack.c.l.bf16 %v2819
        %v2852 = vunpack.c.l.bf16 %v2820
        %v2853 = vunpack.c.l.bf16 %v2821
        %v2854 = vunpack.c.l.bf16 %v2822
        %v2855 = vunpack.c.l.bf16 %v2823
        %v2856 = vunpack.c.l.bf16 %v2824
        %v2857 = vunpack.c.l.bf16 %v2825
        %v2858 = vunpack.c.l.bf16 %v2826
        %v2859 = vunpack.c.l.bf16 %v2827
        %v2860 = vunpack.c.l.bf16 %v2828
        %v2861 = vunpack.c.l.bf16 %v2829
        %v2862 = vunpack.c.l.bf16 %v2830
        %v2863 = vunpack.c.l.bf16 %v2831
        %v2864 = vunpack.c.l.bf16 %v2832
        %v2865 = vunpack.c.l.bf16 %v2833
        %v2866 = vunpack.c.l.bf16 %v2834
        %v2867 = vunpack.c.l.bf16 %v2835
        %v2868 = vunpack.c.l.bf16 %v2836
        %v2869 = vunpack.c.l.bf16 %v2837
        %v2870 = vunpack.c.l.bf16 %v2838
        %v2871 = vunpack.c.l.bf16 %v2839
        %v2872 = vunpack.c.l.bf16 %v2840
        %v2873 = vunpack.c.l.bf16 %v2841
        %v2874 = vunpack.c.l.bf16 %v2842
        %v2875 = vadd.f32 %v2779, %v2843
        %v2876 = vadd.f32 %v2780, %v2844
        %v2877 = vadd.f32 %v2781, %v2845
        %v2878 = vadd.f32 %v2782, %v2846
        %v2879 = vadd.f32 %v2783, %v2847
        %v2880 = vadd.f32 %v2784, %v2848
        %v2881 = vadd.f32 %v2785, %v2849
        %v2882 = vadd.f32 %v2786, %v2850
        %v2883 = vadd.f32 %v2787, %v2851
        %v2884 = vadd.f32 %v2788, %v2852
        %v2885 = vadd.f32 %v2789, %v2853
        %v2886 = vadd.f32 %v2790, %v2854
        %v2887 = vadd.f32 %v2791, %v2855
        %v2888 = vadd.f32 %v2792, %v2856
        %v2889 = vadd.f32 %v2793, %v2857
        %v2890 = vadd.f32 %v2794, %v2858
        %v2891 = vadd.f32 %v2795, %v2859
        %v2892 = vadd.f32 %v2796, %v2860
        %v2893 = vadd.f32 %v2797, %v2861
        %v2894 = vadd.f32 %v2798, %v2862
        %v2895 = vadd.f32 %v2799, %v2863
        %v2896 = vadd.f32 %v2800, %v2864
        %v2897 = vadd.f32 %v2801, %v2865
        %v2898 = vadd.f32 %v2802, %v2866
        %v2899 = vadd.f32 %v2803, %v2867
        %v2900 = vadd.f32 %v2804, %v2868
        %v2901 = vadd.f32 %v2805, %v2869
        %v2902 = vadd.f32 %v2806, %v2870
        %v2903 = vadd.f32 %v2807, %v2871
        %v2904 = vadd.f32 %v2808, %v2872
        %v2905 = vadd.f32 %v2809, %v2873
        %v2906 = vadd.f32 %v2810, %v2874
        %v2907 = vmax.f32 %v2875, 0.0
        %v2908 = vmax.f32 %v2876, 0.0
        %v2909 = vmax.f32 %v2877, 0.0
        %v2910 = vmax.f32 %v2878, 0.0
        %v2911 = vmax.f32 %v2879, 0.0
        %v2912 = vmax.f32 %v2880, 0.0
        %v2913 = vmax.f32 %v2881, 0.0
        %v2914 = vmax.f32 %v2882, 0.0
        %v2915 = vmax.f32 %v2883, 0.0
        %v2916 = vmax.f32 %v2884, 0.0
        %v2917 = vmax.f32 %v2885, 0.0
        %v2918 = vmax.f32 %v2886, 0.0
        %v2919 = vmax.f32 %v2887, 0.0
        %v2920 = vmax.f32 %v2888, 0.0
        %v2921 = vmax.f32 %v2889, 0.0
        %v2922 = vmax.f32 %v2890, 0.0
        %v2923 = vmax.f32 %v2891, 0.0
        %v2924 = vmax.f32 %v2892, 0.0
        %v2925 = vmax.f32 %v2893, 0.0
        %v2926 = vmax.f32 %v2894, 0.0
        %v2927 = vmax.f32 %v2895, 0.0
        %v2928 = vmax.f32 %v2896, 0.0
        %v2929 = vmax.f32 %v2897, 0.0
        %v2930 = vmax.f32 %v2898, 0.0
        %v2931 = vmax.f32 %v2899, 0.0
        %v2932 = vmax.f32 %v2900, 0.0
        %v2933 = vmax.f32 %v2901, 0.0
        %v2934 = vmax.f32 %v2902, 0.0
        %v2935 = vmax.f32 %v2903, 0.0
        %v2936 = vmax.f32 %v2904, 0.0
        %v2937 = vmax.f32 %v2905, 0.0
        %v2938 = vmax.f32 %v2906, 0.0
        %v2939 = vpack.c.bf16 %v2908, %v2907
        %v2940 = vpack.c.bf16 %v2910, %v2909
        %v2941 = vpack.c.bf16 %v2912, %v2911
        %v2942 = vpack.c.bf16 %v2914, %v2913
        %v2943 = vpack.c.bf16 %v2916, %v2915
        %v2944 = vpack.c.bf16 %v2918, %v2917
        %v2945 = vpack.c.bf16 %v2920, %v2919
        %v2946 = vpack.c.bf16 %v2922, %v2921
        %v2947 = vpack.c.bf16 %v2924, %v2923
        %v2948 = vpack.c.bf16 %v2926, %v2925
        %v2949 = vpack.c.bf16 %v2928, %v2927
        %v2950 = vpack.c.bf16 %v2930, %v2929
        %v2951 = vpack.c.bf16 %v2932, %v2931
        %v2952 = vpack.c.bf16 %v2934, %v2933
        %v2953 = vpack.c.bf16 %v2936, %v2935
        %v2954 = vpack.c.bf16 %v2938, %v2937
        %v2971 = vunpack.c.l.b16 %v2939
        %v2972 = vunpack.c.h.b16 %v2939
        %v2973 = vunpack.c.l.b16 %v2940
        %v2974 = vunpack.c.h.b16 %v2940
        %v2975 = vunpack.c.l.b16 %v2941
        %v2976 = vunpack.c.h.b16 %v2941
        %v2977 = vunpack.c.l.b16 %v2942
        %v2978 = vunpack.c.h.b16 %v2942
        %v2979 = vunpack.c.l.b16 %v2943
        %v2980 = vunpack.c.h.b16 %v2943
        %v2981 = vunpack.c.l.b16 %v2944
        %v2982 = vunpack.c.h.b16 %v2944
        %v2983 = vunpack.c.l.b16 %v2945
        %v2984 = vunpack.c.h.b16 %v2945
        %v2985 = vunpack.c.l.b16 %v2946
        %v2986 = vunpack.c.h.b16 %v2946
        %v2987 = vunpack.c.l.b16 %v2947
        %v2988 = vunpack.c.h.b16 %v2947
        %v2989 = vunpack.c.l.b16 %v2948
        %v2990 = vunpack.c.h.b16 %v2948
        %v2991 = vunpack.c.l.b16 %v2949
        %v2992 = vunpack.c.h.b16 %v2949
        %v2993 = vunpack.c.l.b16 %v2950
        %v2994 = vunpack.c.h.b16 %v2950
        %v2995 = vunpack.c.l.b16 %v2951
        %v2996 = vunpack.c.h.b16 %v2951
        %v2997 = vunpack.c.l.b16 %v2952
        %v2998 = vunpack.c.h.b16 %v2952
        %v2999 = vunpack.c.l.b16 %v2953
        %v3000 = vunpack.c.h.b16 %v2953
        %v3001 = vunpack.c.l.b16 %v2954
        %v3002 = vunpack.c.h.b16 %v2954
        %v3003 = vpack.c.b16 %v2971, %v2971
        %v3004 = vpack.c.b16 %v2972, %v2972
        %v3005 = vpack.c.b16 %v2973, %v2973
        %v3006 = vpack.c.b16 %v2974, %v2974
        %v3007 = vpack.c.b16 %v2975, %v2975
        %v3008 = vpack.c.b16 %v2976, %v2976
        %v3009 = vpack.c.b16 %v2977, %v2977
        %v3010 = vpack.c.b16 %v2978, %v2978
        %v3011 = vpack.c.b16 %v2979, %v2979
        %v3012 = vpack.c.b16 %v2980, %v2980
        %v3013 = vpack.c.b16 %v2981, %v2981
        %v3014 = vpack.c.b16 %v2982, %v2982
        %v3015 = vpack.c.b16 %v2983, %v2983
        %v3016 = vpack.c.b16 %v2984, %v2984
        %v3017 = vpack.c.b16 %v2985, %v2985
        %v3018 = vpack.c.b16 %v2986, %v2986
        %v3019 = vpack.c.b16 %v2987, %v2987
        %v3020 = vpack.c.b16 %v2988, %v2988
        %v3021 = vpack.c.b16 %v2989, %v2989
        %v3022 = vpack.c.b16 %v2990, %v2990
        %v3023 = vpack.c.b16 %v2991, %v2991
        %v3024 = vpack.c.b16 %v2992, %v2992
        %v3025 = vpack.c.b16 %v2993, %v2993
        %v3026 = vpack.c.b16 %v2994, %v2994
        %v3027 = vpack.c.b16 %v2995, %v2995
        %v3028 = vpack.c.b16 %v2996, %v2996
        %v3029 = vpack.c.b16 %v2997, %v2997
        %v3030 = vpack.c.b16 %v2998, %v2998
        %v3031 = vpack.c.b16 %v2999, %v2999
        %v3032 = vpack.c.b16 %v3000, %v3000
        %v3033 = vpack.c.b16 %v3001, %v3001
        %v3034 = vpack.c.b16 %v3002, %v3002
        %3067 = vst [vmem:[%s325] sm:$0xf] %v3003
        %3068 = vst [vmem:[%s325 + $0x4] sm:$0xf] %v3004
        %3069 = vst [vmem:[%s325 + $0x8] sm:$0xf] %v3005
        %3070 = vst [vmem:[%s325 + $0xc] sm:$0xf] %v3006
        %3071 = vst [vmem:[%s325 + $0x10] sm:$0xf] %v3007
        %3072 = vst [vmem:[%s325 + $0x14] sm:$0xf] %v3008
        %3073 = vst [vmem:[%s325 + $0x18] sm:$0xf] %v3009
        %3074 = vst [vmem:[%s325 + $0x1c] sm:$0xf] %v3010
        %3075 = vst [vmem:[%s325 + $0x20] sm:$0xf] %v3011
        %3076 = vst [vmem:[%s325 + $0x24] sm:$0xf] %v3012
        %3077 = vst [vmem:[%s325 + $0x28] sm:$0xf] %v3013
        %3078 = vst [vmem:[%s325 + $0x2c] sm:$0xf] %v3014
        %3079 = vst [vmem:[%s325 + $0x30] sm:$0xf] %v3015
        %3080 = vst [vmem:[%s325 + $0x34] sm:$0xf] %v3016
        %3081 = vst [vmem:[%s325 + $0x38] sm:$0xf] %v3017
        %3082 = vst [vmem:[%s325 + $0x3c] sm:$0xf] %v3018
        %3083 = vst [vmem:[%s325 + $0x40] sm:$0xf] %v3019
        %3084 = vst [vmem:[%s325 + $0x44] sm:$0xf] %v3020
        %3085 = vst [vmem:[%s325 + $0x48] sm:$0xf] %v3021
        %3086 = vst [vmem:[%s325 + $0x4c] sm:$0xf] %v3022
        %3087 = vst [vmem:[%s325 + $0x50] sm:$0xf] %v3023
        %3088 = vst [vmem:[%s325 + $0x54] sm:$0xf] %v3024
        %3089 = vst [vmem:[%s325 + $0x58] sm:$0xf] %v3025
        %3090 = vst [vmem:[%s325 + $0x5c] sm:$0xf] %v3026
        %3091 = vst [vmem:[%s325 + $0x60] sm:$0xf] %v3027
        %3092 = vst [vmem:[%s325 + $0x64] sm:$0xf] %v3028
        %3093 = vst [vmem:[%s325 + $0x68] sm:$0xf] %v3029
        %3094 = vst [vmem:[%s325 + $0x6c] sm:$0xf] %v3030
        %3095 = vst [vmem:[%s325 + $0x70] sm:$0xf] %v3031
        %3096 = vst [vmem:[%s325 + $0x74] sm:$0xf] %v3032
        %3097 = vst [vmem:[%s325 + $0x78] sm:$0xf] %v3033
        %3098 = vst [vmem:[%s325 + $0x7c] sm:$0xf] %v3034
      $region44: #{resnet_forward.13} parent=35 // pred_fallthru
        _
      %s3099 = smul.u32 32, %s20
      %p3100 = scmp.lt.s32.totalorder %s3099, 63
      %s3101 = scalar_select %p3100, %s3099, 63
      %p3102 = scmp.lt.s32.totalorder %s21, 0
      %s3103 = scalar_select %p3102, %s21, 0
      %s3104 = sadd.s32 %s3103, %s3101
      %s3105 = smul.addr %s3104, 4
      %s3106 = scalar_lea.vmem %s4, %s3105
      // Predicated region
      $region45: #{resnet_forward.13} parent=35 // pred_check
        %p3107 = pneg %p164
      $region46: #{resnet_forward.13} parent=35 // pred_check_branch
        %3109 = sbr.rel (%p3107) target = $region48
      $region47: #{resnet_forward.13} parent=35 // pred_region
        %s3110 = smul.u32 32, %s20
      $region48: #{resnet_forward.13} parent=35 // pred_fallthru
        _
    $region36: #{resnet_forward.13} parent=5 // pred_fallthru
      _
    %p3111 = scmp.le.s32.totalorder 2, %s10
    // Predicated region
    $region49: #{resnet_forward.13} parent=5 // pred_check
      %p3112 = pneg %p3111
    $region50: #{resnet_forward.13} parent=5 // pred_check_branch
      %3114 = sbr.rel (%p3112) target = $region52
    $region51: #{resnet_forward.13} parent=5 // pred_region
      %s3115 = ssub.s32 %s10, 2
      // Predicated region
      $region53: #{resnet_forward.13} parent=51 // pred_check
        %p3116 = pneg %p170
      $region54: #{resnet_forward.13} parent=51 // pred_check_branch
        %3118 = sbr.rel (%p3116) target = $region56
      $region55: #{resnet_forward.13} parent=51 // pred_region
        %s3119 = smul.u32 32, %s23
        %p3120 = scmp.lt.s32.totalorder %s3119, 63
        %s3121 = scalar_select %p3120, %s3119, 63
        %p3122 = scmp.lt.s32.totalorder %s24, 0
        %s3123 = scalar_select %p3122, %s24, 0
        %s3124 = sadd.s32 %s3123, %s3121
        %s3125 = smul.addr %s3124, 4
        %s3126 = scalar_lea.vmem %s4, %s3125
      $region56: #{resnet_forward.13} parent=51 // pred_fallthru
        _
    $region52: #{resnet_forward.13} parent=5 // pred_fallthru
      _
  $region6: #{resnet_forward.13} parent=0 // loop_footer
    %s14 = sadd.s32 1, %s10
  $region7: #{resnet_forward.13} parent=0 // loop_footer_branch
    %9 = sbr.rel target = $region3
  $region8: #{resnet_forward.13} parent=0 // loop_exit
    _

// kernel: resnet_forward.17
$region0: #{resnet_forward.17}
  #allocation0 [shape = 'u32[]', space=smem, size = 0x4, offset = 0x4, fixed_abs, tag = 'smem constant byte address 0x4 - core index']
  #allocation1 [shape = 'u32[144,128]{1,0:T(1,128)}', space=vmem, size = 0x12000, scoped, tag = 'internal scratch']
  #allocation2 [shape = 'f32[64,128]{1,0:T(8,128)}', space=vmem, size = 0x8000, scoped, tag = 'scratch operand']
  %s0 = inlined_call_operand.vmem [shape: bf16[128,1152], index: 0, kind: input, shape index: {}]
  %s1 = inlined_call_operand.vmem [shape: bf16[1152,128], index: 1, kind: input, shape index: {}]
  %s2 = inlined_call_operand.vmem [shape: f32[1,128], index: 2, kind: input, shape index: {}]
  %s3 = inlined_call_operand.vmem [shape: bf16[128,128], index: 3, kind: output, shape index: {}]
  %s4 = sld [smem:[#allocation0]]
  $region53: #{resnet_forward.17} parent=0
    _
  %s6 = ssub.s32 1, %s4
  %s7 = scalar_select 0, %s6, %s4
  loop: start=0, step=1, limit=4
  $region2: #{resnet_forward.17} parent=0 // loop_pre_header
    _
  $region3: #{resnet_forward.17} parent=0 // loop_header
    %s9 = sphi 0, %s13
    %p10 = scmp.ge.s32.totalorder %s9, 4
    %s16 = sphi 0, %s35
    %s17 = sphi 0, %s31
    %s18 = sphi 0, %s27
    %s19 = sphi 0, %s16
    %s20 = sphi 0, %s17
    %s21 = sphi 0, %s18
    %s22 = sphi 0, %s19
    %s23 = sphi 0, %s20
    %s24 = sphi 0, %s21
    %s40 = sphi 0, %s42
    %s43 = sphi 0, %s40
    %s44 = sphi 0, %s43
    %s60 = sphi 0, %s44
    %s68 = sphi 0, %s70
    %s71 = sphi 0, %s68
    %s72 = sphi 0, %s71
    %s88 = sphi 0, %s72
    %s94 = sphi 0, %s96
    %s97 = sphi 0, %s94
    %s98 = sphi 0, %s97
    %s114 = sphi 0, %s98
    %s122 = sphi 0, %s124
    %s125 = sphi 0, %s122
    %s126 = sphi 0, %s125
    %s142 = sphi 0, %s126
  $region4: #{resnet_forward.17} parent=0 // loop_header_branch
    %12 = sbr.rel (%p10) target = $region8
  $region5: #{resnet_forward.17} parent=0 // loop_body
    %s14 = ssub.s32 %s9, 1
    %s15 = ssub.s32 %s9, 2
    %s25 = sadd.s32 1, %s18
    %p26 = scmp.ge.s32.totalorder %s25, 1
    %s27 = scalar_select %p26, 0, %s25
    %s28 = sadd.s32 1, %s17
    %s29 = scalar_select %p26, %s28, %s17
    %p30 = scmp.ge.s32.totalorder %s29, 1
    %s31 = scalar_select %p30, 0, %s29
    %s32 = sadd.s32 1, %s16
    %s33 = scalar_select %p30, %s32, %s16
    %p34 = scmp.ge.s32.totalorder %s33, 2
    %s35 = scalar_select %p34, 0, %s33
    %s36 = ssub.s32 %s16, %s35
    %s37 = ssub.s32 %s18, %s27
    %s38 = sor.u32 %s36, %s37
    %p39 = scmp.eq.s32.totalorder %s38, 0
    %s41 = sadd.s32 %s40, 1
    %s42 = scalar_select %p39, %s40, %s41
    %p45 = pneg %p39
    %p46 = scmp.eq.s32.totalorder %s9, 1
    %p47 = por %p45, %p46
    %p48 = scmp.ne.s32.totalorder %s40, %s43
    %p49 = scmp.eq.s32.totalorder %s9, 0
    %p50 = por %p48, %p49
    %p51 = scmp.ne.s32.totalorder %s40, %s43
    %p52 = scmp.eq.s32.totalorder %s14, 1
    %p53 = por %p51, %p52
    %p54 = scmp.ne.s32.totalorder %s43, %s44
    %p55 = scmp.eq.s32.totalorder %s14, 0
    %p56 = por %p54, %p55
    %p57 = scmp.ne.s32.totalorder %s43, %s44
    %p58 = scmp.eq.s32.totalorder %s15, 1
    %p59 = por %p57, %p58
    %p61 = scmp.ne.s32.totalorder %s44, %s60
    %p62 = scmp.eq.s32.totalorder %s15, 0
    %p63 = por %p61, %p62
    %s64 = ssub.s32 %s18, %s27
    %s65 = ssub.s32 %s17, %s31
    %s66 = sor.u32 %s64, %s65
    %p67 = scmp.eq.s32.totalorder %s66, 0
    %s69 = sadd.s32 %s68, 1
    %s70 = scalar_select %p67, %s68, %s69
    %p73 = pneg %p67
    %p74 = scmp.eq.s32.totalorder %s9, 1
    %p75 = por %p73, %p74
    %p76 = scmp.ne.s32.totalorder %s68, %s71
    %p77 = scmp.eq.s32.totalorder %s9, 0
    %p78 = por %p76, %p77
    %p79 = scmp.ne.s32.totalorder %s68, %s71
    %p80 = scmp.eq.s32.totalorder %s14, 1
    %p81 = por %p79, %p80
    %p82 = scmp.ne.s32.totalorder %s71, %s72
    %p83 = scmp.eq.s32.totalorder %s14, 0
    %p84 = por %p82, %p83
    %p85 = scmp.ne.s32.totalorder %s71, %s72
    %p86 = scmp.eq.s32.totalorder %s15, 1
    %p87 = por %p85, %p86
    %p89 = scmp.ne.s32.totalorder %s72, %s88
    %p90 = scmp.eq.s32.totalorder %s15, 0
    %p91 = por %p89, %p90
    %s92 = ssub.s32 %s17, %s31
    %p93 = scmp.eq.s32.totalorder %s92, 0
    %s95 = sadd.s32 %s94, 1
    %s96 = scalar_select %p93, %s94, %s95
    %p99 = pneg %p93
    %p100 = scmp.eq.s32.totalorder %s9, 1
    %p101 = por %p99, %p100
    %p102 = scmp.ne.s32.totalorder %s94, %s97
    %p103 = scmp.eq.s32.totalorder %s9, 0
    %p104 = por %p102, %p103
    %p105 = scmp.ne.s32.totalorder %s94, %s97
    %p106 = scmp.eq.s32.totalorder %s14, 1
    %p107 = por %p105, %p106
    %p108 = scmp.ne.s32.totalorder %s97, %s98
    %p109 = scmp.eq.s32.totalorder %s14, 0
    %p110 = por %p108, %p109
    %p111 = scmp.ne.s32.totalorder %s97, %s98
    %p112 = scmp.eq.s32.totalorder %s15, 1
    %p113 = por %p111, %p112
    %p115 = scmp.ne.s32.totalorder %s98, %s114
    %p116 = scmp.eq.s32.totalorder %s15, 0
    %p117 = por %p115, %p116
    %s118 = ssub.s32 %s16, %s35
    %s119 = ssub.s32 %s17, %s31
    %s120 = sor.u32 %s118, %s119
    %p121 = scmp.eq.s32.totalorder %s120, 0
    %s123 = sadd.s32 %s122, 1
    %s124 = scalar_select %p121, %s122, %s123
    %p127 = pneg %p121
    %p128 = scmp.eq.s32.totalorder %s9, 1
    %p129 = por %p127, %p128
    %p130 = scmp.ne.s32.totalorder %s122, %s125
    %p131 = scmp.eq.s32.totalorder %s9, 0
    %p132 = por %p130, %p131
    %p133 = scmp.ne.s32.totalorder %s122, %s125
    %p134 = scmp.eq.s32.totalorder %s14, 1
    %p135 = por %p133, %p134
    %p136 = scmp.ne.s32.totalorder %s125, %s126
    %p137 = scmp.eq.s32.totalorder %s14, 0
    %p138 = por %p136, %p137
    %p139 = scmp.ne.s32.totalorder %s125, %s126
    %p140 = scmp.eq.s32.totalorder %s15, 1
    %p141 = por %p139, %p140
    %p143 = scmp.ne.s32.totalorder %s126, %s142
    %p144 = scmp.eq.s32.totalorder %s15, 0
    %p145 = por %p143, %p144
    %p146 = scmp.le.s32.totalorder 1, %s9
    %p147 = scmp.lt.s32.totalorder %s9, 3
    %p148 = pnand %p146, %p147
    %p149 = pneg %p148
    // Predicated region
    $region9: #{resnet_forward.17} parent=5 // pred_check
      _
    $region10: #{resnet_forward.17} parent=5 // pred_check_branch
      %151 = sbr.rel (%p148) target = $region12
    $region11: #{resnet_forward.17} parent=5 // pred_region
      %s152 = ssub.s32 %s9, 1
      // Predicated region
      $region13: #{resnet_forward.17} parent=11 // pred_check
        %p153 = pneg %p84
      $region14: #{resnet_forward.17} parent=11 // pred_check_branch
        %155 = sbr.rel (%p153) target = $region16
      $region15: #{resnet_forward.17} parent=11 // pred_region
        %s156 = smul.u32 144, %s21
        %p157 = scmp.lt.s32.totalorder %s156, 143
        %s158 = scalar_select %p157, %s156, 143
        %p159 = scmp.lt.s32.totalorder %s20, 0
        %s160 = scalar_select %p159, %s20, 0
        %s161 = sadd.s32 %s160, %s158
        %s162 = smul.addr %s161, 4
        %s163 = scalar_lea.vmem %s1, %s162
        %s164 = smul.u32 144, %s21
      $region16: #{resnet_forward.17} parent=11 // pred_fallthru
        _
      // Predicated region
      $region17: #{resnet_forward.17} parent=11 // pred_check
        %p165 = pneg %p110
      $region18: #{resnet_forward.17} parent=11 // pred_check_branch
        %167 = sbr.rel (%p165) target = $region20
      $region19: #{resnet_forward.17} parent=11 // pred_region
        %p168 = scmp.lt.s32.totalorder %s20, 0
        %s169 = scalar_select %p168, %s20, 0
        %s170 = scalar_lea.vmem %s2, %s169
      $region20: #{resnet_forward.17} parent=11 // pred_fallthru
        _
    $region12: #{resnet_forward.17} parent=5 // pred_fallthru
      _
    %p171 = scmp.lt.s32.totalorder %s9, 2
    // Predicated region
    $region21: #{resnet_forward.17} parent=5 // pred_check
      %p172 = pneg %p171
    $region22: #{resnet_forward.17} parent=5 // pred_check_branch
      %174 = sbr.rel (%p172) target = $region24
    $region23: #{resnet_forward.17} parent=5 // pred_region
      // Predicated region
      $region25: #{resnet_forward.17} parent=23 // pred_check
        %p175 = pneg %p50
      $region26: #{resnet_forward.17} parent=23 // pred_check_branch
        %177 = sbr.rel (%p175) target = $region28
      $region27: #{resnet_forward.17} parent=23 // pred_region
        %s178 = smul.u32 8, %s16
        %s179 = smul.u32 9, %s18
        %p180 = scmp.lt.s32.totalorder %s178, 15
        %s181 = scalar_select %p180, %s178, 15
        %p182 = scmp.lt.s32.totalorder %s179, 8
        %s183 = scalar_select %p182, %s179, 8
        %s184 = smul.addr %s181, 9
        %s185 = sadd.s32 %s183, %s184
        %s186 = smul.addr %s185, 4
        %s187 = scalar_lea.vmem %s0, %s186
        %s188 = smul.u32 8, %s16
        %s189 = smul.u32 9, %s18
      $region28: #{resnet_forward.17} parent=23 // pred_fallthru
        _
    $region24: #{resnet_forward.17} parent=5 // pred_fallthru
      _
    %p190 = scmp.le.s32.totalorder 1, %s9
    %p191 = scmp.lt.s32.totalorder %s9, 3
    %p192 = pnand %p190, %p191
    %p193 = pneg %p192
    // Predicated region
    $region29: #{resnet_forward.17} parent=5 // pred_check
      _
    $region30: #{resnet_forward.17} parent=5 // pred_check_branch
      %195 = sbr.rel (%p192) target = $region32
    $region31: #{resnet_forward.17} parent=5 // pred_region
      %s196 = ssub.s32 %s9, 1
      %s197 = smul.u32 8, %s19
      %s198 = smul.u32 9, %s21
      %p199 = scmp.lt.s32.totalorder %s197, 15
      %s200 = scalar_select %p199, %s197, 15
      %p201 = scmp.lt.s32.totalorder %s198, 8
      %s202 = scalar_select %p201, %s198, 8
      %s203 = smul.addr %s200, 9
      %s204 = sadd.s32 %s202, %s203
      %s205 = smul.addr %s204, 4
      %s206 = scalar_lea.vmem %s0, %s205
      %p207 = pneg %p56
      %p208 = pneg %p53
      %s209 = smul.u32 144, %s21
      %p210 = scmp.lt.s32.totalorder %s209, 143
      %s211 = scalar_select %p210, %s209, 143
      %p212 = scmp.lt.s32.totalorder %s20, 0
      %s213 = scalar_select %p212, %s20, 0
      %s214 = sadd.s32 %s213, %s211
      %s215 = smul.addr %s214, 4
      %s216 = scalar_lea.vmem %s1, %s215
      %p217 = pneg %p84
      %p218 = pneg %p81
      %p219 = scmp.lt.s32.totalorder %s20, 0
      %s220 = scalar_select %p219, %s20, 0
      %s221 = scalar_lea.vmem %s2, %s220
      %p222 = pneg %p110
      %p223 = pneg %p107
      %p224 = pneg %p138
      %p225 = pneg %p135
      %s226 = smul.u32 8, %s19
      %p227 = scmp.lt.s32.totalorder %s226, 15
      %s228 = scalar_select %p227, %s226, 15
      %p229 = scmp.lt.s32.totalorder %s20, 0
      %s230 = scalar_select %p229, %s20, 0
      %s231 = sadd.s32 %s230, %s228
      %s232 = smul.addr %s231, 4
      %s233 = scalar_lea.vmem %s3, %s232
      %s234 = smul.u32 8, %s19
      %s235 = smul.u32 9, %s21
      %p236 = scmp.lt.s32.totalorder %s234, 15
      %s237 = scalar_select %p236, %s234, 15
      %p238 = scmp.lt.s32.totalorder %s235, 8
      %s239 = scalar_select %p238, %s235, 8
      %s240 = smul.addr %s237, 9
      %s241 = sadd.s32 %s239, %s240
      %s242 = smul.addr %s241, 4
      %s243 = scalar_lea.vmem %s0, %s242
      %s244 = smul.u32 8, %s19
      %s245 = smul.u32 9, %s21
      %s246 = smul.u32 144, %s21
      %p247 = scmp.lt.s32.totalorder %s246, 143
      %s248 = scalar_select %p247, %s246, 143
      %p249 = scmp.lt.s32.totalorder %s20, 0
      %s250 = scalar_select %p249, %s20, 0
      %s251 = sadd.s32 %s250, %s248
      %s252 = smul.addr %s251, 4
      %s253 = scalar_lea.vmem %s1, %s252
      %s254 = smul.u32 144, %s21
      %p255 = scmp.lt.s32.totalorder %s20, 0
      %s256 = scalar_select %p255, %s20, 0
      %s257 = scalar_lea.vmem %s2, %s256
      %s258 = smul.u32 8, %s19
      %p259 = scmp.lt.s32.totalorder %s258, 15
      %s260 = scalar_select %p259, %s258, 15
      %p261 = scmp.lt.s32.totalorder %s20, 0
      %s262 = scalar_select %p261, %s20, 0
      %s263 = sadd.s32 %s262, %s260
      %s264 = smul.addr %s263, 4
      %s265 = scalar_lea.vmem %s3, %s264
      %s266 = smul.u32 8, %s19
      %p268 = scmp.eq.s32.totalorder %s21, 0
      // Predicated region
      $region33: #{resnet_forward.17} parent=31 // pred_check
        %p269 = pneg %p268
      $region34: #{resnet_forward.17} parent=31 // pred_check_branch
        %271 = sbr.rel (%p269) target = $region36
      $region35: #{resnet_forward.17} parent=31 // pred_region
        %272 = vst [vmem:[#allocation2] sm:$0xff] 0.0
        %273 = vst [vmem:[#allocation2 + $0x8] sm:$0xff] 0.0
        %274 = vst [vmem:[#allocation2 + $0x10] sm:$0xff] 0.0
        %275 = vst [vmem:[#allocation2 + $0x18] sm:$0xff] 0.0
        %276 = vst [vmem:[#allocation2 + $0x20] sm:$0xff] 0.0
        %277 = vst [vmem:[#allocation2 + $0x28] sm:$0xff] 0.0
        %278 = vst [vmem:[#allocation2 + $0x30] sm:$0xff] 0.0
        %279 = vst [vmem:[#allocation2 + $0x38] sm:$0xff] 0.0
      $region36: #{resnet_forward.17} parent=31 // pred_fallthru
        _
      %v280 = vld [vmem:[#allocation2] sm:$0xff]
      %v281 = vld [vmem:[#allocation2 + $0x8] sm:$0xff]
      %v282 = vld [vmem:[#allocation2 + $0x10] sm:$0xff]
      %v283 = vld [vmem:[#allocation2 + $0x18] sm:$0xff]
      %v284 = vld [vmem:[#allocation2 + $0x20] sm:$0xff]
      %v285 = vld [vmem:[#allocation2 + $0x28] sm:$0xff]
      %v286 = vld [vmem:[#allocation2 + $0x30] sm:$0xff]
      %v287 = vld [vmem:[#allocation2 + $0x38] sm:$0xff]
      %v288 = vld [vmem:[%s243] sm:$0xff]
      %v289 = vld [vmem:[%s243 + $0x8] sm:$0xff]
      %v290 = vld [vmem:[%s243 + $0x10] sm:$0xff]
      %v291 = vld [vmem:[%s243 + $0x18] sm:$0xff]
      %v292 = vld [vmem:[%s243 + $0x20] sm:$0xf]
      %v293 = vld [vmem:[%s243 + $0x24] sm:$0xff]
      %v294 = vld [vmem:[%s243 + $0x2c] sm:$0xff]
      %v295 = vld [vmem:[%s243 + $0x34] sm:$0xff]
      %v296 = vld [vmem:[%s243 + $0x3c] sm:$0xff]
      %v297 = vld [vmem:[%s243 + $0x44] sm:$0xf]
      %v298 = vld [vmem:[%s243 + $0x48] sm:$0xff]
      %v299 = vld [vmem:[%s243 + $0x50] sm:$0xff]
      %v300 = vld [vmem:[%s243 + $0x58] sm:$0xff]
      %v301 = vld [vmem:[%s243 + $0x60] sm:$0xff]
      %v302 = vld [vmem:[%s243 + $0x68] sm:$0xf]
      %v303 = vld [vmem:[%s243 + $0x6c] sm:$0xff]
      %v304 = vld [vmem:[%s243 + $0x74] sm:$0xff]
      %v305 = vld [vmem:[%s243 + $0x7c] sm:$0xff]
      %v306 = vld [vmem:[%s243 + $0x84] sm:$0xff]
      %v307 = vld [vmem:[%s243 + $0x8c] sm:$0xf]
      %v308 = vld [vmem:[%s243 + $0x90] sm:$0xff]
      %v309 = vld [vmem:[%s243 + $0x98] sm:$0xff]
      %v310 = vld [vmem:[%s243 + $0xa0] sm:$0xff]
      %v311 = vld [vmem:[%s243 + $0xa8] sm:$0xff]
      %v312 = vld [vmem:[%s243 + $0xb0] sm:$0xf]
      %v313 = vld [vmem:[%s243 + $0xb4] sm:$0xff]
      %v314 = vld [vmem:[%s243 + $0xbc] sm:$0xff]
      %v315 = vld [vmem:[%s243 + $0xc4] sm:$0xff]
      %v316 = vld [vmem:[%s243 + $0xcc] sm:$0xff]
      %v317 = vld [vmem:[%s243 + $0xd4] sm:$0xf]
      %v318 = vld [vmem:[%s243 + $0xd8] sm:$0xff]
      %v319 = vld [vmem:[%s243 + $0xe0] sm:$0xff]
      %v320 = vld [vmem:[%s243 + $0xe8] sm:$0xff]
      %v321 = vld [vmem:[%s243 + $0xf0] sm:$0xff]
      %v322 = vld [vmem:[%s243 + $0xf8] sm:$0xf]
      %v323 = vld [vmem:[%s243 + $0xfc] sm:$0xff]
      %v324 = vld [vmem:[%s243 + $0x104] sm:$0xff]
      %v325 = vld [vmem:[%s243 + $0x10c] sm:$0xff]
      %v326 = vld [vmem:[%s243 + $0x114] sm:$0xff]
      %v327 = vld [vmem:[%s243 + $0x11c] sm:$0xf]
      %v328 = vld [vmem:[%s253] sm:$0xf]
      %v329 = vld [vmem:[%s253 + $0x4] sm:$0xf]
      %v330 = vld [vmem:[%s253 + $0x8] sm:$0xf]
      %v331 = vld [vmem:[%s253 + $0xc] sm:$0xf]
      %v332 = vld [vmem:[%s253 + $0x10] sm:$0xf]
      %v333 = vld [vmem:[%s253 + $0x14] sm:$0xf]
      %v334 = vld [vmem:[%s253 + $0x18] sm:$0xf]
      %v335 = vld [vmem:[%s253 + $0x1c] sm:$0xf]
      %v336 = vld [vmem:[%s253 + $0x20] sm:$0xf]
      %v337 = vld [vmem:[%s253 + $0x24] sm:$0xf]
      %v338 = vld [vmem:[%s253 + $0x28] sm:$0xf]
      %v339 = vld [vmem:[%s253 + $0x2c] sm:$0xf]
      %v340 = vld [vmem:[%s253 + $0x30] sm:$0xf]
      %v341 = vld [vmem:[%s253 + $0x34] sm:$0xf]
      %v342 = vld [vmem:[%s253 + $0x38] sm:$0xf]
      %v343 = vld [vmem:[%s253 + $0x3c] sm:$0xf]
      %v344 = vld [vmem:[%s253 + $0x40] sm:$0xf]
      %v345 = vld [vmem:[%s253 + $0x44] sm:$0xf]
      %v346 = vld [vmem:[%s253 + $0x48] sm:$0xf]
      %v347 = vld [vmem:[%s253 + $0x4c] sm:$0xf]
      %v348 = vld [vmem:[%s253 + $0x50] sm:$0xf]
      %v349 = vld [vmem:[%s253 + $0x54] sm:$0xf]
      %v350 = vld [vmem:[%s253 + $0x58] sm:$0xf]
      %v351 = vld [vmem:[%s253 + $0x5c] sm:$0xf]
      %v352 = vld [vmem:[%s253 + $0x60] sm:$0xf]
      %v353 = vld [vmem:[%s253 + $0x64] sm:$0xf]
      %v354 = vld [vmem:[%s253 + $0x68] sm:$0xf]
      %v355 = vld [vmem:[%s253 + $0x6c] sm:$0xf]
      %v356 = vld [vmem:[%s253 + $0x70] sm:$0xf]
      %v357 = vld [vmem:[%s253 + $0x74] sm:$0xf]
      %v358 = vld [vmem:[%s253 + $0x78] sm:$0xf]
      %v359 = vld [vmem:[%s253 + $0x7c] sm:$0xf]
      %v360 = vld [vmem:[%s253 + $0x80] sm:$0xf]
      %v361 = vld [vmem:[%s253 + $0x84] sm:$0xf]
      %v362 = vld [vmem:[%s253 + $0x88] sm:$0xf]
      %v363 = vld [vmem:[%s253 + $0x8c] sm:$0xf]
      %v364 = vld [vmem:[%s253 + $0x90] sm:$0xf]
      %v365 = vld [vmem:[%s253 + $0x94] sm:$0xf]
      %v366 = vld [vmem:[%s253 + $0x98] sm:$0xf]
      %v367 = vld [vmem:[%s253 + $0x9c] sm:$0xf]
      %v368 = vld [vmem:[%s253 + $0xa0] sm:$0xf]
      %v369 = vld [vmem:[%s253 + $0xa4] sm:$0xf]
      %v370 = vld [vmem:[%s253 + $0xa8] sm:$0xf]
      %v371 = vld [vmem:[%s253 + $0xac] sm:$0xf]
      %v372 = vld [vmem:[%s253 + $0xb0] sm:$0xf]
      %v373 = vld [vmem:[%s253 + $0xb4] sm:$0xf]
      %v374 = vld [vmem:[%s253 + $0xb8] sm:$0xf]
      %v375 = vld [vmem:[%s253 + $0xbc] sm:$0xf]
      %v376 = vld [vmem:[%s253 + $0xc0] sm:$0xf]
      %v377 = vld [vmem:[%s253 + $0xc4] sm:$0xf]
      %v378 = vld [vmem:[%s253 + $0xc8] sm:$0xf]
      %v379 = vld [vmem:[%s253 + $0xcc] sm:$0xf]
      %v380 = vld [vmem:[%s253 + $0xd0] sm:$0xf]
      %v381 = vld [vmem:[%s253 + $0xd4] sm:$0xf]
      %v382 = vld [vmem:[%s253 + $0xd8] sm:$0xf]
      %v383 = vld [vmem:[%s253 + $0xdc] sm:$0xf]
      %v384 = vld [vmem:[%s253 + $0xe0] sm:$0xf]
      %v385 = vld [vmem:[%s253 + $0xe4] sm:$0xf]
      %v386 = vld [vmem:[%s253 + $0xe8] sm:$0xf]
      %v387 = vld [vmem:[%s253 + $0xec] sm:$0xf]
      %v388 = vld [vmem:[%s253 + $0xf0] sm:$0xf]
      %v389 = vld [vmem:[%s253 + $0xf4] sm:$0xf]
      %v390 = vld [vmem:[%s253 + $0xf8] sm:$0xf]
      %v391 = vld [vmem:[%s253 + $0xfc] sm:$0xf]
      %v392 = vld [vmem:[%s253 + $0x100] sm:$0xf]
      %v393 = vld [vmem:[%s253 + $0x104] sm:$0xf]
      %v394 = vld [vmem:[%s253 + $0x108] sm:$0xf]
      %v395 = vld [vmem:[%s253 + $0x10c] sm:$0xf]
      %v396 = vld [vmem:[%s253 + $0x110] sm:$0xf]
      %v397 = vld [vmem:[%s253 + $0x114] sm:$0xf]
      %v398 = vld [vmem:[%s253 + $0x118] sm:$0xf]
      %v399 = vld [vmem:[%s253 + $0x11c] sm:$0xf]
      %v400 = vld [vmem:[%s253 + $0x120] sm:$0xf]
      %v401 = vld [vmem:[%s253 + $0x124] sm:$0xf]
      %v402 = vld [vmem:[%s253 + $0x128] sm:$0xf]
      %v403 = vld [vmem:[%s253 + $0x12c] sm:$0xf]
      %v404 = vld [vmem:[%s253 + $0x130] sm:$0xf]
      %v405 = vld [vmem:[%s253 + $0x134] sm:$0xf]
      %v406 = vld [vmem:[%s253 + $0x138] sm:$0xf]
      %v407 = vld [vmem:[%s253 + $0x13c] sm:$0xf]
      %v408 = vld [vmem:[%s253 + $0x140] sm:$0xf]
      %v409 = vld [vmem:[%s253 + $0x144] sm:$0xf]
      %v410 = vld [vmem:[%s253 + $0x148] sm:$0xf]
      %v411 = vld [vmem:[%s253 + $0x14c] sm:$0xf]
      %v412 = vld [vmem:[%s253 + $0x150] sm:$0xf]
      %v413 = vld [vmem:[%s253 + $0x154] sm:$0xf]
      %v414 = vld [vmem:[%s253 + $0x158] sm:$0xf]
      %v415 = vld [vmem:[%s253 + $0x15c] sm:$0xf]
      %v416 = vld [vmem:[%s253 + $0x160] sm:$0xf]
      %v417 = vld [vmem:[%s253 + $0x164] sm:$0xf]
      %v418 = vld [vmem:[%s253 + $0x168] sm:$0xf]
      %v419 = vld [vmem:[%s253 + $0x16c] sm:$0xf]
      %v420 = vld [vmem:[%s253 + $0x170] sm:$0xf]
      %v421 = vld [vmem:[%s253 + $0x174] sm:$0xf]
      %v422 = vld [vmem:[%s253 + $0x178] sm:$0xf]
      %v423 = vld [vmem:[%s253 + $0x17c] sm:$0xf]
      %v424 = vld [vmem:[%s253 + $0x180] sm:$0xf]
      %v425 = vld [vmem:[%s253 + $0x184] sm:$0xf]
      %v426 = vld [vmem:[%s253 + $0x188] sm:$0xf]
      %v427 = vld [vmem:[%s253 + $0x18c] sm:$0xf]
      %v428 = vld [vmem:[%s253 + $0x190] sm:$0xf]
      %v429 = vld [vmem:[%s253 + $0x194] sm:$0xf]
      %v430 = vld [vmem:[%s253 + $0x198] sm:$0xf]
      %v431 = vld [vmem:[%s253 + $0x19c] sm:$0xf]
      %v432 = vld [vmem:[%s253 + $0x1a0] sm:$0xf]
      %v433 = vld [vmem:[%s253 + $0x1a4] sm:$0xf]
      %v434 = vld [vmem:[%s253 + $0x1a8] sm:$0xf]
      %v435 = vld [vmem:[%s253 + $0x1ac] sm:$0xf]
      %v436 = vld [vmem:[%s253 + $0x1b0] sm:$0xf]
      %v437 = vld [vmem:[%s253 + $0x1b4] sm:$0xf]
      %v438 = vld [vmem:[%s253 + $0x1b8] sm:$0xf]
      %v439 = vld [vmem:[%s253 + $0x1bc] sm:$0xf]
      %v440 = vld [vmem:[%s253 + $0x1c0] sm:$0xf]
      %v441 = vld [vmem:[%s253 + $0x1c4] sm:$0xf]
      %v442 = vld [vmem:[%s253 + $0x1c8] sm:$0xf]
      %v443 = vld [vmem:[%s253 + $0x1cc] sm:$0xf]
      %v444 = vld [vmem:[%s253 + $0x1d0] sm:$0xf]
      %v445 = vld [vmem:[%s253 + $0x1d4] sm:$0xf]
      %v446 = vld [vmem:[%s253 + $0x1d8] sm:$0xf]
      %v447 = vld [vmem:[%s253 + $0x1dc] sm:$0xf]
      %v448 = vld [vmem:[%s253 + $0x1e0] sm:$0xf]
      %v449 = vld [vmem:[%s253 + $0x1e4] sm:$0xf]
      %v450 = vld [vmem:[%s253 + $0x1e8] sm:$0xf]
      %v451 = vld [vmem:[%s253 + $0x1ec] sm:$0xf]
      %v452 = vld [vmem:[%s253 + $0x1f0] sm:$0xf]
      %v453 = vld [vmem:[%s253 + $0x1f4] sm:$0xf]
      %v454 = vld [vmem:[%s253 + $0x1f8] sm:$0xf]
      %v455 = vld [vmem:[%s253 + $0x1fc] sm:$0xf]
      %v456 = vld [vmem:[%s253 + $0x200] sm:$0xf]
      %v457 = vld [vmem:[%s253 + $0x204] sm:$0xf]
      %v458 = vld [vmem:[%s253 + $0x208] sm:$0xf]
      %v459 = vld [vmem:[%s253 + $0x20c] sm:$0xf]
      %v460 = vld [vmem:[%s253 + $0x210] sm:$0xf]
      %v461 = vld [vmem:[%s253 + $0x214] sm:$0xf]
      %v462 = vld [vmem:[%s253 + $0x218] sm:$0xf]
      %v463 = vld [vmem:[%s253 + $0x21c] sm:$0xf]
      %v464 = vld [vmem:[%s253 + $0x220] sm:$0xf]
      %v465 = vld [vmem:[%s253 + $0x224] sm:$0xf]
      %v466 = vld [vmem:[%s253 + $0x228] sm:$0xf]
      %v467 = vld [vmem:[%s253 + $0x22c] sm:$0xf]
      %v468 = vld [vmem:[%s253 + $0x230] sm:$0xf]
      %v469 = vld [vmem:[%s253 + $0x234] sm:$0xf]
      %v470 = vld [vmem:[%s253 + $0x238] sm:$0xf]
      %v471 = vld [vmem:[%s253 + $0x23c] sm:$0xf]
      %v512 = vunpack.c.l.b16 %v288
      %v513 = vunpack.c.h.b16 %v288
      %v514 = vunpack.c.l.b16 %v289
      %v515 = vunpack.c.h.b16 %v289
      %v516 = vunpack.c.l.b16 %v290
      %v517 = vunpack.c.h.b16 %v290
      %v518 = vunpack.c.l.b16 %v291
      %v519 = vunpack.c.h.b16 %v291
      %v520 = vunpack.c.l.b16 %v292
      %v521 = vunpack.c.l.b16 %v293
      %v522 = vunpack.c.h.b16 %v293
      %v523 = vunpack.c.l.b16 %v294
      %v524 = vunpack.c.h.b16 %v294
      %v525 = vunpack.c.l.b16 %v295
      %v526 = vunpack.c.h.b16 %v295
      %v527 = vunpack.c.l.b16 %v296
      %v528 = vunpack.c.h.b16 %v296
      %v529 = vunpack.c.l.b16 %v297
      %v530 = vunpack.c.l.b16 %v298
      %v531 = vunpack.c.h.b16 %v298
      %v532 = vunpack.c.l.b16 %v299
      %v533 = vunpack.c.h.b16 %v299
      %v534 = vunpack.c.l.b16 %v300
      %v535 = vunpack.c.h.b16 %v300
      %v536 = vunpack.c.l.b16 %v301
      %v537 = vunpack.c.h.b16 %v301
      %v538 = vunpack.c.l.b16 %v302
      %v539 = vunpack.c.l.b16 %v303
      %v540 = vunpack.c.h.b16 %v303
      %v541 = vunpack.c.l.b16 %v304
      %v542 = vunpack.c.h.b16 %v304
      %v543 = vunpack.c.l.b16 %v305
      %v544 = vunpack.c.h.b16 %v305
      %v545 = vunpack.c.l.b16 %v306
      %v546 = vunpack.c.h.b16 %v306
      %v547 = vunpack.c.l.b16 %v307
      %v548 = vunpack.c.l.b16 %v308
      %v549 = vunpack.c.h.b16 %v308
      %v550 = vunpack.c.l.b16 %v309
      %v551 = vunpack.c.h.b16 %v309
      %v552 = vunpack.c.l.b16 %v310
      %v553 = vunpack.c.h.b16 %v310
      %v554 = vunpack.c.l.b16 %v311
      %v555 = vunpack.c.h.b16 %v311
      %v556 = vunpack.c.l.b16 %v312
      %v557 = vunpack.c.l.b16 %v313
      %v558 = vunpack.c.h.b16 %v313
      %v559 = vunpack.c.l.b16 %v314
      %v560 = vunpack.c.h.b16 %v314
      %v561 = vunpack.c.l.b16 %v315
      %v562 = vunpack.c.h.b16 %v315
      %v563 = vunpack.c.l.b16 %v316
      %v564 = vunpack.c.h.b16 %v316
      %v565 = vunpack.c.l.b16 %v317
      %v566 = vunpack.c.l.b16 %v318
      %v567 = vunpack.c.h.b16 %v318
      %v568 = vunpack.c.l.b16 %v319
      %v569 = vunpack.c.h.b16 %v319
      %v570 = vunpack.c.l.b16 %v320
      %v571 = vunpack.c.h.b16 %v320
      %v572 = vunpack.c.l.b16 %v321
      %v573 = vunpack.c.h.b16 %v321
      %v574 = vunpack.c.l.b16 %v322
      %v575 = vunpack.c.l.b16 %v323
      %v576 = vunpack.c.h.b16 %v323
      %v577 = vunpack.c.l.b16 %v324
      %v578 = vunpack.c.h.b16 %v324
      %v579 = vunpack.c.l.b16 %v325
      %v580 = vunpack.c.h.b16 %v325
      %v581 = vunpack.c.l.b16 %v326
      %v582 = vunpack.c.h.b16 %v326
      %v583 = vunpack.c.l.b16 %v327
      %v584 = vpack.c.b16 %v521, %v512
      %v585 = vpack.c.b16 %v522, %v513
      %v586 = vpack.c.b16 %v523, %v514
      %v587 = vpack.c.b16 %v524, %v515
      %v588 = vpack.c.b16 %v525, %v516
      %v589 = vpack.c.b16 %v526, %v517
      %v590 = vpack.c.b16 %v527, %v518
      %v591 = vpack.c.b16 %v528, %v519
      %v592 = vpack.c.b16 %v529, %v520
      %v593 = vpack.c.b16 %v539, %v530
      %v594 = vpack.c.b16 %v540, %v531
      %v595 = vpack.c.b16 %v541, %v532
      %v596 = vpack.c.b16 %v542, %v533
      %v597 = vpack.c.b16 %v543, %v534
      %v598 = vpack.c.b16 %v544, %v535
      %v599 = vpack.c.b16 %v545, %v536
      %v600 = vpack.c.b16 %v546, %v537
      %v601 = vpack.c.b16 %v547, %v538
      %v602 = vpack.c.b16 %v557, %v548
      %v603 = vpack.c.b16 %v558, %v549
      %v604 = vpack.c.b16 %v559, %v550
      %v605 = vpack.c.b16 %v560, %v551
      %v606 = vpack.c.b16 %v561, %v552
      %v607 = vpack.c.b16 %v562, %v553
      %v608 = vpack.c.b16 %v563, %v554
      %v609 = vpack.c.b16 %v564, %v555
      %v610 = vpack.c.b16 %v565, %v556
      %v611 = vpack.c.b16 %v575, %v566
      %v612 = vpack.c.b16 %v576, %v567
      %v613 = vpack.c.b16 %v577, %v568
      %v614 = vpack.c.b16 %v578, %v569
      %v615 = vpack.c.b16 %v579, %v570
      %v616 = vpack.c.b16 %v580, %v571
      %v617 = vpack.c.b16 %v581, %v572
      %v618 = vpack.c.b16 %v582, %v573
      %v619 = vpack.c.b16 %v583, %v574
      %v800 = vunpack.c.l.b16 %v328
      %v801 = vunpack.c.l.b16 %v329
      %v802 = vunpack.c.l.b16 %v330
      %v803 = vunpack.c.l.b16 %v331
      %v804 = vunpack.c.l.b16 %v332
      %v805 = vunpack.c.l.b16 %v333
      %v806 = vunpack.c.l.b16 %v334
      %v807 = vunpack.c.l.b16 %v335
      %v808 = vunpack.c.l.b16 %v336
      %v809 = vunpack.c.l.b16 %v337
      %v810 = vunpack.c.l.b16 %v338
      %v811 = vunpack.c.l.b16 %v339
      %v812 = vunpack.c.l.b16 %v340
      %v813 = vunpack.c.l.b16 %v341
      %v814 = vunpack.c.l.b16 %v342
      %v815 = vunpack.c.l.b16 %v343
      %v816 = vunpack.c.l.b16 %v344
      %v817 = vunpack.c.l.b16 %v345
      %v818 = vunpack.c.l.b16 %v346
      %v819 = vunpack.c.l.b16 %v347
      %v820 = vunpack.c.l.b16 %v348
      %v821 = vunpack.c.l.b16 %v349
      %v822 = vunpack.c.l.b16 %v350
      %v823 = vunpack.c.l.b16 %v351
      %v824 = vunpack.c.l.b16 %v352
      %v825 = vunpack.c.l.b16 %v353
      %v826 = vunpack.c.l.b16 %v354
      %v827 = vunpack.c.l.b16 %v355
      %v828 = vunpack.c.l.b16 %v356
      %v829 = vunpack.c.l.b16 %v357
      %v830 = vunpack.c.l.b16 %v358
      %v831 = vunpack.c.l.b16 %v359
      %v832 = vunpack.c.l.b16 %v360
      %v833 = vunpack.c.l.b16 %v361
      %v834 = vunpack.c.l.b16 %v362
      %v835 = vunpack.c.l.b16 %v363
      %v836 = vunpack.c.l.b16 %v364
      %v837 = vunpack.c.l.b16 %v365
      %v838 = vunpack.c.l.b16 %v366
      %v839 = vunpack.c.l.b16 %v367
      %v840 = vunpack.c.l.b16 %v368
      %v841 = vunpack.c.l.b16 %v369
      %v842 = vunpack.c.l.b16 %v370
      %v843 = vunpack.c.l.b16 %v371
      %v844 = vunpack.c.l.b16 %v372
      %v845 = vunpack.c.l.b16 %v373
      %v846 = vunpack.c.l.b16 %v374
      %v847 = vunpack.c.l.b16 %v375
      %v848 = vunpack.c.l.b16 %v376
      %v849 = vunpack.c.l.b16 %v377
      %v850 = vunpack.c.l.b16 %v378
      %v851 = vunpack.c.l.b16 %v379
      %v852 = vunpack.c.l.b16 %v380
      %v853 = vunpack.c.l.b16 %v381
      %v854 = vunpack.c.l.b16 %v382
      %v855 = vunpack.c.l.b16 %v383
      %v856 = vunpack.c.l.b16 %v384
      %v857 = vunpack.c.l.b16 %v385
      %v858 = vunpack.c.l.b16 %v386
      %v859 = vunpack.c.l.b16 %v387
      %v860 = vunpack.c.l.b16 %v388
      %v861 = vunpack.c.l.b16 %v389
      %v862 = vunpack.c.l.b16 %v390
      %v863 = vunpack.c.l.b16 %v391
      %v864 = vunpack.c.l.b16 %v392
      %v865 = vunpack.c.l.b16 %v393
      %v866 = vunpack.c.l.b16 %v394
      %v867 = vunpack.c.l.b16 %v395
      %v868 = vunpack.c.l.b16 %v396
      %v869 = vunpack.c.l.b16 %v397
      %v870 = vunpack.c.l.b16 %v398
      %v871 = vunpack.c.l.b16 %v399
      %v872 = vunpack.c.l.b16 %v400
      %v873 = vunpack.c.l.b16 %v401
      %v874 = vunpack.c.l.b16 %v402
      %v875 = vunpack.c.l.b16 %v403
      %v876 = vunpack.c.l.b16 %v404
      %v877 = vunpack.c.l.b16 %v405
      %v878 = vunpack.c.l.b16 %v406
      %v879 = vunpack.c.l.b16 %v407
      %v880 = vunpack.c.l.b16 %v408
      %v881 = vunpack.c.l.b16 %v409
      %v882 = vunpack.c.l.b16 %v410
      %v883 = vunpack.c.l.b16 %v411
      %v884 = vunpack.c.l.b16 %v412
      %v885 = vunpack.c.l.b16 %v413
      %v886 = vunpack.c.l.b16 %v414
      %v887 = vunpack.c.l.b16 %v415
      %v888 = vunpack.c.l.b16 %v416
      %v889 = vunpack.c.l.b16 %v417
      %v890 = vunpack.c.l.b16 %v418
      %v891 = vunpack.c.l.b16 %v419
      %v892 = vunpack.c.l.b16 %v420
      %v893 = vunpack.c.l.b16 %v421
      %v894 = vunpack.c.l.b16 %v422
      %v895 = vunpack.c.l.b16 %v423
      %v896 = vunpack.c.l.b16 %v424
      %v897 = vunpack.c.l.b16 %v425
      %v898 = vunpack.c.l.b16 %v426
      %v899 = vunpack.c.l.b16 %v427
      %v900 = vunpack.c.l.b16 %v428
      %v901 = vunpack.c.l.b16 %v429
      %v902 = vunpack.c.l.b16 %v430
      %v903 = vunpack.c.l.b16 %v431
      %v904 = vunpack.c.l.b16 %v432
      %v905 = vunpack.c.l.b16 %v433
      %v906 = vunpack.c.l.b16 %v434
      %v907 = vunpack.c.l.b16 %v435
      %v908 = vunpack.c.l.b16 %v436
      %v909 = vunpack.c.l.b16 %v437
      %v910 = vunpack.c.l.b16 %v438
      %v911 = vunpack.c.l.b16 %v439
      %v912 = vunpack.c.l.b16 %v440
      %v913 = vunpack.c.l.b16 %v441
      %v914 = vunpack.c.l.b16 %v442
      %v915 = vunpack.c.l.b16 %v443
      %v916 = vunpack.c.l.b16 %v444
      %v917 = vunpack.c.l.b16 %v445
      %v918 = vunpack.c.l.b16 %v446
      %v919 = vunpack.c.l.b16 %v447
      %v920 = vunpack.c.l.b16 %v448
      %v921 = vunpack.c.l.b16 %v449
      %v922 = vunpack.c.l.b16 %v450
      %v923 = vunpack.c.l.b16 %v451
      %v924 = vunpack.c.l.b16 %v452
      %v925 = vunpack.c.l.b16 %v453
      %v926 = vunpack.c.l.b16 %v454
      %v927 = vunpack.c.l.b16 %v455
      %v928 = vunpack.c.l.b16 %v456
      %v929 = vunpack.c.l.b16 %v457
      %v930 = vunpack.c.l.b16 %v458
      %v931 = vunpack.c.l.b16 %v459
      %v932 = vunpack.c.l.b16 %v460
      %v933 = vunpack.c.l.b16 %v461
      %v934 = vunpack.c.l.b16 %v462
      %v935 = vunpack.c.l.b16 %v463
      %v936 = vunpack.c.l.b16 %v464
      %v937 = vunpack.c.l.b16 %v465
      %v938 = vunpack.c.l.b16 %v466
      %v939 = vunpack.c.l.b16 %v467
      %v940 = vunpack.c.l.b16 %v468
      %v941 = vunpack.c.l.b16 %v469
      %v942 = vunpack.c.l.b16 %v470
      %v943 = vunpack.c.l.b16 %v471
      %v944 = vpack.c.b16 %v801, %v800
      %v945 = vpack.c.b16 %v803, %v802
      %v946 = vpack.c.b16 %v805, %v804
      %v947 = vpack.c.b16 %v807, %v806
      %v948 = vpack.c.b16 %v809, %v808
      %v949 = vpack.c.b16 %v811, %v810
      %v950 = vpack.c.b16 %v813, %v812
      %v951 = vpack.c.b16 %v815, %v814
      %v952 = vpack.c.b16 %v817, %v816
      %v953 = vpack.c.b16 %v819, %v818
      %v954 = vpack.c.b16 %v821, %v820
      %v955 = vpack.c.b16 %v823, %v822
      %v956 = vpack.c.b16 %v825, %v824
      %v957 = vpack.c.b16 %v827, %v826
      %v958 = vpack.c.b16 %v829, %v828
      %v959 = vpack.c.b16 %v831, %v830
      %v960 = vpack.c.b16 %v833, %v832
      %v961 = vpack.c.b16 %v835, %v834
      %v962 = vpack.c.b16 %v837, %v836
      %v963 = vpack.c.b16 %v839, %v838
      %v964 = vpack.c.b16 %v841, %v840
      %v965 = vpack.c.b16 %v843, %v842
      %v966 = vpack.c.b16 %v845, %v844
      %v967 = vpack.c.b16 %v847, %v846
      %v968 = vpack.c.b16 %v849, %v848
      %v969 = vpack.c.b16 %v851, %v850
      %v970 = vpack.c.b16 %v853, %v852
      %v971 = vpack.c.b16 %v855, %v854
      %v972 = vpack.c.b16 %v857, %v856
      %v973 = vpack.c.b16 %v859, %v858
      %v974 = vpack.c.b16 %v861, %v860
      %v975 = vpack.c.b16 %v863, %v862
      %v976 = vpack.c.b16 %v865, %v864
      %v977 = vpack.c.b16 %v867, %v866
      %v978 = vpack.c.b16 %v869, %v868
      %v979 = vpack.c.b16 %v871, %v870
      %v980 = vpack.c.b16 %v873, %v872
      %v981 = vpack.c.b16 %v875, %v874
      %v982 = vpack.c.b16 %v877, %v876
      %v983 = vpack.c.b16 %v879, %v878
      %v984 = vpack.c.b16 %v881, %v880
      %v985 = vpack.c.b16 %v883, %v882
      %v986 = vpack.c.b16 %v885, %v884
      %v987 = vpack.c.b16 %v887, %v886
      %v988 = vpack.c.b16 %v889, %v888
      %v989 = vpack.c.b16 %v891, %v890
      %v990 = vpack.c.b16 %v893, %v892
      %v991 = vpack.c.b16 %v895, %v894
      %v992 = vpack.c.b16 %v897, %v896
      %v993 = vpack.c.b16 %v899, %v898
      %v994 = vpack.c.b16 %v901, %v900
      %v995 = vpack.c.b16 %v903, %v902
      %v996 = vpack.c.b16 %v905, %v904
      %v997 = vpack.c.b16 %v907, %v906
      %v998 = vpack.c.b16 %v909, %v908
      %v999 = vpack.c.b16 %v911, %v910
      %v1000 = vpack.c.b16 %v913, %v912
      %v1001 = vpack.c.b16 %v915, %v914
      %v1002 = vpack.c.b16 %v917, %v916
      %v1003 = vpack.c.b16 %v919, %v918
      %v1004 = vpack.c.b16 %v921, %v920
      %v1005 = vpack.c.b16 %v923, %v922
      %v1006 = vpack.c.b16 %v925, %v924
      %v1007 = vpack.c.b16 %v927, %v926
      %v1008 = vpack.c.b16 %v929, %v928
      %v1009 = vpack.c.b16 %v931, %v930
      %v1010 = vpack.c.b16 %v933, %v932
      %v1011 = vpack.c.b16 %v935, %v934
      %v1012 = vpack.c.b16 %v937, %v936
      %v1013 = vpack.c.b16 %v939, %v938
      %v1014 = vpack.c.b16 %v941, %v940
      %v1015 = vpack.c.b16 %v943, %v942
      %1088 = vmatprep.subr.bf16.mxu0 0
      %1089 = vmatpush1.bf16.msra.mxu0 %v944
      %1090 = vmatprep.subr.bf16.mxu0 0
      %1091 = vmatpush1.bf16.msra.mxu0 %v945
      %1092 = vmatprep.subr.bf16.mxu0 0
      %1093 = vmatpush1.bf16.msra.mxu0 %v946
      %1094 = vmatprep.subr.bf16.mxu0 0
      %1095 = vmatpush1.bf16.msra.mxu0 %v947
      %1096 = vmatprep.subr.bf16.mxu0 0
      %1097 = vmatpush1.bf16.msra.mxu0 %v948
      %1098 = vmatprep.subr.bf16.mxu0 0
      %1099 = vmatpush1.bf16.msra.mxu0 %v949
      %1100 = vmatprep.subr.bf16.mxu0 0
      %1101 = vmatpush1.bf16.msra.mxu0 %v950
      %1102 = vmatprep.subr.bf16.mxu0 0
      %1103 = vmatpush1.bf16.msra.mxu0 %v951
      %1104 = vmatprep.subr.bf16.mxu0 0
      %1105 = vmatpush1.bf16.msra.mxu0 %v952
      %1106 = vmatprep.subr.bf16.mxu0 0
      %1107 = vmatpush1.bf16.msra.mxu0 %v953
      %1108 = vmatprep.subr.bf16.mxu0 0
      %1109 = vmatpush1.bf16.msra.mxu0 %v954
      %1110 = vmatprep.subr.bf16.mxu0 0
      %1111 = vmatpush1.bf16.msra.mxu0 %v955
      %1112 = vmatprep.subr.bf16.mxu0 0
      %1113 = vmatpush1.bf16.msra.mxu0 %v956
      %1114 = vmatprep.subr.bf16.mxu0 0
      %1115 = vmatpush1.bf16.msra.mxu0 %v957
      %1116 = vmatprep.subr.bf16.mxu0 0
      %1117 = vmatpush1.bf16.msra.mxu0 %v958
      %1118 = vmatprep.subr.bf16.mxu0 0
      %1119 = vmatpush1.bf16.msra.mxu0 %v959
      %1120 = vmatprep.mubr.bf16.mxu0 %v585
      %1121 = vmatmul.mubr.bf16.gmra.mrb[0].mxu0 %v584
      %v1122 = vpop.f32.mrb[0].mxu0
      %v1123 = vadd.f32 0.0, %v1122
      %v1124 = vpop.f32.mrb[0].mxu0
      %v1125 = vpop.f32.mrb[0].mxu0
      %v1126 = vadd.f32 0.0, %v1125
      %v1127 = vpop.f32.mrb[0].mxu0
      %1128 = vmatprep.mubr.bf16.mxu0 %v594
      %1129 = vmatmul.mubr.bf16.gmra.mrb[0].mxu0 %v593
      %v1130 = vpop.f32.mrb[0].mxu0
      %v1131 = vadd.f32 0.0, %v1130
      %v1132 = vpop.f32.mrb[0].mxu0
      %v1133 = vpop.f32.mrb[0].mxu0
      %v1134 = vadd.f32 0.0, %v1133
      %v1135 = vpop.f32.mrb[0].mxu0
      %1136 = vmatprep.mubr.bf16.mxu0 %v603
      %1137 = vmatmul.mubr.bf16.gmra.mrb[0].mxu0 %v602
      %v1138 = vpop.f32.mrb[0].mxu0
      %v1139 = vadd.f32 0.0, %v1138
      %v1140 = vpop.f32.mrb[0].mxu0
      %v1141 = vpop.f32.mrb[0].mxu0
      %v1142 = vadd.f32 0.0, %v1141
      %v1143 = vpop.f32.mrb[0].mxu0
      %1144 = vmatprep.mubr.bf16.mxu0 %v612
      %1145 = vmatmul.mubr.bf16.gmra.mrb[0].mxu0 %v611
      %v1146 = vpop.f32.mrb[0].mxu0
      %v1147 = vadd.f32 0.0, %v1146
      %v1148 = vpop.f32.mrb[0].mxu0
      %v1149 = vpop.f32.mrb[0].mxu0
      %v1150 = vadd.f32 0.0, %v1149
      %v1151 = vpop.f32.mrb[0].mxu0
      %1152 = vdwg.mxu0
      %1153 = vmatprep.subr.bf16.mxu0 0
      %1154 = vmatpush1.bf16.msra.mxu0 %v960
      %1155 = vmatprep.subr.bf16.mxu0 0
      %1156 = vmatpush1.bf16.msra.mxu0 %v961
      %1157 = vmatprep.subr.bf16.mxu0 0
      %1158 = vmatpush1.bf16.msra.mxu0 %v962
      %1159 = vmatprep.subr.bf16.mxu0 0
      %1160 = vmatpush1.bf16.msra.mxu0 %v963
      %1161 = vmatprep.subr.bf16.mxu0 0
      %1162 = vmatpush1.bf16.msra.mxu0 %v964
      %1163 = vmatprep.subr.bf16.mxu0 0
      %1164 = vmatpush1.bf16.msra.mxu0 %v965
      %1165 = vmatprep.subr.bf16.mxu0 0
      %1166 = vmatpush1.bf16.msra.mxu0 %v966
      %1167 = vmatprep.subr.bf16.mxu0 0
      %1168 = vmatpush1.bf16.msra.mxu0 %v967
      %1169 = vmatprep.subr.bf16.mxu0 0
      %1170 = vmatpush1.bf16.msra.mxu0 %v968
      %1171 = vmatprep.subr.bf16.mxu0 0
      %1172 = vmatpush1.bf16.msra.mxu0 %v969
      %1173 = vmatprep.subr.bf16.mxu0 0
      %1174 = vmatpush1.bf16.msra.mxu0 %v970
      %1175 = vmatprep.subr.bf16.mxu0 0
      %1176 = vmatpush1.bf16.msra.mxu0 %v971
      %1177 = vmatprep.subr.bf16.mxu0 0
      %1178 = vmatpush1.bf16.msra.mxu0 %v972
      %1179 = vmatprep.subr.bf16.mxu0 0
      %1180 = vmatpush1.bf16.msra.mxu0 %v973
      %1181 = vmatprep.subr.bf16.mxu0 0
      %1182 = vmatpush1.bf16.msra.mxu0 %v974
      %1183 = vmatprep.subr.bf16.mxu0 0
      %1184 = vmatpush1.bf16.msra.mxu0 %v975
      %1185 = vmatprep.mubr.bf16.mxu0 %v587
      %1186 = vmatmul.mubr.bf16.gmra.mrb[0].mxu0 %v586
      %v1187 = vpop.f32.mrb[0].mxu0
      %v1188 = vadd.f32 %v1123, %v1187
      %v1189 = vpop.f32.mrb[0].mxu0
      %v1190 = vpop.f32.mrb[0].mxu0
      %v1191 = vadd.f32 %v1126, %v1190
      %v1192 = vpop.f32.mrb[0].mxu0
      %1193 = vmatprep.mubr.bf16.mxu0 %v596
      %1194 = vmatmul.mubr.bf16.gmra.mrb[0].mxu0 %v595
      %v1195 = vpop.f32.mrb[0].mxu0
      %v1196 = vadd.f32 %v1131, %v1195
      %v1197 = vpop.f32.mrb[0].mxu0
      %v1198 = vpop.f32.mrb[0].mxu0
      %v1199 = vadd.f32 %v1134, %v1198
      %v1200 = vpop.f32.mrb[0].mxu0
      %1201 = vmatprep.mubr.bf16.mxu0 %v605
      %1202 = vmatmul.mubr.bf16.gmra.mrb[0].mxu0 %v604
      %v1203 = vpop.f32.mrb[0].mxu0
      %v1204 = vadd.f32 %v1139, %v1203
      %v1205 = vpop.f32.mrb[0].mxu0
      %v1206 = vpop.f32.mrb[0].mxu0
      %v1207 = vadd.f32 %v1142, %v1206
      %v1208 = vpop.f32.mrb[0].mxu0
      %1209 = vmatprep.mubr.bf16.mxu0 %v614
      %1210 = vmatmul.mubr.bf16.gmra.mrb[0].mxu0 %v613
      %v1211 = vpop.f32.mrb[0].mxu0
      %v1212 = vadd.f32 %v1147, %v1211
      %v1213 = vpop.f32.mrb[0].mxu0
      %v1214 = vpop.f32.mrb[0].mxu0
      %v1215 = vadd.f32 %v1150, %v1214
      %v1216 = vpop.f32.mrb[0].mxu0
      %1217 = vdwg.mxu0
      %1218 = vmatprep.subr.bf16.mxu0 0
      %1219 = vmatpush1.bf16.msra.mxu0 %v976
      %1220 = vmatprep.subr.bf16.mxu0 0
      %1221 = vmatpush1.bf16.msra.mxu0 %v977
      %1222 = vmatprep.subr.bf16.mxu0 0
      %1223 = vmatpush1.bf16.msra.mxu0 %v978
      %1224 = vmatprep.subr.bf16.mxu0 0
      %1225 = vmatpush1.bf16.msra.mxu0 %v979
      %1226 = vmatprep.subr.bf16.mxu0 0
      %1227 = vmatpush1.bf16.msra.mxu0 %v980
      %1228 = vmatprep.subr.bf16.mxu0 0
      %1229 = vmatpush1.bf16.msra.mxu0 %v981
      %1230 = vmatprep.subr.bf16.mxu0 0
      %1231 = vmatpush1.bf16.msra.mxu0 %v982
      %1232 = vmatprep.subr.bf16.mxu0 0
      %1233 = vmatpush1.bf16.msra.mxu0 %v983
      %1234 = vmatprep.subr.bf16.mxu0 0
      %1235 = vmatpush1.bf16.msra.mxu0 %v984
      %1236 = vmatprep.subr.bf16.mxu0 0
      %1237 = vmatpush1.bf16.msra.mxu0 %v985
      %1238 = vmatprep.subr.bf16.mxu0 0
      %1239 = vmatpush1.bf16.msra.mxu0 %v986
      %1240 = vmatprep.subr.bf16.mxu0 0
      %1241 = vmatpush1.bf16.msra.mxu0 %v987
      %1242 = vmatprep.subr.bf16.mxu0 0
      %1243 = vmatpush1.bf16.msra.mxu0 %v988
      %1244 = vmatprep.subr.bf16.mxu0 0
      %1245 = vmatpush1.bf16.msra.mxu0 %v989
      %1246 = vmatprep.subr.bf16.mxu0 0
      %1247 = vmatpush1.bf16.msra.mxu0 %v990
      %1248 = vmatprep.subr.bf16.mxu0 0
      %1249 = vmatpush1.bf16.msra.mxu0 %v991
      %1250 = vmatprep.mubr.bf16.mxu0 %v589
      %1251 = vmatmul.mubr.bf16.gmra.mrb[0].mxu0 %v588
      %v1252 = vpop.f32.mrb[0].mxu0
      %v1253 = vadd.f32 %v1188, %v1252
      %v1254 = vpop.f32.mrb[0].mxu0
      %v1255 = vpop.f32.mrb[0].mxu0
      %v1256 = vadd.f32 %v1191, %v1255
      %v1257 = vpop.f32.mrb[0].mxu0
      %1258 = vmatprep.mubr.bf16.mxu0 %v598
      %1259 = vmatmul.mubr.bf16.gmra.mrb[0].mxu0 %v597
      %v1260 = vpop.f32.mrb[0].mxu0
      %v1261 = vadd.f32 %v1196, %v1260
      %v1262 = vpop.f32.mrb[0].mxu0
      %v1263 = vpop.f32.mrb[0].mxu0
      %v1264 = vadd.f32 %v1199, %v1263
      %v1265 = vpop.f32.mrb[0].mxu0
      %1266 = vmatprep.mubr.bf16.mxu0 %v607
      %1267 = vmatmul.mubr.bf16.gmra.mrb[0].mxu0 %v606
      %v1268 = vpop.f32.mrb[0].mxu0
      %v1269 = vadd.f32 %v1204, %v1268
      %v1270 = vpop.f32.mrb[0].mxu0
      %v1271 = vpop.f32.mrb[0].mxu0
      %v1272 = vadd.f32 %v1207, %v1271
      %v1273 = vpop.f32.mrb[0].mxu0
      %1274 = vmatprep.mubr.bf16.mxu0 %v616
      %1275 = vmatmul.mubr.bf16.gmra.mrb[0].mxu0 %v615
      %v1276 = vpop.f32.mrb[0].mxu0
      %v1277 = vadd.f32 %v1212, %v1276
      %v1278 = vpop.f32.mrb[0].mxu0
      %v1279 = vpop.f32.mrb[0].mxu0
      %v1280 = vadd.f32 %v1215, %v1279
      %v1281 = vpop.f32.mrb[0].mxu0
      %1282 = vdwg.mxu0
      %1283 = vmatprep.subr.bf16.mxu0 0
      %1284 = vmatpush1.bf16.msra.mxu0 %v992
      %1285 = vmatprep.subr.bf16.mxu0 0
      %1286 = vmatpush1.bf16.msra.mxu0 %v993
      %1287 = vmatprep.subr.bf16.mxu0 0
      %1288 = vmatpush1.bf16.msra.mxu0 %v994
      %1289 = vmatprep.subr.bf16.mxu0 0
      %1290 = vmatpush1.bf16.msra.mxu0 %v995
      %1291 = vmatprep.subr.bf16.mxu0 0
      %1292 = vmatpush1.bf16.msra.mxu0 %v996
      %1293 = vmatprep.subr.bf16.mxu0 0
      %1294 = vmatpush1.bf16.msra.mxu0 %v997
      %1295 = vmatprep.subr.bf16.mxu0 0
      %1296 = vmatpush1.bf16.msra.mxu0 %v998
      %1297 = vmatprep.subr.bf16.mxu0 0
      %1298 = vmatpush1.bf16.msra.mxu0 %v999
      %1299 = vmatprep.subr.bf16.mxu0 0
      %1300 = vmatpush1.bf16.msra.mxu0 %v1000
      %1301 = vmatprep.subr.bf16.mxu0 0
      %1302 = vmatpush1.bf16.msra.mxu0 %v1001
      %1303 = vmatprep.subr.bf16.mxu0 0
      %1304 = vmatpush1.bf16.msra.mxu0 %v1002
      %1305 = vmatprep.subr.bf16.mxu0 0
      %1306 = vmatpush1.bf16.msra.mxu0 %v1003
      %1307 = vmatprep.subr.bf16.mxu0 0
      %1308 = vmatpush1.bf16.msra.mxu0 %v1004
      %1309 = vmatprep.subr.bf16.mxu0 0
      %1310 = vmatpush1.bf16.msra.mxu0 %v1005
      %1311 = vmatprep.subr.bf16.mxu0 0
      %1312 = vmatpush1.bf16.msra.mxu0 %v1006
      %1313 = vmatprep.subr.bf16.mxu0 0
      %1314 = vmatpush1.bf16.msra.mxu0 %v1007
      %1315 = vmatprep.mubr.bf16.mxu0 %v591
      %1316 = vmatmul.mubr.bf16.gmra.mrb[0].mxu0 %v590
      %v1317 = vpop.f32.mrb[0].mxu0
      %v1318 = vadd.f32 %v1253, %v1317
      %v1319 = vpop.f32.mrb[0].mxu0
      %v1320 = vpop.f32.mrb[0].mxu0
      %v1321 = vadd.f32 %v1256, %v1320
      %v1322 = vpop.f32.mrb[0].mxu0
      %1323 = vmatprep.mubr.bf16.mxu0 %v600
      %1324 = vmatmul.mubr.bf16.gmra.mrb[0].mxu0 %v599
      %v1325 = vpop.f32.mrb[0].mxu0
      %v1326 = vadd.f32 %v1261, %v1325
      %v1327 = vpop.f32.mrb[0].mxu0
      %v1328 = vpop.f32.mrb[0].mxu0
      %v1329 = vadd.f32 %v1264, %v1328
      %v1330 = vpop.f32.mrb[0].mxu0
      %1331 = vmatprep.mubr.bf16.mxu0 %v609
      %1332 = vmatmul.mubr.bf16.gmra.mrb[0].mxu0 %v608
      %v1333 = vpop.f32.mrb[0].mxu0
      %v1334 = vadd.f32 %v1269, %v1333
      %v1335 = vpop.f32.mrb[0].mxu0
      %v1336 = vpop.f32.mrb[0].mxu0
      %v1337 = vadd.f32 %v1272, %v1336
      %v1338 = vpop.f32.mrb[0].mxu0
      %1339 = vmatprep.mubr.bf16.mxu0 %v618
      %1340 = vmatmul.mubr.bf16.gmra.mrb[0].mxu0 %v617
      %v1341 = vpop.f32.mrb[0].mxu0
      %v1342 = vadd.f32 %v1277, %v1341
      %v1343 = vpop.f32.mrb[0].mxu0
      %v1344 = vpop.f32.mrb[0].mxu0
      %v1345 = vadd.f32 %v1280, %v1344
      %v1346 = vpop.f32.mrb[0].mxu0
      %1347 = vdwg.mxu0
      %1348 = vmatprep.subr.bf16.mxu0 0
      %1349 = vmatpush1.bf16.msra.mxu0 %v1008
      %1350 = vmatprep.subr.bf16.mxu0 0
      %1351 = vmatpush1.bf16.msra.mxu0 %v1009
      %1352 = vmatprep.subr.bf16.mxu0 0
      %1353 = vmatpush1.bf16.msra.mxu0 %v1010
      %1354 = vmatprep.subr.bf16.mxu0 0
      %1355 = vmatpush1.bf16.msra.mxu0 %v1011
      %1356 = vmatprep.subr.bf16.mxu0 0
      %1357 = vmatpush1.bf16.msra.mxu0 %v1012
      %1358 = vmatprep.subr.bf16.mxu0 0
      %1359 = vmatpush1.bf16.msra.mxu0 %v1013
      %1360 = vmatprep.subr.bf16.mxu0 0
      %1361 = vmatpush1.bf16.msra.mxu0 %v1014
      %1362 = vmatprep.subr.bf16.mxu0 0
      %1363 = vmatpush1.bf16.msra.mxu0 %v1015
      %1364 = vmatprep.subr.bf16.mxu0 0
      %1365 = vmatpush1.bf16.msra.mxu0 0
      %1366 = vmatprep.subr.bf16.mxu0 0
      %1367 = vmatpush1.bf16.msra.mxu0 0
      %1368 = vmatprep.subr.bf16.mxu0 0
      %1369 = vmatpush1.bf16.msra.mxu0 0
      %1370 = vmatprep.subr.bf16.mxu0 0
      %1371 = vmatpush1.bf16.msra.mxu0 0
      %1372 = vmatprep.subr.bf16.mxu0 0
      %1373 = vmatpush1.bf16.msra.mxu0 0
      %1374 = vmatprep.subr.bf16.mxu0 0
      %1375 = vmatpush1.bf16.msra.mxu0 0
      %1376 = vmatprep.subr.bf16.mxu0 0
      %1377 = vmatpush1.bf16.msra.mxu0 0
      %1378 = vmatprep.subr.bf16.mxu0 0
      %1379 = vmatpush1.bf16.msra.mxu0 0
      %1380 = vmatprep.mubr.bf16.mxu0 0
      %1381 = vmatmul.mubr.bf16.gmra.mrb[0].mxu0 %v592
      %v1382 = vpop.f32.mrb[0].mxu0
      %v1383 = vadd.f32 %v1318, %v1382
      %v1384 = vpop.f32.mrb[0].mxu0
      %v1385 = vpop.f32.mrb[0].mxu0
      %v1386 = vadd.f32 %v1321, %v1385
      %v1387 = vpop.f32.mrb[0].mxu0
      %1388 = vmatprep.mubr.bf16.mxu0 0
      %1389 = vmatmul.mubr.bf16.gmra.mrb[0].mxu0 %v601
      %v1390 = vpop.f32.mrb[0].mxu0
      %v1391 = vadd.f32 %v1326, %v1390
      %v1392 = vpop.f32.mrb[0].mxu0
      %v1393 = vpop.f32.mrb[0].mxu0
      %v1394 = vadd.f32 %v1329, %v1393
      %v1395 = vpop.f32.mrb[0].mxu0
      %1396 = vmatprep.mubr.bf16.mxu0 0
      %1397 = vmatmul.mubr.bf16.gmra.mrb[0].mxu0 %v610
      %v1398 = vpop.f32.mrb[0].mxu0
      %v1399 = vadd.f32 %v1334, %v1398
      %v1400 = vpop.f32.mrb[0].mxu0
      %v1401 = vpop.f32.mrb[0].mxu0
      %v1402 = vadd.f32 %v1337, %v1401
      %v1403 = vpop.f32.mrb[0].mxu0
      %1404 = vmatprep.mubr.bf16.mxu0 0
      %1405 = vmatmul.mubr.bf16.gmra.mrb[0].mxu0 %v619
      %v1406 = vpop.f32.mrb[0].mxu0
      %v1407 = vadd.f32 %v1342, %v1406
      %v1408 = vpop.f32.mrb[0].mxu0
      %v1409 = vpop.f32.mrb[0].mxu0
      %v1410 = vadd.f32 %v1345, %v1409
      %v1411 = vpop.f32.mrb[0].mxu0
      %1412 = vdwg.mxu0
      %v1413 = vadd.f32 %v280, %v1383
      %v1414 = vadd.f32 %v281, %v1386
      %v1415 = vadd.f32 %v282, %v1391
      %v1416 = vadd.f32 %v283, %v1394
      %v1417 = vadd.f32 %v284, %v1399
      %v1418 = vadd.f32 %v285, %v1402
      %v1419 = vadd.f32 %v286, %v1407
      %v1420 = vadd.f32 %v287, %v1410
      %1421 = vst [vmem:[#allocation2] sm:$0xff] %v1413
      %1422 = vst [vmem:[#allocation2 + $0x8] sm:$0xff] %v1414
      %1423 = vst [vmem:[#allocation2 + $0x10] sm:$0xff] %v1415
      %1424 = vst [vmem:[#allocation2 + $0x18] sm:$0xff] %v1416
      %1425 = vst [vmem:[#allocation2 + $0x20] sm:$0xff] %v1417
      %1426 = vst [vmem:[#allocation2 + $0x28] sm:$0xff] %v1418
      %1427 = vst [vmem:[#allocation2 + $0x30] sm:$0xff] %v1419
      %1428 = vst [vmem:[#allocation2 + $0x38] sm:$0xff] %v1420
      // Predicated region
      $region37: #{resnet_forward.17} parent=31 // pred_check
        %p1429 = pneg %p268
      $region38: #{resnet_forward.17} parent=31 // pred_check_branch
        %1431 = sbr.rel (%p1429) target = $region40
      $region39: #{resnet_forward.17} parent=31 // pred_region
        %v1432 = vld [vmem:[#allocation2] sm:$0xff]
        %v1433 = vld [vmem:[#allocation2 + $0x8] sm:$0xff]
        %v1434 = vld [vmem:[#allocation2 + $0x10] sm:$0xff]
        %v1435 = vld [vmem:[#allocation2 + $0x18] sm:$0xff]
        %v1436 = vld [vmem:[#allocation2 + $0x20] sm:$0xff]
        %v1437 = vld [vmem:[#allocation2 + $0x28] sm:$0xff]
        %v1438 = vld [vmem:[#allocation2 + $0x30] sm:$0xff]
        %v1439 = vld [vmem:[#allocation2 + $0x38] sm:$0xff]
        %v1440 = vld [vmem:[%s257] sm:$0x1]
        %v1442 = vlaneseq
        %v1443 = vshrl.u32 %v1442, 7
        %v1444 = vsub.s32 0, %v1443
        %v1445 = vrot.slane %v1440, %v1444
        %v1447 = vadd.f32 %v1432, %v1445
        %v1448 = vadd.f32 %v1433, %v1445
        %v1449 = vadd.f32 %v1434, %v1445
        %v1450 = vadd.f32 %v1435, %v1445
        %v1451 = vadd.f32 %v1436, %v1445
        %v1452 = vadd.f32 %v1437, %v1445
        %v1453 = vadd.f32 %v1438, %v1445
        %v1454 = vadd.f32 %v1439, %v1445
        %v1455 = vmax.f32 %v1447, 0.0
        %v1456 = vmax.f32 %v1448, 0.0
        %v1457 = vmax.f32 %v1449, 0.0
        %v1458 = vmax.f32 %v1450, 0.0
        %v1459 = vmax.f32 %v1451, 0.0
        %v1460 = vmax.f32 %v1452, 0.0
        %v1461 = vmax.f32 %v1453, 0.0
        %v1462 = vmax.f32 %v1454, 0.0
        %v1463 = vpack.c.bf16 %v1456, %v1455
        %v1464 = vpack.c.bf16 %v1458, %v1457
        %v1465 = vpack.c.bf16 %v1460, %v1459
        %v1466 = vpack.c.bf16 %v1462, %v1461
        %v1471 = vunpack.c.l.b16 %v1463
        %v1472 = vunpack.c.h.b16 %v1463
        %v1473 = vunpack.c.l.b16 %v1464
        %v1474 = vunpack.c.h.b16 %v1464
        %v1475 = vunpack.c.l.b16 %v1465
        %v1476 = vunpack.c.h.b16 %v1465
        %v1477 = vunpack.c.l.b16 %v1466
        %v1478 = vunpack.c.h.b16 %v1466
        %v1479 = vpack.c.b16 %v1471, %v1471
        %v1480 = vpack.c.b16 %v1472, %v1472
        %v1481 = vpack.c.b16 %v1473, %v1473
        %v1482 = vpack.c.b16 %v1474, %v1474
        %v1483 = vpack.c.b16 %v1475, %v1475
        %v1484 = vpack.c.b16 %v1476, %v1476
        %v1485 = vpack.c.b16 %v1477, %v1477
        %v1486 = vpack.c.b16 %v1478, %v1478
        %1495 = vst [vmem:[%s265] sm:$0xf] %v1479
        %1496 = vst [vmem:[%s265 + $0x4] sm:$0xf] %v1480
        %1497 = vst [vmem:[%s265 + $0x8] sm:$0xf] %v1481
        %1498 = vst [vmem:[%s265 + $0xc] sm:$0xf] %v1482
        %1499 = vst [vmem:[%s265 + $0x10] sm:$0xf] %v1483
        %1500 = vst [vmem:[%s265 + $0x14] sm:$0xf] %v1484
        %1501 = vst [vmem:[%s265 + $0x18] sm:$0xf] %v1485
        %1502 = vst [vmem:[%s265 + $0x1c] sm:$0xf] %v1486
      $region40: #{resnet_forward.17} parent=31 // pred_fallthru
        _
      %s1503 = smul.u32 8, %s19
      %p1504 = scmp.lt.s32.totalorder %s1503, 15
      %s1505 = scalar_select %p1504, %s1503, 15
      %p1506 = scmp.lt.s32.totalorder %s20, 0
      %s1507 = scalar_select %p1506, %s20, 0
      %s1508 = sadd.s32 %s1507, %s1505
      %s1509 = smul.addr %s1508, 4
      %s1510 = scalar_lea.vmem %s3, %s1509
      // Predicated region
      $region41: #{resnet_forward.17} parent=31 // pred_check
        %p1511 = pneg %p135
      $region42: #{resnet_forward.17} parent=31 // pred_check_branch
        %1513 = sbr.rel (%p1511) target = $region44
      $region43: #{resnet_forward.17} parent=31 // pred_region
        %s1514 = smul.u32 8, %s19
      $region44: #{resnet_forward.17} parent=31 // pred_fallthru
        _
    $region32: #{resnet_forward.17} parent=5 // pred_fallthru
      _
    %p1515 = scmp.le.s32.totalorder 2, %s9
    // Predicated region
    $region45: #{resnet_forward.17} parent=5 // pred_check
      %p1516 = pneg %p1515
    $region46: #{resnet_forward.17} parent=5 // pred_check_branch
      %1518 = sbr.rel (%p1516) target = $region48
    $region47: #{resnet_forward.17} parent=5 // pred_region
      %s1519 = ssub.s32 %s9, 2
      // Predicated region
      $region49: #{resnet_forward.17} parent=47 // pred_check
        %p1520 = pneg %p141
      $region50: #{resnet_forward.17} parent=47 // pred_check_branch
        %1522 = sbr.rel (%p1520) target = $region52
      $region51: #{resnet_forward.17} parent=47 // pred_region
        %s1523 = smul.u32 8, %s22
        %p1524 = scmp.lt.s32.totalorder %s1523, 15
        %s1525 = scalar_select %p1524, %s1523, 15
        %p1526 = scmp.lt.s32.totalorder %s23, 0
        %s1527 = scalar_select %p1526, %s23, 0
        %s1528 = sadd.s32 %s1527, %s1525
        %s1529 = smul.addr %s1528, 4
        %s1530 = scalar_lea.vmem %s3, %s1529
      $region52: #{resnet_forward.17} parent=47 // pred_fallthru
        _
    $region48: #{resnet_forward.17} parent=5 // pred_fallthru
      _
  $region6: #{resnet_forward.17} parent=0 // loop_footer
    %s13 = sadd.s32 1, %s9
  $region7: #{resnet_forward.17} parent=0 // loop_footer_branch
    %8 = sbr.rel target = $region3
  $region8: #{resnet_forward.17} parent=0 // loop_exit
    _

// kernel: resnet_forward.21
$region0: #{resnet_forward.21}
  #allocation0 [shape = 'u32[]', space=smem, size = 0x4, offset = 0x4, fixed_abs, tag = 'smem constant byte address 0x4 - core index']
  #allocation1 [shape = 'u32[144,128]{1,0:T(1,128)}', space=vmem, size = 0x12000, scoped, tag = 'internal scratch']
  #allocation2 [shape = 'f32[8,128]{1,0:T(8,128)}', space=vmem, size = 0x1000, scoped, tag = 'scratch operand']
  %s0 = inlined_call_operand.vmem [shape: bf16[2,64,128], index: 0, kind: input, shape index: {}]
  %s1 = inlined_call_operand.vmem [shape: f32[128,128], index: 1, kind: input, shape index: {}]
  %s2 = inlined_call_operand.vmem [shape: f32[1,128], index: 2, kind: input, shape index: {}]
  %s3 = inlined_call_operand.vmem [shape: f32[8,128], index: 3, kind: output, shape index: {}]
  %s4 = sld [smem:[#allocation0]]
  $region22: #{resnet_forward.21} parent=0
    _
  %s6 = ssub.s32 1, %s4
  %s7 = scalar_select 0, %s6, %s4
  // Predicated region
  $region2: #{resnet_forward.21} parent=0 // pred_check
    _
  $region3: #{resnet_forward.21} parent=0 // pred_check_branch
    %9 = sbr.rel (0) target = $region5
  $region4: #{resnet_forward.21} parent=0 // pred_region
    _
  $region5: #{resnet_forward.21} parent=0 // pred_fallthru
    _
  // Predicated region
  $region6: #{resnet_forward.21} parent=0 // pred_check
    _
  $region7: #{resnet_forward.21} parent=0 // pred_check_branch
    %11 = sbr.rel (0) target = $region9
  $region8: #{resnet_forward.21} parent=0 // pred_region
    _
  $region9: #{resnet_forward.21} parent=0 // pred_fallthru
    _
  // Predicated region
  $region10: #{resnet_forward.21} parent=0 // pred_check
    _
  $region11: #{resnet_forward.21} parent=0 // pred_check_branch
    %13 = sbr.rel (0) target = $region13
  $region12: #{resnet_forward.21} parent=0 // pred_region
    _
  $region13: #{resnet_forward.21} parent=0 // pred_fallthru
    _
  %14 = vst [vmem:[#allocation2] sm:$0xff] 0.0
  %v15 = vld [vmem:[%s0] sm:$0xf]
  %v16 = vld [vmem:[%s0 + $0x4] sm:$0xf]
  %v17 = vld [vmem:[%s0 + $0x8] sm:$0xf]
  %v18 = vld [vmem:[%s0 + $0xc] sm:$0xf]
  %v19 = vld [vmem:[%s0 + $0x10] sm:$0xf]
  %v20 = vld [vmem:[%s0 + $0x14] sm:$0xf]
  %v21 = vld [vmem:[%s0 + $0x18] sm:$0xf]
  %v22 = vld [vmem:[%s0 + $0x1c] sm:$0xf]
  %v23 = vld [vmem:[%s0 + $0x20] sm:$0xf]
  %v24 = vld [vmem:[%s0 + $0x24] sm:$0xf]
  %v25 = vld [vmem:[%s0 + $0x28] sm:$0xf]
  %v26 = vld [vmem:[%s0 + $0x2c] sm:$0xf]
  %v27 = vld [vmem:[%s0 + $0x30] sm:$0xf]
  %v28 = vld [vmem:[%s0 + $0x34] sm:$0xf]
  %v29 = vld [vmem:[%s0 + $0x38] sm:$0xf]
  %v30 = vld [vmem:[%s0 + $0x3c] sm:$0xf]
  %v31 = vunpack.c.l.bf16 %v15
  %v32 = vunpack.c.l.bf16 %v16
  %v33 = vunpack.c.l.bf16 %v17
  %v34 = vunpack.c.l.bf16 %v18
  %v35 = vunpack.c.l.bf16 %v19
  %v36 = vunpack.c.l.bf16 %v20
  %v37 = vunpack.c.l.bf16 %v21
  %v38 = vunpack.c.l.bf16 %v22
  %v39 = vunpack.c.l.bf16 %v23
  %v40 = vunpack.c.l.bf16 %v24
  %v41 = vunpack.c.l.bf16 %v25
  %v42 = vunpack.c.l.bf16 %v26
  %v43 = vunpack.c.l.bf16 %v27
  %v44 = vunpack.c.l.bf16 %v28
  %v45 = vunpack.c.l.bf16 %v29
  %v46 = vunpack.c.l.bf16 %v30
  %v47 = vadd.f32 %v31, %v32
  %v48 = vadd.f32 %v47, %v33
  %v49 = vadd.f32 %v48, %v34
  %v50 = vadd.f32 %v49, %v35
  %v51 = vadd.f32 %v50, %v36
  %v52 = vadd.f32 %v51, %v37
  %v53 = vadd.f32 %v52, %v38
  %v54 = vrot.slane %v53, 4
  %v55 = vadd.f32 %v53, %v54
  %v56 = vrot.slane %v55, 2
  %v57 = vadd.f32 %v55, %v56
  %v58 = vrot.slane %v57, 1
  %v59 = vadd.f32 %v57, %v58
  %v60 = vadd.f32 %v39, %v40
  %v61 = vadd.f32 %v60, %v41
  %v62 = vadd.f32 %v61, %v42
  %v63 = vadd.f32 %v62, %v43
  %v64 = vadd.f32 %v63, %v44
  %v65 = vadd.f32 %v64, %v45
  %v66 = vadd.f32 %v65, %v46
  %v67 = vrot.slane %v66, 4
  %v68 = vadd.f32 %v66, %v67
  %v69 = vrot.slane %v68, 2
  %v70 = vadd.f32 %v68, %v69
  %v71 = vrot.slane %v70, 1
  %v72 = vadd.f32 %v70, %v71
  %v73 = vrcp.pop 64.0
  %v74 = vmul.f32 %v59, %v73
  %v75 = vmul.f32 %v72, %v73
  %vm78 = vcmask 1041409
  %v79 = vsel %vm78, %v75, %v74
  %81 = vst [vmem:[#allocation2] sm:$0x3] %v79
  %v82 = vld [vmem:[#allocation2] sm:$0xff]
  %v83 = vld [vmem:[%s1] sm:$0xff]
  %v84 = vld [vmem:[%s1 + $0x8] sm:$0xff]
  %v85 = vld [vmem:[%s1 + $0x10] sm:$0xff]
  %v86 = vld [vmem:[%s1 + $0x18] sm:$0xff]
  %v87 = vld [vmem:[%s1 + $0x20] sm:$0xff]
  %v88 = vld [vmem:[%s1 + $0x28] sm:$0xff]
  %v89 = vld [vmem:[%s1 + $0x30] sm:$0xff]
  %v90 = vld [vmem:[%s1 + $0x38] sm:$0xff]
  %v91 = vld [vmem:[%s1 + $0x40] sm:$0xff]
  %v92 = vld [vmem:[%s1 + $0x48] sm:$0xff]
  %v93 = vld [vmem:[%s1 + $0x50] sm:$0xff]
  %v94 = vld [vmem:[%s1 + $0x58] sm:$0xff]
  %v95 = vld [vmem:[%s1 + $0x60] sm:$0xff]
  %v96 = vld [vmem:[%s1 + $0x68] sm:$0xff]
  %v97 = vld [vmem:[%s1 + $0x70] sm:$0xff]
  %v98 = vld [vmem:[%s1 + $0x78] sm:$0xff]
  %v99 = vld [vmem:[%s2] sm:$0x1]
  %v101 = vlaneseq
  %v102 = vshrl.u32 %v101, 7
  %v103 = vsub.s32 0, %v102
  %v104 = vrot.slane %v99, %v103
  %106 = vmatprep.subr.mxu0 0.0
  %107 = vmatpush1.msra.mxu0 %v83
  %108 = vmatprep.subr.mxu0 0.0
  %109 = vmatpush1.msra.mxu0 %v84
  %110 = vmatprep.subr.mxu0 0.0
  %111 = vmatpush1.msra.mxu0 %v85
  %112 = vmatprep.subr.mxu0 0.0
  %113 = vmatpush1.msra.mxu0 %v86
  %114 = vmatprep.subr.mxu0 0.0
  %115 = vmatpush1.msra.mxu0 %v87
  %116 = vmatprep.subr.mxu0 0.0
  %117 = vmatpush1.msra.mxu0 %v88
  %118 = vmatprep.subr.mxu0 0.0
  %119 = vmatpush1.msra.mxu0 %v89
  %120 = vmatprep.subr.mxu0 0.0
  %121 = vmatpush1.msra.mxu0 %v90
  %122 = vmatprep.subr.mxu0 0.0
  %123 = vmatpush1.msra.mxu0 %v91
  %124 = vmatprep.subr.mxu0 0.0
  %125 = vmatpush1.msra.mxu0 %v92
  %126 = vmatprep.subr.mxu0 0.0
  %127 = vmatpush1.msra.mxu0 %v93
  %128 = vmatprep.subr.mxu0 0.0
  %129 = vmatpush1.msra.mxu0 %v94
  %130 = vmatprep.subr.mxu0 0.0
  %131 = vmatpush1.msra.mxu0 %v95
  %132 = vmatprep.subr.mxu0 0.0
  %133 = vmatpush1.msra.mxu0 %v96
  %134 = vmatprep.subr.mxu0 0.0
  %135 = vmatpush1.msra.mxu0 %v97
  %136 = vmatprep.subr.mxu0 0.0
  %137 = vmatpush1.msra.mxu0 %v98
  %138 = vmatprep.subr.mxu0 0.0
  %139 = vmatpush1.msra.mxu0 0.0
  %140 = vmatprep.subr.mxu0 0.0
  %141 = vmatpush1.msra.mxu0 0.0
  %142 = vmatprep.subr.mxu0 0.0
  %143 = vmatpush1.msra.mxu0 0.0
  %144 = vmatprep.subr.mxu0 0.0
  %145 = vmatpush1.msra.mxu0 0.0
  %146 = vmatprep.subr.mxu0 0.0
  %147 = vmatpush1.msra.mxu0 0.0
  %148 = vmatprep.subr.mxu0 0.0
  %149 = vmatpush1.msra.mxu0 0.0
  %150 = vmatprep.subr.mxu0 0.0
  %151 = vmatpush1.msra.mxu0 0.0
  %152 = vmatprep.subr.mxu0 0.0
  %153 = vmatpush1.msra.mxu0 0.0
  %154 = vmatprep.subr.mxu0 0.0
  %155 = vmatpush1.msra.mxu0 0.0
  %156 = vmatprep.subr.mxu0 0.0
  %157 = vmatpush1.msra.mxu0 0.0
  %158 = vmatprep.subr.mxu0 0.0
  %159 = vmatpush1.msra.mxu0 0.0
  %160 = vmatprep.subr.mxu0 0.0
  %161 = vmatpush1.msra.mxu0 0.0
  %162 = vmatprep.subr.mxu0 0.0
  %163 = vmatpush1.msra.mxu0 0.0
  %164 = vmatprep.subr.mxu0 0.0
  %165 = vmatpush1.msra.mxu0 0.0
  %166 = vmatprep.subr.mxu0 0.0
  %167 = vmatpush1.msra.mxu0 0.0
  %168 = vmatprep.subr.mxu0 0.0
  %169 = vmatpush1.msra.mxu0 0.0
  %170 = vmatprep.mubr.f32.mxu0 0.0
  %171 = vmatmul.mubr.f32.gmra.mrb[0].mxu0 %v82
  %v172 = vpop.f32.mrb[0].mxu0
  %v173 = vadd.f32 %v104, %v172
  %v174 = vpop.f32.mrb[0].mxu0
  %175 = vdwg.mxu0
  %176 = vst [vmem:[%s3] sm:$0xff] %v173
  // Predicated region
  $region14: #{resnet_forward.21} parent=0 // pred_check
    _
  $region15: #{resnet_forward.21} parent=0 // pred_check_branch
    %178 = sbr.rel (0) target = $region17
  $region16: #{resnet_forward.21} parent=0 // pred_region
    _
  $region17: #{resnet_forward.21} parent=0 // pred_fallthru
    _
  // Predicated region
  $region18: #{resnet_forward.21} parent=0 // pred_check
    _
  $region19: #{resnet_forward.21} parent=0 // pred_check_branch
    %180 = sbr.rel (0) target = $region21
  $region20: #{resnet_forward.21} parent=0 // pred_region
    _
  $region21: #{resnet_forward.21} parent=0 // pred_fallthru
    _

// kernel: resnet_forward.18
$region0: #{resnet_forward.18}
  #allocation0 [shape = 'u32[]', space=smem, size = 0x4, offset = 0x4, fixed_abs, tag = 'smem constant byte address 0x4 - core index']
  #allocation1 [shape = 'u32[144,128]{1,0:T(1,128)}', space=vmem, size = 0x12000, scoped, tag = 'internal scratch']
  #allocation2 [shape = 'f32[64,128]{1,0:T(8,128)}', space=vmem, size = 0x8000, scoped, tag = 'scratch operand']
  %s0 = inlined_call_operand.vmem [shape: bf16[128,1152], index: 0, kind: input, shape index: {}]
  %s1 = inlined_call_operand.vmem [shape: bf16[1152,128], index: 1, kind: input, shape index: {}]
  %s2 = inlined_call_operand.vmem [shape: f32[1,128], index: 2, kind: input, shape index: {}]
  %s3 = inlined_call_operand.vmem [shape: bf16[128,128], index: 3, kind: input, shape index: {}]
  %s4 = inlined_call_operand.vmem [shape: bf16[128,128], index: 4, kind: output, shape index: {}]
  %s5 = sld [smem:[#allocation0]]
  $region57: #{resnet_forward.18} parent=0
    _
  %s7 = ssub.s32 1, %s5
  %s8 = scalar_select 0, %s7, %s5
  loop: start=0, step=1, limit=4
  $region2: #{resnet_forward.18} parent=0 // loop_pre_header
    _
  $region3: #{resnet_forward.18} parent=0 // loop_header
    %s10 = sphi 0, %s14
    %p11 = scmp.ge.s32.totalorder %s10, 4
    %s17 = sphi 0, %s36
    %s18 = sphi 0, %s32
    %s19 = sphi 0, %s28
    %s20 = sphi 0, %s17
    %s21 = sphi 0, %s18
    %s22 = sphi 0, %s19
    %s23 = sphi 0, %s20
    %s24 = sphi 0, %s21
    %s25 = sphi 0, %s22
    %s41 = sphi 0, %s43
    %s44 = sphi 0, %s41
    %s45 = sphi 0, %s44
    %s61 = sphi 0, %s45
    %s69 = sphi 0, %s71
    %s72 = sphi 0, %s69
    %s73 = sphi 0, %s72
    %s89 = sphi 0, %s73
    %s95 = sphi 0, %s97
    %s98 = sphi 0, %s95
    %s99 = sphi 0, %s98
    %s115 = sphi 0, %s99
    %s123 = sphi 0, %s125
    %s126 = sphi 0, %s123
    %s127 = sphi 0, %s126
    %s143 = sphi 0, %s127
    %s151 = sphi 0, %s153
    %s154 = sphi 0, %s151
    %s155 = sphi 0, %s154
    %s171 = sphi 0, %s155
  $region4: #{resnet_forward.18} parent=0 // loop_header_branch
    %13 = sbr.rel (%p11) target = $region8
  $region5: #{resnet_forward.18} parent=0 // loop_body
    %s15 = ssub.s32 %s10, 1
    %s16 = ssub.s32 %s10, 2
    %s26 = sadd.s32 1, %s19
    %p27 = scmp.ge.s32.totalorder %s26, 1
    %s28 = scalar_select %p27, 0, %s26
    %s29 = sadd.s32 1, %s18
    %s30 = scalar_select %p27, %s29, %s18
    %p31 = scmp.ge.s32.totalorder %s30, 1
    %s32 = scalar_select %p31, 0, %s30
    %s33 = sadd.s32 1, %s17
    %s34 = scalar_select %p31, %s33, %s17
    %p35 = scmp.ge.s32.totalorder %s34, 2
    %s36 = scalar_select %p35, 0, %s34
    %s37 = ssub.s32 %s17, %s36
    %s38 = ssub.s32 %s19, %s28
    %s39 = sor.u32 %s37, %s38
    %p40 = scmp.eq.s32.totalorder %s39, 0
    %s42 = sadd.s32 %s41, 1
    %s43 = scalar_select %p40, %s41, %s42
    %p46 = pneg %p40
    %p47 = scmp.eq.s32.totalorder %s10, 1
    %p48 = por %p46, %p47
    %p49 = scmp.ne.s32.totalorder %s41, %s44
    %p50 = scmp.eq.s32.totalorder %s10, 0
    %p51 = por %p49, %p50
    %p52 = scmp.ne.s32.totalorder %s41, %s44
    %p53 = scmp.eq.s32.totalorder %s15, 1
    %p54 = por %p52, %p53
    %p55 = scmp.ne.s32.totalorder %s44, %s45
    %p56 = scmp.eq.s32.totalorder %s15, 0
    %p57 = por %p55, %p56
    %p58 = scmp.ne.s32.totalorder %s44, %s45
    %p59 = scmp.eq.s32.totalorder %s16, 1
    %p60 = por %p58, %p59
    %p62 = scmp.ne.s32.totalorder %s45, %s61
    %p63 = scmp.eq.s32.totalorder %s16, 0
    %p64 = por %p62, %p63
    %s65 = ssub.s32 %s19, %s28
    %s66 = ssub.s32 %s18, %s32
    %s67 = sor.u32 %s65, %s66
    %p68 = scmp.eq.s32.totalorder %s67, 0
    %s70 = sadd.s32 %s69, 1
    %s71 = scalar_select %p68, %s69, %s70
    %p74 = pneg %p68
    %p75 = scmp.eq.s32.totalorder %s10, 1
    %p76 = por %p74, %p75
    %p77 = scmp.ne.s32.totalorder %s69, %s72
    %p78 = scmp.eq.s32.totalorder %s10, 0
    %p79 = por %p77, %p78
    %p80 = scmp.ne.s32.totalorder %s69, %s72
    %p81 = scmp.eq.s32.totalorder %s15, 1
    %p82 = por %p80, %p81
    %p83 = scmp.ne.s32.totalorder %s72, %s73
    %p84 = scmp.eq.s32.totalorder %s15, 0
    %p85 = por %p83, %p84
    %p86 = scmp.ne.s32.totalorder %s72, %s73
    %p87 = scmp.eq.s32.totalorder %s16, 1
    %p88 = por %p86, %p87
    %p90 = scmp.ne.s32.totalorder %s73, %s89
    %p91 = scmp.eq.s32.totalorder %s16, 0
    %p92 = por %p90, %p91
    %s93 = ssub.s32 %s18, %s32
    %p94 = scmp.eq.s32.totalorder %s93, 0
    %s96 = sadd.s32 %s95, 1
    %s97 = scalar_select %p94, %s95, %s96
    %p100 = pneg %p94
    %p101 = scmp.eq.s32.totalorder %s10, 1
    %p102 = por %p100, %p101
    %p103 = scmp.ne.s32.totalorder %s95, %s98
    %p104 = scmp.eq.s32.totalorder %s10, 0
    %p105 = por %p103, %p104
    %p106 = scmp.ne.s32.totalorder %s95, %s98
    %p107 = scmp.eq.s32.totalorder %s15, 1
    %p108 = por %p106, %p107
    %p109 = scmp.ne.s32.totalorder %s98, %s99
    %p110 = scmp.eq.s32.totalorder %s15, 0
    %p111 = por %p109, %p110
    %p112 = scmp.ne.s32.totalorder %s98, %s99
    %p113 = scmp.eq.s32.totalorder %s16, 1
    %p114 = por %p112, %p113
    %p116 = scmp.ne.s32.totalorder %s99, %s115
    %p117 = scmp.eq.s32.totalorder %s16, 0
    %p118 = por %p116, %p117
    %s119 = ssub.s32 %s17, %s36
    %s120 = ssub.s32 %s18, %s32
    %s121 = sor.u32 %s119, %s120
    %p122 = scmp.eq.s32.totalorder %s121, 0
    %s124 = sadd.s32 %s123, 1
    %s125 = scalar_select %p122, %s123, %s124
    %p128 = pneg %p122
    %p129 = scmp.eq.s32.totalorder %s10, 1
    %p130 = por %p128, %p129
    %p131 = scmp.ne.s32.totalorder %s123, %s126
    %p132 = scmp.eq.s32.totalorder %s10, 0
    %p133 = por %p131, %p132
    %p134 = scmp.ne.s32.totalorder %s123, %s126
    %p135 = scmp.eq.s32.totalorder %s15, 1
    %p136 = por %p134, %p135
    %p137 = scmp.ne.s32.totalorder %s126, %s127
    %p138 = scmp.eq.s32.totalorder %s15, 0
    %p139 = por %p137, %p138
    %p140 = scmp.ne.s32.totalorder %s126, %s127
    %p141 = scmp.eq.s32.totalorder %s16, 1
    %p142 = por %p140, %p141
    %p144 = scmp.ne.s32.totalorder %s127, %s143
    %p145 = scmp.eq.s32.totalorder %s16, 0
    %p146 = por %p144, %p145
    %s147 = ssub.s32 %s17, %s36
    %s148 = ssub.s32 %s18, %s32
    %s149 = sor.u32 %s147, %s148
    %p150 = scmp.eq.s32.totalorder %s149, 0
    %s152 = sadd.s32 %s151, 1
    %s153 = scalar_select %p150, %s151, %s152
    %p156 = pneg %p150
    %p157 = scmp.eq.s32.totalorder %s10, 1
    %p158 = por %p156, %p157
    %p159 = scmp.ne.s32.totalorder %s151, %s154
    %p160 = scmp.eq.s32.totalorder %s10, 0
    %p161 = por %p159, %p160
    %p162 = scmp.ne.s32.totalorder %s151, %s154
    %p163 = scmp.eq.s32.totalorder %s15, 1
    %p164 = por %p162, %p163
    %p165 = scmp.ne.s32.totalorder %s154, %s155
    %p166 = scmp.eq.s32.totalorder %s15, 0
    %p167 = por %p165, %p166
    %p168 = scmp.ne.s32.totalorder %s154, %s155
    %p169 = scmp.eq.s32.totalorder %s16, 1
    %p170 = por %p168, %p169
    %p172 = scmp.ne.s32.totalorder %s155, %s171
    %p173 = scmp.eq.s32.totalorder %s16, 0
    %p174 = por %p172, %p173
    %p175 = scmp.le.s32.totalorder 1, %s10
    %p176 = scmp.lt.s32.totalorder %s10, 3
    %p177 = pnand %p175, %p176
    %p178 = pneg %p177
    // Predicated region
    $region9: #{resnet_forward.18} parent=5 // pred_check
      _
    $region10: #{resnet_forward.18} parent=5 // pred_check_branch
      %180 = sbr.rel (%p177) target = $region12
    $region11: #{resnet_forward.18} parent=5 // pred_region
      %s181 = ssub.s32 %s10, 1
      // Predicated region
      $region13: #{resnet_forward.18} parent=11 // pred_check
        %p182 = pneg %p85
      $region14: #{resnet_forward.18} parent=11 // pred_check_branch
        %184 = sbr.rel (%p182) target = $region16
      $region15: #{resnet_forward.18} parent=11 // pred_region
        %s185 = smul.u32 144, %s22
        %p186 = scmp.lt.s32.totalorder %s185, 143
        %s187 = scalar_select %p186, %s185, 143
        %p188 = scmp.lt.s32.totalorder %s21, 0
        %s189 = scalar_select %p188, %s21, 0
        %s190 = sadd.s32 %s189, %s187
        %s191 = smul.addr %s190, 4
        %s192 = scalar_lea.vmem %s1, %s191
        %s193 = smul.u32 144, %s22
      $region16: #{resnet_forward.18} parent=11 // pred_fallthru
        _
      // Predicated region
      $region17: #{resnet_forward.18} parent=11 // pred_check
        %p194 = pneg %p111
      $region18: #{resnet_forward.18} parent=11 // pred_check_branch
        %196 = sbr.rel (%p194) target = $region20
      $region19: #{resnet_forward.18} parent=11 // pred_region
        %p197 = scmp.lt.s32.totalorder %s21, 0
        %s198 = scalar_select %p197, %s21, 0
        %s199 = scalar_lea.vmem %s2, %s198
      $region20: #{resnet_forward.18} parent=11 // pred_fallthru
        _
    $region12: #{resnet_forward.18} parent=5 // pred_fallthru
      _
    %p200 = scmp.lt.s32.totalorder %s10, 2
    // Predicated region
    $region21: #{resnet_forward.18} parent=5 // pred_check
      %p201 = pneg %p200
    $region22: #{resnet_forward.18} parent=5 // pred_check_branch
      %203 = sbr.rel (%p201) target = $region24
    $region23: #{resnet_forward.18} parent=5 // pred_region
      // Predicated region
      $region25: #{resnet_forward.18} parent=23 // pred_check
        %p204 = pneg %p51
      $region26: #{resnet_forward.18} parent=23 // pred_check_branch
        %206 = sbr.rel (%p204) target = $region28
      $region27: #{resnet_forward.18} parent=23 // pred_region
        %s207 = smul.u32 8, %s17
        %s208 = smul.u32 9, %s19
        %p209 = scmp.lt.s32.totalorder %s207, 15
        %s210 = scalar_select %p209, %s207, 15
        %p211 = scmp.lt.s32.totalorder %s208, 8
        %s212 = scalar_select %p211, %s208, 8
        %s213 = smul.addr %s210, 9
        %s214 = sadd.s32 %s212, %s213
        %s215 = smul.addr %s214, 4
        %s216 = scalar_lea.vmem %s0, %s215
        %s217 = smul.u32 8, %s17
        %s218 = smul.u32 9, %s19
      $region28: #{resnet_forward.18} parent=23 // pred_fallthru
        _
      // Predicated region
      $region29: #{resnet_forward.18} parent=23 // pred_check
        %p219 = pneg %p133
      $region30: #{resnet_forward.18} parent=23 // pred_check_branch
        %221 = sbr.rel (%p219) target = $region32
      $region31: #{resnet_forward.18} parent=23 // pred_region
        %s222 = smul.u32 8, %s17
        %p223 = scmp.lt.s32.totalorder %s222, 15
        %s224 = scalar_select %p223, %s222, 15
        %p225 = scmp.lt.s32.totalorder %s18, 0
        %s226 = scalar_select %p225, %s18, 0
        %s227 = sadd.s32 %s226, %s224
        %s228 = smul.addr %s227, 4
        %s229 = scalar_lea.vmem %s3, %s228
        %s230 = smul.u32 8, %s17
      $region32: #{resnet_forward.18} parent=23 // pred_fallthru
        _
    $region24: #{resnet_forward.18} parent=5 // pred_fallthru
      _
    %p231 = scmp.le.s32.totalorder 1, %s10
    %p232 = scmp.lt.s32.totalorder %s10, 3
    %p233 = pnand %p231, %p232
    %p234 = pneg %p233
    // Predicated region
    $region33: #{resnet_forward.18} parent=5 // pred_check
      _
    $region34: #{resnet_forward.18} parent=5 // pred_check_branch
      %236 = sbr.rel (%p233) target = $region36
    $region35: #{resnet_forward.18} parent=5 // pred_region
      %s237 = ssub.s32 %s10, 1
      %s238 = smul.u32 8, %s20
      %s239 = smul.u32 9, %s22
      %p240 = scmp.lt.s32.totalorder %s238, 15
      %s241 = scalar_select %p240, %s238, 15
      %p242 = scmp.lt.s32.totalorder %s239, 8
      %s243 = scalar_select %p242, %s239, 8
      %s244 = smul.addr %s241, 9
      %s245 = sadd.s32 %s243, %s244
      %s246 = smul.addr %s245, 4
      %s247 = scalar_lea.vmem %s0, %s246
      %p248 = pneg %p57
      %p249 = pneg %p54
      %s250 = smul.u32 144, %s22
      %p251 = scmp.lt.s32.totalorder %s250, 143
      %s252 = scalar_select %p251, %s250, 143
      %p253 = scmp.lt.s32.totalorder %s21, 0
      %s254 = scalar_select %p253, %s21, 0
      %s255 = sadd.s32 %s254, %s252
      %s256 = smul.addr %s255, 4
      %s257 = scalar_lea.vmem %s1, %s256
      %p258 = pneg %p85
      %p259 = pneg %p82
      %p260 = scmp.lt.s32.totalorder %s21, 0
      %s261 = scalar_select %p260, %s21, 0
      %s262 = scalar_lea.vmem %s2, %s261
      %p263 = pneg %p111
      %p264 = pneg %p108
      %s265 = smul.u32 8, %s20
      %p266 = scmp.lt.s32.totalorder %s265, 15
      %s267 = scalar_select %p266, %s265, 15
      %p268 = scmp.lt.s32.totalorder %s21, 0
      %s269 = scalar_select %p268, %s21, 0
      %s270 = sadd.s32 %s269, %s267
      %s271 = smul.addr %s270, 4
      %s272 = scalar_lea.vmem %s3, %s271
      %p273 = pneg %p139
      %p274 = pneg %p136
      %p275 = pneg %p167
      %p276 = pneg %p164
      %s277 = smul.u32 8, %s20
      %p278 = scmp.lt.s32.totalorder %s277, 15
      %s279 = scalar_select %p278, %s277, 15
      %p280 = scmp.lt.s32.totalorder %s21, 0
      %s281 = scalar_select %p280, %s21, 0
      %s282 = sadd.s32 %s281, %s279
      %s283 = smul.addr %s282, 4
      %s284 = scalar_lea.vmem %s4, %s283
      %s285 = smul.u32 8, %s20
      %s286 = smul.u32 9, %s22
      %p287 = scmp.lt.s32.totalorder %s285, 15
      %s288 = scalar_select %p287, %s285, 15
      %p289 = scmp.lt.s32.totalorder %s286, 8
      %s290 = scalar_select %p289, %s286, 8
      %s291 = smul.addr %s288, 9
      %s292 = sadd.s32 %s290, %s291
      %s293 = smul.addr %s292, 4
      %s294 = scalar_lea.vmem %s0, %s293
      %s295 = smul.u32 8, %s20
      %s296 = smul.u32 9, %s22
      %s297 = smul.u32 144, %s22
      %p298 = scmp.lt.s32.totalorder %s297, 143
      %s299 = scalar_select %p298, %s297, 143
      %p300 = scmp.lt.s32.totalorder %s21, 0
      %s301 = scalar_select %p300, %s21, 0
      %s302 = sadd.s32 %s301, %s299
      %s303 = smul.addr %s302, 4
      %s304 = scalar_lea.vmem %s1, %s303
      %s305 = smul.u32 144, %s22
      %p306 = scmp.lt.s32.totalorder %s21, 0
      %s307 = scalar_select %p306, %s21, 0
      %s308 = scalar_lea.vmem %s2, %s307
      %s309 = smul.u32 8, %s20
      %p310 = scmp.lt.s32.totalorder %s309, 15
      %s311 = scalar_select %p310, %s309, 15
      %p312 = scmp.lt.s32.totalorder %s21, 0
      %s313 = scalar_select %p312, %s21, 0
      %s314 = sadd.s32 %s313, %s311
      %s315 = smul.addr %s314, 4
      %s316 = scalar_lea.vmem %s3, %s315
      %s317 = smul.u32 8, %s20
      %s318 = smul.u32 8, %s20
      %p319 = scmp.lt.s32.totalorder %s318, 15
      %s320 = scalar_select %p319, %s318, 15
      %p321 = scmp.lt.s32.totalorder %s21, 0
      %s322 = scalar_select %p321, %s21, 0
      %s323 = sadd.s32 %s322, %s320
      %s324 = smul.addr %s323, 4
      %s325 = scalar_lea.vmem %s4, %s324
      %s326 = smul.u32 8, %s20
      %p328 = scmp.eq.s32.totalorder %s22, 0
      // Predicated region
      $region37: #{resnet_forward.18} parent=35 // pred_check
        %p329 = pneg %p328
      $region38: #{resnet_forward.18} parent=35 // pred_check_branch
        %331 = sbr.rel (%p329) target = $region40
      $region39: #{resnet_forward.18} parent=35 // pred_region
        %332 = vst [vmem:[#allocation2] sm:$0xff] 0.0
        %333 = vst [vmem:[#allocation2 + $0x8] sm:$0xff] 0.0
        %334 = vst [vmem:[#allocation2 + $0x10] sm:$0xff] 0.0
        %335 = vst [vmem:[#allocation2 + $0x18] sm:$0xff] 0.0
        %336 = vst [vmem:[#allocation2 + $0x20] sm:$0xff] 0.0
        %337 = vst [vmem:[#allocation2 + $0x28] sm:$0xff] 0.0
        %338 = vst [vmem:[#allocation2 + $0x30] sm:$0xff] 0.0
        %339 = vst [vmem:[#allocation2 + $0x38] sm:$0xff] 0.0
      $region40: #{resnet_forward.18} parent=35 // pred_fallthru
        _
      %v340 = vld [vmem:[#allocation2] sm:$0xff]
      %v341 = vld [vmem:[#allocation2 + $0x8] sm:$0xff]
      %v342 = vld [vmem:[#allocation2 + $0x10] sm:$0xff]
      %v343 = vld [vmem:[#allocation2 + $0x18] sm:$0xff]
      %v344 = vld [vmem:[#allocation2 + $0x20] sm:$0xff]
      %v345 = vld [vmem:[#allocation2 + $0x28] sm:$0xff]
      %v346 = vld [vmem:[#allocation2 + $0x30] sm:$0xff]
      %v347 = vld [vmem:[#allocation2 + $0x38] sm:$0xff]
      %v348 = vld [vmem:[%s294] sm:$0xff]
      %v349 = vld [vmem:[%s294 + $0x8] sm:$0xff]
      %v350 = vld [vmem:[%s294 + $0x10] sm:$0xff]
      %v351 = vld [vmem:[%s294 + $0x18] sm:$0xff]
      %v352 = vld [vmem:[%s294 + $0x20] sm:$0xf]
      %v353 = vld [vmem:[%s294 + $0x24] sm:$0xff]
      %v354 = vld [vmem:[%s294 + $0x2c] sm:$0xff]
      %v355 = vld [vmem:[%s294 + $0x34] sm:$0xff]
      %v356 = vld [vmem:[%s294 + $0x3c] sm:$0xff]
      %v357 = vld [vmem:[%s294 + $0x44] sm:$0xf]
      %v358 = vld [vmem:[%s294 + $0x48] sm:$0xff]
      %v359 = vld [vmem:[%s294 + $0x50] sm:$0xff]
      %v360 = vld [vmem:[%s294 + $0x58] sm:$0xff]
      %v361 = vld [vmem:[%s294 + $0x60] sm:$0xff]
      %v362 = vld [vmem:[%s294 + $0x68] sm:$0xf]
      %v363 = vld [vmem:[%s294 + $0x6c] sm:$0xff]
      %v364 = vld [vmem:[%s294 + $0x74] sm:$0xff]
      %v365 = vld [vmem:[%s294 + $0x7c] sm:$0xff]
      %v366 = vld [vmem:[%s294 + $0x84] sm:$0xff]
      %v367 = vld [vmem:[%s294 + $0x8c] sm:$0xf]
      %v368 = vld [vmem:[%s294 + $0x90] sm:$0xff]
      %v369 = vld [vmem:[%s294 + $0x98] sm:$0xff]
      %v370 = vld [vmem:[%s294 + $0xa0] sm:$0xff]
      %v371 = vld [vmem:[%s294 + $0xa8] sm:$0xff]
      %v372 = vld [vmem:[%s294 + $0xb0] sm:$0xf]
      %v373 = vld [vmem:[%s294 + $0xb4] sm:$0xff]
      %v374 = vld [vmem:[%s294 + $0xbc] sm:$0xff]
      %v375 = vld [vmem:[%s294 + $0xc4] sm:$0xff]
      %v376 = vld [vmem:[%s294 + $0xcc] sm:$0xff]
      %v377 = vld [vmem:[%s294 + $0xd4] sm:$0xf]
      %v378 = vld [vmem:[%s294 + $0xd8] sm:$0xff]
      %v379 = vld [vmem:[%s294 + $0xe0] sm:$0xff]
      %v380 = vld [vmem:[%s294 + $0xe8] sm:$0xff]
      %v381 = vld [vmem:[%s294 + $0xf0] sm:$0xff]
      %v382 = vld [vmem:[%s294 + $0xf8] sm:$0xf]
      %v383 = vld [vmem:[%s294 + $0xfc] sm:$0xff]
      %v384 = vld [vmem:[%s294 + $0x104] sm:$0xff]
      %v385 = vld [vmem:[%s294 + $0x10c] sm:$0xff]
      %v386 = vld [vmem:[%s294 + $0x114] sm:$0xff]
      %v387 = vld [vmem:[%s294 + $0x11c] sm:$0xf]
      %v388 = vld [vmem:[%s304] sm:$0xf]
      %v389 = vld [vmem:[%s304 + $0x4] sm:$0xf]
      %v390 = vld [vmem:[%s304 + $0x8] sm:$0xf]
      %v391 = vld [vmem:[%s304 + $0xc] sm:$0xf]
      %v392 = vld [vmem:[%s304 + $0x10] sm:$0xf]
      %v393 = vld [vmem:[%s304 + $0x14] sm:$0xf]
      %v394 = vld [vmem:[%s304 + $0x18] sm:$0xf]
      %v395 = vld [vmem:[%s304 + $0x1c] sm:$0xf]
      %v396 = vld [vmem:[%s304 + $0x20] sm:$0xf]
      %v397 = vld [vmem:[%s304 + $0x24] sm:$0xf]
      %v398 = vld [vmem:[%s304 + $0x28] sm:$0xf]
      %v399 = vld [vmem:[%s304 + $0x2c] sm:$0xf]
      %v400 = vld [vmem:[%s304 + $0x30] sm:$0xf]
      %v401 = vld [vmem:[%s304 + $0x34] sm:$0xf]
      %v402 = vld [vmem:[%s304 + $0x38] sm:$0xf]
      %v403 = vld [vmem:[%s304 + $0x3c] sm:$0xf]
      %v404 = vld [vmem:[%s304 + $0x40] sm:$0xf]
      %v405 = vld [vmem:[%s304 + $0x44] sm:$0xf]
      %v406 = vld [vmem:[%s304 + $0x48] sm:$0xf]
      %v407 = vld [vmem:[%s304 + $0x4c] sm:$0xf]
      %v408 = vld [vmem:[%s304 + $0x50] sm:$0xf]
      %v409 = vld [vmem:[%s304 + $0x54] sm:$0xf]
      %v410 = vld [vmem:[%s304 + $0x58] sm:$0xf]
      %v411 = vld [vmem:[%s304 + $0x5c] sm:$0xf]
      %v412 = vld [vmem:[%s304 + $0x60] sm:$0xf]
      %v413 = vld [vmem:[%s304 + $0x64] sm:$0xf]
      %v414 = vld [vmem:[%s304 + $0x68] sm:$0xf]
      %v415 = vld [vmem:[%s304 + $0x6c] sm:$0xf]
      %v416 = vld [vmem:[%s304 + $0x70] sm:$0xf]
      %v417 = vld [vmem:[%s304 + $0x74] sm:$0xf]
      %v418 = vld [vmem:[%s304 + $0x78] sm:$0xf]
      %v419 = vld [vmem:[%s304 + $0x7c] sm:$0xf]
      %v420 = vld [vmem:[%s304 + $0x80] sm:$0xf]
      %v421 = vld [vmem:[%s304 + $0x84] sm:$0xf]
      %v422 = vld [vmem:[%s304 + $0x88] sm:$0xf]
      %v423 = vld [vmem:[%s304 + $0x8c] sm:$0xf]
      %v424 = vld [vmem:[%s304 + $0x90] sm:$0xf]
      %v425 = vld [vmem:[%s304 + $0x94] sm:$0xf]
      %v426 = vld [vmem:[%s304 + $0x98] sm:$0xf]
      %v427 = vld [vmem:[%s304 + $0x9c] sm:$0xf]
      %v428 = vld [vmem:[%s304 + $0xa0] sm:$0xf]
      %v429 = vld [vmem:[%s304 + $0xa4] sm:$0xf]
      %v430 = vld [vmem:[%s304 + $0xa8] sm:$0xf]
      %v431 = vld [vmem:[%s304 + $0xac] sm:$0xf]
      %v432 = vld [vmem:[%s304 + $0xb0] sm:$0xf]
      %v433 = vld [vmem:[%s304 + $0xb4] sm:$0xf]
      %v434 = vld [vmem:[%s304 + $0xb8] sm:$0xf]
      %v435 = vld [vmem:[%s304 + $0xbc] sm:$0xf]
      %v436 = vld [vmem:[%s304 + $0xc0] sm:$0xf]
      %v437 = vld [vmem:[%s304 + $0xc4] sm:$0xf]
      %v438 = vld [vmem:[%s304 + $0xc8] sm:$0xf]
      %v439 = vld [vmem:[%s304 + $0xcc] sm:$0xf]
      %v440 = vld [vmem:[%s304 + $0xd0] sm:$0xf]
      %v441 = vld [vmem:[%s304 + $0xd4] sm:$0xf]
      %v442 = vld [vmem:[%s304 + $0xd8] sm:$0xf]
      %v443 = vld [vmem:[%s304 + $0xdc] sm:$0xf]
      %v444 = vld [vmem:[%s304 + $0xe0] sm:$0xf]
      %v445 = vld [vmem:[%s304 + $0xe4] sm:$0xf]
      %v446 = vld [vmem:[%s304 + $0xe8] sm:$0xf]
      %v447 = vld [vmem:[%s304 + $0xec] sm:$0xf]
      %v448 = vld [vmem:[%s304 + $0xf0] sm:$0xf]
      %v449 = vld [vmem:[%s304 + $0xf4] sm:$0xf]
      %v450 = vld [vmem:[%s304 + $0xf8] sm:$0xf]
      %v451 = vld [vmem:[%s304 + $0xfc] sm:$0xf]
      %v452 = vld [vmem:[%s304 + $0x100] sm:$0xf]
      %v453 = vld [vmem:[%s304 + $0x104] sm:$0xf]
      %v454 = vld [vmem:[%s304 + $0x108] sm:$0xf]
      %v455 = vld [vmem:[%s304 + $0x10c] sm:$0xf]
      %v456 = vld [vmem:[%s304 + $0x110] sm:$0xf]
      %v457 = vld [vmem:[%s304 + $0x114] sm:$0xf]
      %v458 = vld [vmem:[%s304 + $0x118] sm:$0xf]
      %v459 = vld [vmem:[%s304 + $0x11c] sm:$0xf]
      %v460 = vld [vmem:[%s304 + $0x120] sm:$0xf]
      %v461 = vld [vmem:[%s304 + $0x124] sm:$0xf]
      %v462 = vld [vmem:[%s304 + $0x128] sm:$0xf]
      %v463 = vld [vmem:[%s304 + $0x12c] sm:$0xf]
      %v464 = vld [vmem:[%s304 + $0x130] sm:$0xf]
      %v465 = vld [vmem:[%s304 + $0x134] sm:$0xf]
      %v466 = vld [vmem:[%s304 + $0x138] sm:$0xf]
      %v467 = vld [vmem:[%s304 + $0x13c] sm:$0xf]
      %v468 = vld [vmem:[%s304 + $0x140] sm:$0xf]
      %v469 = vld [vmem:[%s304 + $0x144] sm:$0xf]
      %v470 = vld [vmem:[%s304 + $0x148] sm:$0xf]
      %v471 = vld [vmem:[%s304 + $0x14c] sm:$0xf]
      %v472 = vld [vmem:[%s304 + $0x150] sm:$0xf]
      %v473 = vld [vmem:[%s304 + $0x154] sm:$0xf]
      %v474 = vld [vmem:[%s304 + $0x158] sm:$0xf]
      %v475 = vld [vmem:[%s304 + $0x15c] sm:$0xf]
      %v476 = vld [vmem:[%s304 + $0x160] sm:$0xf]
      %v477 = vld [vmem:[%s304 + $0x164] sm:$0xf]
      %v478 = vld [vmem:[%s304 + $0x168] sm:$0xf]
      %v479 = vld [vmem:[%s304 + $0x16c] sm:$0xf]
      %v480 = vld [vmem:[%s304 + $0x170] sm:$0xf]
      %v481 = vld [vmem:[%s304 + $0x174] sm:$0xf]
      %v482 = vld [vmem:[%s304 + $0x178] sm:$0xf]
      %v483 = vld [vmem:[%s304 + $0x17c] sm:$0xf]
      %v484 = vld [vmem:[%s304 + $0x180] sm:$0xf]
      %v485 = vld [vmem:[%s304 + $0x184] sm:$0xf]
      %v486 = vld [vmem:[%s304 + $0x188] sm:$0xf]
      %v487 = vld [vmem:[%s304 + $0x18c] sm:$0xf]
      %v488 = vld [vmem:[%s304 + $0x190] sm:$0xf]
      %v489 = vld [vmem:[%s304 + $0x194] sm:$0xf]
      %v490 = vld [vmem:[%s304 + $0x198] sm:$0xf]
      %v491 = vld [vmem:[%s304 + $0x19c] sm:$0xf]
      %v492 = vld [vmem:[%s304 + $0x1a0] sm:$0xf]
      %v493 = vld [vmem:[%s304 + $0x1a4] sm:$0xf]
      %v494 = vld [vmem:[%s304 + $0x1a8] sm:$0xf]
      %v495 = vld [vmem:[%s304 + $0x1ac] sm:$0xf]
      %v496 = vld [vmem:[%s304 + $0x1b0] sm:$0xf]
      %v497 = vld [vmem:[%s304 + $0x1b4] sm:$0xf]
      %v498 = vld [vmem:[%s304 + $0x1b8] sm:$0xf]
      %v499 = vld [vmem:[%s304 + $0x1bc] sm:$0xf]
      %v500 = vld [vmem:[%s304 + $0x1c0] sm:$0xf]
      %v501 = vld [vmem:[%s304 + $0x1c4] sm:$0xf]
      %v502 = vld [vmem:[%s304 + $0x1c8] sm:$0xf]
      %v503 = vld [vmem:[%s304 + $0x1cc] sm:$0xf]
      %v504 = vld [vmem:[%s304 + $0x1d0] sm:$0xf]
      %v505 = vld [vmem:[%s304 + $0x1d4] sm:$0xf]
      %v506 = vld [vmem:[%s304 + $0x1d8] sm:$0xf]
      %v507 = vld [vmem:[%s304 + $0x1dc] sm:$0xf]
      %v508 = vld [vmem:[%s304 + $0x1e0] sm:$0xf]
      %v509 = vld [vmem:[%s304 + $0x1e4] sm:$0xf]
      %v510 = vld [vmem:[%s304 + $0x1e8] sm:$0xf]
      %v511 = vld [vmem:[%s304 + $0x1ec] sm:$0xf]
      %v512 = vld [vmem:[%s304 + $0x1f0] sm:$0xf]
      %v513 = vld [vmem:[%s304 + $0x1f4] sm:$0xf]
      %v514 = vld [vmem:[%s304 + $0x1f8] sm:$0xf]
      %v515 = vld [vmem:[%s304 + $0x1fc] sm:$0xf]
      %v516 = vld [vmem:[%s304 + $0x200] sm:$0xf]
      %v517 = vld [vmem:[%s304 + $0x204] sm:$0xf]
      %v518 = vld [vmem:[%s304 + $0x208] sm:$0xf]
      %v519 = vld [vmem:[%s304 + $0x20c] sm:$0xf]
      %v520 = vld [vmem:[%s304 + $0x210] sm:$0xf]
      %v521 = vld [vmem:[%s304 + $0x214] sm:$0xf]
      %v522 = vld [vmem:[%s304 + $0x218] sm:$0xf]
      %v523 = vld [vmem:[%s304 + $0x21c] sm:$0xf]
      %v524 = vld [vmem:[%s304 + $0x220] sm:$0xf]
      %v525 = vld [vmem:[%s304 + $0x224] sm:$0xf]
      %v526 = vld [vmem:[%s304 + $0x228] sm:$0xf]
      %v527 = vld [vmem:[%s304 + $0x22c] sm:$0xf]
      %v528 = vld [vmem:[%s304 + $0x230] sm:$0xf]
      %v529 = vld [vmem:[%s304 + $0x234] sm:$0xf]
      %v530 = vld [vmem:[%s304 + $0x238] sm:$0xf]
      %v531 = vld [vmem:[%s304 + $0x23c] sm:$0xf]
      %v572 = vunpack.c.l.b16 %v348
      %v573 = vunpack.c.h.b16 %v348
      %v574 = vunpack.c.l.b16 %v349
      %v575 = vunpack.c.h.b16 %v349
      %v576 = vunpack.c.l.b16 %v350
      %v577 = vunpack.c.h.b16 %v350
      %v578 = vunpack.c.l.b16 %v351
      %v579 = vunpack.c.h.b16 %v351
      %v580 = vunpack.c.l.b16 %v352
      %v581 = vunpack.c.l.b16 %v353
      %v582 = vunpack.c.h.b16 %v353
      %v583 = vunpack.c.l.b16 %v354
      %v584 = vunpack.c.h.b16 %v354
      %v585 = vunpack.c.l.b16 %v355
      %v586 = vunpack.c.h.b16 %v355
      %v587 = vunpack.c.l.b16 %v356
      %v588 = vunpack.c.h.b16 %v356
      %v589 = vunpack.c.l.b16 %v357
      %v590 = vunpack.c.l.b16 %v358
      %v591 = vunpack.c.h.b16 %v358
      %v592 = vunpack.c.l.b16 %v359
      %v593 = vunpack.c.h.b16 %v359
      %v594 = vunpack.c.l.b16 %v360
      %v595 = vunpack.c.h.b16 %v360
      %v596 = vunpack.c.l.b16 %v361
      %v597 = vunpack.c.h.b16 %v361
      %v598 = vunpack.c.l.b16 %v362
      %v599 = vunpack.c.l.b16 %v363
      %v600 = vunpack.c.h.b16 %v363
      %v601 = vunpack.c.l.b16 %v364
      %v602 = vunpack.c.h.b16 %v364
      %v603 = vunpack.c.l.b16 %v365
      %v604 = vunpack.c.h.b16 %v365
      %v605 = vunpack.c.l.b16 %v366
      %v606 = vunpack.c.h.b16 %v366
      %v607 = vunpack.c.l.b16 %v367
      %v608 = vunpack.c.l.b16 %v368
      %v609 = vunpack.c.h.b16 %v368
      %v610 = vunpack.c.l.b16 %v369
      %v611 = vunpack.c.h.b16 %v369
      %v612 = vunpack.c.l.b16 %v370
      %v613 = vunpack.c.h.b16 %v370
      %v614 = vunpack.c.l.b16 %v371
      %v615 = vunpack.c.h.b16 %v371
      %v616 = vunpack.c.l.b16 %v372
      %v617 = vunpack.c.l.b16 %v373
      %v618 = vunpack.c.h.b16 %v373
      %v619 = vunpack.c.l.b16 %v374
      %v620 = vunpack.c.h.b16 %v374
      %v621 = vunpack.c.l.b16 %v375
      %v622 = vunpack.c.h.b16 %v375
      %v623 = vunpack.c.l.b16 %v376
      %v624 = vunpack.c.h.b16 %v376
      %v625 = vunpack.c.l.b16 %v377
      %v626 = vunpack.c.l.b16 %v378
      %v627 = vunpack.c.h.b16 %v378
      %v628 = vunpack.c.l.b16 %v379
      %v629 = vunpack.c.h.b16 %v379
      %v630 = vunpack.c.l.b16 %v380
      %v631 = vunpack.c.h.b16 %v380
      %v632 = vunpack.c.l.b16 %v381
      %v633 = vunpack.c.h.b16 %v381
      %v634 = vunpack.c.l.b16 %v382
      %v635 = vunpack.c.l.b16 %v383
      %v636 = vunpack.c.h.b16 %v383
      %v637 = vunpack.c.l.b16 %v384
      %v638 = vunpack.c.h.b16 %v384
      %v639 = vunpack.c.l.b16 %v385
      %v640 = vunpack.c.h.b16 %v385
      %v641 = vunpack.c.l.b16 %v386
      %v642 = vunpack.c.h.b16 %v386
      %v643 = vunpack.c.l.b16 %v387
      %v644 = vpack.c.b16 %v581, %v572
      %v645 = vpack.c.b16 %v582, %v573
      %v646 = vpack.c.b16 %v583, %v574
      %v647 = vpack.c.b16 %v584, %v575
      %v648 = vpack.c.b16 %v585, %v576
      %v649 = vpack.c.b16 %v586, %v577
      %v650 = vpack.c.b16 %v587, %v578
      %v651 = vpack.c.b16 %v588, %v579
      %v652 = vpack.c.b16 %v589, %v580
      %v653 = vpack.c.b16 %v599, %v590
      %v654 = vpack.c.b16 %v600, %v591
      %v655 = vpack.c.b16 %v601, %v592
      %v656 = vpack.c.b16 %v602, %v593
      %v657 = vpack.c.b16 %v603, %v594
      %v658 = vpack.c.b16 %v604, %v595
      %v659 = vpack.c.b16 %v605, %v596
      %v660 = vpack.c.b16 %v606, %v597
      %v661 = vpack.c.b16 %v607, %v598
      %v662 = vpack.c.b16 %v617, %v608
      %v663 = vpack.c.b16 %v618, %v609
      %v664 = vpack.c.b16 %v619, %v610
      %v665 = vpack.c.b16 %v620, %v611
      %v666 = vpack.c.b16 %v621, %v612
      %v667 = vpack.c.b16 %v622, %v613
      %v668 = vpack.c.b16 %v623, %v614
      %v669 = vpack.c.b16 %v624, %v615
      %v670 = vpack.c.b16 %v625, %v616
      %v671 = vpack.c.b16 %v635, %v626
      %v672 = vpack.c.b16 %v636, %v627
      %v673 = vpack.c.b16 %v637, %v628
      %v674 = vpack.c.b16 %v638, %v629
      %v675 = vpack.c.b16 %v639, %v630
      %v676 = vpack.c.b16 %v640, %v631
      %v677 = vpack.c.b16 %v641, %v632
      %v678 = vpack.c.b16 %v642, %v633
      %v679 = vpack.c.b16 %v643, %v634
      %v860 = vunpack.c.l.b16 %v388
      %v861 = vunpack.c.l.b16 %v389
      %v862 = vunpack.c.l.b16 %v390
      %v863 = vunpack.c.l.b16 %v391
      %v864 = vunpack.c.l.b16 %v392
      %v865 = vunpack.c.l.b16 %v393
      %v866 = vunpack.c.l.b16 %v394
      %v867 = vunpack.c.l.b16 %v395
      %v868 = vunpack.c.l.b16 %v396
      %v869 = vunpack.c.l.b16 %v397
      %v870 = vunpack.c.l.b16 %v398
      %v871 = vunpack.c.l.b16 %v399
      %v872 = vunpack.c.l.b16 %v400
      %v873 = vunpack.c.l.b16 %v401
      %v874 = vunpack.c.l.b16 %v402
      %v875 = vunpack.c.l.b16 %v403
      %v876 = vunpack.c.l.b16 %v404
      %v877 = vunpack.c.l.b16 %v405
      %v878 = vunpack.c.l.b16 %v406
      %v879 = vunpack.c.l.b16 %v407
      %v880 = vunpack.c.l.b16 %v408
      %v881 = vunpack.c.l.b16 %v409
      %v882 = vunpack.c.l.b16 %v410
      %v883 = vunpack.c.l.b16 %v411
      %v884 = vunpack.c.l.b16 %v412
      %v885 = vunpack.c.l.b16 %v413
      %v886 = vunpack.c.l.b16 %v414
      %v887 = vunpack.c.l.b16 %v415
      %v888 = vunpack.c.l.b16 %v416
      %v889 = vunpack.c.l.b16 %v417
      %v890 = vunpack.c.l.b16 %v418
      %v891 = vunpack.c.l.b16 %v419
      %v892 = vunpack.c.l.b16 %v420
      %v893 = vunpack.c.l.b16 %v421
      %v894 = vunpack.c.l.b16 %v422
      %v895 = vunpack.c.l.b16 %v423
      %v896 = vunpack.c.l.b16 %v424
      %v897 = vunpack.c.l.b16 %v425
      %v898 = vunpack.c.l.b16 %v426
      %v899 = vunpack.c.l.b16 %v427
      %v900 = vunpack.c.l.b16 %v428
      %v901 = vunpack.c.l.b16 %v429
      %v902 = vunpack.c.l.b16 %v430
      %v903 = vunpack.c.l.b16 %v431
      %v904 = vunpack.c.l.b16 %v432
      %v905 = vunpack.c.l.b16 %v433
      %v906 = vunpack.c.l.b16 %v434
      %v907 = vunpack.c.l.b16 %v435
      %v908 = vunpack.c.l.b16 %v436
      %v909 = vunpack.c.l.b16 %v437
      %v910 = vunpack.c.l.b16 %v438
      %v911 = vunpack.c.l.b16 %v439
      %v912 = vunpack.c.l.b16 %v440
      %v913 = vunpack.c.l.b16 %v441
      %v914 = vunpack.c.l.b16 %v442
      %v915 = vunpack.c.l.b16 %v443
      %v916 = vunpack.c.l.b16 %v444
      %v917 = vunpack.c.l.b16 %v445
      %v918 = vunpack.c.l.b16 %v446
      %v919 = vunpack.c.l.b16 %v447
      %v920 = vunpack.c.l.b16 %v448
      %v921 = vunpack.c.l.b16 %v449
      %v922 = vunpack.c.l.b16 %v450
      %v923 = vunpack.c.l.b16 %v451
      %v924 = vunpack.c.l.b16 %v452
      %v925 = vunpack.c.l.b16 %v453
      %v926 = vunpack.c.l.b16 %v454
      %v927 = vunpack.c.l.b16 %v455
      %v928 = vunpack.c.l.b16 %v456
      %v929 = vunpack.c.l.b16 %v457
      %v930 = vunpack.c.l.b16 %v458
      %v931 = vunpack.c.l.b16 %v459
      %v932 = vunpack.c.l.b16 %v460
      %v933 = vunpack.c.l.b16 %v461
      %v934 = vunpack.c.l.b16 %v462
      %v935 = vunpack.c.l.b16 %v463
      %v936 = vunpack.c.l.b16 %v464
      %v937 = vunpack.c.l.b16 %v465
      %v938 = vunpack.c.l.b16 %v466
      %v939 = vunpack.c.l.b16 %v467
      %v940 = vunpack.c.l.b16 %v468
      %v941 = vunpack.c.l.b16 %v469
      %v942 = vunpack.c.l.b16 %v470
      %v943 = vunpack.c.l.b16 %v471
      %v944 = vunpack.c.l.b16 %v472
      %v945 = vunpack.c.l.b16 %v473
      %v946 = vunpack.c.l.b16 %v474
      %v947 = vunpack.c.l.b16 %v475
      %v948 = vunpack.c.l.b16 %v476
      %v949 = vunpack.c.l.b16 %v477
      %v950 = vunpack.c.l.b16 %v478
      %v951 = vunpack.c.l.b16 %v479
      %v952 = vunpack.c.l.b16 %v480
      %v953 = vunpack.c.l.b16 %v481
      %v954 = vunpack.c.l.b16 %v482
      %v955 = vunpack.c.l.b16 %v483
      %v956 = vunpack.c.l.b16 %v484
      %v957 = vunpack.c.l.b16 %v485
      %v958 = vunpack.c.l.b16 %v486
      %v959 = vunpack.c.l.b16 %v487
      %v960 = vunpack.c.l.b16 %v488
      %v961 = vunpack.c.l.b16 %v489
      %v962 = vunpack.c.l.b16 %v490
      %v963 = vunpack.c.l.b16 %v491
      %v964 = vunpack.c.l.b16 %v492
      %v965 = vunpack.c.l.b16 %v493
      %v966 = vunpack.c.l.b16 %v494
      %v967 = vunpack.c.l.b16 %v495
      %v968 = vunpack.c.l.b16 %v496
      %v969 = vunpack.c.l.b16 %v497
      %v970 = vunpack.c.l.b16 %v498
      %v971 = vunpack.c.l.b16 %v499
      %v972 = vunpack.c.l.b16 %v500
      %v973 = vunpack.c.l.b16 %v501
      %v974 = vunpack.c.l.b16 %v502
      %v975 = vunpack.c.l.b16 %v503
      %v976 = vunpack.c.l.b16 %v504
      %v977 = vunpack.c.l.b16 %v505
      %v978 = vunpack.c.l.b16 %v506
      %v979 = vunpack.c.l.b16 %v507
      %v980 = vunpack.c.l.b16 %v508
      %v981 = vunpack.c.l.b16 %v509
      %v982 = vunpack.c.l.b16 %v510
      %v983 = vunpack.c.l.b16 %v511
      %v984 = vunpack.c.l.b16 %v512
      %v985 = vunpack.c.l.b16 %v513
      %v986 = vunpack.c.l.b16 %v514
      %v987 = vunpack.c.l.b16 %v515
      %v988 = vunpack.c.l.b16 %v516
      %v989 = vunpack.c.l.b16 %v517
      %v990 = vunpack.c.l.b16 %v518
      %v991 = vunpack.c.l.b16 %v519
      %v992 = vunpack.c.l.b16 %v520
      %v993 = vunpack.c.l.b16 %v521
      %v994 = vunpack.c.l.b16 %v522
      %v995 = vunpack.c.l.b16 %v523
      %v996 = vunpack.c.l.b16 %v524
      %v997 = vunpack.c.l.b16 %v525
      %v998 = vunpack.c.l.b16 %v526
      %v999 = vunpack.c.l.b16 %v527
      %v1000 = vunpack.c.l.b16 %v528
      %v1001 = vunpack.c.l.b16 %v529
      %v1002 = vunpack.c.l.b16 %v530
      %v1003 = vunpack.c.l.b16 %v531
      %v1004 = vpack.c.b16 %v861, %v860
      %v1005 = vpack.c.b16 %v863, %v862
      %v1006 = vpack.c.b16 %v865, %v864
      %v1007 = vpack.c.b16 %v867, %v866
      %v1008 = vpack.c.b16 %v869, %v868
      %v1009 = vpack.c.b16 %v871, %v870
      %v1010 = vpack.c.b16 %v873, %v872
      %v1011 = vpack.c.b16 %v875, %v874
      %v1012 = vpack.c.b16 %v877, %v876
      %v1013 = vpack.c.b16 %v879, %v878
      %v1014 = vpack.c.b16 %v881, %v880
      %v1015 = vpack.c.b16 %v883, %v882
      %v1016 = vpack.c.b16 %v885, %v884
      %v1017 = vpack.c.b16 %v887, %v886
      %v1018 = vpack.c.b16 %v889, %v888
      %v1019 = vpack.c.b16 %v891, %v890
      %v1020 = vpack.c.b16 %v893, %v892
      %v1021 = vpack.c.b16 %v895, %v894
      %v1022 = vpack.c.b16 %v897, %v896
      %v1023 = vpack.c.b16 %v899, %v898
      %v1024 = vpack.c.b16 %v901, %v900
      %v1025 = vpack.c.b16 %v903, %v902
      %v1026 = vpack.c.b16 %v905, %v904
      %v1027 = vpack.c.b16 %v907, %v906
      %v1028 = vpack.c.b16 %v909, %v908
      %v1029 = vpack.c.b16 %v911, %v910
      %v1030 = vpack.c.b16 %v913, %v912
      %v1031 = vpack.c.b16 %v915, %v914
      %v1032 = vpack.c.b16 %v917, %v916
      %v1033 = vpack.c.b16 %v919, %v918
      %v1034 = vpack.c.b16 %v921, %v920
      %v1035 = vpack.c.b16 %v923, %v922
      %v1036 = vpack.c.b16 %v925, %v924
      %v1037 = vpack.c.b16 %v927, %v926
      %v1038 = vpack.c.b16 %v929, %v928
      %v1039 = vpack.c.b16 %v931, %v930
      %v1040 = vpack.c.b16 %v933, %v932
      %v1041 = vpack.c.b16 %v935, %v934
      %v1042 = vpack.c.b16 %v937, %v936
      %v1043 = vpack.c.b16 %v939, %v938
      %v1044 = vpack.c.b16 %v941, %v940
      %v1045 = vpack.c.b16 %v943, %v942
      %v1046 = vpack.c.b16 %v945, %v944
      %v1047 = vpack.c.b16 %v947, %v946
      %v1048 = vpack.c.b16 %v949, %v948
      %v1049 = vpack.c.b16 %v951, %v950
      %v1050 = vpack.c.b16 %v953, %v952
      %v1051 = vpack.c.b16 %v955, %v954
      %v1052 = vpack.c.b16 %v957, %v956
      %v1053 = vpack.c.b16 %v959, %v958
      %v1054 = vpack.c.b16 %v961, %v960
      %v1055 = vpack.c.b16 %v963, %v962
      %v1056 = vpack.c.b16 %v965, %v964
      %v1057 = vpack.c.b16 %v967, %v966
      %v1058 = vpack.c.b16 %v969, %v968
      %v1059 = vpack.c.b16 %v971, %v970
      %v1060 = vpack.c.b16 %v973, %v972
      %v1061 = vpack.c.b16 %v975, %v974
      %v1062 = vpack.c.b16 %v977, %v976
      %v1063 = vpack.c.b16 %v979, %v978
      %v1064 = vpack.c.b16 %v981, %v980
      %v1065 = vpack.c.b16 %v983, %v982
      %v1066 = vpack.c.b16 %v985, %v984
      %v1067 = vpack.c.b16 %v987, %v986
      %v1068 = vpack.c.b16 %v989, %v988
      %v1069 = vpack.c.b16 %v991, %v990
      %v1070 = vpack.c.b16 %v993, %v992
      %v1071 = vpack.c.b16 %v995, %v994
      %v1072 = vpack.c.b16 %v997, %v996
      %v1073 = vpack.c.b16 %v999, %v998
      %v1074 = vpack.c.b16 %v1001, %v1000
      %v1075 = vpack.c.b16 %v1003, %v1002
      %1148 = vmatprep.subr.bf16.mxu0 0
      %1149 = vmatpush1.bf16.msra.mxu0 %v1004
      %1150 = vmatprep.subr.bf16.mxu0 0
      %1151 = vmatpush1.bf16.msra.mxu0 %v1005
      %1152 = vmatprep.subr.bf16.mxu0 0
      %1153 = vmatpush1.bf16.msra.mxu0 %v1006
      %1154 = vmatprep.subr.bf16.mxu0 0
      %1155 = vmatpush1.bf16.msra.mxu0 %v1007
      %1156 = vmatprep.subr.bf16.mxu0 0
      %1157 = vmatpush1.bf16.msra.mxu0 %v1008
      %1158 = vmatprep.subr.bf16.mxu0 0
      %1159 = vmatpush1.bf16.msra.mxu0 %v1009
      %1160 = vmatprep.subr.bf16.mxu0 0
      %1161 = vmatpush1.bf16.msra.mxu0 %v1010
      %1162 = vmatprep.subr.bf16.mxu0 0
      %1163 = vmatpush1.bf16.msra.mxu0 %v1011
      %1164 = vmatprep.subr.bf16.mxu0 0
      %1165 = vmatpush1.bf16.msra.mxu0 %v1012
      %1166 = vmatprep.subr.bf16.mxu0 0
      %1167 = vmatpush1.bf16.msra.mxu0 %v1013
      %1168 = vmatprep.subr.bf16.mxu0 0
      %1169 = vmatpush1.bf16.msra.mxu0 %v1014
      %1170 = vmatprep.subr.bf16.mxu0 0
      %1171 = vmatpush1.bf16.msra.mxu0 %v1015
      %1172 = vmatprep.subr.bf16.mxu0 0
      %1173 = vmatpush1.bf16.msra.mxu0 %v1016
      %1174 = vmatprep.subr.bf16.mxu0 0
      %1175 = vmatpush1.bf16.msra.mxu0 %v1017
      %1176 = vmatprep.subr.bf16.mxu0 0
      %1177 = vmatpush1.bf16.msra.mxu0 %v1018
      %1178 = vmatprep.subr.bf16.mxu0 0
      %1179 = vmatpush1.bf16.msra.mxu0 %v1019
      %1180 = vmatprep.mubr.bf16.mxu0 %v645
      %1181 = vmatmul.mubr.bf16.gmra.mrb[0].mxu0 %v644
      %v1182 = vpop.f32.mrb[0].mxu0
      %v1183 = vadd.f32 0.0, %v1182
      %v1184 = vpop.f32.mrb[0].mxu0
      %v1185 = vpop.f32.mrb[0].mxu0
      %v1186 = vadd.f32 0.0, %v1185
      %v1187 = vpop.f32.mrb[0].mxu0
      %1188 = vmatprep.mubr.bf16.mxu0 %v654
      %1189 = vmatmul.mubr.bf16.gmra.mrb[0].mxu0 %v653
      %v1190 = vpop.f32.mrb[0].mxu0
      %v1191 = vadd.f32 0.0, %v1190
      %v1192 = vpop.f32.mrb[0].mxu0
      %v1193 = vpop.f32.mrb[0].mxu0
      %v1194 = vadd.f32 0.0, %v1193
      %v1195 = vpop.f32.mrb[0].mxu0
      %1196 = vmatprep.mubr.bf16.mxu0 %v663
      %1197 = vmatmul.mubr.bf16.gmra.mrb[0].mxu0 %v662
      %v1198 = vpop.f32.mrb[0].mxu0
      %v1199 = vadd.f32 0.0, %v1198
      %v1200 = vpop.f32.mrb[0].mxu0
      %v1201 = vpop.f32.mrb[0].mxu0
      %v1202 = vadd.f32 0.0, %v1201
      %v1203 = vpop.f32.mrb[0].mxu0
      %1204 = vmatprep.mubr.bf16.mxu0 %v672
      %1205 = vmatmul.mubr.bf16.gmra.mrb[0].mxu0 %v671
      %v1206 = vpop.f32.mrb[0].mxu0
      %v1207 = vadd.f32 0.0, %v1206
      %v1208 = vpop.f32.mrb[0].mxu0
      %v1209 = vpop.f32.mrb[0].mxu0
      %v1210 = vadd.f32 0.0, %v1209
      %v1211 = vpop.f32.mrb[0].mxu0
      %1212 = vdwg.mxu0
      %1213 = vmatprep.subr.bf16.mxu0 0
      %1214 = vmatpush1.bf16.msra.mxu0 %v1020
      %1215 = vmatprep.subr.bf16.mxu0 0
      %1216 = vmatpush1.bf16.msra.mxu0 %v1021
      %1217 = vmatprep.subr.bf16.mxu0 0
      %1218 = vmatpush1.bf16.msra.mxu0 %v1022
      %1219 = vmatprep.subr.bf16.mxu0 0
      %1220 = vmatpush1.bf16.msra.mxu0 %v1023
      %1221 = vmatprep.subr.bf16.mxu0 0
      %1222 = vmatpush1.bf16.msra.mxu0 %v1024
      %1223 = vmatprep.subr.bf16.mxu0 0
      %1224 = vmatpush1.bf16.msra.mxu0 %v1025
      %1225 = vmatprep.subr.bf16.mxu0 0
      %1226 = vmatpush1.bf16.msra.mxu0 %v1026
      %1227 = vmatprep.subr.bf16.mxu0 0
      %1228 = vmatpush1.bf16.msra.mxu0 %v1027
      %1229 = vmatprep.subr.bf16.mxu0 0
      %1230 = vmatpush1.bf16.msra.mxu0 %v1028
      %1231 = vmatprep.subr.bf16.mxu0 0
      %1232 = vmatpush1.bf16.msra.mxu0 %v1029
      %1233 = vmatprep.subr.bf16.mxu0 0
      %1234 = vmatpush1.bf16.msra.mxu0 %v1030
      %1235 = vmatprep.subr.bf16.mxu0 0
      %1236 = vmatpush1.bf16.msra.mxu0 %v1031
      %1237 = vmatprep.subr.bf16.mxu0 0
      %1238 = vmatpush1.bf16.msra.mxu0 %v1032
      %1239 = vmatprep.subr.bf16.mxu0 0
      %1240 = vmatpush1.bf16.msra.mxu0 %v1033
      %1241 = vmatprep.subr.bf16.mxu0 0
      %1242 = vmatpush1.bf16.msra.mxu0 %v1034
      %1243 = vmatprep.subr.bf16.mxu0 0
      %1244 = vmatpush1.bf16.msra.mxu0 %v1035
      %1245 = vmatprep.mubr.bf16.mxu0 %v647
      %1246 = vmatmul.mubr.bf16.gmra.mrb[0].mxu0 %v646
      %v1247 = vpop.f32.mrb[0].mxu0
      %v1248 = vadd.f32 %v1183, %v1247
      %v1249 = vpop.f32.mrb[0].mxu0
      %v1250 = vpop.f32.mrb[0].mxu0
      %v1251 = vadd.f32 %v1186, %v1250
      %v1252 = vpop.f32.mrb[0].mxu0
      %1253 = vmatprep.mubr.bf16.mxu0 %v656
      %1254 = vmatmul.mubr.bf16.gmra.mrb[0].mxu0 %v655
      %v1255 = vpop.f32.mrb[0].mxu0
      %v1256 = vadd.f32 %v1191, %v1255
      %v1257 = vpop.f32.mrb[0].mxu0
      %v1258 = vpop.f32.mrb[0].mxu0
      %v1259 = vadd.f32 %v1194, %v1258
      %v1260 = vpop.f32.mrb[0].mxu0
      %1261 = vmatprep.mubr.bf16.mxu0 %v665
      %1262 = vmatmul.mubr.bf16.gmra.mrb[0].mxu0 %v664
      %v1263 = vpop.f32.mrb[0].mxu0
      %v1264 = vadd.f32 %v1199, %v1263
      %v1265 = vpop.f32.mrb[0].mxu0
      %v1266 = vpop.f32.mrb[0].mxu0
      %v1267 = vadd.f32 %v1202, %v1266
      %v1268 = vpop.f32.mrb[0].mxu0
      %1269 = vmatprep.mubr.bf16.mxu0 %v674
      %1270 = vmatmul.mubr.bf16.gmra.mrb[0].mxu0 %v673
      %v1271 = vpop.f32.mrb[0].mxu0
      %v1272 = vadd.f32 %v1207, %v1271
      %v1273 = vpop.f32.mrb[0].mxu0
      %v1274 = vpop.f32.mrb[0].mxu0
      %v1275 = vadd.f32 %v1210, %v1274
      %v1276 = vpop.f32.mrb[0].mxu0
      %1277 = vdwg.mxu0
      %1278 = vmatprep.subr.bf16.mxu0 0
      %1279 = vmatpush1.bf16.msra.mxu0 %v1036
      %1280 = vmatprep.subr.bf16.mxu0 0
      %1281 = vmatpush1.bf16.msra.mxu0 %v1037
      %1282 = vmatprep.subr.bf16.mxu0 0
      %1283 = vmatpush1.bf16.msra.mxu0 %v1038
      %1284 = vmatprep.subr.bf16.mxu0 0
      %1285 = vmatpush1.bf16.msra.mxu0 %v1039
      %1286 = vmatprep.subr.bf16.mxu0 0
      %1287 = vmatpush1.bf16.msra.mxu0 %v1040
      %1288 = vmatprep.subr.bf16.mxu0 0
      %1289 = vmatpush1.bf16.msra.mxu0 %v1041
      %1290 = vmatprep.subr.bf16.mxu0 0
      %1291 = vmatpush1.bf16.msra.mxu0 %v1042
      %1292 = vmatprep.subr.bf16.mxu0 0
      %1293 = vmatpush1.bf16.msra.mxu0 %v1043
      %1294 = vmatprep.subr.bf16.mxu0 0
      %1295 = vmatpush1.bf16.msra.mxu0 %v1044
      %1296 = vmatprep.subr.bf16.mxu0 0
      %1297 = vmatpush1.bf16.msra.mxu0 %v1045
      %1298 = vmatprep.subr.bf16.mxu0 0
      %1299 = vmatpush1.bf16.msra.mxu0 %v1046
      %1300 = vmatprep.subr.bf16.mxu0 0
      %1301 = vmatpush1.bf16.msra.mxu0 %v1047
      %1302 = vmatprep.subr.bf16.mxu0 0
      %1303 = vmatpush1.bf16.msra.mxu0 %v1048
      %1304 = vmatprep.subr.bf16.mxu0 0
      %1305 = vmatpush1.bf16.msra.mxu0 %v1049
      %1306 = vmatprep.subr.bf16.mxu0 0
      %1307 = vmatpush1.bf16.msra.mxu0 %v1050
      %1308 = vmatprep.subr.bf16.mxu0 0
      %1309 = vmatpush1.bf16.msra.mxu0 %v1051
      %1310 = vmatprep.mubr.bf16.mxu0 %v649
      %1311 = vmatmul.mubr.bf16.gmra.mrb[0].mxu0 %v648
      %v1312 = vpop.f32.mrb[0].mxu0
      %v1313 = vadd.f32 %v1248, %v1312
      %v1314 = vpop.f32.mrb[0].mxu0
      %v1315 = vpop.f32.mrb[0].mxu0
      %v1316 = vadd.f32 %v1251, %v1315
      %v1317 = vpop.f32.mrb[0].mxu0
      %1318 = vmatprep.mubr.bf16.mxu0 %v658
      %1319 = vmatmul.mubr.bf16.gmra.mrb[0].mxu0 %v657
      %v1320 = vpop.f32.mrb[0].mxu0
      %v1321 = vadd.f32 %v1256, %v1320
      %v1322 = vpop.f32.mrb[0].mxu0
      %v1323 = vpop.f32.mrb[0].mxu0
      %v1324 = vadd.f32 %v1259, %v1323
      %v1325 = vpop.f32.mrb[0].mxu0
      %1326 = vmatprep.mubr.bf16.mxu0 %v667
      %1327 = vmatmul.mubr.bf16.gmra.mrb[0].mxu0 %v666
      %v1328 = vpop.f32.mrb[0].mxu0
      %v1329 = vadd.f32 %v1264, %v1328
      %v1330 = vpop.f32.mrb[0].mxu0
      %v1331 = vpop.f32.mrb[0].mxu0
      %v1332 = vadd.f32 %v1267, %v1331
      %v1333 = vpop.f32.mrb[0].mxu0
      %1334 = vmatprep.mubr.bf16.mxu0 %v676
      %1335 = vmatmul.mubr.bf16.gmra.mrb[0].mxu0 %v675
      %v1336 = vpop.f32.mrb[0].mxu0
      %v1337 = vadd.f32 %v1272, %v1336
      %v1338 = vpop.f32.mrb[0].mxu0
      %v1339 = vpop.f32.mrb[0].mxu0
      %v1340 = vadd.f32 %v1275, %v1339
      %v1341 = vpop.f32.mrb[0].mxu0
      %1342 = vdwg.mxu0
      %1343 = vmatprep.subr.bf16.mxu0 0
      %1344 = vmatpush1.bf16.msra.mxu0 %v1052
      %1345 = vmatprep.subr.bf16.mxu0 0
      %1346 = vmatpush1.bf16.msra.mxu0 %v1053
      %1347 = vmatprep.subr.bf16.mxu0 0
      %1348 = vmatpush1.bf16.msra.mxu0 %v1054
      %1349 = vmatprep.subr.bf16.mxu0 0
      %1350 = vmatpush1.bf16.msra.mxu0 %v1055
      %1351 = vmatprep.subr.bf16.mxu0 0
      %1352 = vmatpush1.bf16.msra.mxu0 %v1056
      %1353 = vmatprep.subr.bf16.mxu0 0
      %1354 = vmatpush1.bf16.msra.mxu0 %v1057
      %1355 = vmatprep.subr.bf16.mxu0 0
      %1356 = vmatpush1.bf16.msra.mxu0 %v1058
      %1357 = vmatprep.subr.bf16.mxu0 0
      %1358 = vmatpush1.bf16.msra.mxu0 %v1059
      %1359 = vmatprep.subr.bf16.mxu0 0
      %1360 = vmatpush1.bf16.msra.mxu0 %v1060
      %1361 = vmatprep.subr.bf16.mxu0 0
      %1362 = vmatpush1.bf16.msra.mxu0 %v1061
      %1363 = vmatprep.subr.bf16.mxu0 0
      %1364 = vmatpush1.bf16.msra.mxu0 %v1062
      %1365 = vmatprep.subr.bf16.mxu0 0
      %1366 = vmatpush1.bf16.msra.mxu0 %v1063
      %1367 = vmatprep.subr.bf16.mxu0 0
      %1368 = vmatpush1.bf16.msra.mxu0 %v1064
      %1369 = vmatprep.subr.bf16.mxu0 0
      %1370 = vmatpush1.bf16.msra.mxu0 %v1065
      %1371 = vmatprep.subr.bf16.mxu0 0
      %1372 = vmatpush1.bf16.msra.mxu0 %v1066
      %1373 = vmatprep.subr.bf16.mxu0 0
      %1374 = vmatpush1.bf16.msra.mxu0 %v1067
      %1375 = vmatprep.mubr.bf16.mxu0 %v651
      %1376 = vmatmul.mubr.bf16.gmra.mrb[0].mxu0 %v650
      %v1377 = vpop.f32.mrb[0].mxu0
      %v1378 = vadd.f32 %v1313, %v1377
      %v1379 = vpop.f32.mrb[0].mxu0
      %v1380 = vpop.f32.mrb[0].mxu0
      %v1381 = vadd.f32 %v1316, %v1380
      %v1382 = vpop.f32.mrb[0].mxu0
      %1383 = vmatprep.mubr.bf16.mxu0 %v660
      %1384 = vmatmul.mubr.bf16.gmra.mrb[0].mxu0 %v659
      %v1385 = vpop.f32.mrb[0].mxu0
      %v1386 = vadd.f32 %v1321, %v1385
      %v1387 = vpop.f32.mrb[0].mxu0
      %v1388 = vpop.f32.mrb[0].mxu0
      %v1389 = vadd.f32 %v1324, %v1388
      %v1390 = vpop.f32.mrb[0].mxu0
      %1391 = vmatprep.mubr.bf16.mxu0 %v669
      %1392 = vmatmul.mubr.bf16.gmra.mrb[0].mxu0 %v668
      %v1393 = vpop.f32.mrb[0].mxu0
      %v1394 = vadd.f32 %v1329, %v1393
      %v1395 = vpop.f32.mrb[0].mxu0
      %v1396 = vpop.f32.mrb[0].mxu0
      %v1397 = vadd.f32 %v1332, %v1396
      %v1398 = vpop.f32.mrb[0].mxu0
      %1399 = vmatprep.mubr.bf16.mxu0 %v678
      %1400 = vmatmul.mubr.bf16.gmra.mrb[0].mxu0 %v677
      %v1401 = vpop.f32.mrb[0].mxu0
      %v1402 = vadd.f32 %v1337, %v1401
      %v1403 = vpop.f32.mrb[0].mxu0
      %v1404 = vpop.f32.mrb[0].mxu0
      %v1405 = vadd.f32 %v1340, %v1404
      %v1406 = vpop.f32.mrb[0].mxu0
      %1407 = vdwg.mxu0
      %1408 = vmatprep.subr.bf16.mxu0 0
      %1409 = vmatpush1.bf16.msra.mxu0 %v1068
      %1410 = vmatprep.subr.bf16.mxu0 0
      %1411 = vmatpush1.bf16.msra.mxu0 %v1069
      %1412 = vmatprep.subr.bf16.mxu0 0
      %1413 = vmatpush1.bf16.msra.mxu0 %v1070
      %1414 = vmatprep.subr.bf16.mxu0 0
      %1415 = vmatpush1.bf16.msra.mxu0 %v1071
      %1416 = vmatprep.subr.bf16.mxu0 0
      %1417 = vmatpush1.bf16.msra.mxu0 %v1072
      %1418 = vmatprep.subr.bf16.mxu0 0
      %1419 = vmatpush1.bf16.msra.mxu0 %v1073
      %1420 = vmatprep.subr.bf16.mxu0 0
      %1421 = vmatpush1.bf16.msra.mxu0 %v1074
      %1422 = vmatprep.subr.bf16.mxu0 0
      %1423 = vmatpush1.bf16.msra.mxu0 %v1075
      %1424 = vmatprep.subr.bf16.mxu0 0
      %1425 = vmatpush1.bf16.msra.mxu0 0
      %1426 = vmatprep.subr.bf16.mxu0 0
      %1427 = vmatpush1.bf16.msra.mxu0 0
      %1428 = vmatprep.subr.bf16.mxu0 0
      %1429 = vmatpush1.bf16.msra.mxu0 0
      %1430 = vmatprep.subr.bf16.mxu0 0
      %1431 = vmatpush1.bf16.msra.mxu0 0
      %1432 = vmatprep.subr.bf16.mxu0 0
      %1433 = vmatpush1.bf16.msra.mxu0 0
      %1434 = vmatprep.subr.bf16.mxu0 0
      %1435 = vmatpush1.bf16.msra.mxu0 0
      %1436 = vmatprep.subr.bf16.mxu0 0
      %1437 = vmatpush1.bf16.msra.mxu0 0
      %1438 = vmatprep.subr.bf16.mxu0 0
      %1439 = vmatpush1.bf16.msra.mxu0 0
      %1440 = vmatprep.mubr.bf16.mxu0 0
      %1441 = vmatmul.mubr.bf16.gmra.mrb[0].mxu0 %v652
      %v1442 = vpop.f32.mrb[0].mxu0
      %v1443 = vadd.f32 %v1378, %v1442
      %v1444 = vpop.f32.mrb[0].mxu0
      %v1445 = vpop.f32.mrb[0].mxu0
      %v1446 = vadd.f32 %v1381, %v1445
      %v1447 = vpop.f32.mrb[0].mxu0
      %1448 = vmatprep.mubr.bf16.mxu0 0
      %1449 = vmatmul.mubr.bf16.gmra.mrb[0].mxu0 %v661
      %v1450 = vpop.f32.mrb[0].mxu0
      %v1451 = vadd.f32 %v1386, %v1450
      %v1452 = vpop.f32.mrb[0].mxu0
      %v1453 = vpop.f32.mrb[0].mxu0
      %v1454 = vadd.f32 %v1389, %v1453
      %v1455 = vpop.f32.mrb[0].mxu0
      %1456 = vmatprep.mubr.bf16.mxu0 0
      %1457 = vmatmul.mubr.bf16.gmra.mrb[0].mxu0 %v670
      %v1458 = vpop.f32.mrb[0].mxu0
      %v1459 = vadd.f32 %v1394, %v1458
      %v1460 = vpop.f32.mrb[0].mxu0
      %v1461 = vpop.f32.mrb[0].mxu0
      %v1462 = vadd.f32 %v1397, %v1461
      %v1463 = vpop.f32.mrb[0].mxu0
      %1464 = vmatprep.mubr.bf16.mxu0 0
      %1465 = vmatmul.mubr.bf16.gmra.mrb[0].mxu0 %v679
      %v1466 = vpop.f32.mrb[0].mxu0
      %v1467 = vadd.f32 %v1402, %v1466
      %v1468 = vpop.f32.mrb[0].mxu0
      %v1469 = vpop.f32.mrb[0].mxu0
      %v1470 = vadd.f32 %v1405, %v1469
      %v1471 = vpop.f32.mrb[0].mxu0
      %1472 = vdwg.mxu0
      %v1473 = vadd.f32 %v340, %v1443
      %v1474 = vadd.f32 %v341, %v1446
      %v1475 = vadd.f32 %v342, %v1451
      %v1476 = vadd.f32 %v343, %v1454
      %v1477 = vadd.f32 %v344, %v1459
      %v1478 = vadd.f32 %v345, %v1462
      %v1479 = vadd.f32 %v346, %v1467
      %v1480 = vadd.f32 %v347, %v1470
      %1481 = vst [vmem:[#allocation2] sm:$0xff] %v1473
      %1482 = vst [vmem:[#allocation2 + $0x8] sm:$0xff] %v1474
      %1483 = vst [vmem:[#allocation2 + $0x10] sm:$0xff] %v1475
      %1484 = vst [vmem:[#allocation2 + $0x18] sm:$0xff] %v1476
      %1485 = vst [vmem:[#allocation2 + $0x20] sm:$0xff] %v1477
      %1486 = vst [vmem:[#allocation2 + $0x28] sm:$0xff] %v1478
      %1487 = vst [vmem:[#allocation2 + $0x30] sm:$0xff] %v1479
      %1488 = vst [vmem:[#allocation2 + $0x38] sm:$0xff] %v1480
      // Predicated region
      $region41: #{resnet_forward.18} parent=35 // pred_check
        %p1489 = pneg %p328
      $region42: #{resnet_forward.18} parent=35 // pred_check_branch
        %1491 = sbr.rel (%p1489) target = $region44
      $region43: #{resnet_forward.18} parent=35 // pred_region
        %v1492 = vld [vmem:[#allocation2] sm:$0xff]
        %v1493 = vld [vmem:[#allocation2 + $0x8] sm:$0xff]
        %v1494 = vld [vmem:[#allocation2 + $0x10] sm:$0xff]
        %v1495 = vld [vmem:[#allocation2 + $0x18] sm:$0xff]
        %v1496 = vld [vmem:[#allocation2 + $0x20] sm:$0xff]
        %v1497 = vld [vmem:[#allocation2 + $0x28] sm:$0xff]
        %v1498 = vld [vmem:[#allocation2 + $0x30] sm:$0xff]
        %v1499 = vld [vmem:[#allocation2 + $0x38] sm:$0xff]
        %v1500 = vld [vmem:[%s308] sm:$0x1]
        %v1502 = vlaneseq
        %v1503 = vshrl.u32 %v1502, 7
        %v1504 = vsub.s32 0, %v1503
        %v1505 = vrot.slane %v1500, %v1504
        %v1507 = vadd.f32 %v1492, %v1505
        %v1508 = vadd.f32 %v1493, %v1505
        %v1509 = vadd.f32 %v1494, %v1505
        %v1510 = vadd.f32 %v1495, %v1505
        %v1511 = vadd.f32 %v1496, %v1505
        %v1512 = vadd.f32 %v1497, %v1505
        %v1513 = vadd.f32 %v1498, %v1505
        %v1514 = vadd.f32 %v1499, %v1505
        %v1515 = vld [vmem:[%s316] sm:$0xf]
        %v1516 = vld [vmem:[%s316 + $0x4] sm:$0xf]
        %v1517 = vld [vmem:[%s316 + $0x8] sm:$0xf]
        %v1518 = vld [vmem:[%s316 + $0xc] sm:$0xf]
        %v1519 = vld [vmem:[%s316 + $0x10] sm:$0xf]
        %v1520 = vld [vmem:[%s316 + $0x14] sm:$0xf]
        %v1521 = vld [vmem:[%s316 + $0x18] sm:$0xf]
        %v1522 = vld [vmem:[%s316 + $0x1c] sm:$0xf]
        %v1523 = vunpack.c.l.bf16 %v1515
        %v1524 = vunpack.c.l.bf16 %v1516
        %v1525 = vunpack.c.l.bf16 %v1517
        %v1526 = vunpack.c.l.bf16 %v1518
        %v1527 = vunpack.c.l.bf16 %v1519
        %v1528 = vunpack.c.l.bf16 %v1520
        %v1529 = vunpack.c.l.bf16 %v1521
        %v1530 = vunpack.c.l.bf16 %v1522
        %v1531 = vadd.f32 %v1507, %v1523
        %v1532 = vadd.f32 %v1508, %v1524
        %v1533 = vadd.f32 %v1509, %v1525
        %v1534 = vadd.f32 %v1510, %v1526
        %v1535 = vadd.f32 %v1511, %v1527
        %v1536 = vadd.f32 %v1512, %v1528
        %v1537 = vadd.f32 %v1513, %v1529
        %v1538 = vadd.f32 %v1514, %v1530
        %v1539 = vmax.f32 %v1531, 0.0
        %v1540 = vmax.f32 %v1532, 0.0
        %v1541 = vmax.f32 %v1533, 0.0
        %v1542 = vmax.f32 %v1534, 0.0
        %v1543 = vmax.f32 %v1535, 0.0
        %v1544 = vmax.f32 %v1536, 0.0
        %v1545 = vmax.f32 %v1537, 0.0
        %v1546 = vmax.f32 %v1538, 0.0
        %v1547 = vpack.c.bf16 %v1540, %v1539
        %v1548 = vpack.c.bf16 %v1542, %v1541
        %v1549 = vpack.c.bf16 %v1544, %v1543
        %v1550 = vpack.c.bf16 %v1546, %v1545
        %v1555 = vunpack.c.l.b16 %v1547
        %v1556 = vunpack.c.h.b16 %v1547
        %v1557 = vunpack.c.l.b16 %v1548
        %v1558 = vunpack.c.h.b16 %v1548
        %v1559 = vunpack.c.l.b16 %v1549
        %v1560 = vunpack.c.h.b16 %v1549
        %v1561 = vunpack.c.l.b16 %v1550
        %v1562 = vunpack.c.h.b16 %v1550
        %v1563 = vpack.c.b16 %v1555, %v1555
        %v1564 = vpack.c.b16 %v1556, %v1556
        %v1565 = vpack.c.b16 %v1557, %v1557
        %v1566 = vpack.c.b16 %v1558, %v1558
        %v1567 = vpack.c.b16 %v1559, %v1559
        %v1568 = vpack.c.b16 %v1560, %v1560
        %v1569 = vpack.c.b16 %v1561, %v1561
        %v1570 = vpack.c.b16 %v1562, %v1562
        %1579 = vst [vmem:[%s325] sm:$0xf] %v1563
        %1580 = vst [vmem:[%s325 + $0x4] sm:$0xf] %v1564
        %1581 = vst [vmem:[%s325 + $0x8] sm:$0xf] %v1565
        %1582 = vst [vmem:[%s325 + $0xc] sm:$0xf] %v1566
        %1583 = vst [vmem:[%s325 + $0x10] sm:$0xf] %v1567
        %1584 = vst [vmem:[%s325 + $0x14] sm:$0xf] %v1568
        %1585 = vst [vmem:[%s325 + $0x18] sm:$0xf] %v1569
        %1586 = vst [vmem:[%s325 + $0x1c] sm:$0xf] %v1570
      $region44: #{resnet_forward.18} parent=35 // pred_fallthru
        _
      %s1587 = smul.u32 8, %s20
      %p1588 = scmp.lt.s32.totalorder %s1587, 15
      %s1589 = scalar_select %p1588, %s1587, 15
      %p1590 = scmp.lt.s32.totalorder %s21, 0
      %s1591 = scalar_select %p1590, %s21, 0
      %s1592 = sadd.s32 %s1591, %s1589
      %s1593 = smul.addr %s1592, 4
      %s1594 = scalar_lea.vmem %s4, %s1593
      // Predicated region
      $region45: #{resnet_forward.18} parent=35 // pred_check
        %p1595 = pneg %p164
      $region46: #{resnet_forward.18} parent=35 // pred_check_branch
        %1597 = sbr.rel (%p1595) target = $region48
      $region47: #{resnet_forward.18} parent=35 // pred_region
        %s1598 = smul.u32 8, %s20
      $region48: #{resnet_forward.18} parent=35 // pred_fallthru
        _
    $region36: #{resnet_forward.18} parent=5 // pred_fallthru
      _
    %p1599 = scmp.le.s32.totalorder 2, %s10
    // Predicated region
    $region49: #{resnet_forward.18} parent=5 // pred_check
      %p1600 = pneg %p1599
    $region50: #{resnet_forward.18} parent=5 // pred_check_branch
      %1602 = sbr.rel (%p1600) target = $region52
    $region51: #{resnet_forward.18} parent=5 // pred_region
      %s1603 = ssub.s32 %s10, 2
      // Predicated region
      $region53: #{resnet_forward.18} parent=51 // pred_check
        %p1604 = pneg %p170
      $region54: #{resnet_forward.18} parent=51 // pred_check_branch
        %1606 = sbr.rel (%p1604) target = $region56
      $region55: #{resnet_forward.18} parent=51 // pred_region
        %s1607 = smul.u32 8, %s23
        %p1608 = scmp.lt.s32.totalorder %s1607, 15
        %s1609 = scalar_select %p1608, %s1607, 15
        %p1610 = scmp.lt.s32.totalorder %s24, 0
        %s1611 = scalar_select %p1610, %s24, 0
        %s1612 = sadd.s32 %s1611, %s1609
        %s1613 = smul.addr %s1612, 4
        %s1614 = scalar_lea.vmem %s4, %s1613
      $region56: #{resnet_forward.18} parent=51 // pred_fallthru
        _
    $region52: #{resnet_forward.18} parent=5 // pred_fallthru
      _
  $region6: #{resnet_forward.18} parent=0 // loop_footer
    %s14 = sadd.s32 1, %s10
  $region7: #{resnet_forward.18} parent=0 // loop_footer_branch
    %9 = sbr.rel target = $region3
  $region8: #{resnet_forward.18} parent=0 // loop_exit
    _

</llo_original>
